<compile_context>
chip_gen: v7x
topology: tpu7x:2x2x1
jax: 0.10.0
libtpu: 0.0.40
codegen_flags: <defaults>
</compile_context>

<pallas_src>
import jax
import jax.numpy as jnp
from jax.experimental import pallas as pl
from jax.experimental.pallas import tpu as pltpu

EMB_DIM = 100
HIDDEN = 150
HEAD_HIDDEN = 200

LANE = 128
SUBLANE = 8
V_TILE = 512                     # vocab tile for the (large-vocab) head matmul
FUSE_W2_BYTES = 4 * 1024 * 1024  # fuse the head if padded f32 w2 fits in this budget


def _round_up(x, m):
    return (x + m - 1) // m * m


# ----------------------------------------------------------------------------- kernels

def _lstm_body(x_ref, wih0_ref, whh0_ref, b0_ref, wih1_ref, whh1_ref, b1_ref,
               w1_ref, bh1_ref):
    """2-layer LSTM recurrence + first head Linear+ReLU.  Returns hid (BT, HHp)."""
    T, BT, Ep = x_ref.shape
    Hp = whh0_ref.shape[0]
    G = 4 * Hp

    # --- hoisted layer-0 input projection for all timesteps (one well-shaped matmul) ---
    x_all = x_ref[...].reshape(T * BT, Ep)
    xp = (jnp.dot(x_all, wih0_ref[...], preferred_element_type=jnp.float32)
          + b0_ref[...]).reshape(T, BT, G)

    whh0 = whh0_ref[...]
    wih1 = wih1_ref[...]
    whh1 = whh1_ref[...]
    # hoist the bias broadcast out of the loop (JAX does not CSE broadcast_in_dim)
    b1 = jnp.broadcast_to(b1_ref[...], (BT, G))

    def activate(gates, c):
        # gate order (i, f, g, o); slices are 256-lane aligned (free)
        i_g = jax.nn.sigmoid(gates[:, 0 * Hp:1 * Hp])
        f_g = jax.nn.sigmoid(gates[:, 1 * Hp:2 * Hp])
        g_g = jnp.tanh(gates[:, 2 * Hp:3 * Hp])
        o_g = jax.nn.sigmoid(gates[:, 3 * Hp:4 * Hp])
        c_new = f_g * c + i_g * g_g
        return o_g * jnp.tanh(c_new), c_new

    h0 = c0 = h1 = c1 = jnp.zeros((BT, Hp), jnp.float32)
    # r1 = h1_prev @ whh1 + b1, precomputed off the h0 -> g1 critical path.
    # h1_prev starts at 0, so initially r1 == b1.
    r1 = b1
    # Fully unrolled time loop (T is small & static): gives the scheduler cross-step
    # visibility so MXU / EUP / VPU work of adjacent steps interleaves.
    # TODO(synk): switch to lax.fori_loop(..., unroll=2..4) once T exceeds a few dozen.
    for t in range(T):
        g0 = xp[t] + jnp.dot(h0, whh0, preferred_element_type=jnp.float32)
        h0, c0 = activate(g0, c0)
        g1 = jnp.dot(h0, wih1, preferred_element_type=jnp.float32) + r1
        h1, c1 = activate(g1, c1)
        if t + 1 < T:
            # recurrent term for the NEXT step; depends only on h1, not on next h0
            r1 = jnp.dot(h1, whh1, preferred_element_type=jnp.float32) + b1

    hid = jnp.dot(h1, w1_ref[...], preferred_element_type=jnp.float32) + bh1_ref[...]
    return jnp.maximum(hid, 0.0)


def _lstm_fused_kernel(x_ref, wih0_ref, whh0_ref, b0_ref, wih1_ref, whh1_ref, b1_ref,
                       w1_ref, bh1_ref, w2_ref, bh2_ref, out_ref):
    """Recurrence + full MLP head (small/medium vocab: w2 resident in VMEM)."""
    hid = _lstm_body(x_ref, wih0_ref, whh0_ref, b0_ref, wih1_ref, whh1_ref, b1_ref,
                     w1_ref, bh1_ref)
    out_ref[...] = (jnp.dot(hid, w2_ref[...], preferred_element_type=jnp.float32)
                    + bh2_ref[...])


def _lstm_hid_kernel(x_ref, wih0_ref, whh0_ref, b0_ref, wih1_ref, whh1_ref, b1_ref,
                     w1_ref, bh1_ref, hid_ref):
    """Recurrence + first head layer only (large vocab: head done in a second kernel)."""
    hid_ref[...] = _lstm_body(x_ref, wih0_ref, whh0_ref, b0_ref, wih1_ref, whh1_ref,
                              b1_ref, w1_ref, bh1_ref)


def _head_kernel(hid_ref,            # (Bp, HHp)  f32
                 w2_ref,             # (HHp, V_TILE) bf16 (HBM-bandwidth bound -> half bytes)
                 b2_ref,             # (1, V_TILE) f32
                 out_ref):           # (Bp, V_TILE) f32
    h = hid_ref[...].astype(w2_ref.dtype)
    out_ref[...] = (jnp.dot(h, w2_ref[...], preferred_element_type=jnp.float32)
                    + b2_ref[...])


# ----------------------------------------------------------------------------- packing

def _pack_gate_cols(w, H, Hp):
    """(K, 4H) with gate order i,f,g,o -> (K, 4Hp), gate g placed at column g*Hp."""
    K = w.shape[0]
    out = jnp.zeros((K, 4 * Hp), w.dtype)
    for g in range(4):
        out = out.at[:, g * Hp:g * Hp + H].set(w[:, g * H:(g + 1) * H])
    return out


def _pad_rows(w, Kp):
    return jnp.pad(w, ((0, Kp - w.shape[0]), (0, 0)))


def _pack_params(params, Ep, Hp, HHp, Vp, head_dtype):
    H = HIDDEN
    V = params["w2"].shape[1]
    wih0 = _pad_rows(_pack_gate_cols(params["wih0"], H, Hp), Ep)       # (Ep, 4Hp)
    whh0 = _pad_rows(_pack_gate_cols(params["whh0"], H, Hp), Hp)       # (Hp, 4Hp)
    b0 = _pack_gate_cols(params["b0"], H, Hp)                          # (1, 4Hp)
    wih1 = _pad_rows(_pack_gate_cols(params["wih1"], H, Hp), Hp)       # (Hp, 4Hp)
    whh1 = _pad_rows(_pack_gate_cols(params["whh1"], H, Hp), Hp)       # (Hp, 4Hp)
    b1 = _pack_gate_cols(params["b1"], H, Hp)                          # (1, 4Hp)
    w1 = jnp.pad(params["w1"], ((0, Hp - H), (0, HHp - HEAD_HIDDEN)))  # (Hp, HHp)
    bh1 = jnp.pad(params["bh1"], ((0, 0), (0, HHp - HEAD_HIDDEN)))     # (1, HHp)
    w2 = jnp.pad(params["w2"], ((0, HHp - HEAD_HIDDEN), (0, Vp - V))).astype(head_dtype)
    bh2 = jnp.pad(params["bh2"], ((0, 0), (0, Vp - V)))                # (1, Vp)  f32
    return dict(wih0=wih0, whh0=whh0, b0=b0, wih1=wih1, whh1=whh1, b1=b1,
                w1=w1, bh1=bh1, w2=w2, bh2=bh2)


# ----------------------------------------------------------------------------- wrapper

def normal_lstm_forward(tokens, params, fuse_head=None):
    """tokens: (B, T) int32.  Returns logits (B, vocab_size) float32."""
    B, T = tokens.shape
    V = params["w2"].shape[1]

    Bp = _round_up(B, SUBLANE)
    B_TILE = Bp if Bp <= 256 else 256       # batch tile per grid step (MXU-feed sized)
    Bp = _round_up(Bp, B_TILE)
    Ep = _round_up(EMB_DIM, LANE)           # 128
    Hp = _round_up(HIDDEN, LANE)            # 256 -> lane-aligned gate blocks
    HHp = _round_up(HEAD_HIDDEN, LANE)      # 256
    G = 4 * Hp

    if fuse_head is None:
        fuse_head = HHp * _round_up(V, LANE) * 4 <= FUSE_W2_BYTES
    Vp = _round_up(V, LANE) if fuse_head else _round_up(V, V_TILE)
    head_dtype = jnp.float32 if fuse_head else jnp.bfloat16

    p = _pack_params(params, Ep, Hp, HHp, Vp, head_dtype)

    # Embedding lookup (glue).  Transpose the small int32 token matrix first so the
    # gather lands directly in (T, Bp, E) time-major layout (no big activation
    # transpose materialized in HBM).
    # TODO(synk): fold the gather into kernel A via scalar-prefetched token ids +
    #             a pl.Element row gather on the embedding table.
    tok_t = jnp.transpose(tokens)                                  # (T, B)
    tok_t = jnp.pad(tok_t, ((0, 0), (0, Bp - B)))                  # pad batch w/ token 0
    x = jnp.take(params["emb"], tok_t, axis=0)                     # (T, Bp, E)
    x = jnp.pad(x, ((0, 0), (0, 0), (0, Ep - EMB_DIM))).astype(jnp.float32)

    def wspec(r, c):
        return pl.BlockSpec((r, c), lambda b: (0, 0))              # weight: stays resident

    in_specs = [
        pl.BlockSpec((T, B_TILE, Ep), lambda b: (0, b, 0)),        # x batch-tiled
        wspec(Ep, G), wspec(Hp, G), wspec(1, G),                   # wih0, whh0, b0
        wspec(Hp, G), wspec(Hp, G), wspec(1, G),                   # wih1, whh1, b1
        wspec(Hp, HHp), wspec(1, HHp),                             # w1, bh1
    ]
    args = [x, p["wih0"], p["whh0"], p["b0"], p["wih1"], p["whh1"], p["b1"],
            p["w1"], p["bh1"]]
    if fuse_head:
        in_specs += [wspec(HHp, Vp), wspec(1, Vp)]
        args += [p["w2"], p["bh2"]]
        kernel_a, out_cols = _lstm_fused_kernel, Vp
    else:
        kernel_a, out_cols = _lstm_hid_kernel, HHp

    flops_a = (2 * T * Bp * Ep * G                     # hoisted input projection
               + 3 * 2 * T * Bp * Hp * G               # 3 recurrent matmuls / step
               + 2 * Bp * Hp * HHp                     # first head layer
               + (2 * Bp * HHp * Vp if fuse_head else 0))
    cost_a = pl.CostEstimate(
        flops=int(flops_a),
        transcendentals=int(10 * T * Bp * Hp),         # 3 sigmoid + 2 tanh per cell, 2 cells
        bytes_accessed=int(sum(int(a.nbytes) for a in args) + Bp * out_cols * 4))

    # Kernel A: recurrence (+ fused head for small vocab), batch grid axis = parallel.
    out_a = pl.pallas_call(
        kernel_a,
        out_shape=jax.ShapeDtypeStruct((Bp, out_cols), jnp.float32),
        grid=(Bp // B_TILE,),
        in_specs=in_specs,
        out_specs=pl.BlockSpec((B_TILE, out_cols), lambda b: (b, 0)),
        compiler_params=pltpu.CompilerParams(
            dimension_semantics=("parallel",),
            vmem_limit_bytes=32 * 1024 * 1024),        # explicit for v5e's 16 MiB default
        cost_estimate=cost_a,
    )(*args)

    if fuse_head:
        return out_a[:B, :V]

    # Kernel B: vocab projection, tiled wide over V (HBM-bound w2 streaming, bf16 w2).
    hid = out_a                                        # (Bp, HHp) f32
    n_vtiles = Vp // V_TILE
    cost_b = pl.CostEstimate(
        flops=int(2 * Bp * HHp * Vp),
        transcendentals=0,
        bytes_accessed=int(hid.nbytes + p["w2"].nbytes + p["bh2"].nbytes + Bp * Vp * 4))
    logits_p = pl.pallas_call(
        _head_kernel,
        out_shape=jax.ShapeDtypeStruct((Bp, Vp), jnp.float32),
        grid=(n_vtiles,),
        in_specs=[pl.BlockSpec((Bp, HHp), lambda j: (0, 0)),
                  pl.BlockSpec((HHp, V_TILE), lambda j: (0, j)),
                  pl.BlockSpec((1, V_TILE), lambda j: (0, j))],
        out_specs=pl.BlockSpec((Bp, V_TILE), lambda j: (0, j)),
        compiler_params=pltpu.CompilerParams(
            dimension_semantics=("parallel",),
            vmem_limit_bytes=32 * 1024 * 1024),
        cost_estimate=cost_b,
    )(hid, p["w2"], p["bh2"])

    return logits_p[:B, :V]


# ----------------------------------------------------------------------------- init / ref

def init_params(key, vocab_size):
    """Deterministic PyTorch-style uniform init (no checkpoint loading)."""
    ks = jax.random.split(key, 13)

    def uni(k, shape, bound):
        return jax.random.uniform(k, shape, jnp.float32, -bound, bound)

    emb = jax.random.normal(ks[0], (vocab_size, EMB_DIM), jnp.float32)
    emb = emb.at[0].set(0.0)                       # padding_idx=0

    kl = 1.0 / jnp.sqrt(HIDDEN).astype(jnp.float32)
    # LSTM layer 0 (input 100 -> hidden 150); stored transposed, biases pre-summed
    wih0 = uni(ks[1], (EMB_DIM, 4 * HIDDEN), kl)
    whh0 = uni(ks[2], (HIDDEN, 4 * HIDDEN), kl)
    b0 = uni(ks[3], (1, 4 * HIDDEN), kl) + uni(ks[4], (1, 4 * HIDDEN), kl)
    # LSTM layer 1 (input 150 -> hidden 150)
    wih1 = uni(ks[5], (HIDDEN, 4 * HIDDEN), kl)
    whh1 = uni(ks[6], (HIDDEN, 4 * HIDDEN), kl)
    b1 = uni(ks[7], (1, 4 * HIDDEN), kl) + uni(ks[8], (1, 4 * HIDDEN), kl)
    # Head: Linear(150, 200) -> ReLU -> Linear(200, vocab_size)
    k1 = 1.0 / jnp.sqrt(HIDDEN).astype(jnp.float32)
    w1 = uni(ks[9], (HIDDEN, HEAD_HIDDEN), k1)
    bh1 = uni(ks[10], (1, HEAD_HIDDEN), k1)
    k2 = 1.0 / jnp.sqrt(HEAD_HIDDEN).astype(jnp.float32)
    w2 = uni(ks[11], (HEAD_HIDDEN, vocab_size), k2)
    bh2 = uni(ks[12], (1, vocab_size), k2)

    return dict(emb=emb, wih0=wih0, whh0=whh0, b0=b0,
                wih1=wih1, whh1=whh1, b1=b1,
                w1=w1, bh1=bh1, w2=w2, bh2=bh2)


def reference_forward(tokens, params):
    """Pure-JAX reference replicating the PyTorch forward (eval mode)."""
    x = jnp.take(params["emb"], tokens, axis=0)    # (B, T, E)
    B, T, _ = x.shape
    H = HIDDEN

    def cell(x_t, h, c, wih, whh, b):
        g = x_t @ wih + h @ whh + b
        i = jax.nn.sigmoid(g[:, :H])
        f = jax.nn.sigmoid(g[:, H:2 * H])
        gg = jnp.tanh(g[:, 2 * H:3 * H])
        o = jax.nn.sigmoid(g[:, 3 * H:])
        c = f * c + i * gg
        return o * jnp.tanh(c), c

    h0 = c0 = h1 = c1 = jnp.zeros((B, H), jnp.float32)
    for t in range(T):
        h0, c0 = cell(x[:, t, :], h0, c0, params["wih0"], params["whh0"], params["b0"])
        h1, c1 = cell(h0, h1, c1, params["wih1"], params["whh1"], params["b1"])
    hid = jnp.maximum(h1 @ params["w1"] + params["bh1"], 0.0)
    return hid @ params["w2"] + params["bh2"]


if __name__ == "__main__":
    key = jax.random.PRNGKey(0)
    k_tok, k_par = jax.random.split(key)

    vocab_size = 50
    B, T = 2, 8
    tokens = jax.random.randint(k_tok, (B, T), 0, vocab_size, dtype=jnp.int32)
    params = init_params(k_par, vocab_size)

    ref = jax.block_until_ready(reference_forward(tokens, params))

    # Path 1: fused head (auto-selected for small vocab), all f32.
    out = jax.block_until_ready(normal_lstm_forward(tokens, params))
    assert out.shape == (B, vocab_size), out.shape
    assert jnp.allclose(out, ref, rtol=1e-3, atol=1e-3), float(jnp.max(jnp.abs(out - ref)))

    # Path 2: separate V-tiled head kernel (large-vocab path), bf16 w2 streaming.
    out2 = jax.block_until_ready(normal_lstm_forward(tokens, params, fuse_head=False))
    assert out2.shape == (B, vocab_size), out2.shape
    assert jnp.allclose(out2, ref, rtol=2e-2, atol=2e-2), float(jnp.max(jnp.abs(out2 - ref)))

    print("KERNEL_OK")
</pallas_src>

<mosaic_0001>
module attributes {stable_mosaic.version = 11 : i64} {
  func.func @_lstm_fused_kernel(%arg0: i32, %arg1: memref<8x8x128xf32, #tpu.memory_space<vmem>>, %arg2: memref<128x1024xf32, #tpu.memory_space<vmem>>, %arg3: memref<256x1024xf32, #tpu.memory_space<vmem>>, %arg4: memref<1x1024xf32, #tpu.memory_space<vmem>>, %arg5: memref<256x1024xf32, #tpu.memory_space<vmem>>, %arg6: memref<256x1024xf32, #tpu.memory_space<vmem>>, %arg7: memref<1x1024xf32, #tpu.memory_space<vmem>>, %arg8: memref<256x256xf32, #tpu.memory_space<vmem>>, %arg9: memref<1x256xf32, #tpu.memory_space<vmem>>, %arg10: memref<256x128xf32, #tpu.memory_space<vmem>>, %arg11: memref<1x128xf32, #tpu.memory_space<vmem>>, %arg12: memref<8x128xf32, #tpu.memory_space<vmem>>) attributes {dimension_semantics = [#tpu.dimension_semantics<parallel>], iteration_bounds = array<i64: 1>, scalar_prefetch = 0 : i64, scratch_operands = 0 : i64, tpu.core_type = #tpu.core_type<tc>, window_params = [{transform_indices = @transform_0, window_bounds = array<i64: 8, 8, 128>}, {pipeline_mode = #tpu.pipeline_mode<synchronous>, transform_indices = @transform_1, window_bounds = array<i64: 128, 1024>}, {pipeline_mode = #tpu.pipeline_mode<synchronous>, transform_indices = @transform_2, window_bounds = array<i64: 256, 1024>}, {pipeline_mode = #tpu.pipeline_mode<synchronous>, transform_indices = @transform_3, window_bounds = array<i64: 1, 1024>}, {pipeline_mode = #tpu.pipeline_mode<synchronous>, transform_indices = @transform_4, window_bounds = array<i64: 256, 1024>}, {pipeline_mode = #tpu.pipeline_mode<synchronous>, transform_indices = @transform_5, window_bounds = array<i64: 256, 1024>}, {pipeline_mode = #tpu.pipeline_mode<synchronous>, transform_indices = @transform_6, window_bounds = array<i64: 1, 1024>}, {pipeline_mode = #tpu.pipeline_mode<synchronous>, transform_indices = @transform_7, window_bounds = array<i64: 256, 256>}, {pipeline_mode = #tpu.pipeline_mode<synchronous>, transform_indices = @transform_8, window_bounds = array<i64: 1, 256>}, {pipeline_mode = #tpu.pipeline_mode<synchronous>, transform_indices = @transform_9, window_bounds = array<i64: 256, 128>}, {pipeline_mode = #tpu.pipeline_mode<synchronous>, transform_indices = @transform_10, window_bounds = array<i64: 1, 128>}, {transform_indices = @transform_11, window_bounds = array<i64: 8, 128>}]} {
    %c0 = arith.constant 0 : index
    %c0_0 = arith.constant 0 : index
    %c0_1 = arith.constant 0 : index
    %0 = vector.load %arg1[%c0, %c0_0, %c0_1] : memref<8x8x128xf32, #tpu.memory_space<vmem>>, vector<8x8x128xf32>
    %1 = vector.shape_cast %0 : vector<8x8x128xf32> to vector<64x128xf32>
    %c0_2 = arith.constant 0 : index
    %c0_3 = arith.constant 0 : index
    %2 = vector.load %arg2[%c0_2, %c0_3] : memref<128x1024xf32, #tpu.memory_space<vmem>>, vector<128x1024xf32>
    %cst = arith.constant dense<0.000000e+00> : vector<64x1024xf32>
    %3 = tpu.matmul %1, %2, %cst {dimension_numbers = #tpu.dot_dimension_numbers<[1], [0], [0], [1], [0, 0, 1, 1], [], []>} : vector<64x128xf32>, vector<128x1024xf32>, vector<64x1024xf32> -> vector<64x1024xf32>
    %c0_4 = arith.constant 0 : index
    %c0_5 = arith.constant 0 : index
    %4 = vector.load %arg4[%c0_4, %c0_5] : memref<1x1024xf32, #tpu.memory_space<vmem>>, vector<1x1024xf32>
    %5 = vector.broadcast %4 : vector<1x1024xf32> to vector<64x1024xf32>
    %6 = arith.addf %3, %5 : vector<64x1024xf32>
    %7 = vector.shape_cast %6 : vector<64x1024xf32> to vector<8x8x1024xf32>
    %c0_6 = arith.constant 0 : index
    %c0_7 = arith.constant 0 : index
    %8 = vector.load %arg3[%c0_6, %c0_7] : memref<256x1024xf32, #tpu.memory_space<vmem>>, vector<256x1024xf32>
    %c0_8 = arith.constant 0 : index
    %c0_9 = arith.constant 0 : index
    %9 = vector.load %arg5[%c0_8, %c0_9] : memref<256x1024xf32, #tpu.memory_space<vmem>>, vector<256x1024xf32>
    %c0_10 = arith.constant 0 : index
    %c0_11 = arith.constant 0 : index
    %10 = vector.load %arg6[%c0_10, %c0_11] : memref<256x1024xf32, #tpu.memory_space<vmem>>, vector<256x1024xf32>
    %c0_12 = arith.constant 0 : index
    %c0_13 = arith.constant 0 : index
    %11 = vector.load %arg7[%c0_12, %c0_13] : memref<1x1024xf32, #tpu.memory_space<vmem>>, vector<1x1024xf32>
    %12 = vector.shape_cast %11 : vector<1x1024xf32> to vector<1x1024xf32>
    %13 = vector.broadcast %12 : vector<1x1024xf32> to vector<8x1024xf32>
    %cst_14 = arith.constant 0.000000e+00 : f32
    %14 = vector.broadcast %cst_14 : f32 to vector<8x256xf32>
    %15 = vector.extract_strided_slice %7 {offsets = [0, 0, 0], sizes = [1, 8, 1024], strides = [1, 1, 1]} : vector<8x8x1024xf32> to vector<1x8x1024xf32>
    %16 = vector.shape_cast %15 : vector<1x8x1024xf32> to vector<8x1024xf32>
    %cst_15 = arith.constant dense<0.000000e+00> : vector<8x1024xf32>
    %17 = tpu.matmul %14, %8, %cst_15 {dimension_numbers = #tpu.dot_dimension_numbers<[1], [0], [0], [1], [0, 0, 1, 1], [], []>} : vector<8x256xf32>, vector<256x1024xf32>, vector<8x1024xf32> -> vector<8x1024xf32>
    %18 = arith.addf %16, %17 : vector<8x1024xf32>
    %19 = vector.extract_strided_slice %18 {offsets = [0, 0], sizes = [8, 256], strides = [1, 1]} : vector<8x1024xf32> to vector<8x256xf32>
    %20 = arith.negf %19 : vector<8x256xf32>
    %21 = math.exp %20 : vector<8x256xf32>
    %cst_16 = arith.constant 1.000000e+00 : f32
    %22 = vector.broadcast %cst_16 : f32 to vector<8x256xf32>
    %23 = arith.addf %22, %21 : vector<8x256xf32>
    %24 = arith.divf %22, %23 : vector<8x256xf32>
    %25 = vector.extract_strided_slice %18 {offsets = [0, 256], sizes = [8, 256], strides = [1, 1]} : vector<8x1024xf32> to vector<8x256xf32>
    %26 = arith.negf %25 : vector<8x256xf32>
    %27 = math.exp %26 : vector<8x256xf32>
    %cst_17 = arith.constant 1.000000e+00 : f32
    %28 = vector.broadcast %cst_17 : f32 to vector<8x256xf32>
    %29 = arith.addf %28, %27 : vector<8x256xf32>
    %30 = arith.divf %28, %29 : vector<8x256xf32>
    %31 = vector.extract_strided_slice %18 {offsets = [0, 512], sizes = [8, 256], strides = [1, 1]} : vector<8x1024xf32> to vector<8x256xf32>
    %32 = math.tanh %31 : vector<8x256xf32>
    %33 = vector.extract_strided_slice %18 {offsets = [0, 768], sizes = [8, 256], strides = [1, 1]} : vector<8x1024xf32> to vector<8x256xf32>
    %34 = arith.negf %33 : vector<8x256xf32>
    %35 = math.exp %34 : vector<8x256xf32>
    %cst_18 = arith.constant 1.000000e+00 : f32
    %36 = vector.broadcast %cst_18 : f32 to vector<8x256xf32>
    %37 = arith.addf %36, %35 : vector<8x256xf32>
    %38 = arith.divf %36, %37 : vector<8x256xf32>
    %39 = arith.mulf %30, %14 : vector<8x256xf32>
    %40 = arith.mulf %24, %32 : vector<8x256xf32>
    %41 = arith.addf %39, %40 : vector<8x256xf32>
    %42 = math.tanh %41 : vector<8x256xf32>
    %43 = arith.mulf %38, %42 : vector<8x256xf32>
    %cst_19 = arith.constant dense<0.000000e+00> : vector<8x1024xf32>
    %44 = tpu.matmul %43, %9, %cst_19 {dimension_numbers = #tpu.dot_dimension_numbers<[1], [0], [0], [1], [0, 0, 1, 1], [], []>} : vector<8x256xf32>, vector<256x1024xf32>, vector<8x1024xf32> -> vector<8x1024xf32>
    %45 = arith.addf %44, %13 : vector<8x1024xf32>
    %46 = vector.extract_strided_slice %45 {offsets = [0, 0], sizes = [8, 256], strides = [1, 1]} : vector<8x1024xf32> to vector<8x256xf32>
    %47 = arith.negf %46 : vector<8x256xf32>
    %48 = math.exp %47 : vector<8x256xf32>
    %cst_20 = arith.constant 1.000000e+00 : f32
    %49 = vector.broadcast %cst_20 : f32 to vector<8x256xf32>
    %50 = arith.addf %49, %48 : vector<8x256xf32>
    %51 = arith.divf %49, %50 : vector<8x256xf32>
    %52 = vector.extract_strided_slice %45 {offsets = [0, 256], sizes = [8, 256], strides = [1, 1]} : vector<8x1024xf32> to vector<8x256xf32>
    %53 = arith.negf %52 : vector<8x256xf32>
    %54 = math.exp %53 : vector<8x256xf32>
    %cst_21 = arith.constant 1.000000e+00 : f32
    %55 = vector.broadcast %cst_21 : f32 to vector<8x256xf32>
    %56 = arith.addf %55, %54 : vector<8x256xf32>
    %57 = arith.divf %55, %56 : vector<8x256xf32>
    %58 = vector.extract_strided_slice %45 {offsets = [0, 512], sizes = [8, 256], strides = [1, 1]} : vector<8x1024xf32> to vector<8x256xf32>
    %59 = math.tanh %58 : vector<8x256xf32>
    %60 = vector.extract_strided_slice %45 {offsets = [0, 768], sizes = [8, 256], strides = [1, 1]} : vector<8x1024xf32> to vector<8x256xf32>
    %61 = arith.negf %60 : vector<8x256xf32>
    %62 = math.exp %61 : vector<8x256xf32>
    %cst_22 = arith.constant 1.000000e+00 : f32
    %63 = vector.broadcast %cst_22 : f32 to vector<8x256xf32>
    %64 = arith.addf %63, %62 : vector<8x256xf32>
    %65 = arith.divf %63, %64 : vector<8x256xf32>
    %66 = arith.mulf %57, %14 : vector<8x256xf32>
    %67 = arith.mulf %51, %59 : vector<8x256xf32>
    %68 = arith.addf %66, %67 : vector<8x256xf32>
    %69 = math.tanh %68 : vector<8x256xf32>
    %70 = arith.mulf %65, %69 : vector<8x256xf32>
    %cst_23 = arith.constant dense<0.000000e+00> : vector<8x1024xf32>
    %71 = tpu.matmul %70, %10, %cst_23 {dimension_numbers = #tpu.dot_dimension_numbers<[1], [0], [0], [1], [0, 0, 1, 1], [], []>} : vector<8x256xf32>, vector<256x1024xf32>, vector<8x1024xf32> -> vector<8x1024xf32>
    %72 = arith.addf %71, %13 : vector<8x1024xf32>
    %73 = vector.extract_strided_slice %7 {offsets = [1, 0, 0], sizes = [1, 8, 1024], strides = [1, 1, 1]} : vector<8x8x1024xf32> to vector<1x8x1024xf32>
    %74 = vector.shape_cast %73 : vector<1x8x1024xf32> to vector<8x1024xf32>
    %cst_24 = arith.constant dense<0.000000e+00> : vector<8x1024xf32>
    %75 = tpu.matmul %43, %8, %cst_24 {dimension_numbers = #tpu.dot_dimension_numbers<[1], [0], [0], [1], [0, 0, 1, 1], [], []>} : vector<8x256xf32>, vector<256x1024xf32>, vector<8x1024xf32> -> vector<8x1024xf32>
    %76 = arith.addf %74, %75 : vector<8x1024xf32>
    %77 = vector.extract_strided_slice %76 {offsets = [0, 0], sizes = [8, 256], strides = [1, 1]} : vector<8x1024xf32> to vector<8x256xf32>
    %78 = arith.negf %77 : vector<8x256xf32>
    %79 = math.exp %78 : vector<8x256xf32>
    %cst_25 = arith.constant 1.000000e+00 : f32
    %80 = vector.broadcast %cst_25 : f32 to vector<8x256xf32>
    %81 = arith.addf %80, %79 : vector<8x256xf32>
    %82 = arith.divf %80, %81 : vector<8x256xf32>
    %83 = vector.extract_strided_slice %76 {offsets = [0, 256], sizes = [8, 256], strides = [1, 1]} : vector<8x1024xf32> to vector<8x256xf32>
    %84 = arith.negf %83 : vector<8x256xf32>
    %85 = math.exp %84 : vector<8x256xf32>
    %cst_26 = arith.constant 1.000000e+00 : f32
    %86 = vector.broadcast %cst_26 : f32 to vector<8x256xf32>
    %87 = arith.addf %86, %85 : vector<8x256xf32>
    %88 = arith.divf %86, %87 : vector<8x256xf32>
    %89 = vector.extract_strided_slice %76 {offsets = [0, 512], sizes = [8, 256], strides = [1, 1]} : vector<8x1024xf32> to vector<8x256xf32>
    %90 = math.tanh %89 : vector<8x256xf32>
    %91 = vector.extract_strided_slice %76 {offsets = [0, 768], sizes = [8, 256], strides = [1, 1]} : vector<8x1024xf32> to vector<8x256xf32>
    %92 = arith.negf %91 : vector<8x256xf32>
    %93 = math.exp %92 : vector<8x256xf32>
    %cst_27 = arith.constant 1.000000e+00 : f32
    %94 = vector.broadcast %cst_27 : f32 to vector<8x256xf32>
    %95 = arith.addf %94, %93 : vector<8x256xf32>
    %96 = arith.divf %94, %95 : vector<8x256xf32>
    %97 = arith.mulf %88, %41 : vector<8x256xf32>
    %98 = arith.mulf %82, %90 : vector<8x256xf32>
    %99 = arith.addf %97, %98 : vector<8x256xf32>
    %100 = math.tanh %99 : vector<8x256xf32>
    %101 = arith.mulf %96, %100 : vector<8x256xf32>
    %cst_28 = arith.constant dense<0.000000e+00> : vector<8x1024xf32>
    %102 = tpu.matmul %101, %9, %cst_28 {dimension_numbers = #tpu.dot_dimension_numbers<[1], [0], [0], [1], [0, 0, 1, 1], [], []>} : vector<8x256xf32>, vector<256x1024xf32>, vector<8x1024xf32> -> vector<8x1024xf32>
    %103 = arith.addf %102, %72 : vector<8x1024xf32>
    %104 = vector.extract_strided_slice %103 {offsets = [0, 0], sizes = [8, 256], strides = [1, 1]} : vector<8x1024xf32> to vector<8x256xf32>
    %105 = arith.negf %104 : vector<8x256xf32>
    %106 = math.exp %105 : vector<8x256xf32>
    %cst_29 = arith.constant 1.000000e+00 : f32
    %107 = vector.broadcast %cst_29 : f32 to vector<8x256xf32>
    %108 = arith.addf %107, %106 : vector<8x256xf32>
    %109 = arith.divf %107, %108 : vector<8x256xf32>
    %110 = vector.extract_strided_slice %103 {offsets = [0, 256], sizes = [8, 256], strides = [1, 1]} : vector<8x1024xf32> to vector<8x256xf32>
    %111 = arith.negf %110 : vector<8x256xf32>
    %112 = math.exp %111 : vector<8x256xf32>
    %cst_30 = arith.constant 1.000000e+00 : f32
    %113 = vector.broadcast %cst_30 : f32 to vector<8x256xf32>
    %114 = arith.addf %113, %112 : vector<8x256xf32>
    %115 = arith.divf %113, %114 : vector<8x256xf32>
    %116 = vector.extract_strided_slice %103 {offsets = [0, 512], sizes = [8, 256], strides = [1, 1]} : vector<8x1024xf32> to vector<8x256xf32>
    %117 = math.tanh %116 : vector<8x256xf32>
    %118 = vector.extract_strided_slice %103 {offsets = [0, 768], sizes = [8, 256], strides = [1, 1]} : vector<8x1024xf32> to vector<8x256xf32>
    %119 = arith.negf %118 : vector<8x256xf32>
    %120 = math.exp %119 : vector<8x256xf32>
    %cst_31 = arith.constant 1.000000e+00 : f32
    %121 = vector.broadcast %cst_31 : f32 to vector<8x256xf32>
    %122 = arith.addf %121, %120 : vector<8x256xf32>
    %123 = arith.divf %121, %122 : vector<8x256xf32>
    %124 = arith.mulf %115, %68 : vector<8x256xf32>
    %125 = arith.mulf %109, %117 : vector<8x256xf32>
    %126 = arith.addf %124, %125 : vector<8x256xf32>
    %127 = math.tanh %126 : vector<8x256xf32>
    %128 = arith.mulf %123, %127 : vector<8x256xf32>
    %cst_32 = arith.constant dense<0.000000e+00> : vector<8x1024xf32>
    %129 = tpu.matmul %128, %10, %cst_32 {dimension_numbers = #tpu.dot_dimension_numbers<[1], [0], [0], [1], [0, 0, 1, 1], [], []>} : vector<8x256xf32>, vector<256x1024xf32>, vector<8x1024xf32> -> vector<8x1024xf32>
    %130 = arith.addf %129, %13 : vector<8x1024xf32>
    %131 = vector.extract_strided_slice %7 {offsets = [2, 0, 0], sizes = [1, 8, 1024], strides = [1, 1, 1]} : vector<8x8x1024xf32> to vector<1x8x1024xf32>
    %132 = vector.shape_cast %131 : vector<1x8x1024xf32> to vector<8x1024xf32>
    %cst_33 = arith.constant dense<0.000000e+00> : vector<8x1024xf32>
    %133 = tpu.matmul %101, %8, %cst_33 {dimension_numbers = #tpu.dot_dimension_numbers<[1], [0], [0], [1], [0, 0, 1, 1], [], []>} : vector<8x256xf32>, vector<256x1024xf32>, vector<8x1024xf32> -> vector<8x1024xf32>
    %134 = arith.addf %132, %133 : vector<8x1024xf32>
    %135 = vector.extract_strided_slice %134 {offsets = [0, 0], sizes = [8, 256], strides = [1, 1]} : vector<8x1024xf32> to vector<8x256xf32>
    %136 = arith.negf %135 : vector<8x256xf32>
    %137 = math.exp %136 : vector<8x256xf32>
    %cst_34 = arith.constant 1.000000e+00 : f32
    %138 = vector.broadcast %cst_34 : f32 to vector<8x256xf32>
    %139 = arith.addf %138, %137 : vector<8x256xf32>
    %140 = arith.divf %138, %139 : vector<8x256xf32>
    %141 = vector.extract_strided_slice %134 {offsets = [0, 256], sizes = [8, 256], strides = [1, 1]} : vector<8x1024xf32> to vector<8x256xf32>
    %142 = arith.negf %141 : vector<8x256xf32>
    %143 = math.exp %142 : vector<8x256xf32>
    %cst_35 = arith.constant 1.000000e+00 : f32
    %144 = vector.broadcast %cst_35 : f32 to vector<8x256xf32>
    %145 = arith.addf %144, %143 : vector<8x256xf32>
    %146 = arith.divf %144, %145 : vector<8x256xf32>
    %147 = vector.extract_strided_slice %134 {offsets = [0, 512], sizes = [8, 256], strides = [1, 1]} : vector<8x1024xf32> to vector<8x256xf32>
    %148 = math.tanh %147 : vector<8x256xf32>
    %149 = vector.extract_strided_slice %134 {offsets = [0, 768], sizes = [8, 256], strides = [1, 1]} : vector<8x1024xf32> to vector<8x256xf32>
    %150 = arith.negf %149 : vector<8x256xf32>
    %151 = math.exp %150 : vector<8x256xf32>
    %cst_36 = arith.constant 1.000000e+00 : f32
    %152 = vector.broadcast %cst_36 : f32 to vector<8x256xf32>
    %153 = arith.addf %152, %151 : vector<8x256xf32>
    %154 = arith.divf %152, %153 : vector<8x256xf32>
    %155 = arith.mulf %146, %99 : vector<8x256xf32>
    %156 = arith.mulf %140, %148 : vector<8x256xf32>
    %157 = arith.addf %155, %156 : vector<8x256xf32>
    %158 = math.tanh %157 : vector<8x256xf32>
    %159 = arith.mulf %154, %158 : vector<8x256xf32>
    %cst_37 = arith.constant dense<0.000000e+00> : vector<8x1024xf32>
    %160 = tpu.matmul %159, %9, %cst_37 {dimension_numbers = #tpu.dot_dimension_numbers<[1], [0], [0], [1], [0, 0, 1, 1], [], []>} : vector<8x256xf32>, vector<256x1024xf32>, vector<8x1024xf32> -> vector<8x1024xf32>
    %161 = arith.addf %160, %130 : vector<8x1024xf32>
    %162 = vector.extract_strided_slice %161 {offsets = [0, 0], sizes = [8, 256], strides = [1, 1]} : vector<8x1024xf32> to vector<8x256xf32>
    %163 = arith.negf %162 : vector<8x256xf32>
    %164 = math.exp %163 : vector<8x256xf32>
    %cst_38 = arith.constant 1.000000e+00 : f32
    %165 = vector.broadcast %cst_38 : f32 to vector<8x256xf32>
    %166 = arith.addf %165, %164 : vector<8x256xf32>
    %167 = arith.divf %165, %166 : vector<8x256xf32>
    %168 = vector.extract_strided_slice %161 {offsets = [0, 256], sizes = [8, 256], strides = [1, 1]} : vector<8x1024xf32> to vector<8x256xf32>
    %169 = arith.negf %168 : vector<8x256xf32>
    %170 = math.exp %169 : vector<8x256xf32>
    %cst_39 = arith.constant 1.000000e+00 : f32
    %171 = vector.broadcast %cst_39 : f32 to vector<8x256xf32>
    %172 = arith.addf %171, %170 : vector<8x256xf32>
    %173 = arith.divf %171, %172 : vector<8x256xf32>
    %174 = vector.extract_strided_slice %161 {offsets = [0, 512], sizes = [8, 256], strides = [1, 1]} : vector<8x1024xf32> to vector<8x256xf32>
    %175 = math.tanh %174 : vector<8x256xf32>
    %176 = vector.extract_strided_slice %161 {offsets = [0, 768], sizes = [8, 256], strides = [1, 1]} : vector<8x1024xf32> to vector<8x256xf32>
    %177 = arith.negf %176 : vector<8x256xf32>
    %178 = math.exp %177 : vector<8x256xf32>
    %cst_40 = arith.constant 1.000000e+00 : f32
    %179 = vector.broadcast %cst_40 : f32 to vector<8x256xf32>
    %180 = arith.addf %179, %178 : vector<8x256xf32>
    %181 = arith.divf %179, %180 : vector<8x256xf32>
    %182 = arith.mulf %173, %126 : vector<8x256xf32>
    %183 = arith.mulf %167, %175 : vector<8x256xf32>
    %184 = arith.addf %182, %183 : vector<8x256xf32>
    %185 = math.tanh %184 : vector<8x256xf32>
    %186 = arith.mulf %181, %185 : vector<8x256xf32>
    %cst_41 = arith.constant dense<0.000000e+00> : vector<8x1024xf32>
    %187 = tpu.matmul %186, %10, %cst_41 {dimension_numbers = #tpu.dot_dimension_numbers<[1], [0], [0], [1], [0, 0, 1, 1], [], []>} : vector<8x256xf32>, vector<256x1024xf32>, vector<8x1024xf32> -> vector<8x1024xf32>
    %188 = arith.addf %187, %13 : vector<8x1024xf32>
    %189 = vector.extract_strided_slice %7 {offsets = [3, 0, 0], sizes = [1, 8, 1024], strides = [1, 1, 1]} : vector<8x8x1024xf32> to vector<1x8x1024xf32>
    %190 = vector.shape_cast %189 : vector<1x8x1024xf32> to vector<8x1024xf32>
    %cst_42 = arith.constant dense<0.000000e+00> : vector<8x1024xf32>
    %191 = tpu.matmul %159, %8, %cst_42 {dimension_numbers = #tpu.dot_dimension_numbers<[1], [0], [0], [1], [0, 0, 1, 1], [], []>} : vector<8x256xf32>, vector<256x1024xf32>, vector<8x1024xf32> -> vector<8x1024xf32>
    %192 = arith.addf %190, %191 : vector<8x1024xf32>
    %193 = vector.extract_strided_slice %192 {offsets = [0, 0], sizes = [8, 256], strides = [1, 1]} : vector<8x1024xf32> to vector<8x256xf32>
    %194 = arith.negf %193 : vector<8x256xf32>
    %195 = math.exp %194 : vector<8x256xf32>
    %cst_43 = arith.constant 1.000000e+00 : f32
    %196 = vector.broadcast %cst_43 : f32 to vector<8x256xf32>
    %197 = arith.addf %196, %195 : vector<8x256xf32>
    %198 = arith.divf %196, %197 : vector<8x256xf32>
    %199 = vector.extract_strided_slice %192 {offsets = [0, 256], sizes = [8, 256], strides = [1, 1]} : vector<8x1024xf32> to vector<8x256xf32>
    %200 = arith.negf %199 : vector<8x256xf32>
    %201 = math.exp %200 : vector<8x256xf32>
    %cst_44 = arith.constant 1.000000e+00 : f32
    %202 = vector.broadcast %cst_44 : f32 to vector<8x256xf32>
    %203 = arith.addf %202, %201 : vector<8x256xf32>
    %204 = arith.divf %202, %203 : vector<8x256xf32>
    %205 = vector.extract_strided_slice %192 {offsets = [0, 512], sizes = [8, 256], strides = [1, 1]} : vector<8x1024xf32> to vector<8x256xf32>
    %206 = math.tanh %205 : vector<8x256xf32>
    %207 = vector.extract_strided_slice %192 {offsets = [0, 768], sizes = [8, 256], strides = [1, 1]} : vector<8x1024xf32> to vector<8x256xf32>
    %208 = arith.negf %207 : vector<8x256xf32>
    %209 = math.exp %208 : vector<8x256xf32>
    %cst_45 = arith.constant 1.000000e+00 : f32
    %210 = vector.broadcast %cst_45 : f32 to vector<8x256xf32>
    %211 = arith.addf %210, %209 : vector<8x256xf32>
    %212 = arith.divf %210, %211 : vector<8x256xf32>
    %213 = arith.mulf %204, %157 : vector<8x256xf32>
    %214 = arith.mulf %198, %206 : vector<8x256xf32>
    %215 = arith.addf %213, %214 : vector<8x256xf32>
    %216 = math.tanh %215 : vector<8x256xf32>
    %217 = arith.mulf %212, %216 : vector<8x256xf32>
    %cst_46 = arith.constant dense<0.000000e+00> : vector<8x1024xf32>
    %218 = tpu.matmul %217, %9, %cst_46 {dimension_numbers = #tpu.dot_dimension_numbers<[1], [0], [0], [1], [0, 0, 1, 1], [], []>} : vector<8x256xf32>, vector<256x1024xf32>, vector<8x1024xf32> -> vector<8x1024xf32>
    %219 = arith.addf %218, %188 : vector<8x1024xf32>
    %220 = vector.extract_strided_slice %219 {offsets = [0, 0], sizes = [8, 256], strides = [1, 1]} : vector<8x1024xf32> to vector<8x256xf32>
    %221 = arith.negf %220 : vector<8x256xf32>
    %222 = math.exp %221 : vector<8x256xf32>
    %cst_47 = arith.constant 1.000000e+00 : f32
    %223 = vector.broadcast %cst_47 : f32 to vector<8x256xf32>
    %224 = arith.addf %223, %222 : vector<8x256xf32>
    %225 = arith.divf %223, %224 : vector<8x256xf32>
    %226 = vector.extract_strided_slice %219 {offsets = [0, 256], sizes = [8, 256], strides = [1, 1]} : vector<8x1024xf32> to vector<8x256xf32>
    %227 = arith.negf %226 : vector<8x256xf32>
    %228 = math.exp %227 : vector<8x256xf32>
    %cst_48 = arith.constant 1.000000e+00 : f32
    %229 = vector.broadcast %cst_48 : f32 to vector<8x256xf32>
    %230 = arith.addf %229, %228 : vector<8x256xf32>
    %231 = arith.divf %229, %230 : vector<8x256xf32>
    %232 = vector.extract_strided_slice %219 {offsets = [0, 512], sizes = [8, 256], strides = [1, 1]} : vector<8x1024xf32> to vector<8x256xf32>
    %233 = math.tanh %232 : vector<8x256xf32>
    %234 = vector.extract_strided_slice %219 {offsets = [0, 768], sizes = [8, 256], strides = [1, 1]} : vector<8x1024xf32> to vector<8x256xf32>
    %235 = arith.negf %234 : vector<8x256xf32>
    %236 = math.exp %235 : vector<8x256xf32>
    %cst_49 = arith.constant 1.000000e+00 : f32
    %237 = vector.broadcast %cst_49 : f32 to vector<8x256xf32>
    %238 = arith.addf %237, %236 : vector<8x256xf32>
    %239 = arith.divf %237, %238 : vector<8x256xf32>
    %240 = arith.mulf %231, %184 : vector<8x256xf32>
    %241 = arith.mulf %225, %233 : vector<8x256xf32>
    %242 = arith.addf %240, %241 : vector<8x256xf32>
    %243 = math.tanh %242 : vector<8x256xf32>
    %244 = arith.mulf %239, %243 : vector<8x256xf32>
    %cst_50 = arith.constant dense<0.000000e+00> : vector<8x1024xf32>
    %245 = tpu.matmul %244, %10, %cst_50 {dimension_numbers = #tpu.dot_dimension_numbers<[1], [0], [0], [1], [0, 0, 1, 1], [], []>} : vector<8x256xf32>, vector<256x1024xf32>, vector<8x1024xf32> -> vector<8x1024xf32>
    %246 = arith.addf %245, %13 : vector<8x1024xf32>
    %247 = vector.extract_strided_slice %7 {offsets = [4, 0, 0], sizes = [1, 8, 1024], strides = [1, 1, 1]} : vector<8x8x1024xf32> to vector<1x8x1024xf32>
    %248 = vector.shape_cast %247 : vector<1x8x1024xf32> to vector<8x1024xf32>
    %cst_51 = arith.constant dense<0.000000e+00> : vector<8x1024xf32>
    %249 = tpu.matmul %217, %8, %cst_51 {dimension_numbers = #tpu.dot_dimension_numbers<[1], [0], [0], [1], [0, 0, 1, 1], [], []>} : vector<8x256xf32>, vector<256x1024xf32>, vector<8x1024xf32> -> vector<8x1024xf32>
    %250 = arith.addf %248, %249 : vector<8x1024xf32>
    %251 = vector.extract_strided_slice %250 {offsets = [0, 0], sizes = [8, 256], strides = [1, 1]} : vector<8x1024xf32> to vector<8x256xf32>
    %252 = arith.negf %251 : vector<8x256xf32>
    %253 = math.exp %252 : vector<8x256xf32>
    %cst_52 = arith.constant 1.000000e+00 : f32
    %254 = vector.broadcast %cst_52 : f32 to vector<8x256xf32>
    %255 = arith.addf %254, %253 : vector<8x256xf32>
    %256 = arith.divf %254, %255 : vector<8x256xf32>
    %257 = vector.extract_strided_slice %250 {offsets = [0, 256], sizes = [8, 256], strides = [1, 1]} : vector<8x1024xf32> to vector<8x256xf32>
    %258 = arith.negf %257 : vector<8x256xf32>
    %259 = math.exp %258 : vector<8x256xf32>
    %cst_53 = arith.constant 1.000000e+00 : f32
    %260 = vector.broadcast %cst_53 : f32 to vector<8x256xf32>
    %261 = arith.addf %260, %259 : vector<8x256xf32>
    %262 = arith.divf %260, %261 : vector<8x256xf32>
    %263 = vector.extract_strided_slice %250 {offsets = [0, 512], sizes = [8, 256], strides = [1, 1]} : vector<8x1024xf32> to vector<8x256xf32>
    %264 = math.tanh %263 : vector<8x256xf32>
    %265 = vector.extract_strided_slice %250 {offsets = [0, 768], sizes = [8, 256], strides = [1, 1]} : vector<8x1024xf32> to vector<8x256xf32>
    %266 = arith.negf %265 : vector<8x256xf32>
    %267 = math.exp %266 : vector<8x256xf32>
    %cst_54 = arith.constant 1.000000e+00 : f32
    %268 = vector.broadcast %cst_54 : f32 to vector<8x256xf32>
    %269 = arith.addf %268, %267 : vector<8x256xf32>
    %270 = arith.divf %268, %269 : vector<8x256xf32>
    %271 = arith.mulf %262, %215 : vector<8x256xf32>
    %272 = arith.mulf %256, %264 : vector<8x256xf32>
    %273 = arith.addf %271, %272 : vector<8x256xf32>
    %274 = math.tanh %273 : vector<8x256xf32>
    %275 = arith.mulf %270, %274 : vector<8x256xf32>
    %cst_55 = arith.constant dense<0.000000e+00> : vector<8x1024xf32>
    %276 = tpu.matmul %275, %9, %cst_55 {dimension_numbers = #tpu.dot_dimension_numbers<[1], [0], [0], [1], [0, 0, 1, 1], [], []>} : vector<8x256xf32>, vector<256x1024xf32>, vector<8x1024xf32> -> vector<8x1024xf32>
    %277 = arith.addf %276, %246 : vector<8x1024xf32>
    %278 = vector.extract_strided_slice %277 {offsets = [0, 0], sizes = [8, 256], strides = [1, 1]} : vector<8x1024xf32> to vector<8x256xf32>
    %279 = arith.negf %278 : vector<8x256xf32>
    %280 = math.exp %279 : vector<8x256xf32>
    %cst_56 = arith.constant 1.000000e+00 : f32
    %281 = vector.broadcast %cst_56 : f32 to vector<8x256xf32>
    %282 = arith.addf %281, %280 : vector<8x256xf32>
    %283 = arith.divf %281, %282 : vector<8x256xf32>
    %284 = vector.extract_strided_slice %277 {offsets = [0, 256], sizes = [8, 256], strides = [1, 1]} : vector<8x1024xf32> to vector<8x256xf32>
    %285 = arith.negf %284 : vector<8x256xf32>
    %286 = math.exp %285 : vector<8x256xf32>
    %cst_57 = arith.constant 1.000000e+00 : f32
    %287 = vector.broadcast %cst_57 : f32 to vector<8x256xf32>
    %288 = arith.addf %287, %286 : vector<8x256xf32>
    %289 = arith.divf %287, %288 : vector<8x256xf32>
    %290 = vector.extract_strided_slice %277 {offsets = [0, 512], sizes = [8, 256], strides = [1, 1]} : vector<8x1024xf32> to vector<8x256xf32>
    %291 = math.tanh %290 : vector<8x256xf32>
    %292 = vector.extract_strided_slice %277 {offsets = [0, 768], sizes = [8, 256], strides = [1, 1]} : vector<8x1024xf32> to vector<8x256xf32>
    %293 = arith.negf %292 : vector<8x256xf32>
    %294 = math.exp %293 : vector<8x256xf32>
    %cst_58 = arith.constant 1.000000e+00 : f32
    %295 = vector.broadcast %cst_58 : f32 to vector<8x256xf32>
    %296 = arith.addf %295, %294 : vector<8x256xf32>
    %297 = arith.divf %295, %296 : vector<8x256xf32>
    %298 = arith.mulf %289, %242 : vector<8x256xf32>
    %299 = arith.mulf %283, %291 : vector<8x256xf32>
    %300 = arith.addf %298, %299 : vector<8x256xf32>
    %301 = math.tanh %300 : vector<8x256xf32>
    %302 = arith.mulf %297, %301 : vector<8x256xf32>
    %cst_59 = arith.constant dense<0.000000e+00> : vector<8x1024xf32>
    %303 = tpu.matmul %302, %10, %cst_59 {dimension_numbers = #tpu.dot_dimension_numbers<[1], [0], [0], [1], [0, 0, 1, 1], [], []>} : vector<8x256xf32>, vector<256x1024xf32>, vector<8x1024xf32> -> vector<8x1024xf32>
    %304 = arith.addf %303, %13 : vector<8x1024xf32>
    %305 = vector.extract_strided_slice %7 {offsets = [5, 0, 0], sizes = [1, 8, 1024], strides = [1, 1, 1]} : vector<8x8x1024xf32> to vector<1x8x1024xf32>
    %306 = vector.shape_cast %305 : vector<1x8x1024xf32> to vector<8x1024xf32>
    %cst_60 = arith.constant dense<0.000000e+00> : vector<8x1024xf32>
    %307 = tpu.matmul %275, %8, %cst_60 {dimension_numbers = #tpu.dot_dimension_numbers<[1], [0], [0], [1], [0, 0, 1, 1], [], []>} : vector<8x256xf32>, vector<256x1024xf32>, vector<8x1024xf32> -> vector<8x1024xf32>
    %308 = arith.addf %306, %307 : vector<8x1024xf32>
    %309 = vector.extract_strided_slice %308 {offsets = [0, 0], sizes = [8, 256], strides = [1, 1]} : vector<8x1024xf32> to vector<8x256xf32>
    %310 = arith.negf %309 : vector<8x256xf32>
    %311 = math.exp %310 : vector<8x256xf32>
    %cst_61 = arith.constant 1.000000e+00 : f32
    %312 = vector.broadcast %cst_61 : f32 to vector<8x256xf32>
    %313 = arith.addf %312, %311 : vector<8x256xf32>
    %314 = arith.divf %312, %313 : vector<8x256xf32>
    %315 = vector.extract_strided_slice %308 {offsets = [0, 256], sizes = [8, 256], strides = [1, 1]} : vector<8x1024xf32> to vector<8x256xf32>
    %316 = arith.negf %315 : vector<8x256xf32>
    %317 = math.exp %316 : vector<8x256xf32>
    %cst_62 = arith.constant 1.000000e+00 : f32
    %318 = vector.broadcast %cst_62 : f32 to vector<8x256xf32>
    %319 = arith.addf %318, %317 : vector<8x256xf32>
    %320 = arith.divf %318, %319 : vector<8x256xf32>
    %321 = vector.extract_strided_slice %308 {offsets = [0, 512], sizes = [8, 256], strides = [1, 1]} : vector<8x1024xf32> to vector<8x256xf32>
    %322 = math.tanh %321 : vector<8x256xf32>
    %323 = vector.extract_strided_slice %308 {offsets = [0, 768], sizes = [8, 256], strides = [1, 1]} : vector<8x1024xf32> to vector<8x256xf32>
    %324 = arith.negf %323 : vector<8x256xf32>
    %325 = math.exp %324 : vector<8x256xf32>
    %cst_63 = arith.constant 1.000000e+00 : f32
    %326 = vector.broadcast %cst_63 : f32 to vector<8x256xf32>
    %327 = arith.addf %326, %325 : vector<8x256xf32>
    %328 = arith.divf %326, %327 : vector<8x256xf32>
    %329 = arith.mulf %320, %273 : vector<8x256xf32>
    %330 = arith.mulf %314, %322 : vector<8x256xf32>
    %331 = arith.addf %329, %330 : vector<8x256xf32>
    %332 = math.tanh %331 : vector<8x256xf32>
    %333 = arith.mulf %328, %332 : vector<8x256xf32>
    %cst_64 = arith.constant dense<0.000000e+00> : vector<8x1024xf32>
    %334 = tpu.matmul %333, %9, %cst_64 {dimension_numbers = #tpu.dot_dimension_numbers<[1], [0], [0], [1], [0, 0, 1, 1], [], []>} : vector<8x256xf32>, vector<256x1024xf32>, vector<8x1024xf32> -> vector<8x1024xf32>
    %335 = arith.addf %334, %304 : vector<8x1024xf32>
    %336 = vector.extract_strided_slice %335 {offsets = [0, 0], sizes = [8, 256], strides = [1, 1]} : vector<8x1024xf32> to vector<8x256xf32>
    %337 = arith.negf %336 : vector<8x256xf32>
    %338 = math.exp %337 : vector<8x256xf32>
    %cst_65 = arith.constant 1.000000e+00 : f32
    %339 = vector.broadcast %cst_65 : f32 to vector<8x256xf32>
    %340 = arith.addf %339, %338 : vector<8x256xf32>
    %341 = arith.divf %339, %340 : vector<8x256xf32>
    %342 = vector.extract_strided_slice %335 {offsets = [0, 256], sizes = [8, 256], strides = [1, 1]} : vector<8x1024xf32> to vector<8x256xf32>
    %343 = arith.negf %342 : vector<8x256xf32>
    %344 = math.exp %343 : vector<8x256xf32>
    %cst_66 = arith.constant 1.000000e+00 : f32
    %345 = vector.broadcast %cst_66 : f32 to vector<8x256xf32>
    %346 = arith.addf %345, %344 : vector<8x256xf32>
    %347 = arith.divf %345, %346 : vector<8x256xf32>
    %348 = vector.extract_strided_slice %335 {offsets = [0, 512], sizes = [8, 256], strides = [1, 1]} : vector<8x1024xf32> to vector<8x256xf32>
    %349 = math.tanh %348 : vector<8x256xf32>
    %350 = vector.extract_strided_slice %335 {offsets = [0, 768], sizes = [8, 256], strides = [1, 1]} : vector<8x1024xf32> to vector<8x256xf32>
    %351 = arith.negf %350 : vector<8x256xf32>
    %352 = math.exp %351 : vector<8x256xf32>
    %cst_67 = arith.constant 1.000000e+00 : f32
    %353 = vector.broadcast %cst_67 : f32 to vector<8x256xf32>
    %354 = arith.addf %353, %352 : vector<8x256xf32>
    %355 = arith.divf %353, %354 : vector<8x256xf32>
    %356 = arith.mulf %347, %300 : vector<8x256xf32>
    %357 = arith.mulf %341, %349 : vector<8x256xf32>
    %358 = arith.addf %356, %357 : vector<8x256xf32>
    %359 = math.tanh %358 : vector<8x256xf32>
    %360 = arith.mulf %355, %359 : vector<8x256xf32>
    %cst_68 = arith.constant dense<0.000000e+00> : vector<8x1024xf32>
    %361 = tpu.matmul %360, %10, %cst_68 {dimension_numbers = #tpu.dot_dimension_numbers<[1], [0], [0], [1], [0, 0, 1, 1], [], []>} : vector<8x256xf32>, vector<256x1024xf32>, vector<8x1024xf32> -> vector<8x1024xf32>
    %362 = arith.addf %361, %13 : vector<8x1024xf32>
    %363 = vector.extract_strided_slice %7 {offsets = [6, 0, 0], sizes = [1, 8, 1024], strides = [1, 1, 1]} : vector<8x8x1024xf32> to vector<1x8x1024xf32>
    %364 = vector.shape_cast %363 : vector<1x8x1024xf32> to vector<8x1024xf32>
    %cst_69 = arith.constant dense<0.000000e+00> : vector<8x1024xf32>
    %365 = tpu.matmul %333, %8, %cst_69 {dimension_numbers = #tpu.dot_dimension_numbers<[1], [0], [0], [1], [0, 0, 1, 1], [], []>} : vector<8x256xf32>, vector<256x1024xf32>, vector<8x1024xf32> -> vector<8x1024xf32>
    %366 = arith.addf %364, %365 : vector<8x1024xf32>
    %367 = vector.extract_strided_slice %366 {offsets = [0, 0], sizes = [8, 256], strides = [1, 1]} : vector<8x1024xf32> to vector<8x256xf32>
    %368 = arith.negf %367 : vector<8x256xf32>
    %369 = math.exp %368 : vector<8x256xf32>
    %cst_70 = arith.constant 1.000000e+00 : f32
    %370 = vector.broadcast %cst_70 : f32 to vector<8x256xf32>
    %371 = arith.addf %370, %369 : vector<8x256xf32>
    %372 = arith.divf %370, %371 : vector<8x256xf32>
    %373 = vector.extract_strided_slice %366 {offsets = [0, 256], sizes = [8, 256], strides = [1, 1]} : vector<8x1024xf32> to vector<8x256xf32>
    %374 = arith.negf %373 : vector<8x256xf32>
    %375 = math.exp %374 : vector<8x256xf32>
    %cst_71 = arith.constant 1.000000e+00 : f32
    %376 = vector.broadcast %cst_71 : f32 to vector<8x256xf32>
    %377 = arith.addf %376, %375 : vector<8x256xf32>
    %378 = arith.divf %376, %377 : vector<8x256xf32>
    %379 = vector.extract_strided_slice %366 {offsets = [0, 512], sizes = [8, 256], strides = [1, 1]} : vector<8x1024xf32> to vector<8x256xf32>
    %380 = math.tanh %379 : vector<8x256xf32>
    %381 = vector.extract_strided_slice %366 {offsets = [0, 768], sizes = [8, 256], strides = [1, 1]} : vector<8x1024xf32> to vector<8x256xf32>
    %382 = arith.negf %381 : vector<8x256xf32>
    %383 = math.exp %382 : vector<8x256xf32>
    %cst_72 = arith.constant 1.000000e+00 : f32
    %384 = vector.broadcast %cst_72 : f32 to vector<8x256xf32>
    %385 = arith.addf %384, %383 : vector<8x256xf32>
    %386 = arith.divf %384, %385 : vector<8x256xf32>
    %387 = arith.mulf %378, %331 : vector<8x256xf32>
    %388 = arith.mulf %372, %380 : vector<8x256xf32>
    %389 = arith.addf %387, %388 : vector<8x256xf32>
    %390 = math.tanh %389 : vector<8x256xf32>
    %391 = arith.mulf %386, %390 : vector<8x256xf32>
    %cst_73 = arith.constant dense<0.000000e+00> : vector<8x1024xf32>
    %392 = tpu.matmul %391, %9, %cst_73 {dimension_numbers = #tpu.dot_dimension_numbers<[1], [0], [0], [1], [0, 0, 1, 1], [], []>} : vector<8x256xf32>, vector<256x1024xf32>, vector<8x1024xf32> -> vector<8x1024xf32>
    %393 = arith.addf %392, %362 : vector<8x1024xf32>
    %394 = vector.extract_strided_slice %393 {offsets = [0, 0], sizes = [8, 256], strides = [1, 1]} : vector<8x1024xf32> to vector<8x256xf32>
    %395 = arith.negf %394 : vector<8x256xf32>
    %396 = math.exp %395 : vector<8x256xf32>
    %cst_74 = arith.constant 1.000000e+00 : f32
    %397 = vector.broadcast %cst_74 : f32 to vector<8x256xf32>
    %398 = arith.addf %397, %396 : vector<8x256xf32>
    %399 = arith.divf %397, %398 : vector<8x256xf32>
    %400 = vector.extract_strided_slice %393 {offsets = [0, 256], sizes = [8, 256], strides = [1, 1]} : vector<8x1024xf32> to vector<8x256xf32>
    %401 = arith.negf %400 : vector<8x256xf32>
    %402 = math.exp %401 : vector<8x256xf32>
    %cst_75 = arith.constant 1.000000e+00 : f32
    %403 = vector.broadcast %cst_75 : f32 to vector<8x256xf32>
    %404 = arith.addf %403, %402 : vector<8x256xf32>
    %405 = arith.divf %403, %404 : vector<8x256xf32>
    %406 = vector.extract_strided_slice %393 {offsets = [0, 512], sizes = [8, 256], strides = [1, 1]} : vector<8x1024xf32> to vector<8x256xf32>
    %407 = math.tanh %406 : vector<8x256xf32>
    %408 = vector.extract_strided_slice %393 {offsets = [0, 768], sizes = [8, 256], strides = [1, 1]} : vector<8x1024xf32> to vector<8x256xf32>
    %409 = arith.negf %408 : vector<8x256xf32>
    %410 = math.exp %409 : vector<8x256xf32>
    %cst_76 = arith.constant 1.000000e+00 : f32
    %411 = vector.broadcast %cst_76 : f32 to vector<8x256xf32>
    %412 = arith.addf %411, %410 : vector<8x256xf32>
    %413 = arith.divf %411, %412 : vector<8x256xf32>
    %414 = arith.mulf %405, %358 : vector<8x256xf32>
    %415 = arith.mulf %399, %407 : vector<8x256xf32>
    %416 = arith.addf %414, %415 : vector<8x256xf32>
    %417 = math.tanh %416 : vector<8x256xf32>
    %418 = arith.mulf %413, %417 : vector<8x256xf32>
    %cst_77 = arith.constant dense<0.000000e+00> : vector<8x1024xf32>
    %419 = tpu.matmul %418, %10, %cst_77 {dimension_numbers = #tpu.dot_dimension_numbers<[1], [0], [0], [1], [0, 0, 1, 1], [], []>} : vector<8x256xf32>, vector<256x1024xf32>, vector<8x1024xf32> -> vector<8x1024xf32>
    %420 = arith.addf %419, %13 : vector<8x1024xf32>
    %421 = vector.extract_strided_slice %7 {offsets = [7, 0, 0], sizes = [1, 8, 1024], strides = [1, 1, 1]} : vector<8x8x1024xf32> to vector<1x8x1024xf32>
    %422 = vector.shape_cast %421 : vector<1x8x1024xf32> to vector<8x1024xf32>
    %cst_78 = arith.constant dense<0.000000e+00> : vector<8x1024xf32>
    %423 = tpu.matmul %391, %8, %cst_78 {dimension_numbers = #tpu.dot_dimension_numbers<[1], [0], [0], [1], [0, 0, 1, 1], [], []>} : vector<8x256xf32>, vector<256x1024xf32>, vector<8x1024xf32> -> vector<8x1024xf32>
    %424 = arith.addf %422, %423 : vector<8x1024xf32>
    %425 = vector.extract_strided_slice %424 {offsets = [0, 0], sizes = [8, 256], strides = [1, 1]} : vector<8x1024xf32> to vector<8x256xf32>
    %426 = arith.negf %425 : vector<8x256xf32>
    %427 = math.exp %426 : vector<8x256xf32>
    %cst_79 = arith.constant 1.000000e+00 : f32
    %428 = vector.broadcast %cst_79 : f32 to vector<8x256xf32>
    %429 = arith.addf %428, %427 : vector<8x256xf32>
    %430 = arith.divf %428, %429 : vector<8x256xf32>
    %431 = vector.extract_strided_slice %424 {offsets = [0, 256], sizes = [8, 256], strides = [1, 1]} : vector<8x1024xf32> to vector<8x256xf32>
    %432 = arith.negf %431 : vector<8x256xf32>
    %433 = math.exp %432 : vector<8x256xf32>
    %cst_80 = arith.constant 1.000000e+00 : f32
    %434 = vector.broadcast %cst_80 : f32 to vector<8x256xf32>
    %435 = arith.addf %434, %433 : vector<8x256xf32>
    %436 = arith.divf %434, %435 : vector<8x256xf32>
    %437 = vector.extract_strided_slice %424 {offsets = [0, 512], sizes = [8, 256], strides = [1, 1]} : vector<8x1024xf32> to vector<8x256xf32>
    %438 = math.tanh %437 : vector<8x256xf32>
    %439 = vector.extract_strided_slice %424 {offsets = [0, 768], sizes = [8, 256], strides = [1, 1]} : vector<8x1024xf32> to vector<8x256xf32>
    %440 = arith.negf %439 : vector<8x256xf32>
    %441 = math.exp %440 : vector<8x256xf32>
    %cst_81 = arith.constant 1.000000e+00 : f32
    %442 = vector.broadcast %cst_81 : f32 to vector<8x256xf32>
    %443 = arith.addf %442, %441 : vector<8x256xf32>
    %444 = arith.divf %442, %443 : vector<8x256xf32>
    %445 = arith.mulf %436, %389 : vector<8x256xf32>
    %446 = arith.mulf %430, %438 : vector<8x256xf32>
    %447 = arith.addf %445, %446 : vector<8x256xf32>
    %448 = math.tanh %447 : vector<8x256xf32>
    %449 = arith.mulf %444, %448 : vector<8x256xf32>
    %cst_82 = arith.constant dense<0.000000e+00> : vector<8x1024xf32>
    %450 = tpu.matmul %449, %9, %cst_82 {dimension_numbers = #tpu.dot_dimension_numbers<[1], [0], [0], [1], [0, 0, 1, 1], [], []>} : vector<8x256xf32>, vector<256x1024xf32>, vector<8x1024xf32> -> vector<8x1024xf32>
    %451 = arith.addf %450, %420 : vector<8x1024xf32>
    %452 = vector.extract_strided_slice %451 {offsets = [0, 0], sizes = [8, 256], strides = [1, 1]} : vector<8x1024xf32> to vector<8x256xf32>
    %453 = arith.negf %452 : vector<8x256xf32>
    %454 = math.exp %453 : vector<8x256xf32>
    %cst_83 = arith.constant 1.000000e+00 : f32
    %455 = vector.broadcast %cst_83 : f32 to vector<8x256xf32>
    %456 = arith.addf %455, %454 : vector<8x256xf32>
    %457 = arith.divf %455, %456 : vector<8x256xf32>
    %458 = vector.extract_strided_slice %451 {offsets = [0, 256], sizes = [8, 256], strides = [1, 1]} : vector<8x1024xf32> to vector<8x256xf32>
    %459 = arith.negf %458 : vector<8x256xf32>
    %460 = math.exp %459 : vector<8x256xf32>
    %cst_84 = arith.constant 1.000000e+00 : f32
    %461 = vector.broadcast %cst_84 : f32 to vector<8x256xf32>
    %462 = arith.addf %461, %460 : vector<8x256xf32>
    %463 = arith.divf %461, %462 : vector<8x256xf32>
    %464 = vector.extract_strided_slice %451 {offsets = [0, 512], sizes = [8, 256], strides = [1, 1]} : vector<8x1024xf32> to vector<8x256xf32>
    %465 = math.tanh %464 : vector<8x256xf32>
    %466 = vector.extract_strided_slice %451 {offsets = [0, 768], sizes = [8, 256], strides = [1, 1]} : vector<8x1024xf32> to vector<8x256xf32>
    %467 = arith.negf %466 : vector<8x256xf32>
    %468 = math.exp %467 : vector<8x256xf32>
    %cst_85 = arith.constant 1.000000e+00 : f32
    %469 = vector.broadcast %cst_85 : f32 to vector<8x256xf32>
    %470 = arith.addf %469, %468 : vector<8x256xf32>
    %471 = arith.divf %469, %470 : vector<8x256xf32>
    %472 = arith.mulf %463, %416 : vector<8x256xf32>
    %473 = arith.mulf %457, %465 : vector<8x256xf32>
    %474 = arith.addf %472, %473 : vector<8x256xf32>
    %475 = math.tanh %474 : vector<8x256xf32>
    %476 = arith.mulf %471, %475 : vector<8x256xf32>
    %c0_86 = arith.constant 0 : index
    %c0_87 = arith.constant 0 : index
    %477 = vector.load %arg8[%c0_86, %c0_87] : memref<256x256xf32, #tpu.memory_space<vmem>>, vector<256x256xf32>
    %cst_88 = arith.constant dense<0.000000e+00> : vector<8x256xf32>
    %478 = tpu.matmul %476, %477, %cst_88 {dimension_numbers = #tpu.dot_dimension_numbers<[1], [0], [0], [1], [0, 0, 1, 1], [], []>} : vector<8x256xf32>, vector<256x256xf32>, vector<8x256xf32> -> vector<8x256xf32>
    %c0_89 = arith.constant 0 : index
    %c0_90 = arith.constant 0 : index
    %479 = vector.load %arg9[%c0_89, %c0_90] : memref<1x256xf32, #tpu.memory_space<vmem>>, vector<1x256xf32>
    %480 = vector.broadcast %479 : vector<1x256xf32> to vector<8x256xf32>
    %481 = arith.addf %478, %480 : vector<8x256xf32>
    %cst_91 = arith.constant 0.000000e+00 : f32
    %482 = vector.broadcast %cst_91 : f32 to vector<8x256xf32>
    %483 = arith.maximumf %481, %482 : vector<8x256xf32>
    %c0_92 = arith.constant 0 : index
    %c0_93 = arith.constant 0 : index
    %484 = vector.load %arg10[%c0_92, %c0_93] : memref<256x128xf32, #tpu.memory_space<vmem>>, vector<256x128xf32>
    %cst_94 = arith.constant dense<0.000000e+00> : vector<8x128xf32>
    %485 = tpu.matmul %483, %484, %cst_94 {dimension_numbers = #tpu.dot_dimension_numbers<[1], [0], [0], [1], [0, 0, 1, 1], [], []>} : vector<8x256xf32>, vector<256x128xf32>, vector<8x128xf32> -> vector<8x128xf32>
    %c0_95 = arith.constant 0 : index
    %c0_96 = arith.constant 0 : index
    %486 = vector.load %arg11[%c0_95, %c0_96] : memref<1x128xf32, #tpu.memory_space<vmem>>, vector<1x128xf32>
    %487 = vector.broadcast %486 : vector<1x128xf32> to vector<8x128xf32>
    %488 = arith.addf %485, %487 : vector<8x128xf32>
    %c0_97 = arith.constant 0 : index
    %c0_98 = arith.constant 0 : index
    %489 = vector.load %arg12[%c0_97, %c0_98] : memref<8x128xf32, #tpu.memory_space<vmem>>, vector<8x128xf32>
    tpu.vector_store %arg12[%c0_97, %c0_98], %488 {strides = array<i32>} : memref<8x128xf32, #tpu.memory_space<vmem>>, vector<8x128xf32>,
    return
  }
  func.func @transform_0(%arg0: i32) -> (i32, i32, i32) {
    %c0_i32 = arith.constant 0 : i32
    %c0_i32_0 = arith.constant 0 : i32
    %c0_i32_1 = arith.constant 0 : i32
    return %c0_i32, %arg0, %c0_i32_0 : i32, i32, i32
  }
  func.func @transform_1(%arg0: i32) -> (i32, i32) {
    %c0_i32 = arith.constant 0 : i32
    %c0_i32_0 = arith.constant 0 : i32
    %c0_i32_1 = arith.constant 0 : i32
    return %c0_i32, %c0_i32_0 : i32, i32
  }
  func.func @transform_2(%arg0: i32) -> (i32, i32) {
    %c0_i32 = arith.constant 0 : i32
    %c0_i32_0 = arith.constant 0 : i32
    %c0_i32_1 = arith.constant 0 : i32
    return %c0_i32, %c0_i32_0 : i32, i32
  }
  func.func @transform_3(%arg0: i32) -> (i32, i32) {
    %c0_i32 = arith.constant 0 : i32
    %c0_i32_0 = arith.constant 0 : i32
    %c0_i32_1 = arith.constant 0 : i32
    return %c0_i32, %c0_i32_0 : i32, i32
  }
  func.func @transform_4(%arg0: i32) -> (i32, i32) {
    %c0_i32 = arith.constant 0 : i32
    %c0_i32_0 = arith.constant 0 : i32
    %c0_i32_1 = arith.constant 0 : i32
    return %c0_i32, %c0_i32_0 : i32, i32
  }
  func.func @transform_5(%arg0: i32) -> (i32, i32) {
    %c0_i32 = arith.constant 0 : i32
    %c0_i32_0 = arith.constant 0 : i32
    %c0_i32_1 = arith.constant 0 : i32
    return %c0_i32, %c0_i32_0 : i32, i32
  }
  func.func @transform_6(%arg0: i32) -> (i32, i32) {
    %c0_i32 = arith.constant 0 : i32
    %c0_i32_0 = arith.constant 0 : i32
    %c0_i32_1 = arith.constant 0 : i32
    return %c0_i32, %c0_i32_0 : i32, i32
  }
  func.func @transform_7(%arg0: i32) -> (i32, i32) {
    %c0_i32 = arith.constant 0 : i32
    %c0_i32_0 = arith.constant 0 : i32
    %c0_i32_1 = arith.constant 0 : i32
    return %c0_i32, %c0_i32_0 : i32, i32
  }
  func.func @transform_8(%arg0: i32) -> (i32, i32) {
    %c0_i32 = arith.constant 0 : i32
    %c0_i32_0 = arith.constant 0 : i32
    %c0_i32_1 = arith.constant 0 : i32
    return %c0_i32, %c0_i32_0 : i32, i32
  }
  func.func @transform_9(%arg0: i32) -> (i32, i32) {
    %c0_i32 = arith.constant 0 : i32
    %c0_i32_0 = arith.constant 0 : i32
    %c0_i32_1 = arith.constant 0 : i32
    return %c0_i32, %c0_i32_0 : i32, i32
  }
  func.func @transform_10(%arg0: i32) -> (i32, i32) {
    %c0_i32 = arith.constant 0 : i32
    %c0_i32_0 = arith.constant 0 : i32
    %c0_i32_1 = arith.constant 0 : i32
    return %c0_i32, %c0_i32_0 : i32, i32
  }
  func.func @transform_11(%arg0: i32) -> (i32, i32) {
    %c0_i32 = arith.constant 0 : i32
    %c0_i32_0 = arith.constant 0 : i32
    return %arg0, %c0_i32 : i32, i32
  }
}

</mosaic_0001>

<llo_original>
// kernel: tpu_custom_call.1
$region0: #{tpu_custom_call.1}
  #allocation0 [shape = 'u32[]', space=smem, size = 0x4, offset = 0x4, fixed_abs, tag = 'smem constant byte address 0x4 - core index']
  #allocation1 [shape = 'u32[144,128]{1,0:T(1,128)}', space=vmem, size = 0x12000, scoped, tag = 'internal scratch']
  %s0 = inlined_call_operand.hbm [shape: f32[8,8,128], index: 0, kind: input, shape index: {}]
  %s1 = inlined_call_operand.hbm [shape: f32[128,1024], index: 1, kind: input, shape index: {}]
  %s2 = inlined_call_operand.hbm [shape: f32[256,1024], index: 2, kind: input, shape index: {}]
  %s3 = inlined_call_operand.vmem [shape: f32[1,1024], index: 3, kind: input, shape index: {}]
  %s4 = inlined_call_operand.hbm [shape: f32[256,1024], index: 4, kind: input, shape index: {}]
  %s5 = inlined_call_operand.hbm [shape: f32[256,1024], index: 5, kind: input, shape index: {}]
  %s6 = inlined_call_operand.vmem [shape: f32[1,1024], index: 6, kind: input, shape index: {}]
  %s7 = inlined_call_operand.hbm [shape: f32[256,256], index: 7, kind: input, shape index: {}]
  %s8 = inlined_call_operand.vmem [shape: f32[1,256], index: 8, kind: input, shape index: {}]
  %s9 = inlined_call_operand.hbm [shape: f32[256,128], index: 9, kind: input, shape index: {}]
  %s10 = inlined_call_operand.vmem [shape: f32[1,128], index: 10, kind: input, shape index: {}]
  %s11 = inlined_call_operand.hbm [shape: f32[8,128], index: 11, kind: output, shape index: {}]
  %s12 = sld [smem:[#allocation0]]
  $region82: #{tpu_custom_call.1} parent=0
    _
  %s14 = ssub.s32 1, %s12
  %s15 = scalar_select 0, %s14, %s12
  $region1: #{tpu_custom_call.1} parent=0
    #allocation2 [shape = 'u8[32768]{0}', space=vmem, size = 0x8000, scoped, tag = 'input window, operand 0, single buffered']
    #allocation3 [shape = 's32[1]{0}', space=sflag, size = 0x4, scoped, tag = 'scoped memory for tpu_custom_call.1']
    #allocation4 [shape = 's32[1]{0}', space=sflag, size = 0x4, scoped, tag = 'scoped memory for tpu_custom_call.1']
    #allocation5 [shape = 'u8[524288]{0}', space=vmem, size = 0x80000, scoped, tag = 'input window, operand 1, single buffered']
    #allocation6 [shape = 's32[1]{0}', space=sflag, size = 0x4, scoped, tag = 'scoped memory for tpu_custom_call.1']
    #allocation7 [shape = 'u8[1048576]{0}', space=vmem, size = 0x100000, scoped, tag = 'input window, operand 2, single buffered']
    #allocation8 [shape = 'u8[1048576]{0}', space=vmem, size = 0x100000, scoped, tag = 'input window, operand 4, single buffered']
    #allocation9 [shape = 's32[1]{0}', space=sflag, size = 0x4, scoped, tag = 'scoped memory for tpu_custom_call.1']
    #allocation10 [shape = 'u8[1048576]{0}', space=vmem, size = 0x100000, scoped, tag = 'input window, operand 5, single buffered']
    #allocation11 [shape = 'u8[262144]{0}', space=vmem, size = 0x40000, scoped, tag = 'input window, operand 7, single buffered']
    #allocation12 [shape = 's32[1]{0}', space=sflag, size = 0x4, scoped, tag = 'scoped memory for tpu_custom_call.1']
    #allocation13 [shape = 'u8[131072]{0}', space=vmem, size = 0x20000, scoped, tag = 'input window, operand 9, single buffered']
    #allocation14 [shape = 'u8[4096]{0}', space=vmem, size = 0x1000, scoped, tag = 'output window, operand 0, single buffered']
    %16 = vsyncpa [#allocation3], 0
    %17 = vsyncpa [#allocation6], 0
    %18 = vsyncpa [#allocation9], 0
    %19 = vsyncpa [#allocation12], 0
    %20 = vsyncpa [#allocation4], 0
    // Predicated region
    $region2: #{tpu_custom_call.1} parent=1 // pred_check
      _
    $region3: #{tpu_custom_call.1} parent=1 // pred_check_branch
      %22 = sbr.rel (0) target = $region5
    $region4: #{tpu_custom_call.1} parent=1 // pred_region
      %s24 = ssub.s32 1024, 1024
      %25 = vsyncadd [#allocation3], %s24
      %s26 = sshll.u32 [#allocation2], 4
      %s27 = int_to_ptr.vmem [resolvable:$true] %s26
      %32 = dma.hbm_to_vmem [thread:$0]  %s0, 1024, %s27, [#allocation3], 128, 128, 8
    $region5: #{tpu_custom_call.1} parent=1 // pred_fallthru
      _
    // Predicated region
    $region6: #{tpu_custom_call.1} parent=1 // pred_check
      _
    $region7: #{tpu_custom_call.1} parent=1 // pred_check_branch
      %34 = sbr.rel (0) target = $region9
    $region8: #{tpu_custom_call.1} parent=1 // pred_region
      %s36 = ssub.s32 16384, 16384
      %37 = vsyncadd [#allocation6], %s36
      %s38 = sshll.u32 [#allocation5], 4
      %s39 = int_to_ptr.vmem [resolvable:$true] %s38
      %44 = dma.hbm_to_vmem [thread:$0]  %s1, 16384, %s39, [#allocation6], 1024, 1024, 64
    $region9: #{tpu_custom_call.1} parent=1 // pred_fallthru
      _
    // Predicated region
    $region10: #{tpu_custom_call.1} parent=1 // pred_check
      _
    $region11: #{tpu_custom_call.1} parent=1 // pred_check_branch
      %46 = sbr.rel (0) target = $region13
    $region12: #{tpu_custom_call.1} parent=1 // pred_region
      %s48 = ssub.s32 32768, 32768
      %49 = vsyncadd [#allocation6], %s48
      %s50 = sshll.u32 [#allocation7], 4
      %s51 = int_to_ptr.vmem [resolvable:$true] %s50
      %56 = dma.hbm_to_vmem [thread:$0]  %s2, 32768, %s51, [#allocation6], 1024, 1024, 64
    $region13: #{tpu_custom_call.1} parent=1 // pred_fallthru
      _
    // Predicated region
    $region14: #{tpu_custom_call.1} parent=1 // pred_check
      _
    $region15: #{tpu_custom_call.1} parent=1 // pred_check_branch
      %58 = sbr.rel (0) target = $region17
    $region16: #{tpu_custom_call.1} parent=1 // pred_region
      _
    $region17: #{tpu_custom_call.1} parent=1 // pred_fallthru
      _
    // Predicated region
    $region18: #{tpu_custom_call.1} parent=1 // pred_check
      _
    $region19: #{tpu_custom_call.1} parent=1 // pred_check_branch
      %60 = sbr.rel (0) target = $region21
    $region20: #{tpu_custom_call.1} parent=1 // pred_region
      %s62 = ssub.s32 32768, 32768
      %63 = vsyncadd [#allocation9], %s62
      %s64 = sshll.u32 [#allocation8], 4
      %s65 = int_to_ptr.vmem [resolvable:$true] %s64
      %70 = dma.hbm_to_vmem [thread:$0]  %s4, 32768, %s65, [#allocation9], 1024, 1024, 64
    $region21: #{tpu_custom_call.1} parent=1 // pred_fallthru
      _
    // Predicated region
    $region22: #{tpu_custom_call.1} parent=1 // pred_check
      _
    $region23: #{tpu_custom_call.1} parent=1 // pred_check_branch
      %72 = sbr.rel (0) target = $region25
    $region24: #{tpu_custom_call.1} parent=1 // pred_region
      %s74 = ssub.s32 32768, 32768
      %75 = vsyncadd [#allocation9], %s74
      %s76 = sshll.u32 [#allocation10], 4
      %s77 = int_to_ptr.vmem [resolvable:$true] %s76
      %82 = dma.hbm_to_vmem [thread:$0]  %s5, 32768, %s77, [#allocation9], 1024, 1024, 64
    $region25: #{tpu_custom_call.1} parent=1 // pred_fallthru
      _
    // Predicated region
    $region26: #{tpu_custom_call.1} parent=1 // pred_check
      _
    $region27: #{tpu_custom_call.1} parent=1 // pred_check_branch
      %84 = sbr.rel (0) target = $region29
    $region28: #{tpu_custom_call.1} parent=1 // pred_region
      _
    $region29: #{tpu_custom_call.1} parent=1 // pred_fallthru
      _
    // Predicated region
    $region30: #{tpu_custom_call.1} parent=1 // pred_check
      _
    $region31: #{tpu_custom_call.1} parent=1 // pred_check_branch
      %86 = sbr.rel (0) target = $region33
    $region32: #{tpu_custom_call.1} parent=1 // pred_region
      %s88 = ssub.s32 8192, 8192
      %89 = vsyncadd [#allocation12], %s88
      %s90 = sshll.u32 [#allocation11], 4
      %s91 = int_to_ptr.vmem [resolvable:$true] %s90
      %96 = dma.hbm_to_vmem [thread:$0]  %s7, 8192, %s91, [#allocation12], 256, 256, 16
    $region33: #{tpu_custom_call.1} parent=1 // pred_fallthru
      _
    // Predicated region
    $region34: #{tpu_custom_call.1} parent=1 // pred_check
      _
    $region35: #{tpu_custom_call.1} parent=1 // pred_check_branch
      %98 = sbr.rel (0) target = $region37
    $region36: #{tpu_custom_call.1} parent=1 // pred_region
      _
    $region37: #{tpu_custom_call.1} parent=1 // pred_fallthru
      _
    // Predicated region
    $region38: #{tpu_custom_call.1} parent=1 // pred_check
      _
    $region39: #{tpu_custom_call.1} parent=1 // pred_check_branch
      %100 = sbr.rel (0) target = $region41
    $region40: #{tpu_custom_call.1} parent=1 // pred_region
      %s102 = ssub.s32 4096, 4096
      %103 = vsyncadd [#allocation12], %s102
      %s104 = sshll.u32 [#allocation13], 4
      %s105 = int_to_ptr.vmem [resolvable:$true] %s104
      %110 = dma.hbm_to_vmem [thread:$0]  %s9, 4096, %s105, [#allocation12], 128, 128, 8
    $region41: #{tpu_custom_call.1} parent=1 // pred_fallthru
      _
    // Predicated region
    $region42: #{tpu_custom_call.1} parent=1 // pred_check
      _
    $region43: #{tpu_custom_call.1} parent=1 // pred_check_branch
      %112 = sbr.rel (0) target = $region45
    $region44: #{tpu_custom_call.1} parent=1 // pred_region
      _
    $region45: #{tpu_custom_call.1} parent=1 // pred_fallthru
      _
    // Predicated region
    $region46: #{tpu_custom_call.1} parent=1 // pred_check
      _
    $region47: #{tpu_custom_call.1} parent=1 // pred_check_branch
      %114 = sbr.rel (0) target = $region49
    $region48: #{tpu_custom_call.1} parent=1 // pred_region
      %115 = dma.done [#allocation3], 1024
    $region49: #{tpu_custom_call.1} parent=1 // pred_fallthru
      _
    // Predicated region
    $region50: #{tpu_custom_call.1} parent=1 // pred_check
      _
    $region51: #{tpu_custom_call.1} parent=1 // pred_check_branch
      %117 = sbr.rel (0) target = $region53
    $region52: #{tpu_custom_call.1} parent=1 // pred_region
      %118 = dma.done [#allocation6], 16384
    $region53: #{tpu_custom_call.1} parent=1 // pred_fallthru
      _
    // Predicated region
    $region54: #{tpu_custom_call.1} parent=1 // pred_check
      _
    $region55: #{tpu_custom_call.1} parent=1 // pred_check_branch
      %120 = sbr.rel (0) target = $region57
    $region56: #{tpu_custom_call.1} parent=1 // pred_region
      %121 = dma.done [#allocation6], 32768
    $region57: #{tpu_custom_call.1} parent=1 // pred_fallthru
      _
    // Predicated region
    $region58: #{tpu_custom_call.1} parent=1 // pred_check
      _
    $region59: #{tpu_custom_call.1} parent=1 // pred_check_branch
      %123 = sbr.rel (0) target = $region61
    $region60: #{tpu_custom_call.1} parent=1 // pred_region
      %124 = dma.done [#allocation9], 32768
    $region61: #{tpu_custom_call.1} parent=1 // pred_fallthru
      _
    // Predicated region
    $region62: #{tpu_custom_call.1} parent=1 // pred_check
      _
    $region63: #{tpu_custom_call.1} parent=1 // pred_check_branch
      %126 = sbr.rel (0) target = $region65
    $region64: #{tpu_custom_call.1} parent=1 // pred_region
      %127 = dma.done [#allocation9], 32768
    $region65: #{tpu_custom_call.1} parent=1 // pred_fallthru
      _
    // Predicated region
    $region66: #{tpu_custom_call.1} parent=1 // pred_check
      _
    $region67: #{tpu_custom_call.1} parent=1 // pred_check_branch
      %129 = sbr.rel (0) target = $region69
    $region68: #{tpu_custom_call.1} parent=1 // pred_region
      %130 = dma.done [#allocation12], 8192
    $region69: #{tpu_custom_call.1} parent=1 // pred_fallthru
      _
    // Predicated region
    $region70: #{tpu_custom_call.1} parent=1 // pred_check
      _
    $region71: #{tpu_custom_call.1} parent=1 // pred_check_branch
      %132 = sbr.rel (0) target = $region73
    $region72: #{tpu_custom_call.1} parent=1 // pred_region
      %133 = dma.done [#allocation12], 4096
    $region73: #{tpu_custom_call.1} parent=1 // pred_fallthru
      _
    %v134 = vld [vmem:[#allocation2] sm:$0xff]
    %v135 = vld [vmem:[#allocation2 + $0x8] sm:$0xff]
    %v136 = vld [vmem:[#allocation2 + $0x10] sm:$0xff]
    %v137 = vld [vmem:[#allocation2 + $0x18] sm:$0xff]
    %v138 = vld [vmem:[#allocation2 + $0x20] sm:$0xff]
    %v139 = vld [vmem:[#allocation2 + $0x28] sm:$0xff]
    %v140 = vld [vmem:[#allocation2 + $0x30] sm:$0xff]
    %v141 = vld [vmem:[#allocation2 + $0x38] sm:$0xff]
    %v142 = vld [vmem:[#allocation5] sm:$0xff]
    %v143 = vld [vmem:[#allocation5 + $0x8] sm:$0xff]
    %v144 = vld [vmem:[#allocation5 + $0x10] sm:$0xff]
    %v145 = vld [vmem:[#allocation5 + $0x18] sm:$0xff]
    %v146 = vld [vmem:[#allocation5 + $0x20] sm:$0xff]
    %v147 = vld [vmem:[#allocation5 + $0x28] sm:$0xff]
    %v148 = vld [vmem:[#allocation5 + $0x30] sm:$0xff]
    %v149 = vld [vmem:[#allocation5 + $0x38] sm:$0xff]
    %v150 = vld [vmem:[#allocation5 + $0x40] sm:$0xff]
    %v151 = vld [vmem:[#allocation5 + $0x48] sm:$0xff]
    %v152 = vld [vmem:[#allocation5 + $0x50] sm:$0xff]
    %v153 = vld [vmem:[#allocation5 + $0x58] sm:$0xff]
    %v154 = vld [vmem:[#allocation5 + $0x60] sm:$0xff]
    %v155 = vld [vmem:[#allocation5 + $0x68] sm:$0xff]
    %v156 = vld [vmem:[#allocation5 + $0x70] sm:$0xff]
    %v157 = vld [vmem:[#allocation5 + $0x78] sm:$0xff]
    %v158 = vld [vmem:[#allocation5 + $0x80] sm:$0xff]
    %v159 = vld [vmem:[#allocation5 + $0x88] sm:$0xff]
    %v160 = vld [vmem:[#allocation5 + $0x90] sm:$0xff]
    %v161 = vld [vmem:[#allocation5 + $0x98] sm:$0xff]
    %v162 = vld [vmem:[#allocation5 + $0xa0] sm:$0xff]
    %v163 = vld [vmem:[#allocation5 + $0xa8] sm:$0xff]
    %v164 = vld [vmem:[#allocation5 + $0xb0] sm:$0xff]
    %v165 = vld [vmem:[#allocation5 + $0xb8] sm:$0xff]
    %v166 = vld [vmem:[#allocation5 + $0xc0] sm:$0xff]
    %v167 = vld [vmem:[#allocation5 + $0xc8] sm:$0xff]
    %v168 = vld [vmem:[#allocation5 + $0xd0] sm:$0xff]
    %v169 = vld [vmem:[#allocation5 + $0xd8] sm:$0xff]
    %v170 = vld [vmem:[#allocation5 + $0xe0] sm:$0xff]
    %v171 = vld [vmem:[#allocation5 + $0xe8] sm:$0xff]
    %v172 = vld [vmem:[#allocation5 + $0xf0] sm:$0xff]
    %v173 = vld [vmem:[#allocation5 + $0xf8] sm:$0xff]
    %v174 = vld [vmem:[#allocation5 + $0x100] sm:$0xff]
    %v175 = vld [vmem:[#allocation5 + $0x108] sm:$0xff]
    %v176 = vld [vmem:[#allocation5 + $0x110] sm:$0xff]
    %v177 = vld [vmem:[#allocation5 + $0x118] sm:$0xff]
    %v178 = vld [vmem:[#allocation5 + $0x120] sm:$0xff]
    %v179 = vld [vmem:[#allocation5 + $0x128] sm:$0xff]
    %v180 = vld [vmem:[#allocation5 + $0x130] sm:$0xff]
    %v181 = vld [vmem:[#allocation5 + $0x138] sm:$0xff]
    %v182 = vld [vmem:[#allocation5 + $0x140] sm:$0xff]
    %v183 = vld [vmem:[#allocation5 + $0x148] sm:$0xff]
    %v184 = vld [vmem:[#allocation5 + $0x150] sm:$0xff]
    %v185 = vld [vmem:[#allocation5 + $0x158] sm:$0xff]
    %v186 = vld [vmem:[#allocation5 + $0x160] sm:$0xff]
    %v187 = vld [vmem:[#allocation5 + $0x168] sm:$0xff]
    %v188 = vld [vmem:[#allocation5 + $0x170] sm:$0xff]
    %v189 = vld [vmem:[#allocation5 + $0x178] sm:$0xff]
    %v190 = vld [vmem:[#allocation5 + $0x180] sm:$0xff]
    %v191 = vld [vmem:[#allocation5 + $0x188] sm:$0xff]
    %v192 = vld [vmem:[#allocation5 + $0x190] sm:$0xff]
    %v193 = vld [vmem:[#allocation5 + $0x198] sm:$0xff]
    %v194 = vld [vmem:[#allocation5 + $0x1a0] sm:$0xff]
    %v195 = vld [vmem:[#allocation5 + $0x1a8] sm:$0xff]
    %v196 = vld [vmem:[#allocation5 + $0x1b0] sm:$0xff]
    %v197 = vld [vmem:[#allocation5 + $0x1b8] sm:$0xff]
    %v198 = vld [vmem:[#allocation5 + $0x1c0] sm:$0xff]
    %v199 = vld [vmem:[#allocation5 + $0x1c8] sm:$0xff]
    %v200 = vld [vmem:[#allocation5 + $0x1d0] sm:$0xff]
    %v201 = vld [vmem:[#allocation5 + $0x1d8] sm:$0xff]
    %v202 = vld [vmem:[#allocation5 + $0x1e0] sm:$0xff]
    %v203 = vld [vmem:[#allocation5 + $0x1e8] sm:$0xff]
    %v204 = vld [vmem:[#allocation5 + $0x1f0] sm:$0xff]
    %v205 = vld [vmem:[#allocation5 + $0x1f8] sm:$0xff]
    %v206 = vld [vmem:[#allocation5 + $0x200] sm:$0xff]
    %v207 = vld [vmem:[#allocation5 + $0x208] sm:$0xff]
    %v208 = vld [vmem:[#allocation5 + $0x210] sm:$0xff]
    %v209 = vld [vmem:[#allocation5 + $0x218] sm:$0xff]
    %v210 = vld [vmem:[#allocation5 + $0x220] sm:$0xff]
    %v211 = vld [vmem:[#allocation5 + $0x228] sm:$0xff]
    %v212 = vld [vmem:[#allocation5 + $0x230] sm:$0xff]
    %v213 = vld [vmem:[#allocation5 + $0x238] sm:$0xff]
    %v214 = vld [vmem:[#allocation5 + $0x240] sm:$0xff]
    %v215 = vld [vmem:[#allocation5 + $0x248] sm:$0xff]
    %v216 = vld [vmem:[#allocation5 + $0x250] sm:$0xff]
    %v217 = vld [vmem:[#allocation5 + $0x258] sm:$0xff]
    %v218 = vld [vmem:[#allocation5 + $0x260] sm:$0xff]
    %v219 = vld [vmem:[#allocation5 + $0x268] sm:$0xff]
    %v220 = vld [vmem:[#allocation5 + $0x270] sm:$0xff]
    %v221 = vld [vmem:[#allocation5 + $0x278] sm:$0xff]
    %v222 = vld [vmem:[#allocation5 + $0x280] sm:$0xff]
    %v223 = vld [vmem:[#allocation5 + $0x288] sm:$0xff]
    %v224 = vld [vmem:[#allocation5 + $0x290] sm:$0xff]
    %v225 = vld [vmem:[#allocation5 + $0x298] sm:$0xff]
    %v226 = vld [vmem:[#allocation5 + $0x2a0] sm:$0xff]
    %v227 = vld [vmem:[#allocation5 + $0x2a8] sm:$0xff]
    %v228 = vld [vmem:[#allocation5 + $0x2b0] sm:$0xff]
    %v229 = vld [vmem:[#allocation5 + $0x2b8] sm:$0xff]
    %v230 = vld [vmem:[#allocation5 + $0x2c0] sm:$0xff]
    %v231 = vld [vmem:[#allocation5 + $0x2c8] sm:$0xff]
    %v232 = vld [vmem:[#allocation5 + $0x2d0] sm:$0xff]
    %v233 = vld [vmem:[#allocation5 + $0x2d8] sm:$0xff]
    %v234 = vld [vmem:[#allocation5 + $0x2e0] sm:$0xff]
    %v235 = vld [vmem:[#allocation5 + $0x2e8] sm:$0xff]
    %v236 = vld [vmem:[#allocation5 + $0x2f0] sm:$0xff]
    %v237 = vld [vmem:[#allocation5 + $0x2f8] sm:$0xff]
    %v238 = vld [vmem:[#allocation5 + $0x300] sm:$0xff]
    %v239 = vld [vmem:[#allocation5 + $0x308] sm:$0xff]
    %v240 = vld [vmem:[#allocation5 + $0x310] sm:$0xff]
    %v241 = vld [vmem:[#allocation5 + $0x318] sm:$0xff]
    %v242 = vld [vmem:[#allocation5 + $0x320] sm:$0xff]
    %v243 = vld [vmem:[#allocation5 + $0x328] sm:$0xff]
    %v244 = vld [vmem:[#allocation5 + $0x330] sm:$0xff]
    %v245 = vld [vmem:[#allocation5 + $0x338] sm:$0xff]
    %v246 = vld [vmem:[#allocation5 + $0x340] sm:$0xff]
    %v247 = vld [vmem:[#allocation5 + $0x348] sm:$0xff]
    %v248 = vld [vmem:[#allocation5 + $0x350] sm:$0xff]
    %v249 = vld [vmem:[#allocation5 + $0x358] sm:$0xff]
    %v250 = vld [vmem:[#allocation5 + $0x360] sm:$0xff]
    %v251 = vld [vmem:[#allocation5 + $0x368] sm:$0xff]
    %v252 = vld [vmem:[#allocation5 + $0x370] sm:$0xff]
    %v253 = vld [vmem:[#allocation5 + $0x378] sm:$0xff]
    %v254 = vld [vmem:[#allocation5 + $0x380] sm:$0xff]
    %v255 = vld [vmem:[#allocation5 + $0x388] sm:$0xff]
    %v256 = vld [vmem:[#allocation5 + $0x390] sm:$0xff]
    %v257 = vld [vmem:[#allocation5 + $0x398] sm:$0xff]
    %v258 = vld [vmem:[#allocation5 + $0x3a0] sm:$0xff]
    %v259 = vld [vmem:[#allocation5 + $0x3a8] sm:$0xff]
    %v260 = vld [vmem:[#allocation5 + $0x3b0] sm:$0xff]
    %v261 = vld [vmem:[#allocation5 + $0x3b8] sm:$0xff]
    %v262 = vld [vmem:[#allocation5 + $0x3c0] sm:$0xff]
    %v263 = vld [vmem:[#allocation5 + $0x3c8] sm:$0xff]
    %v264 = vld [vmem:[#allocation5 + $0x3d0] sm:$0xff]
    %v265 = vld [vmem:[#allocation5 + $0x3d8] sm:$0xff]
    %v266 = vld [vmem:[#allocation5 + $0x3e0] sm:$0xff]
    %v267 = vld [vmem:[#allocation5 + $0x3e8] sm:$0xff]
    %v268 = vld [vmem:[#allocation5 + $0x3f0] sm:$0xff]
    %v269 = vld [vmem:[#allocation5 + $0x3f8] sm:$0xff]
    %v270 = vld [vmem:[%s3] sm:$0xff]
    %v272 = vlaneseq
    %v273 = vshrl.u32 %v272, 7
    %v274 = vsub.s32 0, %v273
    %v275 = vrot.slane %v270, %v274
    %v276 = vlaneseq
    %v277 = vshrl.u32 %v276, 7
    %v278 = vsub.s32 1, %v277
    %v279 = vrot.slane %v270, %v278
    %v280 = vlaneseq
    %v281 = vshrl.u32 %v280, 7
    %v282 = vsub.s32 2, %v281
    %v283 = vrot.slane %v270, %v282
    %v284 = vlaneseq
    %v285 = vshrl.u32 %v284, 7
    %v286 = vsub.s32 3, %v285
    %v287 = vrot.slane %v270, %v286
    %v288 = vlaneseq
    %v289 = vshrl.u32 %v288, 7
    %v290 = vsub.s32 4, %v289
    %v291 = vrot.slane %v270, %v290
    %v292 = vlaneseq
    %v293 = vshrl.u32 %v292, 7
    %v294 = vsub.s32 5, %v293
    %v295 = vrot.slane %v270, %v294
    %v296 = vlaneseq
    %v297 = vshrl.u32 %v296, 7
    %v298 = vsub.s32 6, %v297
    %v299 = vrot.slane %v270, %v298
    %v300 = vlaneseq
    %v301 = vshrl.u32 %v300, 7
    %v302 = vsub.s32 7, %v301
    %v303 = vrot.slane %v270, %v302
    %312 = vmatprep.subr.mxu0 %v143
    %313 = vmatpush1.msra.mxu0 %v142
    %314 = vmatprep.subr.mxu0 %v151
    %315 = vmatpush1.msra.mxu0 %v150
    %316 = vmatprep.subr.mxu0 %v159
    %317 = vmatpush1.msra.mxu0 %v158
    %318 = vmatprep.subr.mxu0 %v167
    %319 = vmatpush1.msra.mxu0 %v166
    %320 = vmatprep.subr.mxu0 %v175
    %321 = vmatpush1.msra.mxu0 %v174
    %322 = vmatprep.subr.mxu0 %v183
    %323 = vmatpush1.msra.mxu0 %v182
    %324 = vmatprep.subr.mxu0 %v191
    %325 = vmatpush1.msra.mxu0 %v190
    %326 = vmatprep.subr.mxu0 %v199
    %327 = vmatpush1.msra.mxu0 %v198
    %328 = vmatprep.subr.mxu0 %v207
    %329 = vmatpush1.msra.mxu0 %v206
    %330 = vmatprep.subr.mxu0 %v215
    %331 = vmatpush1.msra.mxu0 %v214
    %332 = vmatprep.subr.mxu0 %v223
    %333 = vmatpush1.msra.mxu0 %v222
    %334 = vmatprep.subr.mxu0 %v231
    %335 = vmatpush1.msra.mxu0 %v230
    %336 = vmatprep.subr.mxu0 %v239
    %337 = vmatpush1.msra.mxu0 %v238
    %338 = vmatprep.subr.mxu0 %v247
    %339 = vmatpush1.msra.mxu0 %v246
    %340 = vmatprep.subr.mxu0 %v255
    %341 = vmatpush1.msra.mxu0 %v254
    %342 = vmatprep.subr.mxu0 %v263
    %343 = vmatpush1.msra.mxu0 %v262
    %344 = vmatprep.subr.mxu0 0.0
    %345 = vmatpush1.msra.mxu0 0.0
    %346 = vmatprep.subr.mxu0 0.0
    %347 = vmatpush1.msra.mxu0 0.0
    %348 = vmatprep.subr.mxu0 0.0
    %349 = vmatpush1.msra.mxu0 0.0
    %350 = vmatprep.subr.mxu0 0.0
    %351 = vmatpush1.msra.mxu0 0.0
    %352 = vmatprep.subr.mxu0 0.0
    %353 = vmatpush1.msra.mxu0 0.0
    %354 = vmatprep.subr.mxu0 0.0
    %355 = vmatpush1.msra.mxu0 0.0
    %356 = vmatprep.subr.mxu0 0.0
    %357 = vmatpush1.msra.mxu0 0.0
    %358 = vmatprep.subr.mxu0 0.0
    %359 = vmatpush1.msra.mxu0 0.0
    %360 = vmatprep.subr.mxu0 0.0
    %361 = vmatpush1.msra.mxu0 0.0
    %362 = vmatprep.subr.mxu0 0.0
    %363 = vmatpush1.msra.mxu0 0.0
    %364 = vmatprep.subr.mxu0 0.0
    %365 = vmatpush1.msra.mxu0 0.0
    %366 = vmatprep.subr.mxu0 0.0
    %367 = vmatpush1.msra.mxu0 0.0
    %368 = vmatprep.subr.mxu0 0.0
    %369 = vmatpush1.msra.mxu0 0.0
    %370 = vmatprep.subr.mxu0 0.0
    %371 = vmatpush1.msra.mxu0 0.0
    %372 = vmatprep.subr.mxu0 0.0
    %373 = vmatpush1.msra.mxu0 0.0
    %374 = vmatprep.subr.mxu0 0.0
    %375 = vmatpush1.msra.mxu0 0.0
    %376 = vmatprep.mubr.f32.mxu0 0.0
    %377 = vmatmul.mubr.f32.gmra.mrb[0].mxu0 %v134
    %v378 = vpop.f32.mrb[0].mxu0
    %v379 = vadd.f32 %v275, %v378
    %v380 = vpop.f32.mrb[0].mxu0
    %v381 = vadd.f32 %v279, %v380
    %382 = vmatprep.mubr.f32.mxu0 0.0
    %383 = vmatmul.mubr.f32.gmra.mrb[0].mxu0 %v135
    %v384 = vpop.f32.mrb[0].mxu0
    %v385 = vadd.f32 %v275, %v384
    %v386 = vpop.f32.mrb[0].mxu0
    %v387 = vadd.f32 %v279, %v386
    %388 = vmatprep.mubr.f32.mxu0 0.0
    %389 = vmatmul.mubr.f32.gmra.mrb[0].mxu0 %v136
    %v390 = vpop.f32.mrb[0].mxu0
    %v391 = vadd.f32 %v275, %v390
    %v392 = vpop.f32.mrb[0].mxu0
    %v393 = vadd.f32 %v279, %v392
    %394 = vmatprep.mubr.f32.mxu0 0.0
    %395 = vmatmul.mubr.f32.gmra.mrb[0].mxu0 %v137
    %v396 = vpop.f32.mrb[0].mxu0
    %v397 = vadd.f32 %v275, %v396
    %v398 = vpop.f32.mrb[0].mxu0
    %v399 = vadd.f32 %v279, %v398
    %400 = vmatprep.mubr.f32.mxu0 0.0
    %401 = vmatmul.mubr.f32.gmra.mrb[0].mxu0 %v138
    %v402 = vpop.f32.mrb[0].mxu0
    %v403 = vadd.f32 %v275, %v402
    %v404 = vpop.f32.mrb[0].mxu0
    %v405 = vadd.f32 %v279, %v404
    %406 = vmatprep.mubr.f32.mxu0 0.0
    %407 = vmatmul.mubr.f32.gmra.mrb[0].mxu0 %v139
    %v408 = vpop.f32.mrb[0].mxu0
    %v409 = vadd.f32 %v275, %v408
    %v410 = vpop.f32.mrb[0].mxu0
    %v411 = vadd.f32 %v279, %v410
    %412 = vmatprep.mubr.f32.mxu0 0.0
    %413 = vmatmul.mubr.f32.gmra.mrb[0].mxu0 %v140
    %v414 = vpop.f32.mrb[0].mxu0
    %v415 = vadd.f32 %v275, %v414
    %v416 = vpop.f32.mrb[0].mxu0
    %v417 = vadd.f32 %v279, %v416
    %418 = vmatprep.mubr.f32.mxu0 0.0
    %419 = vmatmul.mubr.f32.gmra.mrb[0].mxu0 %v141
    %v420 = vpop.f32.mrb[0].mxu0
    %v421 = vadd.f32 %v275, %v420
    %v422 = vpop.f32.mrb[0].mxu0
    %v423 = vadd.f32 %v279, %v422
    %424 = vdwg.mxu0
    %425 = vmatprep.subr.mxu0 %v145
    %426 = vmatpush1.msra.mxu0 %v144
    %427 = vmatprep.subr.mxu0 %v153
    %428 = vmatpush1.msra.mxu0 %v152
    %429 = vmatprep.subr.mxu0 %v161
    %430 = vmatpush1.msra.mxu0 %v160
    %431 = vmatprep.subr.mxu0 %v169
    %432 = vmatpush1.msra.mxu0 %v168
    %433 = vmatprep.subr.mxu0 %v177
    %434 = vmatpush1.msra.mxu0 %v176
    %435 = vmatprep.subr.mxu0 %v185
    %436 = vmatpush1.msra.mxu0 %v184
    %437 = vmatprep.subr.mxu0 %v193
    %438 = vmatpush1.msra.mxu0 %v192
    %439 = vmatprep.subr.mxu0 %v201
    %440 = vmatpush1.msra.mxu0 %v200
    %441 = vmatprep.subr.mxu0 %v209
    %442 = vmatpush1.msra.mxu0 %v208
    %443 = vmatprep.subr.mxu0 %v217
    %444 = vmatpush1.msra.mxu0 %v216
    %445 = vmatprep.subr.mxu0 %v225
    %446 = vmatpush1.msra.mxu0 %v224
    %447 = vmatprep.subr.mxu0 %v233
    %448 = vmatpush1.msra.mxu0 %v232
    %449 = vmatprep.subr.mxu0 %v241
    %450 = vmatpush1.msra.mxu0 %v240
    %451 = vmatprep.subr.mxu0 %v249
    %452 = vmatpush1.msra.mxu0 %v248
    %453 = vmatprep.subr.mxu0 %v257
    %454 = vmatpush1.msra.mxu0 %v256
    %455 = vmatprep.subr.mxu0 %v265
    %456 = vmatpush1.msra.mxu0 %v264
    %457 = vmatprep.subr.mxu0 0.0
    %458 = vmatpush1.msra.mxu0 0.0
    %459 = vmatprep.subr.mxu0 0.0
    %460 = vmatpush1.msra.mxu0 0.0
    %461 = vmatprep.subr.mxu0 0.0
    %462 = vmatpush1.msra.mxu0 0.0
    %463 = vmatprep.subr.mxu0 0.0
    %464 = vmatpush1.msra.mxu0 0.0
    %465 = vmatprep.subr.mxu0 0.0
    %466 = vmatpush1.msra.mxu0 0.0
    %467 = vmatprep.subr.mxu0 0.0
    %468 = vmatpush1.msra.mxu0 0.0
    %469 = vmatprep.subr.mxu0 0.0
    %470 = vmatpush1.msra.mxu0 0.0
    %471 = vmatprep.subr.mxu0 0.0
    %472 = vmatpush1.msra.mxu0 0.0
    %473 = vmatprep.subr.mxu0 0.0
    %474 = vmatpush1.msra.mxu0 0.0
    %475 = vmatprep.subr.mxu0 0.0
    %476 = vmatpush1.msra.mxu0 0.0
    %477 = vmatprep.subr.mxu0 0.0
    %478 = vmatpush1.msra.mxu0 0.0
    %479 = vmatprep.subr.mxu0 0.0
    %480 = vmatpush1.msra.mxu0 0.0
    %481 = vmatprep.subr.mxu0 0.0
    %482 = vmatpush1.msra.mxu0 0.0
    %483 = vmatprep.subr.mxu0 0.0
    %484 = vmatpush1.msra.mxu0 0.0
    %485 = vmatprep.subr.mxu0 0.0
    %486 = vmatpush1.msra.mxu0 0.0
    %487 = vmatprep.subr.mxu0 0.0
    %488 = vmatpush1.msra.mxu0 0.0
    %489 = vmatprep.mubr.f32.mxu0 0.0
    %490 = vmatmul.mubr.f32.gmra.mrb[0].mxu0 %v134
    %v491 = vpop.f32.mrb[0].mxu0
    %v492 = vadd.f32 %v283, %v491
    %v493 = vpop.f32.mrb[0].mxu0
    %v494 = vadd.f32 %v287, %v493
    %495 = vmatprep.mubr.f32.mxu0 0.0
    %496 = vmatmul.mubr.f32.gmra.mrb[0].mxu0 %v135
    %v497 = vpop.f32.mrb[0].mxu0
    %v498 = vadd.f32 %v283, %v497
    %v499 = vpop.f32.mrb[0].mxu0
    %v500 = vadd.f32 %v287, %v499
    %501 = vmatprep.mubr.f32.mxu0 0.0
    %502 = vmatmul.mubr.f32.gmra.mrb[0].mxu0 %v136
    %v503 = vpop.f32.mrb[0].mxu0
    %v504 = vadd.f32 %v283, %v503
    %v505 = vpop.f32.mrb[0].mxu0
    %v506 = vadd.f32 %v287, %v505
    %507 = vmatprep.mubr.f32.mxu0 0.0
    %508 = vmatmul.mubr.f32.gmra.mrb[0].mxu0 %v137
    %v509 = vpop.f32.mrb[0].mxu0
    %v510 = vadd.f32 %v283, %v509
    %v511 = vpop.f32.mrb[0].mxu0
    %v512 = vadd.f32 %v287, %v511
    %513 = vmatprep.mubr.f32.mxu0 0.0
    %514 = vmatmul.mubr.f32.gmra.mrb[0].mxu0 %v138
    %v515 = vpop.f32.mrb[0].mxu0
    %v516 = vadd.f32 %v283, %v515
    %v517 = vpop.f32.mrb[0].mxu0
    %v518 = vadd.f32 %v287, %v517
    %519 = vmatprep.mubr.f32.mxu0 0.0
    %520 = vmatmul.mubr.f32.gmra.mrb[0].mxu0 %v139
    %v521 = vpop.f32.mrb[0].mxu0
    %v522 = vadd.f32 %v283, %v521
    %v523 = vpop.f32.mrb[0].mxu0
    %v524 = vadd.f32 %v287, %v523
    %525 = vmatprep.mubr.f32.mxu0 0.0
    %526 = vmatmul.mubr.f32.gmra.mrb[0].mxu0 %v140
    %v527 = vpop.f32.mrb[0].mxu0
    %v528 = vadd.f32 %v283, %v527
    %v529 = vpop.f32.mrb[0].mxu0
    %v530 = vadd.f32 %v287, %v529
    %531 = vmatprep.mubr.f32.mxu0 0.0
    %532 = vmatmul.mubr.f32.gmra.mrb[0].mxu0 %v141
    %v533 = vpop.f32.mrb[0].mxu0
    %v534 = vadd.f32 %v283, %v533
    %v535 = vpop.f32.mrb[0].mxu0
    %v536 = vadd.f32 %v287, %v535
    %537 = vdwg.mxu0
    %538 = vmatprep.subr.mxu0 %v147
    %539 = vmatpush1.msra.mxu0 %v146
    %540 = vmatprep.subr.mxu0 %v155
    %541 = vmatpush1.msra.mxu0 %v154
    %542 = vmatprep.subr.mxu0 %v163
    %543 = vmatpush1.msra.mxu0 %v162
    %544 = vmatprep.subr.mxu0 %v171
    %545 = vmatpush1.msra.mxu0 %v170
    %546 = vmatprep.subr.mxu0 %v179
    %547 = vmatpush1.msra.mxu0 %v178
    %548 = vmatprep.subr.mxu0 %v187
    %549 = vmatpush1.msra.mxu0 %v186
    %550 = vmatprep.subr.mxu0 %v195
    %551 = vmatpush1.msra.mxu0 %v194
    %552 = vmatprep.subr.mxu0 %v203
    %553 = vmatpush1.msra.mxu0 %v202
    %554 = vmatprep.subr.mxu0 %v211
    %555 = vmatpush1.msra.mxu0 %v210
    %556 = vmatprep.subr.mxu0 %v219
    %557 = vmatpush1.msra.mxu0 %v218
    %558 = vmatprep.subr.mxu0 %v227
    %559 = vmatpush1.msra.mxu0 %v226
    %560 = vmatprep.subr.mxu0 %v235
    %561 = vmatpush1.msra.mxu0 %v234
    %562 = vmatprep.subr.mxu0 %v243
    %563 = vmatpush1.msra.mxu0 %v242
    %564 = vmatprep.subr.mxu0 %v251
    %565 = vmatpush1.msra.mxu0 %v250
    %566 = vmatprep.subr.mxu0 %v259
    %567 = vmatpush1.msra.mxu0 %v258
    %568 = vmatprep.subr.mxu0 %v267
    %569 = vmatpush1.msra.mxu0 %v266
    %570 = vmatprep.subr.mxu0 0.0
    %571 = vmatpush1.msra.mxu0 0.0
    %572 = vmatprep.subr.mxu0 0.0
    %573 = vmatpush1.msra.mxu0 0.0
    %574 = vmatprep.subr.mxu0 0.0
    %575 = vmatpush1.msra.mxu0 0.0
    %576 = vmatprep.subr.mxu0 0.0
    %577 = vmatpush1.msra.mxu0 0.0
    %578 = vmatprep.subr.mxu0 0.0
    %579 = vmatpush1.msra.mxu0 0.0
    %580 = vmatprep.subr.mxu0 0.0
    %581 = vmatpush1.msra.mxu0 0.0
    %582 = vmatprep.subr.mxu0 0.0
    %583 = vmatpush1.msra.mxu0 0.0
    %584 = vmatprep.subr.mxu0 0.0
    %585 = vmatpush1.msra.mxu0 0.0
    %586 = vmatprep.subr.mxu0 0.0
    %587 = vmatpush1.msra.mxu0 0.0
    %588 = vmatprep.subr.mxu0 0.0
    %589 = vmatpush1.msra.mxu0 0.0
    %590 = vmatprep.subr.mxu0 0.0
    %591 = vmatpush1.msra.mxu0 0.0
    %592 = vmatprep.subr.mxu0 0.0
    %593 = vmatpush1.msra.mxu0 0.0
    %594 = vmatprep.subr.mxu0 0.0
    %595 = vmatpush1.msra.mxu0 0.0
    %596 = vmatprep.subr.mxu0 0.0
    %597 = vmatpush1.msra.mxu0 0.0
    %598 = vmatprep.subr.mxu0 0.0
    %599 = vmatpush1.msra.mxu0 0.0
    %600 = vmatprep.subr.mxu0 0.0
    %601 = vmatpush1.msra.mxu0 0.0
    %602 = vmatprep.mubr.f32.mxu0 0.0
    %603 = vmatmul.mubr.f32.gmra.mrb[0].mxu0 %v134
    %v604 = vpop.f32.mrb[0].mxu0
    %v605 = vadd.f32 %v291, %v604
    %v606 = vpop.f32.mrb[0].mxu0
    %v607 = vadd.f32 %v295, %v606
    %608 = vmatprep.mubr.f32.mxu0 0.0
    %609 = vmatmul.mubr.f32.gmra.mrb[0].mxu0 %v135
    %v610 = vpop.f32.mrb[0].mxu0
    %v611 = vadd.f32 %v291, %v610
    %v612 = vpop.f32.mrb[0].mxu0
    %v613 = vadd.f32 %v295, %v612
    %614 = vmatprep.mubr.f32.mxu0 0.0
    %615 = vmatmul.mubr.f32.gmra.mrb[0].mxu0 %v136
    %v616 = vpop.f32.mrb[0].mxu0
    %v617 = vadd.f32 %v291, %v616
    %v618 = vpop.f32.mrb[0].mxu0
    %v619 = vadd.f32 %v295, %v618
    %620 = vmatprep.mubr.f32.mxu0 0.0
    %621 = vmatmul.mubr.f32.gmra.mrb[0].mxu0 %v137
    %v622 = vpop.f32.mrb[0].mxu0
    %v623 = vadd.f32 %v291, %v622
    %v624 = vpop.f32.mrb[0].mxu0
    %v625 = vadd.f32 %v295, %v624
    %626 = vmatprep.mubr.f32.mxu0 0.0
    %627 = vmatmul.mubr.f32.gmra.mrb[0].mxu0 %v138
    %v628 = vpop.f32.mrb[0].mxu0
    %v629 = vadd.f32 %v291, %v628
    %v630 = vpop.f32.mrb[0].mxu0
    %v631 = vadd.f32 %v295, %v630
    %632 = vmatprep.mubr.f32.mxu0 0.0
    %633 = vmatmul.mubr.f32.gmra.mrb[0].mxu0 %v139
    %v634 = vpop.f32.mrb[0].mxu0
    %v635 = vadd.f32 %v291, %v634
    %v636 = vpop.f32.mrb[0].mxu0
    %v637 = vadd.f32 %v295, %v636
    %638 = vmatprep.mubr.f32.mxu0 0.0
    %639 = vmatmul.mubr.f32.gmra.mrb[0].mxu0 %v140
    %v640 = vpop.f32.mrb[0].mxu0
    %v641 = vadd.f32 %v291, %v640
    %v642 = vpop.f32.mrb[0].mxu0
    %v643 = vadd.f32 %v295, %v642
    %644 = vmatprep.mubr.f32.mxu0 0.0
    %645 = vmatmul.mubr.f32.gmra.mrb[0].mxu0 %v141
    %v646 = vpop.f32.mrb[0].mxu0
    %v647 = vadd.f32 %v291, %v646
    %v648 = vpop.f32.mrb[0].mxu0
    %v649 = vadd.f32 %v295, %v648
    %650 = vdwg.mxu0
    %651 = vmatprep.subr.mxu0 %v149
    %652 = vmatpush1.msra.mxu0 %v148
    %653 = vmatprep.subr.mxu0 %v157
    %654 = vmatpush1.msra.mxu0 %v156
    %655 = vmatprep.subr.mxu0 %v165
    %656 = vmatpush1.msra.mxu0 %v164
    %657 = vmatprep.subr.mxu0 %v173
    %658 = vmatpush1.msra.mxu0 %v172
    %659 = vmatprep.subr.mxu0 %v181
    %660 = vmatpush1.msra.mxu0 %v180
    %661 = vmatprep.subr.mxu0 %v189
    %662 = vmatpush1.msra.mxu0 %v188
    %663 = vmatprep.subr.mxu0 %v197
    %664 = vmatpush1.msra.mxu0 %v196
    %665 = vmatprep.subr.mxu0 %v205
    %666 = vmatpush1.msra.mxu0 %v204
    %667 = vmatprep.subr.mxu0 %v213
    %668 = vmatpush1.msra.mxu0 %v212
    %669 = vmatprep.subr.mxu0 %v221
    %670 = vmatpush1.msra.mxu0 %v220
    %671 = vmatprep.subr.mxu0 %v229
    %672 = vmatpush1.msra.mxu0 %v228
    %673 = vmatprep.subr.mxu0 %v237
    %674 = vmatpush1.msra.mxu0 %v236
    %675 = vmatprep.subr.mxu0 %v245
    %676 = vmatpush1.msra.mxu0 %v244
    %677 = vmatprep.subr.mxu0 %v253
    %678 = vmatpush1.msra.mxu0 %v252
    %679 = vmatprep.subr.mxu0 %v261
    %680 = vmatpush1.msra.mxu0 %v260
    %681 = vmatprep.subr.mxu0 %v269
    %682 = vmatpush1.msra.mxu0 %v268
    %683 = vmatprep.subr.mxu0 0.0
    %684 = vmatpush1.msra.mxu0 0.0
    %685 = vmatprep.subr.mxu0 0.0
    %686 = vmatpush1.msra.mxu0 0.0
    %687 = vmatprep.subr.mxu0 0.0
    %688 = vmatpush1.msra.mxu0 0.0
    %689 = vmatprep.subr.mxu0 0.0
    %690 = vmatpush1.msra.mxu0 0.0
    %691 = vmatprep.subr.mxu0 0.0
    %692 = vmatpush1.msra.mxu0 0.0
    %693 = vmatprep.subr.mxu0 0.0
    %694 = vmatpush1.msra.mxu0 0.0
    %695 = vmatprep.subr.mxu0 0.0
    %696 = vmatpush1.msra.mxu0 0.0
    %697 = vmatprep.subr.mxu0 0.0
    %698 = vmatpush1.msra.mxu0 0.0
    %699 = vmatprep.subr.mxu0 0.0
    %700 = vmatpush1.msra.mxu0 0.0
    %701 = vmatprep.subr.mxu0 0.0
    %702 = vmatpush1.msra.mxu0 0.0
    %703 = vmatprep.subr.mxu0 0.0
    %704 = vmatpush1.msra.mxu0 0.0
    %705 = vmatprep.subr.mxu0 0.0
    %706 = vmatpush1.msra.mxu0 0.0
    %707 = vmatprep.subr.mxu0 0.0
    %708 = vmatpush1.msra.mxu0 0.0
    %709 = vmatprep.subr.mxu0 0.0
    %710 = vmatpush1.msra.mxu0 0.0
    %711 = vmatprep.subr.mxu0 0.0
    %712 = vmatpush1.msra.mxu0 0.0
    %713 = vmatprep.subr.mxu0 0.0
    %714 = vmatpush1.msra.mxu0 0.0
    %715 = vmatprep.mubr.f32.mxu0 0.0
    %716 = vmatmul.mubr.f32.gmra.mrb[0].mxu0 %v134
    %v717 = vpop.f32.mrb[0].mxu0
    %v718 = vadd.f32 %v299, %v717
    %v719 = vpop.f32.mrb[0].mxu0
    %v720 = vadd.f32 %v303, %v719
    %721 = vmatprep.mubr.f32.mxu0 0.0
    %722 = vmatmul.mubr.f32.gmra.mrb[0].mxu0 %v135
    %v723 = vpop.f32.mrb[0].mxu0
    %v724 = vadd.f32 %v299, %v723
    %v725 = vpop.f32.mrb[0].mxu0
    %v726 = vadd.f32 %v303, %v725
    %727 = vmatprep.mubr.f32.mxu0 0.0
    %728 = vmatmul.mubr.f32.gmra.mrb[0].mxu0 %v136
    %v729 = vpop.f32.mrb[0].mxu0
    %v730 = vadd.f32 %v299, %v729
    %v731 = vpop.f32.mrb[0].mxu0
    %v732 = vadd.f32 %v303, %v731
    %733 = vmatprep.mubr.f32.mxu0 0.0
    %734 = vmatmul.mubr.f32.gmra.mrb[0].mxu0 %v137
    %v735 = vpop.f32.mrb[0].mxu0
    %v736 = vadd.f32 %v299, %v735
    %v737 = vpop.f32.mrb[0].mxu0
    %v738 = vadd.f32 %v303, %v737
    %739 = vmatprep.mubr.f32.mxu0 0.0
    %740 = vmatmul.mubr.f32.gmra.mrb[0].mxu0 %v138
    %v741 = vpop.f32.mrb[0].mxu0
    %v742 = vadd.f32 %v299, %v741
    %v743 = vpop.f32.mrb[0].mxu0
    %v744 = vadd.f32 %v303, %v743
    %745 = vmatprep.mubr.f32.mxu0 0.0
    %746 = vmatmul.mubr.f32.gmra.mrb[0].mxu0 %v139
    %v747 = vpop.f32.mrb[0].mxu0
    %v748 = vadd.f32 %v299, %v747
    %v749 = vpop.f32.mrb[0].mxu0
    %v750 = vadd.f32 %v303, %v749
    %751 = vmatprep.mubr.f32.mxu0 0.0
    %752 = vmatmul.mubr.f32.gmra.mrb[0].mxu0 %v140
    %v753 = vpop.f32.mrb[0].mxu0
    %v754 = vadd.f32 %v299, %v753
    %v755 = vpop.f32.mrb[0].mxu0
    %v756 = vadd.f32 %v303, %v755
    %757 = vmatprep.mubr.f32.mxu0 0.0
    %758 = vmatmul.mubr.f32.gmra.mrb[0].mxu0 %v141
    %v759 = vpop.f32.mrb[0].mxu0
    %v760 = vadd.f32 %v299, %v759
    %v761 = vpop.f32.mrb[0].mxu0
    %v762 = vadd.f32 %v303, %v761
    %763 = vdwg.mxu0
    %v764 = vld [vmem:[#allocation7] sm:$0xff]
    %v765 = vld [vmem:[#allocation7 + $0x8] sm:$0xff]
    %v766 = vld [vmem:[#allocation7 + $0x10] sm:$0xff]
    %v767 = vld [vmem:[#allocation7 + $0x18] sm:$0xff]
    %v768 = vld [vmem:[#allocation7 + $0x20] sm:$0xff]
    %v769 = vld [vmem:[#allocation7 + $0x28] sm:$0xff]
    %v770 = vld [vmem:[#allocation7 + $0x30] sm:$0xff]
    %v771 = vld [vmem:[#allocation7 + $0x38] sm:$0xff]
    %v772 = vld [vmem:[#allocation7 + $0x40] sm:$0xff]
    %v773 = vld [vmem:[#allocation7 + $0x48] sm:$0xff]
    %v774 = vld [vmem:[#allocation7 + $0x50] sm:$0xff]
    %v775 = vld [vmem:[#allocation7 + $0x58] sm:$0xff]
    %v776 = vld [vmem:[#allocation7 + $0x60] sm:$0xff]
    %v777 = vld [vmem:[#allocation7 + $0x68] sm:$0xff]
    %v778 = vld [vmem:[#allocation7 + $0x70] sm:$0xff]
    %v779 = vld [vmem:[#allocation7 + $0x78] sm:$0xff]
    %v780 = vld [vmem:[#allocation7 + $0x80] sm:$0xff]
    %v781 = vld [vmem:[#allocation7 + $0x88] sm:$0xff]
    %v782 = vld [vmem:[#allocation7 + $0x90] sm:$0xff]
    %v783 = vld [vmem:[#allocation7 + $0x98] sm:$0xff]
    %v784 = vld [vmem:[#allocation7 + $0xa0] sm:$0xff]
    %v785 = vld [vmem:[#allocation7 + $0xa8] sm:$0xff]
    %v786 = vld [vmem:[#allocation7 + $0xb0] sm:$0xff]
    %v787 = vld [vmem:[#allocation7 + $0xb8] sm:$0xff]
    %v788 = vld [vmem:[#allocation7 + $0xc0] sm:$0xff]
    %v789 = vld [vmem:[#allocation7 + $0xc8] sm:$0xff]
    %v790 = vld [vmem:[#allocation7 + $0xd0] sm:$0xff]
    %v791 = vld [vmem:[#allocation7 + $0xd8] sm:$0xff]
    %v792 = vld [vmem:[#allocation7 + $0xe0] sm:$0xff]
    %v793 = vld [vmem:[#allocation7 + $0xe8] sm:$0xff]
    %v794 = vld [vmem:[#allocation7 + $0xf0] sm:$0xff]
    %v795 = vld [vmem:[#allocation7 + $0xf8] sm:$0xff]
    %v796 = vld [vmem:[#allocation7 + $0x100] sm:$0xff]
    %v797 = vld [vmem:[#allocation7 + $0x108] sm:$0xff]
    %v798 = vld [vmem:[#allocation7 + $0x110] sm:$0xff]
    %v799 = vld [vmem:[#allocation7 + $0x118] sm:$0xff]
    %v800 = vld [vmem:[#allocation7 + $0x120] sm:$0xff]
    %v801 = vld [vmem:[#allocation7 + $0x128] sm:$0xff]
    %v802 = vld [vmem:[#allocation7 + $0x130] sm:$0xff]
    %v803 = vld [vmem:[#allocation7 + $0x138] sm:$0xff]
    %v804 = vld [vmem:[#allocation7 + $0x140] sm:$0xff]
    %v805 = vld [vmem:[#allocation7 + $0x148] sm:$0xff]
    %v806 = vld [vmem:[#allocation7 + $0x150] sm:$0xff]
    %v807 = vld [vmem:[#allocation7 + $0x158] sm:$0xff]
    %v808 = vld [vmem:[#allocation7 + $0x160] sm:$0xff]
    %v809 = vld [vmem:[#allocation7 + $0x168] sm:$0xff]
    %v810 = vld [vmem:[#allocation7 + $0x170] sm:$0xff]
    %v811 = vld [vmem:[#allocation7 + $0x178] sm:$0xff]
    %v812 = vld [vmem:[#allocation7 + $0x180] sm:$0xff]
    %v813 = vld [vmem:[#allocation7 + $0x188] sm:$0xff]
    %v814 = vld [vmem:[#allocation7 + $0x190] sm:$0xff]
    %v815 = vld [vmem:[#allocation7 + $0x198] sm:$0xff]
    %v816 = vld [vmem:[#allocation7 + $0x1a0] sm:$0xff]
    %v817 = vld [vmem:[#allocation7 + $0x1a8] sm:$0xff]
    %v818 = vld [vmem:[#allocation7 + $0x1b0] sm:$0xff]
    %v819 = vld [vmem:[#allocation7 + $0x1b8] sm:$0xff]
    %v820 = vld [vmem:[#allocation7 + $0x1c0] sm:$0xff]
    %v821 = vld [vmem:[#allocation7 + $0x1c8] sm:$0xff]
    %v822 = vld [vmem:[#allocation7 + $0x1d0] sm:$0xff]
    %v823 = vld [vmem:[#allocation7 + $0x1d8] sm:$0xff]
    %v824 = vld [vmem:[#allocation7 + $0x1e0] sm:$0xff]
    %v825 = vld [vmem:[#allocation7 + $0x1e8] sm:$0xff]
    %v826 = vld [vmem:[#allocation7 + $0x1f0] sm:$0xff]
    %v827 = vld [vmem:[#allocation7 + $0x1f8] sm:$0xff]
    %v828 = vld [vmem:[#allocation7 + $0x200] sm:$0xff]
    %v829 = vld [vmem:[#allocation7 + $0x208] sm:$0xff]
    %v830 = vld [vmem:[#allocation7 + $0x210] sm:$0xff]
    %v831 = vld [vmem:[#allocation7 + $0x218] sm:$0xff]
    %v832 = vld [vmem:[#allocation7 + $0x220] sm:$0xff]
    %v833 = vld [vmem:[#allocation7 + $0x228] sm:$0xff]
    %v834 = vld [vmem:[#allocation7 + $0x230] sm:$0xff]
    %v835 = vld [vmem:[#allocation7 + $0x238] sm:$0xff]
    %v836 = vld [vmem:[#allocation7 + $0x240] sm:$0xff]
    %v837 = vld [vmem:[#allocation7 + $0x248] sm:$0xff]
    %v838 = vld [vmem:[#allocation7 + $0x250] sm:$0xff]
    %v839 = vld [vmem:[#allocation7 + $0x258] sm:$0xff]
    %v840 = vld [vmem:[#allocation7 + $0x260] sm:$0xff]
    %v841 = vld [vmem:[#allocation7 + $0x268] sm:$0xff]
    %v842 = vld [vmem:[#allocation7 + $0x270] sm:$0xff]
    %v843 = vld [vmem:[#allocation7 + $0x278] sm:$0xff]
    %v844 = vld [vmem:[#allocation7 + $0x280] sm:$0xff]
    %v845 = vld [vmem:[#allocation7 + $0x288] sm:$0xff]
    %v846 = vld [vmem:[#allocation7 + $0x290] sm:$0xff]
    %v847 = vld [vmem:[#allocation7 + $0x298] sm:$0xff]
    %v848 = vld [vmem:[#allocation7 + $0x2a0] sm:$0xff]
    %v849 = vld [vmem:[#allocation7 + $0x2a8] sm:$0xff]
    %v850 = vld [vmem:[#allocation7 + $0x2b0] sm:$0xff]
    %v851 = vld [vmem:[#allocation7 + $0x2b8] sm:$0xff]
    %v852 = vld [vmem:[#allocation7 + $0x2c0] sm:$0xff]
    %v853 = vld [vmem:[#allocation7 + $0x2c8] sm:$0xff]
    %v854 = vld [vmem:[#allocation7 + $0x2d0] sm:$0xff]
    %v855 = vld [vmem:[#allocation7 + $0x2d8] sm:$0xff]
    %v856 = vld [vmem:[#allocation7 + $0x2e0] sm:$0xff]
    %v857 = vld [vmem:[#allocation7 + $0x2e8] sm:$0xff]
    %v858 = vld [vmem:[#allocation7 + $0x2f0] sm:$0xff]
    %v859 = vld [vmem:[#allocation7 + $0x2f8] sm:$0xff]
    %v860 = vld [vmem:[#allocation7 + $0x300] sm:$0xff]
    %v861 = vld [vmem:[#allocation7 + $0x308] sm:$0xff]
    %v862 = vld [vmem:[#allocation7 + $0x310] sm:$0xff]
    %v863 = vld [vmem:[#allocation7 + $0x318] sm:$0xff]
    %v864 = vld [vmem:[#allocation7 + $0x320] sm:$0xff]
    %v865 = vld [vmem:[#allocation7 + $0x328] sm:$0xff]
    %v866 = vld [vmem:[#allocation7 + $0x330] sm:$0xff]
    %v867 = vld [vmem:[#allocation7 + $0x338] sm:$0xff]
    %v868 = vld [vmem:[#allocation7 + $0x340] sm:$0xff]
    %v869 = vld [vmem:[#allocation7 + $0x348] sm:$0xff]
    %v870 = vld [vmem:[#allocation7 + $0x350] sm:$0xff]
    %v871 = vld [vmem:[#allocation7 + $0x358] sm:$0xff]
    %v872 = vld [vmem:[#allocation7 + $0x360] sm:$0xff]
    %v873 = vld [vmem:[#allocation7 + $0x368] sm:$0xff]
    %v874 = vld [vmem:[#allocation7 + $0x370] sm:$0xff]
    %v875 = vld [vmem:[#allocation7 + $0x378] sm:$0xff]
    %v876 = vld [vmem:[#allocation7 + $0x380] sm:$0xff]
    %v877 = vld [vmem:[#allocation7 + $0x388] sm:$0xff]
    %v878 = vld [vmem:[#allocation7 + $0x390] sm:$0xff]
    %v879 = vld [vmem:[#allocation7 + $0x398] sm:$0xff]
    %v880 = vld [vmem:[#allocation7 + $0x3a0] sm:$0xff]
    %v881 = vld [vmem:[#allocation7 + $0x3a8] sm:$0xff]
    %v882 = vld [vmem:[#allocation7 + $0x3b0] sm:$0xff]
    %v883 = vld [vmem:[#allocation7 + $0x3b8] sm:$0xff]
    %v884 = vld [vmem:[#allocation7 + $0x3c0] sm:$0xff]
    %v885 = vld [vmem:[#allocation7 + $0x3c8] sm:$0xff]
    %v886 = vld [vmem:[#allocation7 + $0x3d0] sm:$0xff]
    %v887 = vld [vmem:[#allocation7 + $0x3d8] sm:$0xff]
    %v888 = vld [vmem:[#allocation7 + $0x3e0] sm:$0xff]
    %v889 = vld [vmem:[#allocation7 + $0x3e8] sm:$0xff]
    %v890 = vld [vmem:[#allocation7 + $0x3f0] sm:$0xff]
    %v891 = vld [vmem:[#allocation7 + $0x3f8] sm:$0xff]
    %v892 = vld [vmem:[#allocation7 + $0x400] sm:$0xff]
    %v893 = vld [vmem:[#allocation7 + $0x408] sm:$0xff]
    %v894 = vld [vmem:[#allocation7 + $0x410] sm:$0xff]
    %v895 = vld [vmem:[#allocation7 + $0x418] sm:$0xff]
    %v896 = vld [vmem:[#allocation7 + $0x420] sm:$0xff]
    %v897 = vld [vmem:[#allocation7 + $0x428] sm:$0xff]
    %v898 = vld [vmem:[#allocation7 + $0x430] sm:$0xff]
    %v899 = vld [vmem:[#allocation7 + $0x438] sm:$0xff]
    %v900 = vld [vmem:[#allocation7 + $0x440] sm:$0xff]
    %v901 = vld [vmem:[#allocation7 + $0x448] sm:$0xff]
    %v902 = vld [vmem:[#allocation7 + $0x450] sm:$0xff]
    %v903 = vld [vmem:[#allocation7 + $0x458] sm:$0xff]
    %v904 = vld [vmem:[#allocation7 + $0x460] sm:$0xff]
    %v905 = vld [vmem:[#allocation7 + $0x468] sm:$0xff]
    %v906 = vld [vmem:[#allocation7 + $0x470] sm:$0xff]
    %v907 = vld [vmem:[#allocation7 + $0x478] sm:$0xff]
    %v908 = vld [vmem:[#allocation7 + $0x480] sm:$0xff]
    %v909 = vld [vmem:[#allocation7 + $0x488] sm:$0xff]
    %v910 = vld [vmem:[#allocation7 + $0x490] sm:$0xff]
    %v911 = vld [vmem:[#allocation7 + $0x498] sm:$0xff]
    %v912 = vld [vmem:[#allocation7 + $0x4a0] sm:$0xff]
    %v913 = vld [vmem:[#allocation7 + $0x4a8] sm:$0xff]
    %v914 = vld [vmem:[#allocation7 + $0x4b0] sm:$0xff]
    %v915 = vld [vmem:[#allocation7 + $0x4b8] sm:$0xff]
    %v916 = vld [vmem:[#allocation7 + $0x4c0] sm:$0xff]
    %v917 = vld [vmem:[#allocation7 + $0x4c8] sm:$0xff]
    %v918 = vld [vmem:[#allocation7 + $0x4d0] sm:$0xff]
    %v919 = vld [vmem:[#allocation7 + $0x4d8] sm:$0xff]
    %v920 = vld [vmem:[#allocation7 + $0x4e0] sm:$0xff]
    %v921 = vld [vmem:[#allocation7 + $0x4e8] sm:$0xff]
    %v922 = vld [vmem:[#allocation7 + $0x4f0] sm:$0xff]
    %v923 = vld [vmem:[#allocation7 + $0x4f8] sm:$0xff]
    %v924 = vld [vmem:[#allocation7 + $0x500] sm:$0xff]
    %v925 = vld [vmem:[#allocation7 + $0x508] sm:$0xff]
    %v926 = vld [vmem:[#allocation7 + $0x510] sm:$0xff]
    %v927 = vld [vmem:[#allocation7 + $0x518] sm:$0xff]
    %v928 = vld [vmem:[#allocation7 + $0x520] sm:$0xff]
    %v929 = vld [vmem:[#allocation7 + $0x528] sm:$0xff]
    %v930 = vld [vmem:[#allocation7 + $0x530] sm:$0xff]
    %v931 = vld [vmem:[#allocation7 + $0x538] sm:$0xff]
    %v932 = vld [vmem:[#allocation7 + $0x540] sm:$0xff]
    %v933 = vld [vmem:[#allocation7 + $0x548] sm:$0xff]
    %v934 = vld [vmem:[#allocation7 + $0x550] sm:$0xff]
    %v935 = vld [vmem:[#allocation7 + $0x558] sm:$0xff]
    %v936 = vld [vmem:[#allocation7 + $0x560] sm:$0xff]
    %v937 = vld [vmem:[#allocation7 + $0x568] sm:$0xff]
    %v938 = vld [vmem:[#allocation7 + $0x570] sm:$0xff]
    %v939 = vld [vmem:[#allocation7 + $0x578] sm:$0xff]
    %v940 = vld [vmem:[#allocation7 + $0x580] sm:$0xff]
    %v941 = vld [vmem:[#allocation7 + $0x588] sm:$0xff]
    %v942 = vld [vmem:[#allocation7 + $0x590] sm:$0xff]
    %v943 = vld [vmem:[#allocation7 + $0x598] sm:$0xff]
    %v944 = vld [vmem:[#allocation7 + $0x5a0] sm:$0xff]
    %v945 = vld [vmem:[#allocation7 + $0x5a8] sm:$0xff]
    %v946 = vld [vmem:[#allocation7 + $0x5b0] sm:$0xff]
    %v947 = vld [vmem:[#allocation7 + $0x5b8] sm:$0xff]
    %v948 = vld [vmem:[#allocation7 + $0x5c0] sm:$0xff]
    %v949 = vld [vmem:[#allocation7 + $0x5c8] sm:$0xff]
    %v950 = vld [vmem:[#allocation7 + $0x5d0] sm:$0xff]
    %v951 = vld [vmem:[#allocation7 + $0x5d8] sm:$0xff]
    %v952 = vld [vmem:[#allocation7 + $0x5e0] sm:$0xff]
    %v953 = vld [vmem:[#allocation7 + $0x5e8] sm:$0xff]
    %v954 = vld [vmem:[#allocation7 + $0x5f0] sm:$0xff]
    %v955 = vld [vmem:[#allocation7 + $0x5f8] sm:$0xff]
    %v956 = vld [vmem:[#allocation7 + $0x600] sm:$0xff]
    %v957 = vld [vmem:[#allocation7 + $0x608] sm:$0xff]
    %v958 = vld [vmem:[#allocation7 + $0x610] sm:$0xff]
    %v959 = vld [vmem:[#allocation7 + $0x618] sm:$0xff]
    %v960 = vld [vmem:[#allocation7 + $0x620] sm:$0xff]
    %v961 = vld [vmem:[#allocation7 + $0x628] sm:$0xff]
    %v962 = vld [vmem:[#allocation7 + $0x630] sm:$0xff]
    %v963 = vld [vmem:[#allocation7 + $0x638] sm:$0xff]
    %v964 = vld [vmem:[#allocation7 + $0x640] sm:$0xff]
    %v965 = vld [vmem:[#allocation7 + $0x648] sm:$0xff]
    %v966 = vld [vmem:[#allocation7 + $0x650] sm:$0xff]
    %v967 = vld [vmem:[#allocation7 + $0x658] sm:$0xff]
    %v968 = vld [vmem:[#allocation7 + $0x660] sm:$0xff]
    %v969 = vld [vmem:[#allocation7 + $0x668] sm:$0xff]
    %v970 = vld [vmem:[#allocation7 + $0x670] sm:$0xff]
    %v971 = vld [vmem:[#allocation7 + $0x678] sm:$0xff]
    %v972 = vld [vmem:[#allocation7 + $0x680] sm:$0xff]
    %v973 = vld [vmem:[#allocation7 + $0x688] sm:$0xff]
    %v974 = vld [vmem:[#allocation7 + $0x690] sm:$0xff]
    %v975 = vld [vmem:[#allocation7 + $0x698] sm:$0xff]
    %v976 = vld [vmem:[#allocation7 + $0x6a0] sm:$0xff]
    %v977 = vld [vmem:[#allocation7 + $0x6a8] sm:$0xff]
    %v978 = vld [vmem:[#allocation7 + $0x6b0] sm:$0xff]
    %v979 = vld [vmem:[#allocation7 + $0x6b8] sm:$0xff]
    %v980 = vld [vmem:[#allocation7 + $0x6c0] sm:$0xff]
    %v981 = vld [vmem:[#allocation7 + $0x6c8] sm:$0xff]
    %v982 = vld [vmem:[#allocation7 + $0x6d0] sm:$0xff]
    %v983 = vld [vmem:[#allocation7 + $0x6d8] sm:$0xff]
    %v984 = vld [vmem:[#allocation7 + $0x6e0] sm:$0xff]
    %v985 = vld [vmem:[#allocation7 + $0x6e8] sm:$0xff]
    %v986 = vld [vmem:[#allocation7 + $0x6f0] sm:$0xff]
    %v987 = vld [vmem:[#allocation7 + $0x6f8] sm:$0xff]
    %v988 = vld [vmem:[#allocation7 + $0x700] sm:$0xff]
    %v989 = vld [vmem:[#allocation7 + $0x708] sm:$0xff]
    %v990 = vld [vmem:[#allocation7 + $0x710] sm:$0xff]
    %v991 = vld [vmem:[#allocation7 + $0x718] sm:$0xff]
    %v992 = vld [vmem:[#allocation7 + $0x720] sm:$0xff]
    %v993 = vld [vmem:[#allocation7 + $0x728] sm:$0xff]
    %v994 = vld [vmem:[#allocation7 + $0x730] sm:$0xff]
    %v995 = vld [vmem:[#allocation7 + $0x738] sm:$0xff]
    %v996 = vld [vmem:[#allocation7 + $0x740] sm:$0xff]
    %v997 = vld [vmem:[#allocation7 + $0x748] sm:$0xff]
    %v998 = vld [vmem:[#allocation7 + $0x750] sm:$0xff]
    %v999 = vld [vmem:[#allocation7 + $0x758] sm:$0xff]
    %v1000 = vld [vmem:[#allocation7 + $0x760] sm:$0xff]
    %v1001 = vld [vmem:[#allocation7 + $0x768] sm:$0xff]
    %v1002 = vld [vmem:[#allocation7 + $0x770] sm:$0xff]
    %v1003 = vld [vmem:[#allocation7 + $0x778] sm:$0xff]
    %v1004 = vld [vmem:[#allocation7 + $0x780] sm:$0xff]
    %v1005 = vld [vmem:[#allocation7 + $0x788] sm:$0xff]
    %v1006 = vld [vmem:[#allocation7 + $0x790] sm:$0xff]
    %v1007 = vld [vmem:[#allocation7 + $0x798] sm:$0xff]
    %v1008 = vld [vmem:[#allocation7 + $0x7a0] sm:$0xff]
    %v1009 = vld [vmem:[#allocation7 + $0x7a8] sm:$0xff]
    %v1010 = vld [vmem:[#allocation7 + $0x7b0] sm:$0xff]
    %v1011 = vld [vmem:[#allocation7 + $0x7b8] sm:$0xff]
    %v1012 = vld [vmem:[#allocation7 + $0x7c0] sm:$0xff]
    %v1013 = vld [vmem:[#allocation7 + $0x7c8] sm:$0xff]
    %v1014 = vld [vmem:[#allocation7 + $0x7d0] sm:$0xff]
    %v1015 = vld [vmem:[#allocation7 + $0x7d8] sm:$0xff]
    %v1016 = vld [vmem:[#allocation7 + $0x7e0] sm:$0xff]
    %v1017 = vld [vmem:[#allocation7 + $0x7e8] sm:$0xff]
    %v1018 = vld [vmem:[#allocation7 + $0x7f0] sm:$0xff]
    %v1019 = vld [vmem:[#allocation7 + $0x7f8] sm:$0xff]
    %v1020 = vld [vmem:[#allocation8] sm:$0xff]
    %v1021 = vld [vmem:[#allocation8 + $0x8] sm:$0xff]
    %v1022 = vld [vmem:[#allocation8 + $0x10] sm:$0xff]
    %v1023 = vld [vmem:[#allocation8 + $0x18] sm:$0xff]
    %v1024 = vld [vmem:[#allocation8 + $0x20] sm:$0xff]
    %v1025 = vld [vmem:[#allocation8 + $0x28] sm:$0xff]
    %v1026 = vld [vmem:[#allocation8 + $0x30] sm:$0xff]
    %v1027 = vld [vmem:[#allocation8 + $0x38] sm:$0xff]
    %v1028 = vld [vmem:[#allocation8 + $0x40] sm:$0xff]
    %v1029 = vld [vmem:[#allocation8 + $0x48] sm:$0xff]
    %v1030 = vld [vmem:[#allocation8 + $0x50] sm:$0xff]
    %v1031 = vld [vmem:[#allocation8 + $0x58] sm:$0xff]
    %v1032 = vld [vmem:[#allocation8 + $0x60] sm:$0xff]
    %v1033 = vld [vmem:[#allocation8 + $0x68] sm:$0xff]
    %v1034 = vld [vmem:[#allocation8 + $0x70] sm:$0xff]
    %v1035 = vld [vmem:[#allocation8 + $0x78] sm:$0xff]
    %v1036 = vld [vmem:[#allocation8 + $0x80] sm:$0xff]
    %v1037 = vld [vmem:[#allocation8 + $0x88] sm:$0xff]
    %v1038 = vld [vmem:[#allocation8 + $0x90] sm:$0xff]
    %v1039 = vld [vmem:[#allocation8 + $0x98] sm:$0xff]
    %v1040 = vld [vmem:[#allocation8 + $0xa0] sm:$0xff]
    %v1041 = vld [vmem:[#allocation8 + $0xa8] sm:$0xff]
    %v1042 = vld [vmem:[#allocation8 + $0xb0] sm:$0xff]
    %v1043 = vld [vmem:[#allocation8 + $0xb8] sm:$0xff]
    %v1044 = vld [vmem:[#allocation8 + $0xc0] sm:$0xff]
    %v1045 = vld [vmem:[#allocation8 + $0xc8] sm:$0xff]
    %v1046 = vld [vmem:[#allocation8 + $0xd0] sm:$0xff]
    %v1047 = vld [vmem:[#allocation8 + $0xd8] sm:$0xff]
    %v1048 = vld [vmem:[#allocation8 + $0xe0] sm:$0xff]
    %v1049 = vld [vmem:[#allocation8 + $0xe8] sm:$0xff]
    %v1050 = vld [vmem:[#allocation8 + $0xf0] sm:$0xff]
    %v1051 = vld [vmem:[#allocation8 + $0xf8] sm:$0xff]
    %v1052 = vld [vmem:[#allocation8 + $0x100] sm:$0xff]
    %v1053 = vld [vmem:[#allocation8 + $0x108] sm:$0xff]
    %v1054 = vld [vmem:[#allocation8 + $0x110] sm:$0xff]
    %v1055 = vld [vmem:[#allocation8 + $0x118] sm:$0xff]
    %v1056 = vld [vmem:[#allocation8 + $0x120] sm:$0xff]
    %v1057 = vld [vmem:[#allocation8 + $0x128] sm:$0xff]
    %v1058 = vld [vmem:[#allocation8 + $0x130] sm:$0xff]
    %v1059 = vld [vmem:[#allocation8 + $0x138] sm:$0xff]
    %v1060 = vld [vmem:[#allocation8 + $0x140] sm:$0xff]
    %v1061 = vld [vmem:[#allocation8 + $0x148] sm:$0xff]
    %v1062 = vld [vmem:[#allocation8 + $0x150] sm:$0xff]
    %v1063 = vld [vmem:[#allocation8 + $0x158] sm:$0xff]
    %v1064 = vld [vmem:[#allocation8 + $0x160] sm:$0xff]
    %v1065 = vld [vmem:[#allocation8 + $0x168] sm:$0xff]
    %v1066 = vld [vmem:[#allocation8 + $0x170] sm:$0xff]
    %v1067 = vld [vmem:[#allocation8 + $0x178] sm:$0xff]
    %v1068 = vld [vmem:[#allocation8 + $0x180] sm:$0xff]
    %v1069 = vld [vmem:[#allocation8 + $0x188] sm:$0xff]
    %v1070 = vld [vmem:[#allocation8 + $0x190] sm:$0xff]
    %v1071 = vld [vmem:[#allocation8 + $0x198] sm:$0xff]
    %v1072 = vld [vmem:[#allocation8 + $0x1a0] sm:$0xff]
    %v1073 = vld [vmem:[#allocation8 + $0x1a8] sm:$0xff]
    %v1074 = vld [vmem:[#allocation8 + $0x1b0] sm:$0xff]
    %v1075 = vld [vmem:[#allocation8 + $0x1b8] sm:$0xff]
    %v1076 = vld [vmem:[#allocation8 + $0x1c0] sm:$0xff]
    %v1077 = vld [vmem:[#allocation8 + $0x1c8] sm:$0xff]
    %v1078 = vld [vmem:[#allocation8 + $0x1d0] sm:$0xff]
    %v1079 = vld [vmem:[#allocation8 + $0x1d8] sm:$0xff]
    %v1080 = vld [vmem:[#allocation8 + $0x1e0] sm:$0xff]
    %v1081 = vld [vmem:[#allocation8 + $0x1e8] sm:$0xff]
    %v1082 = vld [vmem:[#allocation8 + $0x1f0] sm:$0xff]
    %v1083 = vld [vmem:[#allocation8 + $0x1f8] sm:$0xff]
    %v1084 = vld [vmem:[#allocation8 + $0x200] sm:$0xff]
    %v1085 = vld [vmem:[#allocation8 + $0x208] sm:$0xff]
    %v1086 = vld [vmem:[#allocation8 + $0x210] sm:$0xff]
    %v1087 = vld [vmem:[#allocation8 + $0x218] sm:$0xff]
    %v1088 = vld [vmem:[#allocation8 + $0x220] sm:$0xff]
    %v1089 = vld [vmem:[#allocation8 + $0x228] sm:$0xff]
    %v1090 = vld [vmem:[#allocation8 + $0x230] sm:$0xff]
    %v1091 = vld [vmem:[#allocation8 + $0x238] sm:$0xff]
    %v1092 = vld [vmem:[#allocation8 + $0x240] sm:$0xff]
    %v1093 = vld [vmem:[#allocation8 + $0x248] sm:$0xff]
    %v1094 = vld [vmem:[#allocation8 + $0x250] sm:$0xff]
    %v1095 = vld [vmem:[#allocation8 + $0x258] sm:$0xff]
    %v1096 = vld [vmem:[#allocation8 + $0x260] sm:$0xff]
    %v1097 = vld [vmem:[#allocation8 + $0x268] sm:$0xff]
    %v1098 = vld [vmem:[#allocation8 + $0x270] sm:$0xff]
    %v1099 = vld [vmem:[#allocation8 + $0x278] sm:$0xff]
    %v1100 = vld [vmem:[#allocation8 + $0x280] sm:$0xff]
    %v1101 = vld [vmem:[#allocation8 + $0x288] sm:$0xff]
    %v1102 = vld [vmem:[#allocation8 + $0x290] sm:$0xff]
    %v1103 = vld [vmem:[#allocation8 + $0x298] sm:$0xff]
    %v1104 = vld [vmem:[#allocation8 + $0x2a0] sm:$0xff]
    %v1105 = vld [vmem:[#allocation8 + $0x2a8] sm:$0xff]
    %v1106 = vld [vmem:[#allocation8 + $0x2b0] sm:$0xff]
    %v1107 = vld [vmem:[#allocation8 + $0x2b8] sm:$0xff]
    %v1108 = vld [vmem:[#allocation8 + $0x2c0] sm:$0xff]
    %v1109 = vld [vmem:[#allocation8 + $0x2c8] sm:$0xff]
    %v1110 = vld [vmem:[#allocation8 + $0x2d0] sm:$0xff]
    %v1111 = vld [vmem:[#allocation8 + $0x2d8] sm:$0xff]
    %v1112 = vld [vmem:[#allocation8 + $0x2e0] sm:$0xff]
    %v1113 = vld [vmem:[#allocation8 + $0x2e8] sm:$0xff]
    %v1114 = vld [vmem:[#allocation8 + $0x2f0] sm:$0xff]
    %v1115 = vld [vmem:[#allocation8 + $0x2f8] sm:$0xff]
    %v1116 = vld [vmem:[#allocation8 + $0x300] sm:$0xff]
    %v1117 = vld [vmem:[#allocation8 + $0x308] sm:$0xff]
    %v1118 = vld [vmem:[#allocation8 + $0x310] sm:$0xff]
    %v1119 = vld [vmem:[#allocation8 + $0x318] sm:$0xff]
    %v1120 = vld [vmem:[#allocation8 + $0x320] sm:$0xff]
    %v1121 = vld [vmem:[#allocation8 + $0x328] sm:$0xff]
    %v1122 = vld [vmem:[#allocation8 + $0x330] sm:$0xff]
    %v1123 = vld [vmem:[#allocation8 + $0x338] sm:$0xff]
    %v1124 = vld [vmem:[#allocation8 + $0x340] sm:$0xff]
    %v1125 = vld [vmem:[#allocation8 + $0x348] sm:$0xff]
    %v1126 = vld [vmem:[#allocation8 + $0x350] sm:$0xff]
    %v1127 = vld [vmem:[#allocation8 + $0x358] sm:$0xff]
    %v1128 = vld [vmem:[#allocation8 + $0x360] sm:$0xff]
    %v1129 = vld [vmem:[#allocation8 + $0x368] sm:$0xff]
    %v1130 = vld [vmem:[#allocation8 + $0x370] sm:$0xff]
    %v1131 = vld [vmem:[#allocation8 + $0x378] sm:$0xff]
    %v1132 = vld [vmem:[#allocation8 + $0x380] sm:$0xff]
    %v1133 = vld [vmem:[#allocation8 + $0x388] sm:$0xff]
    %v1134 = vld [vmem:[#allocation8 + $0x390] sm:$0xff]
    %v1135 = vld [vmem:[#allocation8 + $0x398] sm:$0xff]
    %v1136 = vld [vmem:[#allocation8 + $0x3a0] sm:$0xff]
    %v1137 = vld [vmem:[#allocation8 + $0x3a8] sm:$0xff]
    %v1138 = vld [vmem:[#allocation8 + $0x3b0] sm:$0xff]
    %v1139 = vld [vmem:[#allocation8 + $0x3b8] sm:$0xff]
    %v1140 = vld [vmem:[#allocation8 + $0x3c0] sm:$0xff]
    %v1141 = vld [vmem:[#allocation8 + $0x3c8] sm:$0xff]
    %v1142 = vld [vmem:[#allocation8 + $0x3d0] sm:$0xff]
    %v1143 = vld [vmem:[#allocation8 + $0x3d8] sm:$0xff]
    %v1144 = vld [vmem:[#allocation8 + $0x3e0] sm:$0xff]
    %v1145 = vld [vmem:[#allocation8 + $0x3e8] sm:$0xff]
    %v1146 = vld [vmem:[#allocation8 + $0x3f0] sm:$0xff]
    %v1147 = vld [vmem:[#allocation8 + $0x3f8] sm:$0xff]
    %v1148 = vld [vmem:[#allocation8 + $0x400] sm:$0xff]
    %v1149 = vld [vmem:[#allocation8 + $0x408] sm:$0xff]
    %v1150 = vld [vmem:[#allocation8 + $0x410] sm:$0xff]
    %v1151 = vld [vmem:[#allocation8 + $0x418] sm:$0xff]
    %v1152 = vld [vmem:[#allocation8 + $0x420] sm:$0xff]
    %v1153 = vld [vmem:[#allocation8 + $0x428] sm:$0xff]
    %v1154 = vld [vmem:[#allocation8 + $0x430] sm:$0xff]
    %v1155 = vld [vmem:[#allocation8 + $0x438] sm:$0xff]
    %v1156 = vld [vmem:[#allocation8 + $0x440] sm:$0xff]
    %v1157 = vld [vmem:[#allocation8 + $0x448] sm:$0xff]
    %v1158 = vld [vmem:[#allocation8 + $0x450] sm:$0xff]
    %v1159 = vld [vmem:[#allocation8 + $0x458] sm:$0xff]
    %v1160 = vld [vmem:[#allocation8 + $0x460] sm:$0xff]
    %v1161 = vld [vmem:[#allocation8 + $0x468] sm:$0xff]
    %v1162 = vld [vmem:[#allocation8 + $0x470] sm:$0xff]
    %v1163 = vld [vmem:[#allocation8 + $0x478] sm:$0xff]
    %v1164 = vld [vmem:[#allocation8 + $0x480] sm:$0xff]
    %v1165 = vld [vmem:[#allocation8 + $0x488] sm:$0xff]
    %v1166 = vld [vmem:[#allocation8 + $0x490] sm:$0xff]
    %v1167 = vld [vmem:[#allocation8 + $0x498] sm:$0xff]
    %v1168 = vld [vmem:[#allocation8 + $0x4a0] sm:$0xff]
    %v1169 = vld [vmem:[#allocation8 + $0x4a8] sm:$0xff]
    %v1170 = vld [vmem:[#allocation8 + $0x4b0] sm:$0xff]
    %v1171 = vld [vmem:[#allocation8 + $0x4b8] sm:$0xff]
    %v1172 = vld [vmem:[#allocation8 + $0x4c0] sm:$0xff]
    %v1173 = vld [vmem:[#allocation8 + $0x4c8] sm:$0xff]
    %v1174 = vld [vmem:[#allocation8 + $0x4d0] sm:$0xff]
    %v1175 = vld [vmem:[#allocation8 + $0x4d8] sm:$0xff]
    %v1176 = vld [vmem:[#allocation8 + $0x4e0] sm:$0xff]
    %v1177 = vld [vmem:[#allocation8 + $0x4e8] sm:$0xff]
    %v1178 = vld [vmem:[#allocation8 + $0x4f0] sm:$0xff]
    %v1179 = vld [vmem:[#allocation8 + $0x4f8] sm:$0xff]
    %v1180 = vld [vmem:[#allocation8 + $0x500] sm:$0xff]
    %v1181 = vld [vmem:[#allocation8 + $0x508] sm:$0xff]
    %v1182 = vld [vmem:[#allocation8 + $0x510] sm:$0xff]
    %v1183 = vld [vmem:[#allocation8 + $0x518] sm:$0xff]
    %v1184 = vld [vmem:[#allocation8 + $0x520] sm:$0xff]
    %v1185 = vld [vmem:[#allocation8 + $0x528] sm:$0xff]
    %v1186 = vld [vmem:[#allocation8 + $0x530] sm:$0xff]
    %v1187 = vld [vmem:[#allocation8 + $0x538] sm:$0xff]
    %v1188 = vld [vmem:[#allocation8 + $0x540] sm:$0xff]
    %v1189 = vld [vmem:[#allocation8 + $0x548] sm:$0xff]
    %v1190 = vld [vmem:[#allocation8 + $0x550] sm:$0xff]
    %v1191 = vld [vmem:[#allocation8 + $0x558] sm:$0xff]
    %v1192 = vld [vmem:[#allocation8 + $0x560] sm:$0xff]
    %v1193 = vld [vmem:[#allocation8 + $0x568] sm:$0xff]
    %v1194 = vld [vmem:[#allocation8 + $0x570] sm:$0xff]
    %v1195 = vld [vmem:[#allocation8 + $0x578] sm:$0xff]
    %v1196 = vld [vmem:[#allocation8 + $0x580] sm:$0xff]
    %v1197 = vld [vmem:[#allocation8 + $0x588] sm:$0xff]
    %v1198 = vld [vmem:[#allocation8 + $0x590] sm:$0xff]
    %v1199 = vld [vmem:[#allocation8 + $0x598] sm:$0xff]
    %v1200 = vld [vmem:[#allocation8 + $0x5a0] sm:$0xff]
    %v1201 = vld [vmem:[#allocation8 + $0x5a8] sm:$0xff]
    %v1202 = vld [vmem:[#allocation8 + $0x5b0] sm:$0xff]
    %v1203 = vld [vmem:[#allocation8 + $0x5b8] sm:$0xff]
    %v1204 = vld [vmem:[#allocation8 + $0x5c0] sm:$0xff]
    %v1205 = vld [vmem:[#allocation8 + $0x5c8] sm:$0xff]
    %v1206 = vld [vmem:[#allocation8 + $0x5d0] sm:$0xff]
    %v1207 = vld [vmem:[#allocation8 + $0x5d8] sm:$0xff]
    %v1208 = vld [vmem:[#allocation8 + $0x5e0] sm:$0xff]
    %v1209 = vld [vmem:[#allocation8 + $0x5e8] sm:$0xff]
    %v1210 = vld [vmem:[#allocation8 + $0x5f0] sm:$0xff]
    %v1211 = vld [vmem:[#allocation8 + $0x5f8] sm:$0xff]
    %v1212 = vld [vmem:[#allocation8 + $0x600] sm:$0xff]
    %v1213 = vld [vmem:[#allocation8 + $0x608] sm:$0xff]
    %v1214 = vld [vmem:[#allocation8 + $0x610] sm:$0xff]
    %v1215 = vld [vmem:[#allocation8 + $0x618] sm:$0xff]
    %v1216 = vld [vmem:[#allocation8 + $0x620] sm:$0xff]
    %v1217 = vld [vmem:[#allocation8 + $0x628] sm:$0xff]
    %v1218 = vld [vmem:[#allocation8 + $0x630] sm:$0xff]
    %v1219 = vld [vmem:[#allocation8 + $0x638] sm:$0xff]
    %v1220 = vld [vmem:[#allocation8 + $0x640] sm:$0xff]
    %v1221 = vld [vmem:[#allocation8 + $0x648] sm:$0xff]
    %v1222 = vld [vmem:[#allocation8 + $0x650] sm:$0xff]
    %v1223 = vld [vmem:[#allocation8 + $0x658] sm:$0xff]
    %v1224 = vld [vmem:[#allocation8 + $0x660] sm:$0xff]
    %v1225 = vld [vmem:[#allocation8 + $0x668] sm:$0xff]
    %v1226 = vld [vmem:[#allocation8 + $0x670] sm:$0xff]
    %v1227 = vld [vmem:[#allocation8 + $0x678] sm:$0xff]
    %v1228 = vld [vmem:[#allocation8 + $0x680] sm:$0xff]
    %v1229 = vld [vmem:[#allocation8 + $0x688] sm:$0xff]
    %v1230 = vld [vmem:[#allocation8 + $0x690] sm:$0xff]
    %v1231 = vld [vmem:[#allocation8 + $0x698] sm:$0xff]
    %v1232 = vld [vmem:[#allocation8 + $0x6a0] sm:$0xff]
    %v1233 = vld [vmem:[#allocation8 + $0x6a8] sm:$0xff]
    %v1234 = vld [vmem:[#allocation8 + $0x6b0] sm:$0xff]
    %v1235 = vld [vmem:[#allocation8 + $0x6b8] sm:$0xff]
    %v1236 = vld [vmem:[#allocation8 + $0x6c0] sm:$0xff]
    %v1237 = vld [vmem:[#allocation8 + $0x6c8] sm:$0xff]
    %v1238 = vld [vmem:[#allocation8 + $0x6d0] sm:$0xff]
    %v1239 = vld [vmem:[#allocation8 + $0x6d8] sm:$0xff]
    %v1240 = vld [vmem:[#allocation8 + $0x6e0] sm:$0xff]
    %v1241 = vld [vmem:[#allocation8 + $0x6e8] sm:$0xff]
    %v1242 = vld [vmem:[#allocation8 + $0x6f0] sm:$0xff]
    %v1243 = vld [vmem:[#allocation8 + $0x6f8] sm:$0xff]
    %v1244 = vld [vmem:[#allocation8 + $0x700] sm:$0xff]
    %v1245 = vld [vmem:[#allocation8 + $0x708] sm:$0xff]
    %v1246 = vld [vmem:[#allocation8 + $0x710] sm:$0xff]
    %v1247 = vld [vmem:[#allocation8 + $0x718] sm:$0xff]
    %v1248 = vld [vmem:[#allocation8 + $0x720] sm:$0xff]
    %v1249 = vld [vmem:[#allocation8 + $0x728] sm:$0xff]
    %v1250 = vld [vmem:[#allocation8 + $0x730] sm:$0xff]
    %v1251 = vld [vmem:[#allocation8 + $0x738] sm:$0xff]
    %v1252 = vld [vmem:[#allocation8 + $0x740] sm:$0xff]
    %v1253 = vld [vmem:[#allocation8 + $0x748] sm:$0xff]
    %v1254 = vld [vmem:[#allocation8 + $0x750] sm:$0xff]
    %v1255 = vld [vmem:[#allocation8 + $0x758] sm:$0xff]
    %v1256 = vld [vmem:[#allocation8 + $0x760] sm:$0xff]
    %v1257 = vld [vmem:[#allocation8 + $0x768] sm:$0xff]
    %v1258 = vld [vmem:[#allocation8 + $0x770] sm:$0xff]
    %v1259 = vld [vmem:[#allocation8 + $0x778] sm:$0xff]
    %v1260 = vld [vmem:[#allocation8 + $0x780] sm:$0xff]
    %v1261 = vld [vmem:[#allocation8 + $0x788] sm:$0xff]
    %v1262 = vld [vmem:[#allocation8 + $0x790] sm:$0xff]
    %v1263 = vld [vmem:[#allocation8 + $0x798] sm:$0xff]
    %v1264 = vld [vmem:[#allocation8 + $0x7a0] sm:$0xff]
    %v1265 = vld [vmem:[#allocation8 + $0x7a8] sm:$0xff]
    %v1266 = vld [vmem:[#allocation8 + $0x7b0] sm:$0xff]
    %v1267 = vld [vmem:[#allocation8 + $0x7b8] sm:$0xff]
    %v1268 = vld [vmem:[#allocation8 + $0x7c0] sm:$0xff]
    %v1269 = vld [vmem:[#allocation8 + $0x7c8] sm:$0xff]
    %v1270 = vld [vmem:[#allocation8 + $0x7d0] sm:$0xff]
    %v1271 = vld [vmem:[#allocation8 + $0x7d8] sm:$0xff]
    %v1272 = vld [vmem:[#allocation8 + $0x7e0] sm:$0xff]
    %v1273 = vld [vmem:[#allocation8 + $0x7e8] sm:$0xff]
    %v1274 = vld [vmem:[#allocation8 + $0x7f0] sm:$0xff]
    %v1275 = vld [vmem:[#allocation8 + $0x7f8] sm:$0xff]
    %v1276 = vld [vmem:[#allocation10] sm:$0xff]
    %v1277 = vld [vmem:[#allocation10 + $0x8] sm:$0xff]
    %v1278 = vld [vmem:[#allocation10 + $0x10] sm:$0xff]
    %v1279 = vld [vmem:[#allocation10 + $0x18] sm:$0xff]
    %v1280 = vld [vmem:[#allocation10 + $0x20] sm:$0xff]
    %v1281 = vld [vmem:[#allocation10 + $0x28] sm:$0xff]
    %v1282 = vld [vmem:[#allocation10 + $0x30] sm:$0xff]
    %v1283 = vld [vmem:[#allocation10 + $0x38] sm:$0xff]
    %v1284 = vld [vmem:[#allocation10 + $0x40] sm:$0xff]
    %v1285 = vld [vmem:[#allocation10 + $0x48] sm:$0xff]
    %v1286 = vld [vmem:[#allocation10 + $0x50] sm:$0xff]
    %v1287 = vld [vmem:[#allocation10 + $0x58] sm:$0xff]
    %v1288 = vld [vmem:[#allocation10 + $0x60] sm:$0xff]
    %v1289 = vld [vmem:[#allocation10 + $0x68] sm:$0xff]
    %v1290 = vld [vmem:[#allocation10 + $0x70] sm:$0xff]
    %v1291 = vld [vmem:[#allocation10 + $0x78] sm:$0xff]
    %v1292 = vld [vmem:[#allocation10 + $0x80] sm:$0xff]
    %v1293 = vld [vmem:[#allocation10 + $0x88] sm:$0xff]
    %v1294 = vld [vmem:[#allocation10 + $0x90] sm:$0xff]
    %v1295 = vld [vmem:[#allocation10 + $0x98] sm:$0xff]
    %v1296 = vld [vmem:[#allocation10 + $0xa0] sm:$0xff]
    %v1297 = vld [vmem:[#allocation10 + $0xa8] sm:$0xff]
    %v1298 = vld [vmem:[#allocation10 + $0xb0] sm:$0xff]
    %v1299 = vld [vmem:[#allocation10 + $0xb8] sm:$0xff]
    %v1300 = vld [vmem:[#allocation10 + $0xc0] sm:$0xff]
    %v1301 = vld [vmem:[#allocation10 + $0xc8] sm:$0xff]
    %v1302 = vld [vmem:[#allocation10 + $0xd0] sm:$0xff]
    %v1303 = vld [vmem:[#allocation10 + $0xd8] sm:$0xff]
    %v1304 = vld [vmem:[#allocation10 + $0xe0] sm:$0xff]
    %v1305 = vld [vmem:[#allocation10 + $0xe8] sm:$0xff]
    %v1306 = vld [vmem:[#allocation10 + $0xf0] sm:$0xff]
    %v1307 = vld [vmem:[#allocation10 + $0xf8] sm:$0xff]
    %v1308 = vld [vmem:[#allocation10 + $0x100] sm:$0xff]
    %v1309 = vld [vmem:[#allocation10 + $0x108] sm:$0xff]
    %v1310 = vld [vmem:[#allocation10 + $0x110] sm:$0xff]
    %v1311 = vld [vmem:[#allocation10 + $0x118] sm:$0xff]
    %v1312 = vld [vmem:[#allocation10 + $0x120] sm:$0xff]
    %v1313 = vld [vmem:[#allocation10 + $0x128] sm:$0xff]
    %v1314 = vld [vmem:[#allocation10 + $0x130] sm:$0xff]
    %v1315 = vld [vmem:[#allocation10 + $0x138] sm:$0xff]
    %v1316 = vld [vmem:[#allocation10 + $0x140] sm:$0xff]
    %v1317 = vld [vmem:[#allocation10 + $0x148] sm:$0xff]
    %v1318 = vld [vmem:[#allocation10 + $0x150] sm:$0xff]
    %v1319 = vld [vmem:[#allocation10 + $0x158] sm:$0xff]
    %v1320 = vld [vmem:[#allocation10 + $0x160] sm:$0xff]
    %v1321 = vld [vmem:[#allocation10 + $0x168] sm:$0xff]
    %v1322 = vld [vmem:[#allocation10 + $0x170] sm:$0xff]
    %v1323 = vld [vmem:[#allocation10 + $0x178] sm:$0xff]
    %v1324 = vld [vmem:[#allocation10 + $0x180] sm:$0xff]
    %v1325 = vld [vmem:[#allocation10 + $0x188] sm:$0xff]
    %v1326 = vld [vmem:[#allocation10 + $0x190] sm:$0xff]
    %v1327 = vld [vmem:[#allocation10 + $0x198] sm:$0xff]
    %v1328 = vld [vmem:[#allocation10 + $0x1a0] sm:$0xff]
    %v1329 = vld [vmem:[#allocation10 + $0x1a8] sm:$0xff]
    %v1330 = vld [vmem:[#allocation10 + $0x1b0] sm:$0xff]
    %v1331 = vld [vmem:[#allocation10 + $0x1b8] sm:$0xff]
    %v1332 = vld [vmem:[#allocation10 + $0x1c0] sm:$0xff]
    %v1333 = vld [vmem:[#allocation10 + $0x1c8] sm:$0xff]
    %v1334 = vld [vmem:[#allocation10 + $0x1d0] sm:$0xff]
    %v1335 = vld [vmem:[#allocation10 + $0x1d8] sm:$0xff]
    %v1336 = vld [vmem:[#allocation10 + $0x1e0] sm:$0xff]
    %v1337 = vld [vmem:[#allocation10 + $0x1e8] sm:$0xff]
    %v1338 = vld [vmem:[#allocation10 + $0x1f0] sm:$0xff]
    %v1339 = vld [vmem:[#allocation10 + $0x1f8] sm:$0xff]
    %v1340 = vld [vmem:[#allocation10 + $0x200] sm:$0xff]
    %v1341 = vld [vmem:[#allocation10 + $0x208] sm:$0xff]
    %v1342 = vld [vmem:[#allocation10 + $0x210] sm:$0xff]
    %v1343 = vld [vmem:[#allocation10 + $0x218] sm:$0xff]
    %v1344 = vld [vmem:[#allocation10 + $0x220] sm:$0xff]
    %v1345 = vld [vmem:[#allocation10 + $0x228] sm:$0xff]
    %v1346 = vld [vmem:[#allocation10 + $0x230] sm:$0xff]
    %v1347 = vld [vmem:[#allocation10 + $0x238] sm:$0xff]
    %v1348 = vld [vmem:[#allocation10 + $0x240] sm:$0xff]
    %v1349 = vld [vmem:[#allocation10 + $0x248] sm:$0xff]
    %v1350 = vld [vmem:[#allocation10 + $0x250] sm:$0xff]
    %v1351 = vld [vmem:[#allocation10 + $0x258] sm:$0xff]
    %v1352 = vld [vmem:[#allocation10 + $0x260] sm:$0xff]
    %v1353 = vld [vmem:[#allocation10 + $0x268] sm:$0xff]
    %v1354 = vld [vmem:[#allocation10 + $0x270] sm:$0xff]
    %v1355 = vld [vmem:[#allocation10 + $0x278] sm:$0xff]
    %v1356 = vld [vmem:[#allocation10 + $0x280] sm:$0xff]
    %v1357 = vld [vmem:[#allocation10 + $0x288] sm:$0xff]
    %v1358 = vld [vmem:[#allocation10 + $0x290] sm:$0xff]
    %v1359 = vld [vmem:[#allocation10 + $0x298] sm:$0xff]
    %v1360 = vld [vmem:[#allocation10 + $0x2a0] sm:$0xff]
    %v1361 = vld [vmem:[#allocation10 + $0x2a8] sm:$0xff]
    %v1362 = vld [vmem:[#allocation10 + $0x2b0] sm:$0xff]
    %v1363 = vld [vmem:[#allocation10 + $0x2b8] sm:$0xff]
    %v1364 = vld [vmem:[#allocation10 + $0x2c0] sm:$0xff]
    %v1365 = vld [vmem:[#allocation10 + $0x2c8] sm:$0xff]
    %v1366 = vld [vmem:[#allocation10 + $0x2d0] sm:$0xff]
    %v1367 = vld [vmem:[#allocation10 + $0x2d8] sm:$0xff]
    %v1368 = vld [vmem:[#allocation10 + $0x2e0] sm:$0xff]
    %v1369 = vld [vmem:[#allocation10 + $0x2e8] sm:$0xff]
    %v1370 = vld [vmem:[#allocation10 + $0x2f0] sm:$0xff]
    %v1371 = vld [vmem:[#allocation10 + $0x2f8] sm:$0xff]
    %v1372 = vld [vmem:[#allocation10 + $0x300] sm:$0xff]
    %v1373 = vld [vmem:[#allocation10 + $0x308] sm:$0xff]
    %v1374 = vld [vmem:[#allocation10 + $0x310] sm:$0xff]
    %v1375 = vld [vmem:[#allocation10 + $0x318] sm:$0xff]
    %v1376 = vld [vmem:[#allocation10 + $0x320] sm:$0xff]
    %v1377 = vld [vmem:[#allocation10 + $0x328] sm:$0xff]
    %v1378 = vld [vmem:[#allocation10 + $0x330] sm:$0xff]
    %v1379 = vld [vmem:[#allocation10 + $0x338] sm:$0xff]
    %v1380 = vld [vmem:[#allocation10 + $0x340] sm:$0xff]
    %v1381 = vld [vmem:[#allocation10 + $0x348] sm:$0xff]
    %v1382 = vld [vmem:[#allocation10 + $0x350] sm:$0xff]
    %v1383 = vld [vmem:[#allocation10 + $0x358] sm:$0xff]
    %v1384 = vld [vmem:[#allocation10 + $0x360] sm:$0xff]
    %v1385 = vld [vmem:[#allocation10 + $0x368] sm:$0xff]
    %v1386 = vld [vmem:[#allocation10 + $0x370] sm:$0xff]
    %v1387 = vld [vmem:[#allocation10 + $0x378] sm:$0xff]
    %v1388 = vld [vmem:[#allocation10 + $0x380] sm:$0xff]
    %v1389 = vld [vmem:[#allocation10 + $0x388] sm:$0xff]
    %v1390 = vld [vmem:[#allocation10 + $0x390] sm:$0xff]
    %v1391 = vld [vmem:[#allocation10 + $0x398] sm:$0xff]
    %v1392 = vld [vmem:[#allocation10 + $0x3a0] sm:$0xff]
    %v1393 = vld [vmem:[#allocation10 + $0x3a8] sm:$0xff]
    %v1394 = vld [vmem:[#allocation10 + $0x3b0] sm:$0xff]
    %v1395 = vld [vmem:[#allocation10 + $0x3b8] sm:$0xff]
    %v1396 = vld [vmem:[#allocation10 + $0x3c0] sm:$0xff]
    %v1397 = vld [vmem:[#allocation10 + $0x3c8] sm:$0xff]
    %v1398 = vld [vmem:[#allocation10 + $0x3d0] sm:$0xff]
    %v1399 = vld [vmem:[#allocation10 + $0x3d8] sm:$0xff]
    %v1400 = vld [vmem:[#allocation10 + $0x3e0] sm:$0xff]
    %v1401 = vld [vmem:[#allocation10 + $0x3e8] sm:$0xff]
    %v1402 = vld [vmem:[#allocation10 + $0x3f0] sm:$0xff]
    %v1403 = vld [vmem:[#allocation10 + $0x3f8] sm:$0xff]
    %v1404 = vld [vmem:[#allocation10 + $0x400] sm:$0xff]
    %v1405 = vld [vmem:[#allocation10 + $0x408] sm:$0xff]
    %v1406 = vld [vmem:[#allocation10 + $0x410] sm:$0xff]
    %v1407 = vld [vmem:[#allocation10 + $0x418] sm:$0xff]
    %v1408 = vld [vmem:[#allocation10 + $0x420] sm:$0xff]
    %v1409 = vld [vmem:[#allocation10 + $0x428] sm:$0xff]
    %v1410 = vld [vmem:[#allocation10 + $0x430] sm:$0xff]
    %v1411 = vld [vmem:[#allocation10 + $0x438] sm:$0xff]
    %v1412 = vld [vmem:[#allocation10 + $0x440] sm:$0xff]
    %v1413 = vld [vmem:[#allocation10 + $0x448] sm:$0xff]
    %v1414 = vld [vmem:[#allocation10 + $0x450] sm:$0xff]
    %v1415 = vld [vmem:[#allocation10 + $0x458] sm:$0xff]
    %v1416 = vld [vmem:[#allocation10 + $0x460] sm:$0xff]
    %v1417 = vld [vmem:[#allocation10 + $0x468] sm:$0xff]
    %v1418 = vld [vmem:[#allocation10 + $0x470] sm:$0xff]
    %v1419 = vld [vmem:[#allocation10 + $0x478] sm:$0xff]
    %v1420 = vld [vmem:[#allocation10 + $0x480] sm:$0xff]
    %v1421 = vld [vmem:[#allocation10 + $0x488] sm:$0xff]
    %v1422 = vld [vmem:[#allocation10 + $0x490] sm:$0xff]
    %v1423 = vld [vmem:[#allocation10 + $0x498] sm:$0xff]
    %v1424 = vld [vmem:[#allocation10 + $0x4a0] sm:$0xff]
    %v1425 = vld [vmem:[#allocation10 + $0x4a8] sm:$0xff]
    %v1426 = vld [vmem:[#allocation10 + $0x4b0] sm:$0xff]
    %v1427 = vld [vmem:[#allocation10 + $0x4b8] sm:$0xff]
    %v1428 = vld [vmem:[#allocation10 + $0x4c0] sm:$0xff]
    %v1429 = vld [vmem:[#allocation10 + $0x4c8] sm:$0xff]
    %v1430 = vld [vmem:[#allocation10 + $0x4d0] sm:$0xff]
    %v1431 = vld [vmem:[#allocation10 + $0x4d8] sm:$0xff]
    %v1432 = vld [vmem:[#allocation10 + $0x4e0] sm:$0xff]
    %v1433 = vld [vmem:[#allocation10 + $0x4e8] sm:$0xff]
    %v1434 = vld [vmem:[#allocation10 + $0x4f0] sm:$0xff]
    %v1435 = vld [vmem:[#allocation10 + $0x4f8] sm:$0xff]
    %v1436 = vld [vmem:[#allocation10 + $0x500] sm:$0xff]
    %v1437 = vld [vmem:[#allocation10 + $0x508] sm:$0xff]
    %v1438 = vld [vmem:[#allocation10 + $0x510] sm:$0xff]
    %v1439 = vld [vmem:[#allocation10 + $0x518] sm:$0xff]
    %v1440 = vld [vmem:[#allocation10 + $0x520] sm:$0xff]
    %v1441 = vld [vmem:[#allocation10 + $0x528] sm:$0xff]
    %v1442 = vld [vmem:[#allocation10 + $0x530] sm:$0xff]
    %v1443 = vld [vmem:[#allocation10 + $0x538] sm:$0xff]
    %v1444 = vld [vmem:[#allocation10 + $0x540] sm:$0xff]
    %v1445 = vld [vmem:[#allocation10 + $0x548] sm:$0xff]
    %v1446 = vld [vmem:[#allocation10 + $0x550] sm:$0xff]
    %v1447 = vld [vmem:[#allocation10 + $0x558] sm:$0xff]
    %v1448 = vld [vmem:[#allocation10 + $0x560] sm:$0xff]
    %v1449 = vld [vmem:[#allocation10 + $0x568] sm:$0xff]
    %v1450 = vld [vmem:[#allocation10 + $0x570] sm:$0xff]
    %v1451 = vld [vmem:[#allocation10 + $0x578] sm:$0xff]
    %v1452 = vld [vmem:[#allocation10 + $0x580] sm:$0xff]
    %v1453 = vld [vmem:[#allocation10 + $0x588] sm:$0xff]
    %v1454 = vld [vmem:[#allocation10 + $0x590] sm:$0xff]
    %v1455 = vld [vmem:[#allocation10 + $0x598] sm:$0xff]
    %v1456 = vld [vmem:[#allocation10 + $0x5a0] sm:$0xff]
    %v1457 = vld [vmem:[#allocation10 + $0x5a8] sm:$0xff]
    %v1458 = vld [vmem:[#allocation10 + $0x5b0] sm:$0xff]
    %v1459 = vld [vmem:[#allocation10 + $0x5b8] sm:$0xff]
    %v1460 = vld [vmem:[#allocation10 + $0x5c0] sm:$0xff]
    %v1461 = vld [vmem:[#allocation10 + $0x5c8] sm:$0xff]
    %v1462 = vld [vmem:[#allocation10 + $0x5d0] sm:$0xff]
    %v1463 = vld [vmem:[#allocation10 + $0x5d8] sm:$0xff]
    %v1464 = vld [vmem:[#allocation10 + $0x5e0] sm:$0xff]
    %v1465 = vld [vmem:[#allocation10 + $0x5e8] sm:$0xff]
    %v1466 = vld [vmem:[#allocation10 + $0x5f0] sm:$0xff]
    %v1467 = vld [vmem:[#allocation10 + $0x5f8] sm:$0xff]
    %v1468 = vld [vmem:[#allocation10 + $0x600] sm:$0xff]
    %v1469 = vld [vmem:[#allocation10 + $0x608] sm:$0xff]
    %v1470 = vld [vmem:[#allocation10 + $0x610] sm:$0xff]
    %v1471 = vld [vmem:[#allocation10 + $0x618] sm:$0xff]
    %v1472 = vld [vmem:[#allocation10 + $0x620] sm:$0xff]
    %v1473 = vld [vmem:[#allocation10 + $0x628] sm:$0xff]
    %v1474 = vld [vmem:[#allocation10 + $0x630] sm:$0xff]
    %v1475 = vld [vmem:[#allocation10 + $0x638] sm:$0xff]
    %v1476 = vld [vmem:[#allocation10 + $0x640] sm:$0xff]
    %v1477 = vld [vmem:[#allocation10 + $0x648] sm:$0xff]
    %v1478 = vld [vmem:[#allocation10 + $0x650] sm:$0xff]
    %v1479 = vld [vmem:[#allocation10 + $0x658] sm:$0xff]
    %v1480 = vld [vmem:[#allocation10 + $0x660] sm:$0xff]
    %v1481 = vld [vmem:[#allocation10 + $0x668] sm:$0xff]
    %v1482 = vld [vmem:[#allocation10 + $0x670] sm:$0xff]
    %v1483 = vld [vmem:[#allocation10 + $0x678] sm:$0xff]
    %v1484 = vld [vmem:[#allocation10 + $0x680] sm:$0xff]
    %v1485 = vld [vmem:[#allocation10 + $0x688] sm:$0xff]
    %v1486 = vld [vmem:[#allocation10 + $0x690] sm:$0xff]
    %v1487 = vld [vmem:[#allocation10 + $0x698] sm:$0xff]
    %v1488 = vld [vmem:[#allocation10 + $0x6a0] sm:$0xff]
    %v1489 = vld [vmem:[#allocation10 + $0x6a8] sm:$0xff]
    %v1490 = vld [vmem:[#allocation10 + $0x6b0] sm:$0xff]
    %v1491 = vld [vmem:[#allocation10 + $0x6b8] sm:$0xff]
    %v1492 = vld [vmem:[#allocation10 + $0x6c0] sm:$0xff]
    %v1493 = vld [vmem:[#allocation10 + $0x6c8] sm:$0xff]
    %v1494 = vld [vmem:[#allocation10 + $0x6d0] sm:$0xff]
    %v1495 = vld [vmem:[#allocation10 + $0x6d8] sm:$0xff]
    %v1496 = vld [vmem:[#allocation10 + $0x6e0] sm:$0xff]
    %v1497 = vld [vmem:[#allocation10 + $0x6e8] sm:$0xff]
    %v1498 = vld [vmem:[#allocation10 + $0x6f0] sm:$0xff]
    %v1499 = vld [vmem:[#allocation10 + $0x6f8] sm:$0xff]
    %v1500 = vld [vmem:[#allocation10 + $0x700] sm:$0xff]
    %v1501 = vld [vmem:[#allocation10 + $0x708] sm:$0xff]
    %v1502 = vld [vmem:[#allocation10 + $0x710] sm:$0xff]
    %v1503 = vld [vmem:[#allocation10 + $0x718] sm:$0xff]
    %v1504 = vld [vmem:[#allocation10 + $0x720] sm:$0xff]
    %v1505 = vld [vmem:[#allocation10 + $0x728] sm:$0xff]
    %v1506 = vld [vmem:[#allocation10 + $0x730] sm:$0xff]
    %v1507 = vld [vmem:[#allocation10 + $0x738] sm:$0xff]
    %v1508 = vld [vmem:[#allocation10 + $0x740] sm:$0xff]
    %v1509 = vld [vmem:[#allocation10 + $0x748] sm:$0xff]
    %v1510 = vld [vmem:[#allocation10 + $0x750] sm:$0xff]
    %v1511 = vld [vmem:[#allocation10 + $0x758] sm:$0xff]
    %v1512 = vld [vmem:[#allocation10 + $0x760] sm:$0xff]
    %v1513 = vld [vmem:[#allocation10 + $0x768] sm:$0xff]
    %v1514 = vld [vmem:[#allocation10 + $0x770] sm:$0xff]
    %v1515 = vld [vmem:[#allocation10 + $0x778] sm:$0xff]
    %v1516 = vld [vmem:[#allocation10 + $0x780] sm:$0xff]
    %v1517 = vld [vmem:[#allocation10 + $0x788] sm:$0xff]
    %v1518 = vld [vmem:[#allocation10 + $0x790] sm:$0xff]
    %v1519 = vld [vmem:[#allocation10 + $0x798] sm:$0xff]
    %v1520 = vld [vmem:[#allocation10 + $0x7a0] sm:$0xff]
    %v1521 = vld [vmem:[#allocation10 + $0x7a8] sm:$0xff]
    %v1522 = vld [vmem:[#allocation10 + $0x7b0] sm:$0xff]
    %v1523 = vld [vmem:[#allocation10 + $0x7b8] sm:$0xff]
    %v1524 = vld [vmem:[#allocation10 + $0x7c0] sm:$0xff]
    %v1525 = vld [vmem:[#allocation10 + $0x7c8] sm:$0xff]
    %v1526 = vld [vmem:[#allocation10 + $0x7d0] sm:$0xff]
    %v1527 = vld [vmem:[#allocation10 + $0x7d8] sm:$0xff]
    %v1528 = vld [vmem:[#allocation10 + $0x7e0] sm:$0xff]
    %v1529 = vld [vmem:[#allocation10 + $0x7e8] sm:$0xff]
    %v1530 = vld [vmem:[#allocation10 + $0x7f0] sm:$0xff]
    %v1531 = vld [vmem:[#allocation10 + $0x7f8] sm:$0xff]
    %v1532 = vld [vmem:[%s6] sm:$0xff]
    %v1534 = vlaneseq
    %v1535 = vshrl.u32 %v1534, 7
    %v1536 = vsub.s32 0, %v1535
    %v1537 = vrot.slane %v1532, %v1536
    %v1538 = vlaneseq
    %v1539 = vshrl.u32 %v1538, 7
    %v1540 = vsub.s32 1, %v1539
    %v1541 = vrot.slane %v1532, %v1540
    %v1542 = vlaneseq
    %v1543 = vshrl.u32 %v1542, 7
    %v1544 = vsub.s32 2, %v1543
    %v1545 = vrot.slane %v1532, %v1544
    %v1546 = vlaneseq
    %v1547 = vshrl.u32 %v1546, 7
    %v1548 = vsub.s32 3, %v1547
    %v1549 = vrot.slane %v1532, %v1548
    %v1550 = vlaneseq
    %v1551 = vshrl.u32 %v1550, 7
    %v1552 = vsub.s32 4, %v1551
    %v1553 = vrot.slane %v1532, %v1552
    %v1554 = vlaneseq
    %v1555 = vshrl.u32 %v1554, 7
    %v1556 = vsub.s32 5, %v1555
    %v1557 = vrot.slane %v1532, %v1556
    %v1558 = vlaneseq
    %v1559 = vshrl.u32 %v1558, 7
    %v1560 = vsub.s32 6, %v1559
    %v1561 = vrot.slane %v1532, %v1560
    %v1562 = vlaneseq
    %v1563 = vshrl.u32 %v1562, 7
    %v1564 = vsub.s32 7, %v1563
    %v1565 = vrot.slane %v1532, %v1564
    %1574 = vmatprep.subr.mxu0 %v765
    %1575 = vmatpush1.msra.mxu0 %v764
    %1576 = vmatprep.subr.mxu0 %v773
    %1577 = vmatpush1.msra.mxu0 %v772
    %1578 = vmatprep.subr.mxu0 %v781
    %1579 = vmatpush1.msra.mxu0 %v780
    %1580 = vmatprep.subr.mxu0 %v789
    %1581 = vmatpush1.msra.mxu0 %v788
    %1582 = vmatprep.subr.mxu0 %v797
    %1583 = vmatpush1.msra.mxu0 %v796
    %1584 = vmatprep.subr.mxu0 %v805
    %1585 = vmatpush1.msra.mxu0 %v804
    %1586 = vmatprep.subr.mxu0 %v813
    %1587 = vmatpush1.msra.mxu0 %v812
    %1588 = vmatprep.subr.mxu0 %v821
    %1589 = vmatpush1.msra.mxu0 %v820
    %1590 = vmatprep.subr.mxu0 %v829
    %1591 = vmatpush1.msra.mxu0 %v828
    %1592 = vmatprep.subr.mxu0 %v837
    %1593 = vmatpush1.msra.mxu0 %v836
    %1594 = vmatprep.subr.mxu0 %v845
    %1595 = vmatpush1.msra.mxu0 %v844
    %1596 = vmatprep.subr.mxu0 %v853
    %1597 = vmatpush1.msra.mxu0 %v852
    %1598 = vmatprep.subr.mxu0 %v861
    %1599 = vmatpush1.msra.mxu0 %v860
    %1600 = vmatprep.subr.mxu0 %v869
    %1601 = vmatpush1.msra.mxu0 %v868
    %1602 = vmatprep.subr.mxu0 %v877
    %1603 = vmatpush1.msra.mxu0 %v876
    %1604 = vmatprep.subr.mxu0 %v885
    %1605 = vmatpush1.msra.mxu0 %v884
    %1606 = vmatprep.subr.mxu0 %v893
    %1607 = vmatpush1.msra.mxu0 %v892
    %1608 = vmatprep.subr.mxu0 %v901
    %1609 = vmatpush1.msra.mxu0 %v900
    %1610 = vmatprep.subr.mxu0 %v909
    %1611 = vmatpush1.msra.mxu0 %v908
    %1612 = vmatprep.subr.mxu0 %v917
    %1613 = vmatpush1.msra.mxu0 %v916
    %1614 = vmatprep.subr.mxu0 %v925
    %1615 = vmatpush1.msra.mxu0 %v924
    %1616 = vmatprep.subr.mxu0 %v933
    %1617 = vmatpush1.msra.mxu0 %v932
    %1618 = vmatprep.subr.mxu0 %v941
    %1619 = vmatpush1.msra.mxu0 %v940
    %1620 = vmatprep.subr.mxu0 %v949
    %1621 = vmatpush1.msra.mxu0 %v948
    %1622 = vmatprep.subr.mxu0 %v957
    %1623 = vmatpush1.msra.mxu0 %v956
    %1624 = vmatprep.subr.mxu0 %v965
    %1625 = vmatpush1.msra.mxu0 %v964
    %1626 = vmatprep.subr.mxu0 %v973
    %1627 = vmatpush1.msra.mxu0 %v972
    %1628 = vmatprep.subr.mxu0 %v981
    %1629 = vmatpush1.msra.mxu0 %v980
    %1630 = vmatprep.subr.mxu0 %v989
    %1631 = vmatpush1.msra.mxu0 %v988
    %1632 = vmatprep.subr.mxu0 %v997
    %1633 = vmatpush1.msra.mxu0 %v996
    %1634 = vmatprep.subr.mxu0 %v1005
    %1635 = vmatpush1.msra.mxu0 %v1004
    %1636 = vmatprep.subr.mxu0 %v1013
    %1637 = vmatpush1.msra.mxu0 %v1012
    %1638 = vmatprep.mubr.f32.mxu0 0.0
    %1639 = vmatmul.mubr.f32.gmra.mrb[0].mxu0 0.0
    %v1640 = vpop.f32.mrb[0].mxu0
    %v1641 = vadd.f32 0.0, %v1640
    %v1642 = vpop.f32.mrb[0].mxu0
    %v1643 = vadd.f32 0.0, %v1642
    %1644 = vdwg.mxu0
    %1645 = vmatprep.subr.mxu0 %v767
    %1646 = vmatpush1.msra.mxu0 %v766
    %1647 = vmatprep.subr.mxu0 %v775
    %1648 = vmatpush1.msra.mxu0 %v774
    %1649 = vmatprep.subr.mxu0 %v783
    %1650 = vmatpush1.msra.mxu0 %v782
    %1651 = vmatprep.subr.mxu0 %v791
    %1652 = vmatpush1.msra.mxu0 %v790
    %1653 = vmatprep.subr.mxu0 %v799
    %1654 = vmatpush1.msra.mxu0 %v798
    %1655 = vmatprep.subr.mxu0 %v807
    %1656 = vmatpush1.msra.mxu0 %v806
    %1657 = vmatprep.subr.mxu0 %v815
    %1658 = vmatpush1.msra.mxu0 %v814
    %1659 = vmatprep.subr.mxu0 %v823
    %1660 = vmatpush1.msra.mxu0 %v822
    %1661 = vmatprep.subr.mxu0 %v831
    %1662 = vmatpush1.msra.mxu0 %v830
    %1663 = vmatprep.subr.mxu0 %v839
    %1664 = vmatpush1.msra.mxu0 %v838
    %1665 = vmatprep.subr.mxu0 %v847
    %1666 = vmatpush1.msra.mxu0 %v846
    %1667 = vmatprep.subr.mxu0 %v855
    %1668 = vmatpush1.msra.mxu0 %v854
    %1669 = vmatprep.subr.mxu0 %v863
    %1670 = vmatpush1.msra.mxu0 %v862
    %1671 = vmatprep.subr.mxu0 %v871
    %1672 = vmatpush1.msra.mxu0 %v870
    %1673 = vmatprep.subr.mxu0 %v879
    %1674 = vmatpush1.msra.mxu0 %v878
    %1675 = vmatprep.subr.mxu0 %v887
    %1676 = vmatpush1.msra.mxu0 %v886
    %1677 = vmatprep.subr.mxu0 %v895
    %1678 = vmatpush1.msra.mxu0 %v894
    %1679 = vmatprep.subr.mxu0 %v903
    %1680 = vmatpush1.msra.mxu0 %v902
    %1681 = vmatprep.subr.mxu0 %v911
    %1682 = vmatpush1.msra.mxu0 %v910
    %1683 = vmatprep.subr.mxu0 %v919
    %1684 = vmatpush1.msra.mxu0 %v918
    %1685 = vmatprep.subr.mxu0 %v927
    %1686 = vmatpush1.msra.mxu0 %v926
    %1687 = vmatprep.subr.mxu0 %v935
    %1688 = vmatpush1.msra.mxu0 %v934
    %1689 = vmatprep.subr.mxu0 %v943
    %1690 = vmatpush1.msra.mxu0 %v942
    %1691 = vmatprep.subr.mxu0 %v951
    %1692 = vmatpush1.msra.mxu0 %v950
    %1693 = vmatprep.subr.mxu0 %v959
    %1694 = vmatpush1.msra.mxu0 %v958
    %1695 = vmatprep.subr.mxu0 %v967
    %1696 = vmatpush1.msra.mxu0 %v966
    %1697 = vmatprep.subr.mxu0 %v975
    %1698 = vmatpush1.msra.mxu0 %v974
    %1699 = vmatprep.subr.mxu0 %v983
    %1700 = vmatpush1.msra.mxu0 %v982
    %1701 = vmatprep.subr.mxu0 %v991
    %1702 = vmatpush1.msra.mxu0 %v990
    %1703 = vmatprep.subr.mxu0 %v999
    %1704 = vmatpush1.msra.mxu0 %v998
    %1705 = vmatprep.subr.mxu0 %v1007
    %1706 = vmatpush1.msra.mxu0 %v1006
    %1707 = vmatprep.subr.mxu0 %v1015
    %1708 = vmatpush1.msra.mxu0 %v1014
    %1709 = vmatprep.mubr.f32.mxu0 0.0
    %1710 = vmatmul.mubr.f32.gmra.mrb[0].mxu0 0.0
    %v1711 = vpop.f32.mrb[0].mxu0
    %v1712 = vadd.f32 0.0, %v1711
    %v1713 = vpop.f32.mrb[0].mxu0
    %v1714 = vadd.f32 0.0, %v1713
    %1715 = vdwg.mxu0
    %1716 = vmatprep.subr.mxu0 %v769
    %1717 = vmatpush1.msra.mxu0 %v768
    %1718 = vmatprep.subr.mxu0 %v777
    %1719 = vmatpush1.msra.mxu0 %v776
    %1720 = vmatprep.subr.mxu0 %v785
    %1721 = vmatpush1.msra.mxu0 %v784
    %1722 = vmatprep.subr.mxu0 %v793
    %1723 = vmatpush1.msra.mxu0 %v792
    %1724 = vmatprep.subr.mxu0 %v801
    %1725 = vmatpush1.msra.mxu0 %v800
    %1726 = vmatprep.subr.mxu0 %v809
    %1727 = vmatpush1.msra.mxu0 %v808
    %1728 = vmatprep.subr.mxu0 %v817
    %1729 = vmatpush1.msra.mxu0 %v816
    %1730 = vmatprep.subr.mxu0 %v825
    %1731 = vmatpush1.msra.mxu0 %v824
    %1732 = vmatprep.subr.mxu0 %v833
    %1733 = vmatpush1.msra.mxu0 %v832
    %1734 = vmatprep.subr.mxu0 %v841
    %1735 = vmatpush1.msra.mxu0 %v840
    %1736 = vmatprep.subr.mxu0 %v849
    %1737 = vmatpush1.msra.mxu0 %v848
    %1738 = vmatprep.subr.mxu0 %v857
    %1739 = vmatpush1.msra.mxu0 %v856
    %1740 = vmatprep.subr.mxu0 %v865
    %1741 = vmatpush1.msra.mxu0 %v864
    %1742 = vmatprep.subr.mxu0 %v873
    %1743 = vmatpush1.msra.mxu0 %v872
    %1744 = vmatprep.subr.mxu0 %v881
    %1745 = vmatpush1.msra.mxu0 %v880
    %1746 = vmatprep.subr.mxu0 %v889
    %1747 = vmatpush1.msra.mxu0 %v888
    %1748 = vmatprep.subr.mxu0 %v897
    %1749 = vmatpush1.msra.mxu0 %v896
    %1750 = vmatprep.subr.mxu0 %v905
    %1751 = vmatpush1.msra.mxu0 %v904
    %1752 = vmatprep.subr.mxu0 %v913
    %1753 = vmatpush1.msra.mxu0 %v912
    %1754 = vmatprep.subr.mxu0 %v921
    %1755 = vmatpush1.msra.mxu0 %v920
    %1756 = vmatprep.subr.mxu0 %v929
    %1757 = vmatpush1.msra.mxu0 %v928
    %1758 = vmatprep.subr.mxu0 %v937
    %1759 = vmatpush1.msra.mxu0 %v936
    %1760 = vmatprep.subr.mxu0 %v945
    %1761 = vmatpush1.msra.mxu0 %v944
    %1762 = vmatprep.subr.mxu0 %v953
    %1763 = vmatpush1.msra.mxu0 %v952
    %1764 = vmatprep.subr.mxu0 %v961
    %1765 = vmatpush1.msra.mxu0 %v960
    %1766 = vmatprep.subr.mxu0 %v969
    %1767 = vmatpush1.msra.mxu0 %v968
    %1768 = vmatprep.subr.mxu0 %v977
    %1769 = vmatpush1.msra.mxu0 %v976
    %1770 = vmatprep.subr.mxu0 %v985
    %1771 = vmatpush1.msra.mxu0 %v984
    %1772 = vmatprep.subr.mxu0 %v993
    %1773 = vmatpush1.msra.mxu0 %v992
    %1774 = vmatprep.subr.mxu0 %v1001
    %1775 = vmatpush1.msra.mxu0 %v1000
    %1776 = vmatprep.subr.mxu0 %v1009
    %1777 = vmatpush1.msra.mxu0 %v1008
    %1778 = vmatprep.subr.mxu0 %v1017
    %1779 = vmatpush1.msra.mxu0 %v1016
    %1780 = vmatprep.mubr.f32.mxu0 0.0
    %1781 = vmatmul.mubr.f32.gmra.mrb[0].mxu0 0.0
    %v1782 = vpop.f32.mrb[0].mxu0
    %v1783 = vadd.f32 0.0, %v1782
    %v1784 = vpop.f32.mrb[0].mxu0
    %v1785 = vadd.f32 0.0, %v1784
    %1786 = vdwg.mxu0
    %1787 = vmatprep.subr.mxu0 %v771
    %1788 = vmatpush1.msra.mxu0 %v770
    %1789 = vmatprep.subr.mxu0 %v779
    %1790 = vmatpush1.msra.mxu0 %v778
    %1791 = vmatprep.subr.mxu0 %v787
    %1792 = vmatpush1.msra.mxu0 %v786
    %1793 = vmatprep.subr.mxu0 %v795
    %1794 = vmatpush1.msra.mxu0 %v794
    %1795 = vmatprep.subr.mxu0 %v803
    %1796 = vmatpush1.msra.mxu0 %v802
    %1797 = vmatprep.subr.mxu0 %v811
    %1798 = vmatpush1.msra.mxu0 %v810
    %1799 = vmatprep.subr.mxu0 %v819
    %1800 = vmatpush1.msra.mxu0 %v818
    %1801 = vmatprep.subr.mxu0 %v827
    %1802 = vmatpush1.msra.mxu0 %v826
    %1803 = vmatprep.subr.mxu0 %v835
    %1804 = vmatpush1.msra.mxu0 %v834
    %1805 = vmatprep.subr.mxu0 %v843
    %1806 = vmatpush1.msra.mxu0 %v842
    %1807 = vmatprep.subr.mxu0 %v851
    %1808 = vmatpush1.msra.mxu0 %v850
    %1809 = vmatprep.subr.mxu0 %v859
    %1810 = vmatpush1.msra.mxu0 %v858
    %1811 = vmatprep.subr.mxu0 %v867
    %1812 = vmatpush1.msra.mxu0 %v866
    %1813 = vmatprep.subr.mxu0 %v875
    %1814 = vmatpush1.msra.mxu0 %v874
    %1815 = vmatprep.subr.mxu0 %v883
    %1816 = vmatpush1.msra.mxu0 %v882
    %1817 = vmatprep.subr.mxu0 %v891
    %1818 = vmatpush1.msra.mxu0 %v890
    %1819 = vmatprep.subr.mxu0 %v899
    %1820 = vmatpush1.msra.mxu0 %v898
    %1821 = vmatprep.subr.mxu0 %v907
    %1822 = vmatpush1.msra.mxu0 %v906
    %1823 = vmatprep.subr.mxu0 %v915
    %1824 = vmatpush1.msra.mxu0 %v914
    %1825 = vmatprep.subr.mxu0 %v923
    %1826 = vmatpush1.msra.mxu0 %v922
    %1827 = vmatprep.subr.mxu0 %v931
    %1828 = vmatpush1.msra.mxu0 %v930
    %1829 = vmatprep.subr.mxu0 %v939
    %1830 = vmatpush1.msra.mxu0 %v938
    %1831 = vmatprep.subr.mxu0 %v947
    %1832 = vmatpush1.msra.mxu0 %v946
    %1833 = vmatprep.subr.mxu0 %v955
    %1834 = vmatpush1.msra.mxu0 %v954
    %1835 = vmatprep.subr.mxu0 %v963
    %1836 = vmatpush1.msra.mxu0 %v962
    %1837 = vmatprep.subr.mxu0 %v971
    %1838 = vmatpush1.msra.mxu0 %v970
    %1839 = vmatprep.subr.mxu0 %v979
    %1840 = vmatpush1.msra.mxu0 %v978
    %1841 = vmatprep.subr.mxu0 %v987
    %1842 = vmatpush1.msra.mxu0 %v986
    %1843 = vmatprep.subr.mxu0 %v995
    %1844 = vmatpush1.msra.mxu0 %v994
    %1845 = vmatprep.subr.mxu0 %v1003
    %1846 = vmatpush1.msra.mxu0 %v1002
    %1847 = vmatprep.subr.mxu0 %v1011
    %1848 = vmatpush1.msra.mxu0 %v1010
    %1849 = vmatprep.subr.mxu0 %v1019
    %1850 = vmatpush1.msra.mxu0 %v1018
    %1851 = vmatprep.mubr.f32.mxu0 0.0
    %1852 = vmatmul.mubr.f32.gmra.mrb[0].mxu0 0.0
    %v1853 = vpop.f32.mrb[0].mxu0
    %v1854 = vadd.f32 0.0, %v1853
    %v1855 = vpop.f32.mrb[0].mxu0
    %v1856 = vadd.f32 0.0, %v1855
    %1857 = vdwg.mxu0
    %v1858 = vadd.f32 %v379, %v1641
    %v1859 = vadd.f32 %v381, %v1643
    %v1860 = vadd.f32 %v492, %v1712
    %v1861 = vadd.f32 %v494, %v1714
    %v1862 = vadd.f32 %v605, %v1783
    %v1863 = vadd.f32 %v607, %v1785
    %v1864 = vadd.f32 %v718, %v1854
    %v1865 = vadd.f32 %v720, %v1856
    %v1866 = vxor.u32 %v1858, 2147483648
    %v1867 = vxor.u32 %v1859, 2147483648
    %v1868 = vmul.f32 %v1866, 1.442695
    %v1869 = vpow.pop %v1868
    %v1870 = vmul.f32 %v1867, 1.442695
    %v1871 = vpow.pop %v1870
    %v1872 = vadd.f32 %v1869, 1.0
    %v1873 = vadd.f32 %v1871, 1.0
    %v1874 = vrcp.pop %v1872
    %v1875 = vmul.f32 1.0, %v1874
    %v1876 = vrcp.pop %v1873
    %v1877 = vmul.f32 1.0, %v1876
    %v1878 = vxor.u32 %v1860, 2147483648
    %v1879 = vxor.u32 %v1861, 2147483648
    %v1880 = vmul.f32 %v1878, 1.442695
    %v1881 = vpow.pop %v1880
    %v1882 = vmul.f32 %v1879, 1.442695
    %v1883 = vpow.pop %v1882
    %v1884 = vadd.f32 %v1881, 1.0
    %v1885 = vadd.f32 %v1883, 1.0
    %v1886 = vrcp.pop %v1884
    %v1887 = vmul.f32 1.0, %v1886
    %v1888 = vrcp.pop %v1885
    %v1889 = vmul.f32 1.0, %v1888
    %v1890 = vtanh.pop %v1862
    %v1891 = vtanh.pop %v1863
    %v1892 = vxor.u32 %v1864, 2147483648
    %v1893 = vxor.u32 %v1865, 2147483648
    %v1894 = vmul.f32 %v1892, 1.442695
    %v1895 = vpow.pop %v1894
    %v1896 = vmul.f32 %v1893, 1.442695
    %v1897 = vpow.pop %v1896
    %v1898 = vadd.f32 %v1895, 1.0
    %v1899 = vadd.f32 %v1897, 1.0
    %v1900 = vrcp.pop %v1898
    %v1901 = vmul.f32 1.0, %v1900
    %v1902 = vrcp.pop %v1899
    %v1903 = vmul.f32 1.0, %v1902
    %v1904 = vmul.f32 %v1887, 0.0
    %v1905 = vmul.f32 %v1889, 0.0
    %v1906 = vmul.f32 %v1875, %v1890
    %v1907 = vmul.f32 %v1877, %v1891
    %v1908 = vadd.f32 %v1904, %v1906
    %v1909 = vadd.f32 %v1905, %v1907
    %v1910 = vtanh.pop %v1908
    %v1911 = vtanh.pop %v1909
    %v1912 = vmul.f32 %v1901, %v1910
    %v1913 = vmul.f32 %v1903, %v1911
    %1914 = vmatprep.subr.mxu0 %v1021
    %1915 = vmatpush1.msra.mxu0 %v1020
    %1916 = vmatprep.subr.mxu0 %v1029
    %1917 = vmatpush1.msra.mxu0 %v1028
    %1918 = vmatprep.subr.mxu0 %v1037
    %1919 = vmatpush1.msra.mxu0 %v1036
    %1920 = vmatprep.subr.mxu0 %v1045
    %1921 = vmatpush1.msra.mxu0 %v1044
    %1922 = vmatprep.subr.mxu0 %v1053
    %1923 = vmatpush1.msra.mxu0 %v1052
    %1924 = vmatprep.subr.mxu0 %v1061
    %1925 = vmatpush1.msra.mxu0 %v1060
    %1926 = vmatprep.subr.mxu0 %v1069
    %1927 = vmatpush1.msra.mxu0 %v1068
    %1928 = vmatprep.subr.mxu0 %v1077
    %1929 = vmatpush1.msra.mxu0 %v1076
    %1930 = vmatprep.subr.mxu0 %v1085
    %1931 = vmatpush1.msra.mxu0 %v1084
    %1932 = vmatprep.subr.mxu0 %v1093
    %1933 = vmatpush1.msra.mxu0 %v1092
    %1934 = vmatprep.subr.mxu0 %v1101
    %1935 = vmatpush1.msra.mxu0 %v1100
    %1936 = vmatprep.subr.mxu0 %v1109
    %1937 = vmatpush1.msra.mxu0 %v1108
    %1938 = vmatprep.subr.mxu0 %v1117
    %1939 = vmatpush1.msra.mxu0 %v1116
    %1940 = vmatprep.subr.mxu0 %v1125
    %1941 = vmatpush1.msra.mxu0 %v1124
    %1942 = vmatprep.subr.mxu0 %v1133
    %1943 = vmatpush1.msra.mxu0 %v1132
    %1944 = vmatprep.subr.mxu0 %v1141
    %1945 = vmatpush1.msra.mxu0 %v1140
    %1946 = vmatprep.subr.mxu0 %v1149
    %1947 = vmatpush1.msra.mxu0 %v1148
    %1948 = vmatprep.subr.mxu0 %v1157
    %1949 = vmatpush1.msra.mxu0 %v1156
    %1950 = vmatprep.subr.mxu0 %v1165
    %1951 = vmatpush1.msra.mxu0 %v1164
    %1952 = vmatprep.subr.mxu0 %v1173
    %1953 = vmatpush1.msra.mxu0 %v1172
    %1954 = vmatprep.subr.mxu0 %v1181
    %1955 = vmatpush1.msra.mxu0 %v1180
    %1956 = vmatprep.subr.mxu0 %v1189
    %1957 = vmatpush1.msra.mxu0 %v1188
    %1958 = vmatprep.subr.mxu0 %v1197
    %1959 = vmatpush1.msra.mxu0 %v1196
    %1960 = vmatprep.subr.mxu0 %v1205
    %1961 = vmatpush1.msra.mxu0 %v1204
    %1962 = vmatprep.subr.mxu0 %v1213
    %1963 = vmatpush1.msra.mxu0 %v1212
    %1964 = vmatprep.subr.mxu0 %v1221
    %1965 = vmatpush1.msra.mxu0 %v1220
    %1966 = vmatprep.subr.mxu0 %v1229
    %1967 = vmatpush1.msra.mxu0 %v1228
    %1968 = vmatprep.subr.mxu0 %v1237
    %1969 = vmatpush1.msra.mxu0 %v1236
    %1970 = vmatprep.subr.mxu0 %v1245
    %1971 = vmatpush1.msra.mxu0 %v1244
    %1972 = vmatprep.subr.mxu0 %v1253
    %1973 = vmatpush1.msra.mxu0 %v1252
    %1974 = vmatprep.subr.mxu0 %v1261
    %1975 = vmatpush1.msra.mxu0 %v1260
    %1976 = vmatprep.subr.mxu0 %v1269
    %1977 = vmatpush1.msra.mxu0 %v1268
    %1978 = vmatprep.mubr.f32.mxu0 %v1913
    %1979 = vmatmul.mubr.f32.gmra.mrb[0].mxu0 %v1912
    %v1980 = vpop.f32.mrb[0].mxu0
    %v1981 = vadd.f32 %v1537, %v1980
    %v1982 = vpop.f32.mrb[0].mxu0
    %v1983 = vadd.f32 %v1541, %v1982
    %1984 = vdwg.mxu0
    %1985 = vmatprep.subr.mxu0 %v1023
    %1986 = vmatpush1.msra.mxu0 %v1022
    %1987 = vmatprep.subr.mxu0 %v1031
    %1988 = vmatpush1.msra.mxu0 %v1030
    %1989 = vmatprep.subr.mxu0 %v1039
    %1990 = vmatpush1.msra.mxu0 %v1038
    %1991 = vmatprep.subr.mxu0 %v1047
    %1992 = vmatpush1.msra.mxu0 %v1046
    %1993 = vmatprep.subr.mxu0 %v1055
    %1994 = vmatpush1.msra.mxu0 %v1054
    %1995 = vmatprep.subr.mxu0 %v1063
    %1996 = vmatpush1.msra.mxu0 %v1062
    %1997 = vmatprep.subr.mxu0 %v1071
    %1998 = vmatpush1.msra.mxu0 %v1070
    %1999 = vmatprep.subr.mxu0 %v1079
    %2000 = vmatpush1.msra.mxu0 %v1078
    %2001 = vmatprep.subr.mxu0 %v1087
    %2002 = vmatpush1.msra.mxu0 %v1086
    %2003 = vmatprep.subr.mxu0 %v1095
    %2004 = vmatpush1.msra.mxu0 %v1094
    %2005 = vmatprep.subr.mxu0 %v1103
    %2006 = vmatpush1.msra.mxu0 %v1102
    %2007 = vmatprep.subr.mxu0 %v1111
    %2008 = vmatpush1.msra.mxu0 %v1110
    %2009 = vmatprep.subr.mxu0 %v1119
    %2010 = vmatpush1.msra.mxu0 %v1118
    %2011 = vmatprep.subr.mxu0 %v1127
    %2012 = vmatpush1.msra.mxu0 %v1126
    %2013 = vmatprep.subr.mxu0 %v1135
    %2014 = vmatpush1.msra.mxu0 %v1134
    %2015 = vmatprep.subr.mxu0 %v1143
    %2016 = vmatpush1.msra.mxu0 %v1142
    %2017 = vmatprep.subr.mxu0 %v1151
    %2018 = vmatpush1.msra.mxu0 %v1150
    %2019 = vmatprep.subr.mxu0 %v1159
    %2020 = vmatpush1.msra.mxu0 %v1158
    %2021 = vmatprep.subr.mxu0 %v1167
    %2022 = vmatpush1.msra.mxu0 %v1166
    %2023 = vmatprep.subr.mxu0 %v1175
    %2024 = vmatpush1.msra.mxu0 %v1174
    %2025 = vmatprep.subr.mxu0 %v1183
    %2026 = vmatpush1.msra.mxu0 %v1182
    %2027 = vmatprep.subr.mxu0 %v1191
    %2028 = vmatpush1.msra.mxu0 %v1190
    %2029 = vmatprep.subr.mxu0 %v1199
    %2030 = vmatpush1.msra.mxu0 %v1198
    %2031 = vmatprep.subr.mxu0 %v1207
    %2032 = vmatpush1.msra.mxu0 %v1206
    %2033 = vmatprep.subr.mxu0 %v1215
    %2034 = vmatpush1.msra.mxu0 %v1214
    %2035 = vmatprep.subr.mxu0 %v1223
    %2036 = vmatpush1.msra.mxu0 %v1222
    %2037 = vmatprep.subr.mxu0 %v1231
    %2038 = vmatpush1.msra.mxu0 %v1230
    %2039 = vmatprep.subr.mxu0 %v1239
    %2040 = vmatpush1.msra.mxu0 %v1238
    %2041 = vmatprep.subr.mxu0 %v1247
    %2042 = vmatpush1.msra.mxu0 %v1246
    %2043 = vmatprep.subr.mxu0 %v1255
    %2044 = vmatpush1.msra.mxu0 %v1254
    %2045 = vmatprep.subr.mxu0 %v1263
    %2046 = vmatpush1.msra.mxu0 %v1262
    %2047 = vmatprep.subr.mxu0 %v1271
    %2048 = vmatpush1.msra.mxu0 %v1270
    %2049 = vmatprep.mubr.f32.mxu0 %v1913
    %2050 = vmatmul.mubr.f32.gmra.mrb[0].mxu0 %v1912
    %v2051 = vpop.f32.mrb[0].mxu0
    %v2052 = vadd.f32 %v1545, %v2051
    %v2053 = vpop.f32.mrb[0].mxu0
    %v2054 = vadd.f32 %v1549, %v2053
    %2055 = vdwg.mxu0
    %2056 = vmatprep.subr.mxu0 %v1025
    %2057 = vmatpush1.msra.mxu0 %v1024
    %2058 = vmatprep.subr.mxu0 %v1033
    %2059 = vmatpush1.msra.mxu0 %v1032
    %2060 = vmatprep.subr.mxu0 %v1041
    %2061 = vmatpush1.msra.mxu0 %v1040
    %2062 = vmatprep.subr.mxu0 %v1049
    %2063 = vmatpush1.msra.mxu0 %v1048
    %2064 = vmatprep.subr.mxu0 %v1057
    %2065 = vmatpush1.msra.mxu0 %v1056
    %2066 = vmatprep.subr.mxu0 %v1065
    %2067 = vmatpush1.msra.mxu0 %v1064
    %2068 = vmatprep.subr.mxu0 %v1073
    %2069 = vmatpush1.msra.mxu0 %v1072
    %2070 = vmatprep.subr.mxu0 %v1081
    %2071 = vmatpush1.msra.mxu0 %v1080
    %2072 = vmatprep.subr.mxu0 %v1089
    %2073 = vmatpush1.msra.mxu0 %v1088
    %2074 = vmatprep.subr.mxu0 %v1097
    %2075 = vmatpush1.msra.mxu0 %v1096
    %2076 = vmatprep.subr.mxu0 %v1105
    %2077 = vmatpush1.msra.mxu0 %v1104
    %2078 = vmatprep.subr.mxu0 %v1113
    %2079 = vmatpush1.msra.mxu0 %v1112
    %2080 = vmatprep.subr.mxu0 %v1121
    %2081 = vmatpush1.msra.mxu0 %v1120
    %2082 = vmatprep.subr.mxu0 %v1129
    %2083 = vmatpush1.msra.mxu0 %v1128
    %2084 = vmatprep.subr.mxu0 %v1137
    %2085 = vmatpush1.msra.mxu0 %v1136
    %2086 = vmatprep.subr.mxu0 %v1145
    %2087 = vmatpush1.msra.mxu0 %v1144
    %2088 = vmatprep.subr.mxu0 %v1153
    %2089 = vmatpush1.msra.mxu0 %v1152
    %2090 = vmatprep.subr.mxu0 %v1161
    %2091 = vmatpush1.msra.mxu0 %v1160
    %2092 = vmatprep.subr.mxu0 %v1169
    %2093 = vmatpush1.msra.mxu0 %v1168
    %2094 = vmatprep.subr.mxu0 %v1177
    %2095 = vmatpush1.msra.mxu0 %v1176
    %2096 = vmatprep.subr.mxu0 %v1185
    %2097 = vmatpush1.msra.mxu0 %v1184
    %2098 = vmatprep.subr.mxu0 %v1193
    %2099 = vmatpush1.msra.mxu0 %v1192
    %2100 = vmatprep.subr.mxu0 %v1201
    %2101 = vmatpush1.msra.mxu0 %v1200
    %2102 = vmatprep.subr.mxu0 %v1209
    %2103 = vmatpush1.msra.mxu0 %v1208
    %2104 = vmatprep.subr.mxu0 %v1217
    %2105 = vmatpush1.msra.mxu0 %v1216
    %2106 = vmatprep.subr.mxu0 %v1225
    %2107 = vmatpush1.msra.mxu0 %v1224
    %2108 = vmatprep.subr.mxu0 %v1233
    %2109 = vmatpush1.msra.mxu0 %v1232
    %2110 = vmatprep.subr.mxu0 %v1241
    %2111 = vmatpush1.msra.mxu0 %v1240
    %2112 = vmatprep.subr.mxu0 %v1249
    %2113 = vmatpush1.msra.mxu0 %v1248
    %2114 = vmatprep.subr.mxu0 %v1257
    %2115 = vmatpush1.msra.mxu0 %v1256
    %2116 = vmatprep.subr.mxu0 %v1265
    %2117 = vmatpush1.msra.mxu0 %v1264
    %2118 = vmatprep.subr.mxu0 %v1273
    %2119 = vmatpush1.msra.mxu0 %v1272
    %2120 = vmatprep.mubr.f32.mxu0 %v1913
    %2121 = vmatmul.mubr.f32.gmra.mrb[0].mxu0 %v1912
    %v2122 = vpop.f32.mrb[0].mxu0
    %v2123 = vadd.f32 %v1553, %v2122
    %v2124 = vpop.f32.mrb[0].mxu0
    %v2125 = vadd.f32 %v1557, %v2124
    %2126 = vdwg.mxu0
    %2127 = vmatprep.subr.mxu0 %v1027
    %2128 = vmatpush1.msra.mxu0 %v1026
    %2129 = vmatprep.subr.mxu0 %v1035
    %2130 = vmatpush1.msra.mxu0 %v1034
    %2131 = vmatprep.subr.mxu0 %v1043
    %2132 = vmatpush1.msra.mxu0 %v1042
    %2133 = vmatprep.subr.mxu0 %v1051
    %2134 = vmatpush1.msra.mxu0 %v1050
    %2135 = vmatprep.subr.mxu0 %v1059
    %2136 = vmatpush1.msra.mxu0 %v1058
    %2137 = vmatprep.subr.mxu0 %v1067
    %2138 = vmatpush1.msra.mxu0 %v1066
    %2139 = vmatprep.subr.mxu0 %v1075
    %2140 = vmatpush1.msra.mxu0 %v1074
    %2141 = vmatprep.subr.mxu0 %v1083
    %2142 = vmatpush1.msra.mxu0 %v1082
    %2143 = vmatprep.subr.mxu0 %v1091
    %2144 = vmatpush1.msra.mxu0 %v1090
    %2145 = vmatprep.subr.mxu0 %v1099
    %2146 = vmatpush1.msra.mxu0 %v1098
    %2147 = vmatprep.subr.mxu0 %v1107
    %2148 = vmatpush1.msra.mxu0 %v1106
    %2149 = vmatprep.subr.mxu0 %v1115
    %2150 = vmatpush1.msra.mxu0 %v1114
    %2151 = vmatprep.subr.mxu0 %v1123
    %2152 = vmatpush1.msra.mxu0 %v1122
    %2153 = vmatprep.subr.mxu0 %v1131
    %2154 = vmatpush1.msra.mxu0 %v1130
    %2155 = vmatprep.subr.mxu0 %v1139
    %2156 = vmatpush1.msra.mxu0 %v1138
    %2157 = vmatprep.subr.mxu0 %v1147
    %2158 = vmatpush1.msra.mxu0 %v1146
    %2159 = vmatprep.subr.mxu0 %v1155
    %2160 = vmatpush1.msra.mxu0 %v1154
    %2161 = vmatprep.subr.mxu0 %v1163
    %2162 = vmatpush1.msra.mxu0 %v1162
    %2163 = vmatprep.subr.mxu0 %v1171
    %2164 = vmatpush1.msra.mxu0 %v1170
    %2165 = vmatprep.subr.mxu0 %v1179
    %2166 = vmatpush1.msra.mxu0 %v1178
    %2167 = vmatprep.subr.mxu0 %v1187
    %2168 = vmatpush1.msra.mxu0 %v1186
    %2169 = vmatprep.subr.mxu0 %v1195
    %2170 = vmatpush1.msra.mxu0 %v1194
    %2171 = vmatprep.subr.mxu0 %v1203
    %2172 = vmatpush1.msra.mxu0 %v1202
    %2173 = vmatprep.subr.mxu0 %v1211
    %2174 = vmatpush1.msra.mxu0 %v1210
    %2175 = vmatprep.subr.mxu0 %v1219
    %2176 = vmatpush1.msra.mxu0 %v1218
    %2177 = vmatprep.subr.mxu0 %v1227
    %2178 = vmatpush1.msra.mxu0 %v1226
    %2179 = vmatprep.subr.mxu0 %v1235
    %2180 = vmatpush1.msra.mxu0 %v1234
    %2181 = vmatprep.subr.mxu0 %v1243
    %2182 = vmatpush1.msra.mxu0 %v1242
    %2183 = vmatprep.subr.mxu0 %v1251
    %2184 = vmatpush1.msra.mxu0 %v1250
    %2185 = vmatprep.subr.mxu0 %v1259
    %2186 = vmatpush1.msra.mxu0 %v1258
    %2187 = vmatprep.subr.mxu0 %v1267
    %2188 = vmatpush1.msra.mxu0 %v1266
    %2189 = vmatprep.subr.mxu0 %v1275
    %2190 = vmatpush1.msra.mxu0 %v1274
    %2191 = vmatprep.mubr.f32.mxu0 %v1913
    %2192 = vmatmul.mubr.f32.gmra.mrb[0].mxu0 %v1912
    %v2193 = vpop.f32.mrb[0].mxu0
    %v2194 = vadd.f32 %v1561, %v2193
    %v2195 = vpop.f32.mrb[0].mxu0
    %v2196 = vadd.f32 %v1565, %v2195
    %2197 = vdwg.mxu0
    %v2198 = vxor.u32 %v1981, 2147483648
    %v2199 = vxor.u32 %v1983, 2147483648
    %v2200 = vmul.f32 %v2198, 1.442695
    %v2201 = vpow.pop %v2200
    %v2202 = vmul.f32 %v2199, 1.442695
    %v2203 = vpow.pop %v2202
    %v2204 = vadd.f32 %v2201, 1.0
    %v2205 = vadd.f32 %v2203, 1.0
    %v2206 = vrcp.pop %v2204
    %v2207 = vmul.f32 1.0, %v2206
    %v2208 = vrcp.pop %v2205
    %v2209 = vmul.f32 1.0, %v2208
    %v2210 = vxor.u32 %v2052, 2147483648
    %v2211 = vxor.u32 %v2054, 2147483648
    %v2212 = vmul.f32 %v2210, 1.442695
    %v2213 = vpow.pop %v2212
    %v2214 = vmul.f32 %v2211, 1.442695
    %v2215 = vpow.pop %v2214
    %v2216 = vadd.f32 %v2213, 1.0
    %v2217 = vadd.f32 %v2215, 1.0
    %v2218 = vrcp.pop %v2216
    %v2219 = vmul.f32 1.0, %v2218
    %v2220 = vrcp.pop %v2217
    %v2221 = vmul.f32 1.0, %v2220
    %v2222 = vtanh.pop %v2123
    %v2223 = vtanh.pop %v2125
    %v2224 = vxor.u32 %v2194, 2147483648
    %v2225 = vxor.u32 %v2196, 2147483648
    %v2226 = vmul.f32 %v2224, 1.442695
    %v2227 = vpow.pop %v2226
    %v2228 = vmul.f32 %v2225, 1.442695
    %v2229 = vpow.pop %v2228
    %v2230 = vadd.f32 %v2227, 1.0
    %v2231 = vadd.f32 %v2229, 1.0
    %v2232 = vrcp.pop %v2230
    %v2233 = vmul.f32 1.0, %v2232
    %v2234 = vrcp.pop %v2231
    %v2235 = vmul.f32 1.0, %v2234
    %v2236 = vmul.f32 %v2219, 0.0
    %v2237 = vmul.f32 %v2221, 0.0
    %v2238 = vmul.f32 %v2207, %v2222
    %v2239 = vmul.f32 %v2209, %v2223
    %v2240 = vadd.f32 %v2236, %v2238
    %v2241 = vadd.f32 %v2237, %v2239
    %v2242 = vtanh.pop %v2240
    %v2243 = vtanh.pop %v2241
    %v2244 = vmul.f32 %v2233, %v2242
    %v2245 = vmul.f32 %v2235, %v2243
    %2246 = vmatprep.subr.mxu0 %v1277
    %2247 = vmatpush1.msra.mxu0 %v1276
    %2248 = vmatprep.subr.mxu0 %v1285
    %2249 = vmatpush1.msra.mxu0 %v1284
    %2250 = vmatprep.subr.mxu0 %v1293
    %2251 = vmatpush1.msra.mxu0 %v1292
    %2252 = vmatprep.subr.mxu0 %v1301
    %2253 = vmatpush1.msra.mxu0 %v1300
    %2254 = vmatprep.subr.mxu0 %v1309
    %2255 = vmatpush1.msra.mxu0 %v1308
    %2256 = vmatprep.subr.mxu0 %v1317
    %2257 = vmatpush1.msra.mxu0 %v1316
    %2258 = vmatprep.subr.mxu0 %v1325
    %2259 = vmatpush1.msra.mxu0 %v1324
    %2260 = vmatprep.subr.mxu0 %v1333
    %2261 = vmatpush1.msra.mxu0 %v1332
    %2262 = vmatprep.subr.mxu0 %v1341
    %2263 = vmatpush1.msra.mxu0 %v1340
    %2264 = vmatprep.subr.mxu0 %v1349
    %2265 = vmatpush1.msra.mxu0 %v1348
    %2266 = vmatprep.subr.mxu0 %v1357
    %2267 = vmatpush1.msra.mxu0 %v1356
    %2268 = vmatprep.subr.mxu0 %v1365
    %2269 = vmatpush1.msra.mxu0 %v1364
    %2270 = vmatprep.subr.mxu0 %v1373
    %2271 = vmatpush1.msra.mxu0 %v1372
    %2272 = vmatprep.subr.mxu0 %v1381
    %2273 = vmatpush1.msra.mxu0 %v1380
    %2274 = vmatprep.subr.mxu0 %v1389
    %2275 = vmatpush1.msra.mxu0 %v1388
    %2276 = vmatprep.subr.mxu0 %v1397
    %2277 = vmatpush1.msra.mxu0 %v1396
    %2278 = vmatprep.subr.mxu0 %v1405
    %2279 = vmatpush1.msra.mxu0 %v1404
    %2280 = vmatprep.subr.mxu0 %v1413
    %2281 = vmatpush1.msra.mxu0 %v1412
    %2282 = vmatprep.subr.mxu0 %v1421
    %2283 = vmatpush1.msra.mxu0 %v1420
    %2284 = vmatprep.subr.mxu0 %v1429
    %2285 = vmatpush1.msra.mxu0 %v1428
    %2286 = vmatprep.subr.mxu0 %v1437
    %2287 = vmatpush1.msra.mxu0 %v1436
    %2288 = vmatprep.subr.mxu0 %v1445
    %2289 = vmatpush1.msra.mxu0 %v1444
    %2290 = vmatprep.subr.mxu0 %v1453
    %2291 = vmatpush1.msra.mxu0 %v1452
    %2292 = vmatprep.subr.mxu0 %v1461
    %2293 = vmatpush1.msra.mxu0 %v1460
    %2294 = vmatprep.subr.mxu0 %v1469
    %2295 = vmatpush1.msra.mxu0 %v1468
    %2296 = vmatprep.subr.mxu0 %v1477
    %2297 = vmatpush1.msra.mxu0 %v1476
    %2298 = vmatprep.subr.mxu0 %v1485
    %2299 = vmatpush1.msra.mxu0 %v1484
    %2300 = vmatprep.subr.mxu0 %v1493
    %2301 = vmatpush1.msra.mxu0 %v1492
    %2302 = vmatprep.subr.mxu0 %v1501
    %2303 = vmatpush1.msra.mxu0 %v1500
    %2304 = vmatprep.subr.mxu0 %v1509
    %2305 = vmatpush1.msra.mxu0 %v1508
    %2306 = vmatprep.subr.mxu0 %v1517
    %2307 = vmatpush1.msra.mxu0 %v1516
    %2308 = vmatprep.subr.mxu0 %v1525
    %2309 = vmatpush1.msra.mxu0 %v1524
    %2310 = vmatprep.mubr.f32.mxu0 %v2245
    %2311 = vmatmul.mubr.f32.gmra.mrb[0].mxu0 %v2244
    %v2312 = vpop.f32.mrb[0].mxu0
    %v2313 = vadd.f32 %v1537, %v2312
    %v2314 = vpop.f32.mrb[0].mxu0
    %v2315 = vadd.f32 %v1541, %v2314
    %2316 = vdwg.mxu0
    %2317 = vmatprep.subr.mxu0 %v1279
    %2318 = vmatpush1.msra.mxu0 %v1278
    %2319 = vmatprep.subr.mxu0 %v1287
    %2320 = vmatpush1.msra.mxu0 %v1286
    %2321 = vmatprep.subr.mxu0 %v1295
    %2322 = vmatpush1.msra.mxu0 %v1294
    %2323 = vmatprep.subr.mxu0 %v1303
    %2324 = vmatpush1.msra.mxu0 %v1302
    %2325 = vmatprep.subr.mxu0 %v1311
    %2326 = vmatpush1.msra.mxu0 %v1310
    %2327 = vmatprep.subr.mxu0 %v1319
    %2328 = vmatpush1.msra.mxu0 %v1318
    %2329 = vmatprep.subr.mxu0 %v1327
    %2330 = vmatpush1.msra.mxu0 %v1326
    %2331 = vmatprep.subr.mxu0 %v1335
    %2332 = vmatpush1.msra.mxu0 %v1334
    %2333 = vmatprep.subr.mxu0 %v1343
    %2334 = vmatpush1.msra.mxu0 %v1342
    %2335 = vmatprep.subr.mxu0 %v1351
    %2336 = vmatpush1.msra.mxu0 %v1350
    %2337 = vmatprep.subr.mxu0 %v1359
    %2338 = vmatpush1.msra.mxu0 %v1358
    %2339 = vmatprep.subr.mxu0 %v1367
    %2340 = vmatpush1.msra.mxu0 %v1366
    %2341 = vmatprep.subr.mxu0 %v1375
    %2342 = vmatpush1.msra.mxu0 %v1374
    %2343 = vmatprep.subr.mxu0 %v1383
    %2344 = vmatpush1.msra.mxu0 %v1382
    %2345 = vmatprep.subr.mxu0 %v1391
    %2346 = vmatpush1.msra.mxu0 %v1390
    %2347 = vmatprep.subr.mxu0 %v1399
    %2348 = vmatpush1.msra.mxu0 %v1398
    %2349 = vmatprep.subr.mxu0 %v1407
    %2350 = vmatpush1.msra.mxu0 %v1406
    %2351 = vmatprep.subr.mxu0 %v1415
    %2352 = vmatpush1.msra.mxu0 %v1414
    %2353 = vmatprep.subr.mxu0 %v1423
    %2354 = vmatpush1.msra.mxu0 %v1422
    %2355 = vmatprep.subr.mxu0 %v1431
    %2356 = vmatpush1.msra.mxu0 %v1430
    %2357 = vmatprep.subr.mxu0 %v1439
    %2358 = vmatpush1.msra.mxu0 %v1438
    %2359 = vmatprep.subr.mxu0 %v1447
    %2360 = vmatpush1.msra.mxu0 %v1446
    %2361 = vmatprep.subr.mxu0 %v1455
    %2362 = vmatpush1.msra.mxu0 %v1454
    %2363 = vmatprep.subr.mxu0 %v1463
    %2364 = vmatpush1.msra.mxu0 %v1462
    %2365 = vmatprep.subr.mxu0 %v1471
    %2366 = vmatpush1.msra.mxu0 %v1470
    %2367 = vmatprep.subr.mxu0 %v1479
    %2368 = vmatpush1.msra.mxu0 %v1478
    %2369 = vmatprep.subr.mxu0 %v1487
    %2370 = vmatpush1.msra.mxu0 %v1486
    %2371 = vmatprep.subr.mxu0 %v1495
    %2372 = vmatpush1.msra.mxu0 %v1494
    %2373 = vmatprep.subr.mxu0 %v1503
    %2374 = vmatpush1.msra.mxu0 %v1502
    %2375 = vmatprep.subr.mxu0 %v1511
    %2376 = vmatpush1.msra.mxu0 %v1510
    %2377 = vmatprep.subr.mxu0 %v1519
    %2378 = vmatpush1.msra.mxu0 %v1518
    %2379 = vmatprep.subr.mxu0 %v1527
    %2380 = vmatpush1.msra.mxu0 %v1526
    %2381 = vmatprep.mubr.f32.mxu0 %v2245
    %2382 = vmatmul.mubr.f32.gmra.mrb[0].mxu0 %v2244
    %v2383 = vpop.f32.mrb[0].mxu0
    %v2384 = vadd.f32 %v1545, %v2383
    %v2385 = vpop.f32.mrb[0].mxu0
    %v2386 = vadd.f32 %v1549, %v2385
    %2387 = vdwg.mxu0
    %2388 = vmatprep.subr.mxu0 %v1281
    %2389 = vmatpush1.msra.mxu0 %v1280
    %2390 = vmatprep.subr.mxu0 %v1289
    %2391 = vmatpush1.msra.mxu0 %v1288
    %2392 = vmatprep.subr.mxu0 %v1297
    %2393 = vmatpush1.msra.mxu0 %v1296
    %2394 = vmatprep.subr.mxu0 %v1305
    %2395 = vmatpush1.msra.mxu0 %v1304
    %2396 = vmatprep.subr.mxu0 %v1313
    %2397 = vmatpush1.msra.mxu0 %v1312
    %2398 = vmatprep.subr.mxu0 %v1321
    %2399 = vmatpush1.msra.mxu0 %v1320
    %2400 = vmatprep.subr.mxu0 %v1329
    %2401 = vmatpush1.msra.mxu0 %v1328
    %2402 = vmatprep.subr.mxu0 %v1337
    %2403 = vmatpush1.msra.mxu0 %v1336
    %2404 = vmatprep.subr.mxu0 %v1345
    %2405 = vmatpush1.msra.mxu0 %v1344
    %2406 = vmatprep.subr.mxu0 %v1353
    %2407 = vmatpush1.msra.mxu0 %v1352
    %2408 = vmatprep.subr.mxu0 %v1361
    %2409 = vmatpush1.msra.mxu0 %v1360
    %2410 = vmatprep.subr.mxu0 %v1369
    %2411 = vmatpush1.msra.mxu0 %v1368
    %2412 = vmatprep.subr.mxu0 %v1377
    %2413 = vmatpush1.msra.mxu0 %v1376
    %2414 = vmatprep.subr.mxu0 %v1385
    %2415 = vmatpush1.msra.mxu0 %v1384
    %2416 = vmatprep.subr.mxu0 %v1393
    %2417 = vmatpush1.msra.mxu0 %v1392
    %2418 = vmatprep.subr.mxu0 %v1401
    %2419 = vmatpush1.msra.mxu0 %v1400
    %2420 = vmatprep.subr.mxu0 %v1409
    %2421 = vmatpush1.msra.mxu0 %v1408
    %2422 = vmatprep.subr.mxu0 %v1417
    %2423 = vmatpush1.msra.mxu0 %v1416
    %2424 = vmatprep.subr.mxu0 %v1425
    %2425 = vmatpush1.msra.mxu0 %v1424
    %2426 = vmatprep.subr.mxu0 %v1433
    %2427 = vmatpush1.msra.mxu0 %v1432
    %2428 = vmatprep.subr.mxu0 %v1441
    %2429 = vmatpush1.msra.mxu0 %v1440
    %2430 = vmatprep.subr.mxu0 %v1449
    %2431 = vmatpush1.msra.mxu0 %v1448
    %2432 = vmatprep.subr.mxu0 %v1457
    %2433 = vmatpush1.msra.mxu0 %v1456
    %2434 = vmatprep.subr.mxu0 %v1465
    %2435 = vmatpush1.msra.mxu0 %v1464
    %2436 = vmatprep.subr.mxu0 %v1473
    %2437 = vmatpush1.msra.mxu0 %v1472
    %2438 = vmatprep.subr.mxu0 %v1481
    %2439 = vmatpush1.msra.mxu0 %v1480
    %2440 = vmatprep.subr.mxu0 %v1489
    %2441 = vmatpush1.msra.mxu0 %v1488
    %2442 = vmatprep.subr.mxu0 %v1497
    %2443 = vmatpush1.msra.mxu0 %v1496
    %2444 = vmatprep.subr.mxu0 %v1505
    %2445 = vmatpush1.msra.mxu0 %v1504
    %2446 = vmatprep.subr.mxu0 %v1513
    %2447 = vmatpush1.msra.mxu0 %v1512
    %2448 = vmatprep.subr.mxu0 %v1521
    %2449 = vmatpush1.msra.mxu0 %v1520
    %2450 = vmatprep.subr.mxu0 %v1529
    %2451 = vmatpush1.msra.mxu0 %v1528
    %2452 = vmatprep.mubr.f32.mxu0 %v2245
    %2453 = vmatmul.mubr.f32.gmra.mrb[0].mxu0 %v2244
    %v2454 = vpop.f32.mrb[0].mxu0
    %v2455 = vadd.f32 %v1553, %v2454
    %v2456 = vpop.f32.mrb[0].mxu0
    %v2457 = vadd.f32 %v1557, %v2456
    %2458 = vdwg.mxu0
    %2459 = vmatprep.subr.mxu0 %v1283
    %2460 = vmatpush1.msra.mxu0 %v1282
    %2461 = vmatprep.subr.mxu0 %v1291
    %2462 = vmatpush1.msra.mxu0 %v1290
    %2463 = vmatprep.subr.mxu0 %v1299
    %2464 = vmatpush1.msra.mxu0 %v1298
    %2465 = vmatprep.subr.mxu0 %v1307
    %2466 = vmatpush1.msra.mxu0 %v1306
    %2467 = vmatprep.subr.mxu0 %v1315
    %2468 = vmatpush1.msra.mxu0 %v1314
    %2469 = vmatprep.subr.mxu0 %v1323
    %2470 = vmatpush1.msra.mxu0 %v1322
    %2471 = vmatprep.subr.mxu0 %v1331
    %2472 = vmatpush1.msra.mxu0 %v1330
    %2473 = vmatprep.subr.mxu0 %v1339
    %2474 = vmatpush1.msra.mxu0 %v1338
    %2475 = vmatprep.subr.mxu0 %v1347
    %2476 = vmatpush1.msra.mxu0 %v1346
    %2477 = vmatprep.subr.mxu0 %v1355
    %2478 = vmatpush1.msra.mxu0 %v1354
    %2479 = vmatprep.subr.mxu0 %v1363
    %2480 = vmatpush1.msra.mxu0 %v1362
    %2481 = vmatprep.subr.mxu0 %v1371
    %2482 = vmatpush1.msra.mxu0 %v1370
    %2483 = vmatprep.subr.mxu0 %v1379
    %2484 = vmatpush1.msra.mxu0 %v1378
    %2485 = vmatprep.subr.mxu0 %v1387
    %2486 = vmatpush1.msra.mxu0 %v1386
    %2487 = vmatprep.subr.mxu0 %v1395
    %2488 = vmatpush1.msra.mxu0 %v1394
    %2489 = vmatprep.subr.mxu0 %v1403
    %2490 = vmatpush1.msra.mxu0 %v1402
    %2491 = vmatprep.subr.mxu0 %v1411
    %2492 = vmatpush1.msra.mxu0 %v1410
    %2493 = vmatprep.subr.mxu0 %v1419
    %2494 = vmatpush1.msra.mxu0 %v1418
    %2495 = vmatprep.subr.mxu0 %v1427
    %2496 = vmatpush1.msra.mxu0 %v1426
    %2497 = vmatprep.subr.mxu0 %v1435
    %2498 = vmatpush1.msra.mxu0 %v1434
    %2499 = vmatprep.subr.mxu0 %v1443
    %2500 = vmatpush1.msra.mxu0 %v1442
    %2501 = vmatprep.subr.mxu0 %v1451
    %2502 = vmatpush1.msra.mxu0 %v1450
    %2503 = vmatprep.subr.mxu0 %v1459
    %2504 = vmatpush1.msra.mxu0 %v1458
    %2505 = vmatprep.subr.mxu0 %v1467
    %2506 = vmatpush1.msra.mxu0 %v1466
    %2507 = vmatprep.subr.mxu0 %v1475
    %2508 = vmatpush1.msra.mxu0 %v1474
    %2509 = vmatprep.subr.mxu0 %v1483
    %2510 = vmatpush1.msra.mxu0 %v1482
    %2511 = vmatprep.subr.mxu0 %v1491
    %2512 = vmatpush1.msra.mxu0 %v1490
    %2513 = vmatprep.subr.mxu0 %v1499
    %2514 = vmatpush1.msra.mxu0 %v1498
    %2515 = vmatprep.subr.mxu0 %v1507
    %2516 = vmatpush1.msra.mxu0 %v1506
    %2517 = vmatprep.subr.mxu0 %v1515
    %2518 = vmatpush1.msra.mxu0 %v1514
    %2519 = vmatprep.subr.mxu0 %v1523
    %2520 = vmatpush1.msra.mxu0 %v1522
    %2521 = vmatprep.subr.mxu0 %v1531
    %2522 = vmatpush1.msra.mxu0 %v1530
    %2523 = vmatprep.mubr.f32.mxu0 %v2245
    %2524 = vmatmul.mubr.f32.gmra.mrb[0].mxu0 %v2244
    %v2525 = vpop.f32.mrb[0].mxu0
    %v2526 = vadd.f32 %v1561, %v2525
    %v2527 = vpop.f32.mrb[0].mxu0
    %v2528 = vadd.f32 %v1565, %v2527
    %2529 = vdwg.mxu0
    %2530 = vmatprep.subr.mxu0 %v765
    %2531 = vmatpush1.msra.mxu0 %v764
    %2532 = vmatprep.subr.mxu0 %v773
    %2533 = vmatpush1.msra.mxu0 %v772
    %2534 = vmatprep.subr.mxu0 %v781
    %2535 = vmatpush1.msra.mxu0 %v780
    %2536 = vmatprep.subr.mxu0 %v789
    %2537 = vmatpush1.msra.mxu0 %v788
    %2538 = vmatprep.subr.mxu0 %v797
    %2539 = vmatpush1.msra.mxu0 %v796
    %2540 = vmatprep.subr.mxu0 %v805
    %2541 = vmatpush1.msra.mxu0 %v804
    %2542 = vmatprep.subr.mxu0 %v813
    %2543 = vmatpush1.msra.mxu0 %v812
    %2544 = vmatprep.subr.mxu0 %v821
    %2545 = vmatpush1.msra.mxu0 %v820
    %2546 = vmatprep.subr.mxu0 %v829
    %2547 = vmatpush1.msra.mxu0 %v828
    %2548 = vmatprep.subr.mxu0 %v837
    %2549 = vmatpush1.msra.mxu0 %v836
    %2550 = vmatprep.subr.mxu0 %v845
    %2551 = vmatpush1.msra.mxu0 %v844
    %2552 = vmatprep.subr.mxu0 %v853
    %2553 = vmatpush1.msra.mxu0 %v852
    %2554 = vmatprep.subr.mxu0 %v861
    %2555 = vmatpush1.msra.mxu0 %v860
    %2556 = vmatprep.subr.mxu0 %v869
    %2557 = vmatpush1.msra.mxu0 %v868
    %2558 = vmatprep.subr.mxu0 %v877
    %2559 = vmatpush1.msra.mxu0 %v876
    %2560 = vmatprep.subr.mxu0 %v885
    %2561 = vmatpush1.msra.mxu0 %v884
    %2562 = vmatprep.subr.mxu0 %v893
    %2563 = vmatpush1.msra.mxu0 %v892
    %2564 = vmatprep.subr.mxu0 %v901
    %2565 = vmatpush1.msra.mxu0 %v900
    %2566 = vmatprep.subr.mxu0 %v909
    %2567 = vmatpush1.msra.mxu0 %v908
    %2568 = vmatprep.subr.mxu0 %v917
    %2569 = vmatpush1.msra.mxu0 %v916
    %2570 = vmatprep.subr.mxu0 %v925
    %2571 = vmatpush1.msra.mxu0 %v924
    %2572 = vmatprep.subr.mxu0 %v933
    %2573 = vmatpush1.msra.mxu0 %v932
    %2574 = vmatprep.subr.mxu0 %v941
    %2575 = vmatpush1.msra.mxu0 %v940
    %2576 = vmatprep.subr.mxu0 %v949
    %2577 = vmatpush1.msra.mxu0 %v948
    %2578 = vmatprep.subr.mxu0 %v957
    %2579 = vmatpush1.msra.mxu0 %v956
    %2580 = vmatprep.subr.mxu0 %v965
    %2581 = vmatpush1.msra.mxu0 %v964
    %2582 = vmatprep.subr.mxu0 %v973
    %2583 = vmatpush1.msra.mxu0 %v972
    %2584 = vmatprep.subr.mxu0 %v981
    %2585 = vmatpush1.msra.mxu0 %v980
    %2586 = vmatprep.subr.mxu0 %v989
    %2587 = vmatpush1.msra.mxu0 %v988
    %2588 = vmatprep.subr.mxu0 %v997
    %2589 = vmatpush1.msra.mxu0 %v996
    %2590 = vmatprep.subr.mxu0 %v1005
    %2591 = vmatpush1.msra.mxu0 %v1004
    %2592 = vmatprep.subr.mxu0 %v1013
    %2593 = vmatpush1.msra.mxu0 %v1012
    %2594 = vmatprep.mubr.f32.mxu0 %v1913
    %2595 = vmatmul.mubr.f32.gmra.mrb[0].mxu0 %v1912
    %v2596 = vpop.f32.mrb[0].mxu0
    %v2597 = vadd.f32 0.0, %v2596
    %v2598 = vpop.f32.mrb[0].mxu0
    %v2599 = vadd.f32 0.0, %v2598
    %2600 = vdwg.mxu0
    %2601 = vmatprep.subr.mxu0 %v767
    %2602 = vmatpush1.msra.mxu0 %v766
    %2603 = vmatprep.subr.mxu0 %v775
    %2604 = vmatpush1.msra.mxu0 %v774
    %2605 = vmatprep.subr.mxu0 %v783
    %2606 = vmatpush1.msra.mxu0 %v782
    %2607 = vmatprep.subr.mxu0 %v791
    %2608 = vmatpush1.msra.mxu0 %v790
    %2609 = vmatprep.subr.mxu0 %v799
    %2610 = vmatpush1.msra.mxu0 %v798
    %2611 = vmatprep.subr.mxu0 %v807
    %2612 = vmatpush1.msra.mxu0 %v806
    %2613 = vmatprep.subr.mxu0 %v815
    %2614 = vmatpush1.msra.mxu0 %v814
    %2615 = vmatprep.subr.mxu0 %v823
    %2616 = vmatpush1.msra.mxu0 %v822
    %2617 = vmatprep.subr.mxu0 %v831
    %2618 = vmatpush1.msra.mxu0 %v830
    %2619 = vmatprep.subr.mxu0 %v839
    %2620 = vmatpush1.msra.mxu0 %v838
    %2621 = vmatprep.subr.mxu0 %v847
    %2622 = vmatpush1.msra.mxu0 %v846
    %2623 = vmatprep.subr.mxu0 %v855
    %2624 = vmatpush1.msra.mxu0 %v854
    %2625 = vmatprep.subr.mxu0 %v863
    %2626 = vmatpush1.msra.mxu0 %v862
    %2627 = vmatprep.subr.mxu0 %v871
    %2628 = vmatpush1.msra.mxu0 %v870
    %2629 = vmatprep.subr.mxu0 %v879
    %2630 = vmatpush1.msra.mxu0 %v878
    %2631 = vmatprep.subr.mxu0 %v887
    %2632 = vmatpush1.msra.mxu0 %v886
    %2633 = vmatprep.subr.mxu0 %v895
    %2634 = vmatpush1.msra.mxu0 %v894
    %2635 = vmatprep.subr.mxu0 %v903
    %2636 = vmatpush1.msra.mxu0 %v902
    %2637 = vmatprep.subr.mxu0 %v911
    %2638 = vmatpush1.msra.mxu0 %v910
    %2639 = vmatprep.subr.mxu0 %v919
    %2640 = vmatpush1.msra.mxu0 %v918
    %2641 = vmatprep.subr.mxu0 %v927
    %2642 = vmatpush1.msra.mxu0 %v926
    %2643 = vmatprep.subr.mxu0 %v935
    %2644 = vmatpush1.msra.mxu0 %v934
    %2645 = vmatprep.subr.mxu0 %v943
    %2646 = vmatpush1.msra.mxu0 %v942
    %2647 = vmatprep.subr.mxu0 %v951
    %2648 = vmatpush1.msra.mxu0 %v950
    %2649 = vmatprep.subr.mxu0 %v959
    %2650 = vmatpush1.msra.mxu0 %v958
    %2651 = vmatprep.subr.mxu0 %v967
    %2652 = vmatpush1.msra.mxu0 %v966
    %2653 = vmatprep.subr.mxu0 %v975
    %2654 = vmatpush1.msra.mxu0 %v974
    %2655 = vmatprep.subr.mxu0 %v983
    %2656 = vmatpush1.msra.mxu0 %v982
    %2657 = vmatprep.subr.mxu0 %v991
    %2658 = vmatpush1.msra.mxu0 %v990
    %2659 = vmatprep.subr.mxu0 %v999
    %2660 = vmatpush1.msra.mxu0 %v998
    %2661 = vmatprep.subr.mxu0 %v1007
    %2662 = vmatpush1.msra.mxu0 %v1006
    %2663 = vmatprep.subr.mxu0 %v1015
    %2664 = vmatpush1.msra.mxu0 %v1014
    %2665 = vmatprep.mubr.f32.mxu0 %v1913
    %2666 = vmatmul.mubr.f32.gmra.mrb[0].mxu0 %v1912
    %v2667 = vpop.f32.mrb[0].mxu0
    %v2668 = vadd.f32 0.0, %v2667
    %v2669 = vpop.f32.mrb[0].mxu0
    %v2670 = vadd.f32 0.0, %v2669
    %2671 = vdwg.mxu0
    %2672 = vmatprep.subr.mxu0 %v769
    %2673 = vmatpush1.msra.mxu0 %v768
    %2674 = vmatprep.subr.mxu0 %v777
    %2675 = vmatpush1.msra.mxu0 %v776
    %2676 = vmatprep.subr.mxu0 %v785
    %2677 = vmatpush1.msra.mxu0 %v784
    %2678 = vmatprep.subr.mxu0 %v793
    %2679 = vmatpush1.msra.mxu0 %v792
    %2680 = vmatprep.subr.mxu0 %v801
    %2681 = vmatpush1.msra.mxu0 %v800
    %2682 = vmatprep.subr.mxu0 %v809
    %2683 = vmatpush1.msra.mxu0 %v808
    %2684 = vmatprep.subr.mxu0 %v817
    %2685 = vmatpush1.msra.mxu0 %v816
    %2686 = vmatprep.subr.mxu0 %v825
    %2687 = vmatpush1.msra.mxu0 %v824
    %2688 = vmatprep.subr.mxu0 %v833
    %2689 = vmatpush1.msra.mxu0 %v832
    %2690 = vmatprep.subr.mxu0 %v841
    %2691 = vmatpush1.msra.mxu0 %v840
    %2692 = vmatprep.subr.mxu0 %v849
    %2693 = vmatpush1.msra.mxu0 %v848
    %2694 = vmatprep.subr.mxu0 %v857
    %2695 = vmatpush1.msra.mxu0 %v856
    %2696 = vmatprep.subr.mxu0 %v865
    %2697 = vmatpush1.msra.mxu0 %v864
    %2698 = vmatprep.subr.mxu0 %v873
    %2699 = vmatpush1.msra.mxu0 %v872
    %2700 = vmatprep.subr.mxu0 %v881
    %2701 = vmatpush1.msra.mxu0 %v880
    %2702 = vmatprep.subr.mxu0 %v889
    %2703 = vmatpush1.msra.mxu0 %v888
    %2704 = vmatprep.subr.mxu0 %v897
    %2705 = vmatpush1.msra.mxu0 %v896
    %2706 = vmatprep.subr.mxu0 %v905
    %2707 = vmatpush1.msra.mxu0 %v904
    %2708 = vmatprep.subr.mxu0 %v913
    %2709 = vmatpush1.msra.mxu0 %v912
    %2710 = vmatprep.subr.mxu0 %v921
    %2711 = vmatpush1.msra.mxu0 %v920
    %2712 = vmatprep.subr.mxu0 %v929
    %2713 = vmatpush1.msra.mxu0 %v928
    %2714 = vmatprep.subr.mxu0 %v937
    %2715 = vmatpush1.msra.mxu0 %v936
    %2716 = vmatprep.subr.mxu0 %v945
    %2717 = vmatpush1.msra.mxu0 %v944
    %2718 = vmatprep.subr.mxu0 %v953
    %2719 = vmatpush1.msra.mxu0 %v952
    %2720 = vmatprep.subr.mxu0 %v961
    %2721 = vmatpush1.msra.mxu0 %v960
    %2722 = vmatprep.subr.mxu0 %v969
    %2723 = vmatpush1.msra.mxu0 %v968
    %2724 = vmatprep.subr.mxu0 %v977
    %2725 = vmatpush1.msra.mxu0 %v976
    %2726 = vmatprep.subr.mxu0 %v985
    %2727 = vmatpush1.msra.mxu0 %v984
    %2728 = vmatprep.subr.mxu0 %v993
    %2729 = vmatpush1.msra.mxu0 %v992
    %2730 = vmatprep.subr.mxu0 %v1001
    %2731 = vmatpush1.msra.mxu0 %v1000
    %2732 = vmatprep.subr.mxu0 %v1009
    %2733 = vmatpush1.msra.mxu0 %v1008
    %2734 = vmatprep.subr.mxu0 %v1017
    %2735 = vmatpush1.msra.mxu0 %v1016
    %2736 = vmatprep.mubr.f32.mxu0 %v1913
    %2737 = vmatmul.mubr.f32.gmra.mrb[0].mxu0 %v1912
    %v2738 = vpop.f32.mrb[0].mxu0
    %v2739 = vadd.f32 0.0, %v2738
    %v2740 = vpop.f32.mrb[0].mxu0
    %v2741 = vadd.f32 0.0, %v2740
    %2742 = vdwg.mxu0
    %2743 = vmatprep.subr.mxu0 %v771
    %2744 = vmatpush1.msra.mxu0 %v770
    %2745 = vmatprep.subr.mxu0 %v779
    %2746 = vmatpush1.msra.mxu0 %v778
    %2747 = vmatprep.subr.mxu0 %v787
    %2748 = vmatpush1.msra.mxu0 %v786
    %2749 = vmatprep.subr.mxu0 %v795
    %2750 = vmatpush1.msra.mxu0 %v794
    %2751 = vmatprep.subr.mxu0 %v803
    %2752 = vmatpush1.msra.mxu0 %v802
    %2753 = vmatprep.subr.mxu0 %v811
    %2754 = vmatpush1.msra.mxu0 %v810
    %2755 = vmatprep.subr.mxu0 %v819
    %2756 = vmatpush1.msra.mxu0 %v818
    %2757 = vmatprep.subr.mxu0 %v827
    %2758 = vmatpush1.msra.mxu0 %v826
    %2759 = vmatprep.subr.mxu0 %v835
    %2760 = vmatpush1.msra.mxu0 %v834
    %2761 = vmatprep.subr.mxu0 %v843
    %2762 = vmatpush1.msra.mxu0 %v842
    %2763 = vmatprep.subr.mxu0 %v851
    %2764 = vmatpush1.msra.mxu0 %v850
    %2765 = vmatprep.subr.mxu0 %v859
    %2766 = vmatpush1.msra.mxu0 %v858
    %2767 = vmatprep.subr.mxu0 %v867
    %2768 = vmatpush1.msra.mxu0 %v866
    %2769 = vmatprep.subr.mxu0 %v875
    %2770 = vmatpush1.msra.mxu0 %v874
    %2771 = vmatprep.subr.mxu0 %v883
    %2772 = vmatpush1.msra.mxu0 %v882
    %2773 = vmatprep.subr.mxu0 %v891
    %2774 = vmatpush1.msra.mxu0 %v890
    %2775 = vmatprep.subr.mxu0 %v899
    %2776 = vmatpush1.msra.mxu0 %v898
    %2777 = vmatprep.subr.mxu0 %v907
    %2778 = vmatpush1.msra.mxu0 %v906
    %2779 = vmatprep.subr.mxu0 %v915
    %2780 = vmatpush1.msra.mxu0 %v914
    %2781 = vmatprep.subr.mxu0 %v923
    %2782 = vmatpush1.msra.mxu0 %v922
    %2783 = vmatprep.subr.mxu0 %v931
    %2784 = vmatpush1.msra.mxu0 %v930
    %2785 = vmatprep.subr.mxu0 %v939
    %2786 = vmatpush1.msra.mxu0 %v938
    %2787 = vmatprep.subr.mxu0 %v947
    %2788 = vmatpush1.msra.mxu0 %v946
    %2789 = vmatprep.subr.mxu0 %v955
    %2790 = vmatpush1.msra.mxu0 %v954
    %2791 = vmatprep.subr.mxu0 %v963
    %2792 = vmatpush1.msra.mxu0 %v962
    %2793 = vmatprep.subr.mxu0 %v971
    %2794 = vmatpush1.msra.mxu0 %v970
    %2795 = vmatprep.subr.mxu0 %v979
    %2796 = vmatpush1.msra.mxu0 %v978
    %2797 = vmatprep.subr.mxu0 %v987
    %2798 = vmatpush1.msra.mxu0 %v986
    %2799 = vmatprep.subr.mxu0 %v995
    %2800 = vmatpush1.msra.mxu0 %v994
    %2801 = vmatprep.subr.mxu0 %v1003
    %2802 = vmatpush1.msra.mxu0 %v1002
    %2803 = vmatprep.subr.mxu0 %v1011
    %2804 = vmatpush1.msra.mxu0 %v1010
    %2805 = vmatprep.subr.mxu0 %v1019
    %2806 = vmatpush1.msra.mxu0 %v1018
    %2807 = vmatprep.mubr.f32.mxu0 %v1913
    %2808 = vmatmul.mubr.f32.gmra.mrb[0].mxu0 %v1912
    %v2809 = vpop.f32.mrb[0].mxu0
    %v2810 = vadd.f32 0.0, %v2809
    %v2811 = vpop.f32.mrb[0].mxu0
    %v2812 = vadd.f32 0.0, %v2811
    %2813 = vdwg.mxu0
    %v2814 = vadd.f32 %v385, %v2597
    %v2815 = vadd.f32 %v387, %v2599
    %v2816 = vadd.f32 %v498, %v2668
    %v2817 = vadd.f32 %v500, %v2670
    %v2818 = vadd.f32 %v611, %v2739
    %v2819 = vadd.f32 %v613, %v2741
    %v2820 = vadd.f32 %v724, %v2810
    %v2821 = vadd.f32 %v726, %v2812
    %v2822 = vxor.u32 %v2814, 2147483648
    %v2823 = vxor.u32 %v2815, 2147483648
    %v2824 = vmul.f32 %v2822, 1.442695
    %v2825 = vpow.pop %v2824
    %v2826 = vmul.f32 %v2823, 1.442695
    %v2827 = vpow.pop %v2826
    %v2828 = vadd.f32 %v2825, 1.0
    %v2829 = vadd.f32 %v2827, 1.0
    %v2830 = vrcp.pop %v2828
    %v2831 = vmul.f32 1.0, %v2830
    %v2832 = vrcp.pop %v2829
    %v2833 = vmul.f32 1.0, %v2832
    %v2834 = vxor.u32 %v2816, 2147483648
    %v2835 = vxor.u32 %v2817, 2147483648
    %v2836 = vmul.f32 %v2834, 1.442695
    %v2837 = vpow.pop %v2836
    %v2838 = vmul.f32 %v2835, 1.442695
    %v2839 = vpow.pop %v2838
    %v2840 = vadd.f32 %v2837, 1.0
    %v2841 = vadd.f32 %v2839, 1.0
    %v2842 = vrcp.pop %v2840
    %v2843 = vmul.f32 1.0, %v2842
    %v2844 = vrcp.pop %v2841
    %v2845 = vmul.f32 1.0, %v2844
    %v2846 = vtanh.pop %v2818
    %v2847 = vtanh.pop %v2819
    %v2848 = vxor.u32 %v2820, 2147483648
    %v2849 = vxor.u32 %v2821, 2147483648
    %v2850 = vmul.f32 %v2848, 1.442695
    %v2851 = vpow.pop %v2850
    %v2852 = vmul.f32 %v2849, 1.442695
    %v2853 = vpow.pop %v2852
    %v2854 = vadd.f32 %v2851, 1.0
    %v2855 = vadd.f32 %v2853, 1.0
    %v2856 = vrcp.pop %v2854
    %v2857 = vmul.f32 1.0, %v2856
    %v2858 = vrcp.pop %v2855
    %v2859 = vmul.f32 1.0, %v2858
    %v2860 = vmul.f32 %v2843, %v1908
    %v2861 = vmul.f32 %v2845, %v1909
    %v2862 = vmul.f32 %v2831, %v2846
    %v2863 = vmul.f32 %v2833, %v2847
    %v2864 = vadd.f32 %v2860, %v2862
    %v2865 = vadd.f32 %v2861, %v2863
    %v2866 = vtanh.pop %v2864
    %v2867 = vtanh.pop %v2865
    %v2868 = vmul.f32 %v2857, %v2866
    %v2869 = vmul.f32 %v2859, %v2867
    %2870 = vmatprep.subr.mxu0 %v1021
    %2871 = vmatpush1.msra.mxu0 %v1020
    %2872 = vmatprep.subr.mxu0 %v1029
    %2873 = vmatpush1.msra.mxu0 %v1028
    %2874 = vmatprep.subr.mxu0 %v1037
    %2875 = vmatpush1.msra.mxu0 %v1036
    %2876 = vmatprep.subr.mxu0 %v1045
    %2877 = vmatpush1.msra.mxu0 %v1044
    %2878 = vmatprep.subr.mxu0 %v1053
    %2879 = vmatpush1.msra.mxu0 %v1052
    %2880 = vmatprep.subr.mxu0 %v1061
    %2881 = vmatpush1.msra.mxu0 %v1060
    %2882 = vmatprep.subr.mxu0 %v1069
    %2883 = vmatpush1.msra.mxu0 %v1068
    %2884 = vmatprep.subr.mxu0 %v1077
    %2885 = vmatpush1.msra.mxu0 %v1076
    %2886 = vmatprep.subr.mxu0 %v1085
    %2887 = vmatpush1.msra.mxu0 %v1084
    %2888 = vmatprep.subr.mxu0 %v1093
    %2889 = vmatpush1.msra.mxu0 %v1092
    %2890 = vmatprep.subr.mxu0 %v1101
    %2891 = vmatpush1.msra.mxu0 %v1100
    %2892 = vmatprep.subr.mxu0 %v1109
    %2893 = vmatpush1.msra.mxu0 %v1108
    %2894 = vmatprep.subr.mxu0 %v1117
    %2895 = vmatpush1.msra.mxu0 %v1116
    %2896 = vmatprep.subr.mxu0 %v1125
    %2897 = vmatpush1.msra.mxu0 %v1124
    %2898 = vmatprep.subr.mxu0 %v1133
    %2899 = vmatpush1.msra.mxu0 %v1132
    %2900 = vmatprep.subr.mxu0 %v1141
    %2901 = vmatpush1.msra.mxu0 %v1140
    %2902 = vmatprep.subr.mxu0 %v1149
    %2903 = vmatpush1.msra.mxu0 %v1148
    %2904 = vmatprep.subr.mxu0 %v1157
    %2905 = vmatpush1.msra.mxu0 %v1156
    %2906 = vmatprep.subr.mxu0 %v1165
    %2907 = vmatpush1.msra.mxu0 %v1164
    %2908 = vmatprep.subr.mxu0 %v1173
    %2909 = vmatpush1.msra.mxu0 %v1172
    %2910 = vmatprep.subr.mxu0 %v1181
    %2911 = vmatpush1.msra.mxu0 %v1180
    %2912 = vmatprep.subr.mxu0 %v1189
    %2913 = vmatpush1.msra.mxu0 %v1188
    %2914 = vmatprep.subr.mxu0 %v1197
    %2915 = vmatpush1.msra.mxu0 %v1196
    %2916 = vmatprep.subr.mxu0 %v1205
    %2917 = vmatpush1.msra.mxu0 %v1204
    %2918 = vmatprep.subr.mxu0 %v1213
    %2919 = vmatpush1.msra.mxu0 %v1212
    %2920 = vmatprep.subr.mxu0 %v1221
    %2921 = vmatpush1.msra.mxu0 %v1220
    %2922 = vmatprep.subr.mxu0 %v1229
    %2923 = vmatpush1.msra.mxu0 %v1228
    %2924 = vmatprep.subr.mxu0 %v1237
    %2925 = vmatpush1.msra.mxu0 %v1236
    %2926 = vmatprep.subr.mxu0 %v1245
    %2927 = vmatpush1.msra.mxu0 %v1244
    %2928 = vmatprep.subr.mxu0 %v1253
    %2929 = vmatpush1.msra.mxu0 %v1252
    %2930 = vmatprep.subr.mxu0 %v1261
    %2931 = vmatpush1.msra.mxu0 %v1260
    %2932 = vmatprep.subr.mxu0 %v1269
    %2933 = vmatpush1.msra.mxu0 %v1268
    %2934 = vmatprep.mubr.f32.mxu0 %v2869
    %2935 = vmatmul.mubr.f32.gmra.mrb[0].mxu0 %v2868
    %v2936 = vpop.f32.mrb[0].mxu0
    %v2937 = vadd.f32 %v2313, %v2936
    %v2938 = vpop.f32.mrb[0].mxu0
    %v2939 = vadd.f32 %v2315, %v2938
    %2940 = vdwg.mxu0
    %2941 = vmatprep.subr.mxu0 %v1023
    %2942 = vmatpush1.msra.mxu0 %v1022
    %2943 = vmatprep.subr.mxu0 %v1031
    %2944 = vmatpush1.msra.mxu0 %v1030
    %2945 = vmatprep.subr.mxu0 %v1039
    %2946 = vmatpush1.msra.mxu0 %v1038
    %2947 = vmatprep.subr.mxu0 %v1047
    %2948 = vmatpush1.msra.mxu0 %v1046
    %2949 = vmatprep.subr.mxu0 %v1055
    %2950 = vmatpush1.msra.mxu0 %v1054
    %2951 = vmatprep.subr.mxu0 %v1063
    %2952 = vmatpush1.msra.mxu0 %v1062
    %2953 = vmatprep.subr.mxu0 %v1071
    %2954 = vmatpush1.msra.mxu0 %v1070
    %2955 = vmatprep.subr.mxu0 %v1079
    %2956 = vmatpush1.msra.mxu0 %v1078
    %2957 = vmatprep.subr.mxu0 %v1087
    %2958 = vmatpush1.msra.mxu0 %v1086
    %2959 = vmatprep.subr.mxu0 %v1095
    %2960 = vmatpush1.msra.mxu0 %v1094
    %2961 = vmatprep.subr.mxu0 %v1103
    %2962 = vmatpush1.msra.mxu0 %v1102
    %2963 = vmatprep.subr.mxu0 %v1111
    %2964 = vmatpush1.msra.mxu0 %v1110
    %2965 = vmatprep.subr.mxu0 %v1119
    %2966 = vmatpush1.msra.mxu0 %v1118
    %2967 = vmatprep.subr.mxu0 %v1127
    %2968 = vmatpush1.msra.mxu0 %v1126
    %2969 = vmatprep.subr.mxu0 %v1135
    %2970 = vmatpush1.msra.mxu0 %v1134
    %2971 = vmatprep.subr.mxu0 %v1143
    %2972 = vmatpush1.msra.mxu0 %v1142
    %2973 = vmatprep.subr.mxu0 %v1151
    %2974 = vmatpush1.msra.mxu0 %v1150
    %2975 = vmatprep.subr.mxu0 %v1159
    %2976 = vmatpush1.msra.mxu0 %v1158
    %2977 = vmatprep.subr.mxu0 %v1167
    %2978 = vmatpush1.msra.mxu0 %v1166
    %2979 = vmatprep.subr.mxu0 %v1175
    %2980 = vmatpush1.msra.mxu0 %v1174
    %2981 = vmatprep.subr.mxu0 %v1183
    %2982 = vmatpush1.msra.mxu0 %v1182
    %2983 = vmatprep.subr.mxu0 %v1191
    %2984 = vmatpush1.msra.mxu0 %v1190
    %2985 = vmatprep.subr.mxu0 %v1199
    %2986 = vmatpush1.msra.mxu0 %v1198
    %2987 = vmatprep.subr.mxu0 %v1207
    %2988 = vmatpush1.msra.mxu0 %v1206
    %2989 = vmatprep.subr.mxu0 %v1215
    %2990 = vmatpush1.msra.mxu0 %v1214
    %2991 = vmatprep.subr.mxu0 %v1223
    %2992 = vmatpush1.msra.mxu0 %v1222
    %2993 = vmatprep.subr.mxu0 %v1231
    %2994 = vmatpush1.msra.mxu0 %v1230
    %2995 = vmatprep.subr.mxu0 %v1239
    %2996 = vmatpush1.msra.mxu0 %v1238
    %2997 = vmatprep.subr.mxu0 %v1247
    %2998 = vmatpush1.msra.mxu0 %v1246
    %2999 = vmatprep.subr.mxu0 %v1255
    %3000 = vmatpush1.msra.mxu0 %v1254
    %3001 = vmatprep.subr.mxu0 %v1263
    %3002 = vmatpush1.msra.mxu0 %v1262
    %3003 = vmatprep.subr.mxu0 %v1271
    %3004 = vmatpush1.msra.mxu0 %v1270
    %3005 = vmatprep.mubr.f32.mxu0 %v2869
    %3006 = vmatmul.mubr.f32.gmra.mrb[0].mxu0 %v2868
    %v3007 = vpop.f32.mrb[0].mxu0
    %v3008 = vadd.f32 %v2384, %v3007
    %v3009 = vpop.f32.mrb[0].mxu0
    %v3010 = vadd.f32 %v2386, %v3009
    %3011 = vdwg.mxu0
    %3012 = vmatprep.subr.mxu0 %v1025
    %3013 = vmatpush1.msra.mxu0 %v1024
    %3014 = vmatprep.subr.mxu0 %v1033
    %3015 = vmatpush1.msra.mxu0 %v1032
    %3016 = vmatprep.subr.mxu0 %v1041
    %3017 = vmatpush1.msra.mxu0 %v1040
    %3018 = vmatprep.subr.mxu0 %v1049
    %3019 = vmatpush1.msra.mxu0 %v1048
    %3020 = vmatprep.subr.mxu0 %v1057
    %3021 = vmatpush1.msra.mxu0 %v1056
    %3022 = vmatprep.subr.mxu0 %v1065
    %3023 = vmatpush1.msra.mxu0 %v1064
    %3024 = vmatprep.subr.mxu0 %v1073
    %3025 = vmatpush1.msra.mxu0 %v1072
    %3026 = vmatprep.subr.mxu0 %v1081
    %3027 = vmatpush1.msra.mxu0 %v1080
    %3028 = vmatprep.subr.mxu0 %v1089
    %3029 = vmatpush1.msra.mxu0 %v1088
    %3030 = vmatprep.subr.mxu0 %v1097
    %3031 = vmatpush1.msra.mxu0 %v1096
    %3032 = vmatprep.subr.mxu0 %v1105
    %3033 = vmatpush1.msra.mxu0 %v1104
    %3034 = vmatprep.subr.mxu0 %v1113
    %3035 = vmatpush1.msra.mxu0 %v1112
    %3036 = vmatprep.subr.mxu0 %v1121
    %3037 = vmatpush1.msra.mxu0 %v1120
    %3038 = vmatprep.subr.mxu0 %v1129
    %3039 = vmatpush1.msra.mxu0 %v1128
    %3040 = vmatprep.subr.mxu0 %v1137
    %3041 = vmatpush1.msra.mxu0 %v1136
    %3042 = vmatprep.subr.mxu0 %v1145
    %3043 = vmatpush1.msra.mxu0 %v1144
    %3044 = vmatprep.subr.mxu0 %v1153
    %3045 = vmatpush1.msra.mxu0 %v1152
    %3046 = vmatprep.subr.mxu0 %v1161
    %3047 = vmatpush1.msra.mxu0 %v1160
    %3048 = vmatprep.subr.mxu0 %v1169
    %3049 = vmatpush1.msra.mxu0 %v1168
    %3050 = vmatprep.subr.mxu0 %v1177
    %3051 = vmatpush1.msra.mxu0 %v1176
    %3052 = vmatprep.subr.mxu0 %v1185
    %3053 = vmatpush1.msra.mxu0 %v1184
    %3054 = vmatprep.subr.mxu0 %v1193
    %3055 = vmatpush1.msra.mxu0 %v1192
    %3056 = vmatprep.subr.mxu0 %v1201
    %3057 = vmatpush1.msra.mxu0 %v1200
    %3058 = vmatprep.subr.mxu0 %v1209
    %3059 = vmatpush1.msra.mxu0 %v1208
    %3060 = vmatprep.subr.mxu0 %v1217
    %3061 = vmatpush1.msra.mxu0 %v1216
    %3062 = vmatprep.subr.mxu0 %v1225
    %3063 = vmatpush1.msra.mxu0 %v1224
    %3064 = vmatprep.subr.mxu0 %v1233
    %3065 = vmatpush1.msra.mxu0 %v1232
    %3066 = vmatprep.subr.mxu0 %v1241
    %3067 = vmatpush1.msra.mxu0 %v1240
    %3068 = vmatprep.subr.mxu0 %v1249
    %3069 = vmatpush1.msra.mxu0 %v1248
    %3070 = vmatprep.subr.mxu0 %v1257
    %3071 = vmatpush1.msra.mxu0 %v1256
    %3072 = vmatprep.subr.mxu0 %v1265
    %3073 = vmatpush1.msra.mxu0 %v1264
    %3074 = vmatprep.subr.mxu0 %v1273
    %3075 = vmatpush1.msra.mxu0 %v1272
    %3076 = vmatprep.mubr.f32.mxu0 %v2869
    %3077 = vmatmul.mubr.f32.gmra.mrb[0].mxu0 %v2868
    %v3078 = vpop.f32.mrb[0].mxu0
    %v3079 = vadd.f32 %v2455, %v3078
    %v3080 = vpop.f32.mrb[0].mxu0
    %v3081 = vadd.f32 %v2457, %v3080
    %3082 = vdwg.mxu0
    %3083 = vmatprep.subr.mxu0 %v1027
    %3084 = vmatpush1.msra.mxu0 %v1026
    %3085 = vmatprep.subr.mxu0 %v1035
    %3086 = vmatpush1.msra.mxu0 %v1034
    %3087 = vmatprep.subr.mxu0 %v1043
    %3088 = vmatpush1.msra.mxu0 %v1042
    %3089 = vmatprep.subr.mxu0 %v1051
    %3090 = vmatpush1.msra.mxu0 %v1050
    %3091 = vmatprep.subr.mxu0 %v1059
    %3092 = vmatpush1.msra.mxu0 %v1058
    %3093 = vmatprep.subr.mxu0 %v1067
    %3094 = vmatpush1.msra.mxu0 %v1066
    %3095 = vmatprep.subr.mxu0 %v1075
    %3096 = vmatpush1.msra.mxu0 %v1074
    %3097 = vmatprep.subr.mxu0 %v1083
    %3098 = vmatpush1.msra.mxu0 %v1082
    %3099 = vmatprep.subr.mxu0 %v1091
    %3100 = vmatpush1.msra.mxu0 %v1090
    %3101 = vmatprep.subr.mxu0 %v1099
    %3102 = vmatpush1.msra.mxu0 %v1098
    %3103 = vmatprep.subr.mxu0 %v1107
    %3104 = vmatpush1.msra.mxu0 %v1106
    %3105 = vmatprep.subr.mxu0 %v1115
    %3106 = vmatpush1.msra.mxu0 %v1114
    %3107 = vmatprep.subr.mxu0 %v1123
    %3108 = vmatpush1.msra.mxu0 %v1122
    %3109 = vmatprep.subr.mxu0 %v1131
    %3110 = vmatpush1.msra.mxu0 %v1130
    %3111 = vmatprep.subr.mxu0 %v1139
    %3112 = vmatpush1.msra.mxu0 %v1138
    %3113 = vmatprep.subr.mxu0 %v1147
    %3114 = vmatpush1.msra.mxu0 %v1146
    %3115 = vmatprep.subr.mxu0 %v1155
    %3116 = vmatpush1.msra.mxu0 %v1154
    %3117 = vmatprep.subr.mxu0 %v1163
    %3118 = vmatpush1.msra.mxu0 %v1162
    %3119 = vmatprep.subr.mxu0 %v1171
    %3120 = vmatpush1.msra.mxu0 %v1170
    %3121 = vmatprep.subr.mxu0 %v1179
    %3122 = vmatpush1.msra.mxu0 %v1178
    %3123 = vmatprep.subr.mxu0 %v1187
    %3124 = vmatpush1.msra.mxu0 %v1186
    %3125 = vmatprep.subr.mxu0 %v1195
    %3126 = vmatpush1.msra.mxu0 %v1194
    %3127 = vmatprep.subr.mxu0 %v1203
    %3128 = vmatpush1.msra.mxu0 %v1202
    %3129 = vmatprep.subr.mxu0 %v1211
    %3130 = vmatpush1.msra.mxu0 %v1210
    %3131 = vmatprep.subr.mxu0 %v1219
    %3132 = vmatpush1.msra.mxu0 %v1218
    %3133 = vmatprep.subr.mxu0 %v1227
    %3134 = vmatpush1.msra.mxu0 %v1226
    %3135 = vmatprep.subr.mxu0 %v1235
    %3136 = vmatpush1.msra.mxu0 %v1234
    %3137 = vmatprep.subr.mxu0 %v1243
    %3138 = vmatpush1.msra.mxu0 %v1242
    %3139 = vmatprep.subr.mxu0 %v1251
    %3140 = vmatpush1.msra.mxu0 %v1250
    %3141 = vmatprep.subr.mxu0 %v1259
    %3142 = vmatpush1.msra.mxu0 %v1258
    %3143 = vmatprep.subr.mxu0 %v1267
    %3144 = vmatpush1.msra.mxu0 %v1266
    %3145 = vmatprep.subr.mxu0 %v1275
    %3146 = vmatpush1.msra.mxu0 %v1274
    %3147 = vmatprep.mubr.f32.mxu0 %v2869
    %3148 = vmatmul.mubr.f32.gmra.mrb[0].mxu0 %v2868
    %v3149 = vpop.f32.mrb[0].mxu0
    %v3150 = vadd.f32 %v2526, %v3149
    %v3151 = vpop.f32.mrb[0].mxu0
    %v3152 = vadd.f32 %v2528, %v3151
    %3153 = vdwg.mxu0
    %v3154 = vxor.u32 %v2937, 2147483648
    %v3155 = vxor.u32 %v2939, 2147483648
    %v3156 = vmul.f32 %v3154, 1.442695
    %v3157 = vpow.pop %v3156
    %v3158 = vmul.f32 %v3155, 1.442695
    %v3159 = vpow.pop %v3158
    %v3160 = vadd.f32 %v3157, 1.0
    %v3161 = vadd.f32 %v3159, 1.0
    %v3162 = vrcp.pop %v3160
    %v3163 = vmul.f32 1.0, %v3162
    %v3164 = vrcp.pop %v3161
    %v3165 = vmul.f32 1.0, %v3164
    %v3166 = vxor.u32 %v3008, 2147483648
    %v3167 = vxor.u32 %v3010, 2147483648
    %v3168 = vmul.f32 %v3166, 1.442695
    %v3169 = vpow.pop %v3168
    %v3170 = vmul.f32 %v3167, 1.442695
    %v3171 = vpow.pop %v3170
    %v3172 = vadd.f32 %v3169, 1.0
    %v3173 = vadd.f32 %v3171, 1.0
    %v3174 = vrcp.pop %v3172
    %v3175 = vmul.f32 1.0, %v3174
    %v3176 = vrcp.pop %v3173
    %v3177 = vmul.f32 1.0, %v3176
    %v3178 = vtanh.pop %v3079
    %v3179 = vtanh.pop %v3081
    %v3180 = vxor.u32 %v3150, 2147483648
    %v3181 = vxor.u32 %v3152, 2147483648
    %v3182 = vmul.f32 %v3180, 1.442695
    %v3183 = vpow.pop %v3182
    %v3184 = vmul.f32 %v3181, 1.442695
    %v3185 = vpow.pop %v3184
    %v3186 = vadd.f32 %v3183, 1.0
    %v3187 = vadd.f32 %v3185, 1.0
    %v3188 = vrcp.pop %v3186
    %v3189 = vmul.f32 1.0, %v3188
    %v3190 = vrcp.pop %v3187
    %v3191 = vmul.f32 1.0, %v3190
    %v3192 = vmul.f32 %v3175, %v2240
    %v3193 = vmul.f32 %v3177, %v2241
    %v3194 = vmul.f32 %v3163, %v3178
    %v3195 = vmul.f32 %v3165, %v3179
    %v3196 = vadd.f32 %v3192, %v3194
    %v3197 = vadd.f32 %v3193, %v3195
    %v3198 = vtanh.pop %v3196
    %v3199 = vtanh.pop %v3197
    %v3200 = vmul.f32 %v3189, %v3198
    %v3201 = vmul.f32 %v3191, %v3199
    %3202 = vmatprep.subr.mxu0 %v1277
    %3203 = vmatpush1.msra.mxu0 %v1276
    %3204 = vmatprep.subr.mxu0 %v1285
    %3205 = vmatpush1.msra.mxu0 %v1284
    %3206 = vmatprep.subr.mxu0 %v1293
    %3207 = vmatpush1.msra.mxu0 %v1292
    %3208 = vmatprep.subr.mxu0 %v1301
    %3209 = vmatpush1.msra.mxu0 %v1300
    %3210 = vmatprep.subr.mxu0 %v1309
    %3211 = vmatpush1.msra.mxu0 %v1308
    %3212 = vmatprep.subr.mxu0 %v1317
    %3213 = vmatpush1.msra.mxu0 %v1316
    %3214 = vmatprep.subr.mxu0 %v1325
    %3215 = vmatpush1.msra.mxu0 %v1324
    %3216 = vmatprep.subr.mxu0 %v1333
    %3217 = vmatpush1.msra.mxu0 %v1332
    %3218 = vmatprep.subr.mxu0 %v1341
    %3219 = vmatpush1.msra.mxu0 %v1340
    %3220 = vmatprep.subr.mxu0 %v1349
    %3221 = vmatpush1.msra.mxu0 %v1348
    %3222 = vmatprep.subr.mxu0 %v1357
    %3223 = vmatpush1.msra.mxu0 %v1356
    %3224 = vmatprep.subr.mxu0 %v1365
    %3225 = vmatpush1.msra.mxu0 %v1364
    %3226 = vmatprep.subr.mxu0 %v1373
    %3227 = vmatpush1.msra.mxu0 %v1372
    %3228 = vmatprep.subr.mxu0 %v1381
    %3229 = vmatpush1.msra.mxu0 %v1380
    %3230 = vmatprep.subr.mxu0 %v1389
    %3231 = vmatpush1.msra.mxu0 %v1388
    %3232 = vmatprep.subr.mxu0 %v1397
    %3233 = vmatpush1.msra.mxu0 %v1396
    %3234 = vmatprep.subr.mxu0 %v1405
    %3235 = vmatpush1.msra.mxu0 %v1404
    %3236 = vmatprep.subr.mxu0 %v1413
    %3237 = vmatpush1.msra.mxu0 %v1412
    %3238 = vmatprep.subr.mxu0 %v1421
    %3239 = vmatpush1.msra.mxu0 %v1420
    %3240 = vmatprep.subr.mxu0 %v1429
    %3241 = vmatpush1.msra.mxu0 %v1428
    %3242 = vmatprep.subr.mxu0 %v1437
    %3243 = vmatpush1.msra.mxu0 %v1436
    %3244 = vmatprep.subr.mxu0 %v1445
    %3245 = vmatpush1.msra.mxu0 %v1444
    %3246 = vmatprep.subr.mxu0 %v1453
    %3247 = vmatpush1.msra.mxu0 %v1452
    %3248 = vmatprep.subr.mxu0 %v1461
    %3249 = vmatpush1.msra.mxu0 %v1460
    %3250 = vmatprep.subr.mxu0 %v1469
    %3251 = vmatpush1.msra.mxu0 %v1468
    %3252 = vmatprep.subr.mxu0 %v1477
    %3253 = vmatpush1.msra.mxu0 %v1476
    %3254 = vmatprep.subr.mxu0 %v1485
    %3255 = vmatpush1.msra.mxu0 %v1484
    %3256 = vmatprep.subr.mxu0 %v1493
    %3257 = vmatpush1.msra.mxu0 %v1492
    %3258 = vmatprep.subr.mxu0 %v1501
    %3259 = vmatpush1.msra.mxu0 %v1500
    %3260 = vmatprep.subr.mxu0 %v1509
    %3261 = vmatpush1.msra.mxu0 %v1508
    %3262 = vmatprep.subr.mxu0 %v1517
    %3263 = vmatpush1.msra.mxu0 %v1516
    %3264 = vmatprep.subr.mxu0 %v1525
    %3265 = vmatpush1.msra.mxu0 %v1524
    %3266 = vmatprep.mubr.f32.mxu0 %v3201
    %3267 = vmatmul.mubr.f32.gmra.mrb[0].mxu0 %v3200
    %v3268 = vpop.f32.mrb[0].mxu0
    %v3269 = vadd.f32 %v1537, %v3268
    %v3270 = vpop.f32.mrb[0].mxu0
    %v3271 = vadd.f32 %v1541, %v3270
    %3272 = vdwg.mxu0
    %3273 = vmatprep.subr.mxu0 %v1279
    %3274 = vmatpush1.msra.mxu0 %v1278
    %3275 = vmatprep.subr.mxu0 %v1287
    %3276 = vmatpush1.msra.mxu0 %v1286
    %3277 = vmatprep.subr.mxu0 %v1295
    %3278 = vmatpush1.msra.mxu0 %v1294
    %3279 = vmatprep.subr.mxu0 %v1303
    %3280 = vmatpush1.msra.mxu0 %v1302
    %3281 = vmatprep.subr.mxu0 %v1311
    %3282 = vmatpush1.msra.mxu0 %v1310
    %3283 = vmatprep.subr.mxu0 %v1319
    %3284 = vmatpush1.msra.mxu0 %v1318
    %3285 = vmatprep.subr.mxu0 %v1327
    %3286 = vmatpush1.msra.mxu0 %v1326
    %3287 = vmatprep.subr.mxu0 %v1335
    %3288 = vmatpush1.msra.mxu0 %v1334
    %3289 = vmatprep.subr.mxu0 %v1343
    %3290 = vmatpush1.msra.mxu0 %v1342
    %3291 = vmatprep.subr.mxu0 %v1351
    %3292 = vmatpush1.msra.mxu0 %v1350
    %3293 = vmatprep.subr.mxu0 %v1359
    %3294 = vmatpush1.msra.mxu0 %v1358
    %3295 = vmatprep.subr.mxu0 %v1367
    %3296 = vmatpush1.msra.mxu0 %v1366
    %3297 = vmatprep.subr.mxu0 %v1375
    %3298 = vmatpush1.msra.mxu0 %v1374
    %3299 = vmatprep.subr.mxu0 %v1383
    %3300 = vmatpush1.msra.mxu0 %v1382
    %3301 = vmatprep.subr.mxu0 %v1391
    %3302 = vmatpush1.msra.mxu0 %v1390
    %3303 = vmatprep.subr.mxu0 %v1399
    %3304 = vmatpush1.msra.mxu0 %v1398
    %3305 = vmatprep.subr.mxu0 %v1407
    %3306 = vmatpush1.msra.mxu0 %v1406
    %3307 = vmatprep.subr.mxu0 %v1415
    %3308 = vmatpush1.msra.mxu0 %v1414
    %3309 = vmatprep.subr.mxu0 %v1423
    %3310 = vmatpush1.msra.mxu0 %v1422
    %3311 = vmatprep.subr.mxu0 %v1431
    %3312 = vmatpush1.msra.mxu0 %v1430
    %3313 = vmatprep.subr.mxu0 %v1439
    %3314 = vmatpush1.msra.mxu0 %v1438
    %3315 = vmatprep.subr.mxu0 %v1447
    %3316 = vmatpush1.msra.mxu0 %v1446
    %3317 = vmatprep.subr.mxu0 %v1455
    %3318 = vmatpush1.msra.mxu0 %v1454
    %3319 = vmatprep.subr.mxu0 %v1463
    %3320 = vmatpush1.msra.mxu0 %v1462
    %3321 = vmatprep.subr.mxu0 %v1471
    %3322 = vmatpush1.msra.mxu0 %v1470
    %3323 = vmatprep.subr.mxu0 %v1479
    %3324 = vmatpush1.msra.mxu0 %v1478
    %3325 = vmatprep.subr.mxu0 %v1487
    %3326 = vmatpush1.msra.mxu0 %v1486
    %3327 = vmatprep.subr.mxu0 %v1495
    %3328 = vmatpush1.msra.mxu0 %v1494
    %3329 = vmatprep.subr.mxu0 %v1503
    %3330 = vmatpush1.msra.mxu0 %v1502
    %3331 = vmatprep.subr.mxu0 %v1511
    %3332 = vmatpush1.msra.mxu0 %v1510
    %3333 = vmatprep.subr.mxu0 %v1519
    %3334 = vmatpush1.msra.mxu0 %v1518
    %3335 = vmatprep.subr.mxu0 %v1527
    %3336 = vmatpush1.msra.mxu0 %v1526
    %3337 = vmatprep.mubr.f32.mxu0 %v3201
    %3338 = vmatmul.mubr.f32.gmra.mrb[0].mxu0 %v3200
    %v3339 = vpop.f32.mrb[0].mxu0
    %v3340 = vadd.f32 %v1545, %v3339
    %v3341 = vpop.f32.mrb[0].mxu0
    %v3342 = vadd.f32 %v1549, %v3341
    %3343 = vdwg.mxu0
    %3344 = vmatprep.subr.mxu0 %v1281
    %3345 = vmatpush1.msra.mxu0 %v1280
    %3346 = vmatprep.subr.mxu0 %v1289
    %3347 = vmatpush1.msra.mxu0 %v1288
    %3348 = vmatprep.subr.mxu0 %v1297
    %3349 = vmatpush1.msra.mxu0 %v1296
    %3350 = vmatprep.subr.mxu0 %v1305
    %3351 = vmatpush1.msra.mxu0 %v1304
    %3352 = vmatprep.subr.mxu0 %v1313
    %3353 = vmatpush1.msra.mxu0 %v1312
    %3354 = vmatprep.subr.mxu0 %v1321
    %3355 = vmatpush1.msra.mxu0 %v1320
    %3356 = vmatprep.subr.mxu0 %v1329
    %3357 = vmatpush1.msra.mxu0 %v1328
    %3358 = vmatprep.subr.mxu0 %v1337
    %3359 = vmatpush1.msra.mxu0 %v1336
    %3360 = vmatprep.subr.mxu0 %v1345
    %3361 = vmatpush1.msra.mxu0 %v1344
    %3362 = vmatprep.subr.mxu0 %v1353
    %3363 = vmatpush1.msra.mxu0 %v1352
    %3364 = vmatprep.subr.mxu0 %v1361
    %3365 = vmatpush1.msra.mxu0 %v1360
    %3366 = vmatprep.subr.mxu0 %v1369
    %3367 = vmatpush1.msra.mxu0 %v1368
    %3368 = vmatprep.subr.mxu0 %v1377
    %3369 = vmatpush1.msra.mxu0 %v1376
    %3370 = vmatprep.subr.mxu0 %v1385
    %3371 = vmatpush1.msra.mxu0 %v1384
    %3372 = vmatprep.subr.mxu0 %v1393
    %3373 = vmatpush1.msra.mxu0 %v1392
    %3374 = vmatprep.subr.mxu0 %v1401
    %3375 = vmatpush1.msra.mxu0 %v1400
    %3376 = vmatprep.subr.mxu0 %v1409
    %3377 = vmatpush1.msra.mxu0 %v1408
    %3378 = vmatprep.subr.mxu0 %v1417
    %3379 = vmatpush1.msra.mxu0 %v1416
    %3380 = vmatprep.subr.mxu0 %v1425
    %3381 = vmatpush1.msra.mxu0 %v1424
    %3382 = vmatprep.subr.mxu0 %v1433
    %3383 = vmatpush1.msra.mxu0 %v1432
    %3384 = vmatprep.subr.mxu0 %v1441
    %3385 = vmatpush1.msra.mxu0 %v1440
    %3386 = vmatprep.subr.mxu0 %v1449
    %3387 = vmatpush1.msra.mxu0 %v1448
    %3388 = vmatprep.subr.mxu0 %v1457
    %3389 = vmatpush1.msra.mxu0 %v1456
    %3390 = vmatprep.subr.mxu0 %v1465
    %3391 = vmatpush1.msra.mxu0 %v1464
    %3392 = vmatprep.subr.mxu0 %v1473
    %3393 = vmatpush1.msra.mxu0 %v1472
    %3394 = vmatprep.subr.mxu0 %v1481
    %3395 = vmatpush1.msra.mxu0 %v1480
    %3396 = vmatprep.subr.mxu0 %v1489
    %3397 = vmatpush1.msra.mxu0 %v1488
    %3398 = vmatprep.subr.mxu0 %v1497
    %3399 = vmatpush1.msra.mxu0 %v1496
    %3400 = vmatprep.subr.mxu0 %v1505
    %3401 = vmatpush1.msra.mxu0 %v1504
    %3402 = vmatprep.subr.mxu0 %v1513
    %3403 = vmatpush1.msra.mxu0 %v1512
    %3404 = vmatprep.subr.mxu0 %v1521
    %3405 = vmatpush1.msra.mxu0 %v1520
    %3406 = vmatprep.subr.mxu0 %v1529
    %3407 = vmatpush1.msra.mxu0 %v1528
    %3408 = vmatprep.mubr.f32.mxu0 %v3201
    %3409 = vmatmul.mubr.f32.gmra.mrb[0].mxu0 %v3200
    %v3410 = vpop.f32.mrb[0].mxu0
    %v3411 = vadd.f32 %v1553, %v3410
    %v3412 = vpop.f32.mrb[0].mxu0
    %v3413 = vadd.f32 %v1557, %v3412
    %3414 = vdwg.mxu0
    %3415 = vmatprep.subr.mxu0 %v1283
    %3416 = vmatpush1.msra.mxu0 %v1282
    %3417 = vmatprep.subr.mxu0 %v1291
    %3418 = vmatpush1.msra.mxu0 %v1290
    %3419 = vmatprep.subr.mxu0 %v1299
    %3420 = vmatpush1.msra.mxu0 %v1298
    %3421 = vmatprep.subr.mxu0 %v1307
    %3422 = vmatpush1.msra.mxu0 %v1306
    %3423 = vmatprep.subr.mxu0 %v1315
    %3424 = vmatpush1.msra.mxu0 %v1314
    %3425 = vmatprep.subr.mxu0 %v1323
    %3426 = vmatpush1.msra.mxu0 %v1322
    %3427 = vmatprep.subr.mxu0 %v1331
    %3428 = vmatpush1.msra.mxu0 %v1330
    %3429 = vmatprep.subr.mxu0 %v1339
    %3430 = vmatpush1.msra.mxu0 %v1338
    %3431 = vmatprep.subr.mxu0 %v1347
    %3432 = vmatpush1.msra.mxu0 %v1346
    %3433 = vmatprep.subr.mxu0 %v1355
    %3434 = vmatpush1.msra.mxu0 %v1354
    %3435 = vmatprep.subr.mxu0 %v1363
    %3436 = vmatpush1.msra.mxu0 %v1362
    %3437 = vmatprep.subr.mxu0 %v1371
    %3438 = vmatpush1.msra.mxu0 %v1370
    %3439 = vmatprep.subr.mxu0 %v1379
    %3440 = vmatpush1.msra.mxu0 %v1378
    %3441 = vmatprep.subr.mxu0 %v1387
    %3442 = vmatpush1.msra.mxu0 %v1386
    %3443 = vmatprep.subr.mxu0 %v1395
    %3444 = vmatpush1.msra.mxu0 %v1394
    %3445 = vmatprep.subr.mxu0 %v1403
    %3446 = vmatpush1.msra.mxu0 %v1402
    %3447 = vmatprep.subr.mxu0 %v1411
    %3448 = vmatpush1.msra.mxu0 %v1410
    %3449 = vmatprep.subr.mxu0 %v1419
    %3450 = vmatpush1.msra.mxu0 %v1418
    %3451 = vmatprep.subr.mxu0 %v1427
    %3452 = vmatpush1.msra.mxu0 %v1426
    %3453 = vmatprep.subr.mxu0 %v1435
    %3454 = vmatpush1.msra.mxu0 %v1434
    %3455 = vmatprep.subr.mxu0 %v1443
    %3456 = vmatpush1.msra.mxu0 %v1442
    %3457 = vmatprep.subr.mxu0 %v1451
    %3458 = vmatpush1.msra.mxu0 %v1450
    %3459 = vmatprep.subr.mxu0 %v1459
    %3460 = vmatpush1.msra.mxu0 %v1458
    %3461 = vmatprep.subr.mxu0 %v1467
    %3462 = vmatpush1.msra.mxu0 %v1466
    %3463 = vmatprep.subr.mxu0 %v1475
    %3464 = vmatpush1.msra.mxu0 %v1474
    %3465 = vmatprep.subr.mxu0 %v1483
    %3466 = vmatpush1.msra.mxu0 %v1482
    %3467 = vmatprep.subr.mxu0 %v1491
    %3468 = vmatpush1.msra.mxu0 %v1490
    %3469 = vmatprep.subr.mxu0 %v1499
    %3470 = vmatpush1.msra.mxu0 %v1498
    %3471 = vmatprep.subr.mxu0 %v1507
    %3472 = vmatpush1.msra.mxu0 %v1506
    %3473 = vmatprep.subr.mxu0 %v1515
    %3474 = vmatpush1.msra.mxu0 %v1514
    %3475 = vmatprep.subr.mxu0 %v1523
    %3476 = vmatpush1.msra.mxu0 %v1522
    %3477 = vmatprep.subr.mxu0 %v1531
    %3478 = vmatpush1.msra.mxu0 %v1530
    %3479 = vmatprep.mubr.f32.mxu0 %v3201
    %3480 = vmatmul.mubr.f32.gmra.mrb[0].mxu0 %v3200
    %v3481 = vpop.f32.mrb[0].mxu0
    %v3482 = vadd.f32 %v1561, %v3481
    %v3483 = vpop.f32.mrb[0].mxu0
    %v3484 = vadd.f32 %v1565, %v3483
    %3485 = vdwg.mxu0
    %3486 = vmatprep.subr.mxu0 %v765
    %3487 = vmatpush1.msra.mxu0 %v764
    %3488 = vmatprep.subr.mxu0 %v773
    %3489 = vmatpush1.msra.mxu0 %v772
    %3490 = vmatprep.subr.mxu0 %v781
    %3491 = vmatpush1.msra.mxu0 %v780
    %3492 = vmatprep.subr.mxu0 %v789
    %3493 = vmatpush1.msra.mxu0 %v788
    %3494 = vmatprep.subr.mxu0 %v797
    %3495 = vmatpush1.msra.mxu0 %v796
    %3496 = vmatprep.subr.mxu0 %v805
    %3497 = vmatpush1.msra.mxu0 %v804
    %3498 = vmatprep.subr.mxu0 %v813
    %3499 = vmatpush1.msra.mxu0 %v812
    %3500 = vmatprep.subr.mxu0 %v821
    %3501 = vmatpush1.msra.mxu0 %v820
    %3502 = vmatprep.subr.mxu0 %v829
    %3503 = vmatpush1.msra.mxu0 %v828
    %3504 = vmatprep.subr.mxu0 %v837
    %3505 = vmatpush1.msra.mxu0 %v836
    %3506 = vmatprep.subr.mxu0 %v845
    %3507 = vmatpush1.msra.mxu0 %v844
    %3508 = vmatprep.subr.mxu0 %v853
    %3509 = vmatpush1.msra.mxu0 %v852
    %3510 = vmatprep.subr.mxu0 %v861
    %3511 = vmatpush1.msra.mxu0 %v860
    %3512 = vmatprep.subr.mxu0 %v869
    %3513 = vmatpush1.msra.mxu0 %v868
    %3514 = vmatprep.subr.mxu0 %v877
    %3515 = vmatpush1.msra.mxu0 %v876
    %3516 = vmatprep.subr.mxu0 %v885
    %3517 = vmatpush1.msra.mxu0 %v884
    %3518 = vmatprep.subr.mxu0 %v893
    %3519 = vmatpush1.msra.mxu0 %v892
    %3520 = vmatprep.subr.mxu0 %v901
    %3521 = vmatpush1.msra.mxu0 %v900
    %3522 = vmatprep.subr.mxu0 %v909
    %3523 = vmatpush1.msra.mxu0 %v908
    %3524 = vmatprep.subr.mxu0 %v917
    %3525 = vmatpush1.msra.mxu0 %v916
    %3526 = vmatprep.subr.mxu0 %v925
    %3527 = vmatpush1.msra.mxu0 %v924
    %3528 = vmatprep.subr.mxu0 %v933
    %3529 = vmatpush1.msra.mxu0 %v932
    %3530 = vmatprep.subr.mxu0 %v941
    %3531 = vmatpush1.msra.mxu0 %v940
    %3532 = vmatprep.subr.mxu0 %v949
    %3533 = vmatpush1.msra.mxu0 %v948
    %3534 = vmatprep.subr.mxu0 %v957
    %3535 = vmatpush1.msra.mxu0 %v956
    %3536 = vmatprep.subr.mxu0 %v965
    %3537 = vmatpush1.msra.mxu0 %v964
    %3538 = vmatprep.subr.mxu0 %v973
    %3539 = vmatpush1.msra.mxu0 %v972
    %3540 = vmatprep.subr.mxu0 %v981
    %3541 = vmatpush1.msra.mxu0 %v980
    %3542 = vmatprep.subr.mxu0 %v989
    %3543 = vmatpush1.msra.mxu0 %v988
    %3544 = vmatprep.subr.mxu0 %v997
    %3545 = vmatpush1.msra.mxu0 %v996
    %3546 = vmatprep.subr.mxu0 %v1005
    %3547 = vmatpush1.msra.mxu0 %v1004
    %3548 = vmatprep.subr.mxu0 %v1013
    %3549 = vmatpush1.msra.mxu0 %v1012
    %3550 = vmatprep.mubr.f32.mxu0 %v2869
    %3551 = vmatmul.mubr.f32.gmra.mrb[0].mxu0 %v2868
    %v3552 = vpop.f32.mrb[0].mxu0
    %v3553 = vadd.f32 0.0, %v3552
    %v3554 = vpop.f32.mrb[0].mxu0
    %v3555 = vadd.f32 0.0, %v3554
    %3556 = vdwg.mxu0
    %3557 = vmatprep.subr.mxu0 %v767
    %3558 = vmatpush1.msra.mxu0 %v766
    %3559 = vmatprep.subr.mxu0 %v775
    %3560 = vmatpush1.msra.mxu0 %v774
    %3561 = vmatprep.subr.mxu0 %v783
    %3562 = vmatpush1.msra.mxu0 %v782
    %3563 = vmatprep.subr.mxu0 %v791
    %3564 = vmatpush1.msra.mxu0 %v790
    %3565 = vmatprep.subr.mxu0 %v799
    %3566 = vmatpush1.msra.mxu0 %v798
    %3567 = vmatprep.subr.mxu0 %v807
    %3568 = vmatpush1.msra.mxu0 %v806
    %3569 = vmatprep.subr.mxu0 %v815
    %3570 = vmatpush1.msra.mxu0 %v814
    %3571 = vmatprep.subr.mxu0 %v823
    %3572 = vmatpush1.msra.mxu0 %v822
    %3573 = vmatprep.subr.mxu0 %v831
    %3574 = vmatpush1.msra.mxu0 %v830
    %3575 = vmatprep.subr.mxu0 %v839
    %3576 = vmatpush1.msra.mxu0 %v838
    %3577 = vmatprep.subr.mxu0 %v847
    %3578 = vmatpush1.msra.mxu0 %v846
    %3579 = vmatprep.subr.mxu0 %v855
    %3580 = vmatpush1.msra.mxu0 %v854
    %3581 = vmatprep.subr.mxu0 %v863
    %3582 = vmatpush1.msra.mxu0 %v862
    %3583 = vmatprep.subr.mxu0 %v871
    %3584 = vmatpush1.msra.mxu0 %v870
    %3585 = vmatprep.subr.mxu0 %v879
    %3586 = vmatpush1.msra.mxu0 %v878
    %3587 = vmatprep.subr.mxu0 %v887
    %3588 = vmatpush1.msra.mxu0 %v886
    %3589 = vmatprep.subr.mxu0 %v895
    %3590 = vmatpush1.msra.mxu0 %v894
    %3591 = vmatprep.subr.mxu0 %v903
    %3592 = vmatpush1.msra.mxu0 %v902
    %3593 = vmatprep.subr.mxu0 %v911
    %3594 = vmatpush1.msra.mxu0 %v910
    %3595 = vmatprep.subr.mxu0 %v919
    %3596 = vmatpush1.msra.mxu0 %v918
    %3597 = vmatprep.subr.mxu0 %v927
    %3598 = vmatpush1.msra.mxu0 %v926
    %3599 = vmatprep.subr.mxu0 %v935
    %3600 = vmatpush1.msra.mxu0 %v934
    %3601 = vmatprep.subr.mxu0 %v943
    %3602 = vmatpush1.msra.mxu0 %v942
    %3603 = vmatprep.subr.mxu0 %v951
    %3604 = vmatpush1.msra.mxu0 %v950
    %3605 = vmatprep.subr.mxu0 %v959
    %3606 = vmatpush1.msra.mxu0 %v958
    %3607 = vmatprep.subr.mxu0 %v967
    %3608 = vmatpush1.msra.mxu0 %v966
    %3609 = vmatprep.subr.mxu0 %v975
    %3610 = vmatpush1.msra.mxu0 %v974
    %3611 = vmatprep.subr.mxu0 %v983
    %3612 = vmatpush1.msra.mxu0 %v982
    %3613 = vmatprep.subr.mxu0 %v991
    %3614 = vmatpush1.msra.mxu0 %v990
    %3615 = vmatprep.subr.mxu0 %v999
    %3616 = vmatpush1.msra.mxu0 %v998
    %3617 = vmatprep.subr.mxu0 %v1007
    %3618 = vmatpush1.msra.mxu0 %v1006
    %3619 = vmatprep.subr.mxu0 %v1015
    %3620 = vmatpush1.msra.mxu0 %v1014
    %3621 = vmatprep.mubr.f32.mxu0 %v2869
    %3622 = vmatmul.mubr.f32.gmra.mrb[0].mxu0 %v2868
    %v3623 = vpop.f32.mrb[0].mxu0
    %v3624 = vadd.f32 0.0, %v3623
    %v3625 = vpop.f32.mrb[0].mxu0
    %v3626 = vadd.f32 0.0, %v3625
    %3627 = vdwg.mxu0
    %3628 = vmatprep.subr.mxu0 %v769
    %3629 = vmatpush1.msra.mxu0 %v768
    %3630 = vmatprep.subr.mxu0 %v777
    %3631 = vmatpush1.msra.mxu0 %v776
    %3632 = vmatprep.subr.mxu0 %v785
    %3633 = vmatpush1.msra.mxu0 %v784
    %3634 = vmatprep.subr.mxu0 %v793
    %3635 = vmatpush1.msra.mxu0 %v792
    %3636 = vmatprep.subr.mxu0 %v801
    %3637 = vmatpush1.msra.mxu0 %v800
    %3638 = vmatprep.subr.mxu0 %v809
    %3639 = vmatpush1.msra.mxu0 %v808
    %3640 = vmatprep.subr.mxu0 %v817
    %3641 = vmatpush1.msra.mxu0 %v816
    %3642 = vmatprep.subr.mxu0 %v825
    %3643 = vmatpush1.msra.mxu0 %v824
    %3644 = vmatprep.subr.mxu0 %v833
    %3645 = vmatpush1.msra.mxu0 %v832
    %3646 = vmatprep.subr.mxu0 %v841
    %3647 = vmatpush1.msra.mxu0 %v840
    %3648 = vmatprep.subr.mxu0 %v849
    %3649 = vmatpush1.msra.mxu0 %v848
    %3650 = vmatprep.subr.mxu0 %v857
    %3651 = vmatpush1.msra.mxu0 %v856
    %3652 = vmatprep.subr.mxu0 %v865
    %3653 = vmatpush1.msra.mxu0 %v864
    %3654 = vmatprep.subr.mxu0 %v873
    %3655 = vmatpush1.msra.mxu0 %v872
    %3656 = vmatprep.subr.mxu0 %v881
    %3657 = vmatpush1.msra.mxu0 %v880
    %3658 = vmatprep.subr.mxu0 %v889
    %3659 = vmatpush1.msra.mxu0 %v888
    %3660 = vmatprep.subr.mxu0 %v897
    %3661 = vmatpush1.msra.mxu0 %v896
    %3662 = vmatprep.subr.mxu0 %v905
    %3663 = vmatpush1.msra.mxu0 %v904
    %3664 = vmatprep.subr.mxu0 %v913
    %3665 = vmatpush1.msra.mxu0 %v912
    %3666 = vmatprep.subr.mxu0 %v921
    %3667 = vmatpush1.msra.mxu0 %v920
    %3668 = vmatprep.subr.mxu0 %v929
    %3669 = vmatpush1.msra.mxu0 %v928
    %3670 = vmatprep.subr.mxu0 %v937
    %3671 = vmatpush1.msra.mxu0 %v936
    %3672 = vmatprep.subr.mxu0 %v945
    %3673 = vmatpush1.msra.mxu0 %v944
    %3674 = vmatprep.subr.mxu0 %v953
    %3675 = vmatpush1.msra.mxu0 %v952
    %3676 = vmatprep.subr.mxu0 %v961
    %3677 = vmatpush1.msra.mxu0 %v960
    %3678 = vmatprep.subr.mxu0 %v969
    %3679 = vmatpush1.msra.mxu0 %v968
    %3680 = vmatprep.subr.mxu0 %v977
    %3681 = vmatpush1.msra.mxu0 %v976
    %3682 = vmatprep.subr.mxu0 %v985
    %3683 = vmatpush1.msra.mxu0 %v984
    %3684 = vmatprep.subr.mxu0 %v993
    %3685 = vmatpush1.msra.mxu0 %v992
    %3686 = vmatprep.subr.mxu0 %v1001
    %3687 = vmatpush1.msra.mxu0 %v1000
    %3688 = vmatprep.subr.mxu0 %v1009
    %3689 = vmatpush1.msra.mxu0 %v1008
    %3690 = vmatprep.subr.mxu0 %v1017
    %3691 = vmatpush1.msra.mxu0 %v1016
    %3692 = vmatprep.mubr.f32.mxu0 %v2869
    %3693 = vmatmul.mubr.f32.gmra.mrb[0].mxu0 %v2868
    %v3694 = vpop.f32.mrb[0].mxu0
    %v3695 = vadd.f32 0.0, %v3694
    %v3696 = vpop.f32.mrb[0].mxu0
    %v3697 = vadd.f32 0.0, %v3696
    %3698 = vdwg.mxu0
    %3699 = vmatprep.subr.mxu0 %v771
    %3700 = vmatpush1.msra.mxu0 %v770
    %3701 = vmatprep.subr.mxu0 %v779
    %3702 = vmatpush1.msra.mxu0 %v778
    %3703 = vmatprep.subr.mxu0 %v787
    %3704 = vmatpush1.msra.mxu0 %v786
    %3705 = vmatprep.subr.mxu0 %v795
    %3706 = vmatpush1.msra.mxu0 %v794
    %3707 = vmatprep.subr.mxu0 %v803
    %3708 = vmatpush1.msra.mxu0 %v802
    %3709 = vmatprep.subr.mxu0 %v811
    %3710 = vmatpush1.msra.mxu0 %v810
    %3711 = vmatprep.subr.mxu0 %v819
    %3712 = vmatpush1.msra.mxu0 %v818
    %3713 = vmatprep.subr.mxu0 %v827
    %3714 = vmatpush1.msra.mxu0 %v826
    %3715 = vmatprep.subr.mxu0 %v835
    %3716 = vmatpush1.msra.mxu0 %v834
    %3717 = vmatprep.subr.mxu0 %v843
    %3718 = vmatpush1.msra.mxu0 %v842
    %3719 = vmatprep.subr.mxu0 %v851
    %3720 = vmatpush1.msra.mxu0 %v850
    %3721 = vmatprep.subr.mxu0 %v859
    %3722 = vmatpush1.msra.mxu0 %v858
    %3723 = vmatprep.subr.mxu0 %v867
    %3724 = vmatpush1.msra.mxu0 %v866
    %3725 = vmatprep.subr.mxu0 %v875
    %3726 = vmatpush1.msra.mxu0 %v874
    %3727 = vmatprep.subr.mxu0 %v883
    %3728 = vmatpush1.msra.mxu0 %v882
    %3729 = vmatprep.subr.mxu0 %v891
    %3730 = vmatpush1.msra.mxu0 %v890
    %3731 = vmatprep.subr.mxu0 %v899
    %3732 = vmatpush1.msra.mxu0 %v898
    %3733 = vmatprep.subr.mxu0 %v907
    %3734 = vmatpush1.msra.mxu0 %v906
    %3735 = vmatprep.subr.mxu0 %v915
    %3736 = vmatpush1.msra.mxu0 %v914
    %3737 = vmatprep.subr.mxu0 %v923
    %3738 = vmatpush1.msra.mxu0 %v922
    %3739 = vmatprep.subr.mxu0 %v931
    %3740 = vmatpush1.msra.mxu0 %v930
    %3741 = vmatprep.subr.mxu0 %v939
    %3742 = vmatpush1.msra.mxu0 %v938
    %3743 = vmatprep.subr.mxu0 %v947
    %3744 = vmatpush1.msra.mxu0 %v946
    %3745 = vmatprep.subr.mxu0 %v955
    %3746 = vmatpush1.msra.mxu0 %v954
    %3747 = vmatprep.subr.mxu0 %v963
    %3748 = vmatpush1.msra.mxu0 %v962
    %3749 = vmatprep.subr.mxu0 %v971
    %3750 = vmatpush1.msra.mxu0 %v970
    %3751 = vmatprep.subr.mxu0 %v979
    %3752 = vmatpush1.msra.mxu0 %v978
    %3753 = vmatprep.subr.mxu0 %v987
    %3754 = vmatpush1.msra.mxu0 %v986
    %3755 = vmatprep.subr.mxu0 %v995
    %3756 = vmatpush1.msra.mxu0 %v994
    %3757 = vmatprep.subr.mxu0 %v1003
    %3758 = vmatpush1.msra.mxu0 %v1002
    %3759 = vmatprep.subr.mxu0 %v1011
    %3760 = vmatpush1.msra.mxu0 %v1010
    %3761 = vmatprep.subr.mxu0 %v1019
    %3762 = vmatpush1.msra.mxu0 %v1018
    %3763 = vmatprep.mubr.f32.mxu0 %v2869
    %3764 = vmatmul.mubr.f32.gmra.mrb[0].mxu0 %v2868
    %v3765 = vpop.f32.mrb[0].mxu0
    %v3766 = vadd.f32 0.0, %v3765
    %v3767 = vpop.f32.mrb[0].mxu0
    %v3768 = vadd.f32 0.0, %v3767
    %3769 = vdwg.mxu0
    %v3770 = vadd.f32 %v391, %v3553
    %v3771 = vadd.f32 %v393, %v3555
    %v3772 = vadd.f32 %v504, %v3624
    %v3773 = vadd.f32 %v506, %v3626
    %v3774 = vadd.f32 %v617, %v3695
    %v3775 = vadd.f32 %v619, %v3697
    %v3776 = vadd.f32 %v730, %v3766
    %v3777 = vadd.f32 %v732, %v3768
    %v3778 = vxor.u32 %v3770, 2147483648
    %v3779 = vxor.u32 %v3771, 2147483648
    %v3780 = vmul.f32 %v3778, 1.442695
    %v3781 = vpow.pop %v3780
    %v3782 = vmul.f32 %v3779, 1.442695
    %v3783 = vpow.pop %v3782
    %v3784 = vadd.f32 %v3781, 1.0
    %v3785 = vadd.f32 %v3783, 1.0
    %v3786 = vrcp.pop %v3784
    %v3787 = vmul.f32 1.0, %v3786
    %v3788 = vrcp.pop %v3785
    %v3789 = vmul.f32 1.0, %v3788
    %v3790 = vxor.u32 %v3772, 2147483648
    %v3791 = vxor.u32 %v3773, 2147483648
    %v3792 = vmul.f32 %v3790, 1.442695
    %v3793 = vpow.pop %v3792
    %v3794 = vmul.f32 %v3791, 1.442695
    %v3795 = vpow.pop %v3794
    %v3796 = vadd.f32 %v3793, 1.0
    %v3797 = vadd.f32 %v3795, 1.0
    %v3798 = vrcp.pop %v3796
    %v3799 = vmul.f32 1.0, %v3798
    %v3800 = vrcp.pop %v3797
    %v3801 = vmul.f32 1.0, %v3800
    %v3802 = vtanh.pop %v3774
    %v3803 = vtanh.pop %v3775
    %v3804 = vxor.u32 %v3776, 2147483648
    %v3805 = vxor.u32 %v3777, 2147483648
    %v3806 = vmul.f32 %v3804, 1.442695
    %v3807 = vpow.pop %v3806
    %v3808 = vmul.f32 %v3805, 1.442695
    %v3809 = vpow.pop %v3808
    %v3810 = vadd.f32 %v3807, 1.0
    %v3811 = vadd.f32 %v3809, 1.0
    %v3812 = vrcp.pop %v3810
    %v3813 = vmul.f32 1.0, %v3812
    %v3814 = vrcp.pop %v3811
    %v3815 = vmul.f32 1.0, %v3814
    %v3816 = vmul.f32 %v3799, %v2864
    %v3817 = vmul.f32 %v3801, %v2865
    %v3818 = vmul.f32 %v3787, %v3802
    %v3819 = vmul.f32 %v3789, %v3803
    %v3820 = vadd.f32 %v3816, %v3818
    %v3821 = vadd.f32 %v3817, %v3819
    %v3822 = vtanh.pop %v3820
    %v3823 = vtanh.pop %v3821
    %v3824 = vmul.f32 %v3813, %v3822
    %v3825 = vmul.f32 %v3815, %v3823
    %3826 = vmatprep.subr.mxu0 %v1021
    %3827 = vmatpush1.msra.mxu0 %v1020
    %3828 = vmatprep.subr.mxu0 %v1029
    %3829 = vmatpush1.msra.mxu0 %v1028
    %3830 = vmatprep.subr.mxu0 %v1037
    %3831 = vmatpush1.msra.mxu0 %v1036
    %3832 = vmatprep.subr.mxu0 %v1045
    %3833 = vmatpush1.msra.mxu0 %v1044
    %3834 = vmatprep.subr.mxu0 %v1053
    %3835 = vmatpush1.msra.mxu0 %v1052
    %3836 = vmatprep.subr.mxu0 %v1061
    %3837 = vmatpush1.msra.mxu0 %v1060
    %3838 = vmatprep.subr.mxu0 %v1069
    %3839 = vmatpush1.msra.mxu0 %v1068
    %3840 = vmatprep.subr.mxu0 %v1077
    %3841 = vmatpush1.msra.mxu0 %v1076
    %3842 = vmatprep.subr.mxu0 %v1085
    %3843 = vmatpush1.msra.mxu0 %v1084
    %3844 = vmatprep.subr.mxu0 %v1093
    %3845 = vmatpush1.msra.mxu0 %v1092
    %3846 = vmatprep.subr.mxu0 %v1101
    %3847 = vmatpush1.msra.mxu0 %v1100
    %3848 = vmatprep.subr.mxu0 %v1109
    %3849 = vmatpush1.msra.mxu0 %v1108
    %3850 = vmatprep.subr.mxu0 %v1117
    %3851 = vmatpush1.msra.mxu0 %v1116
    %3852 = vmatprep.subr.mxu0 %v1125
    %3853 = vmatpush1.msra.mxu0 %v1124
    %3854 = vmatprep.subr.mxu0 %v1133
    %3855 = vmatpush1.msra.mxu0 %v1132
    %3856 = vmatprep.subr.mxu0 %v1141
    %3857 = vmatpush1.msra.mxu0 %v1140
    %3858 = vmatprep.subr.mxu0 %v1149
    %3859 = vmatpush1.msra.mxu0 %v1148
    %3860 = vmatprep.subr.mxu0 %v1157
    %3861 = vmatpush1.msra.mxu0 %v1156
    %3862 = vmatprep.subr.mxu0 %v1165
    %3863 = vmatpush1.msra.mxu0 %v1164
    %3864 = vmatprep.subr.mxu0 %v1173
    %3865 = vmatpush1.msra.mxu0 %v1172
    %3866 = vmatprep.subr.mxu0 %v1181
    %3867 = vmatpush1.msra.mxu0 %v1180
    %3868 = vmatprep.subr.mxu0 %v1189
    %3869 = vmatpush1.msra.mxu0 %v1188
    %3870 = vmatprep.subr.mxu0 %v1197
    %3871 = vmatpush1.msra.mxu0 %v1196
    %3872 = vmatprep.subr.mxu0 %v1205
    %3873 = vmatpush1.msra.mxu0 %v1204
    %3874 = vmatprep.subr.mxu0 %v1213
    %3875 = vmatpush1.msra.mxu0 %v1212
    %3876 = vmatprep.subr.mxu0 %v1221
    %3877 = vmatpush1.msra.mxu0 %v1220
    %3878 = vmatprep.subr.mxu0 %v1229
    %3879 = vmatpush1.msra.mxu0 %v1228
    %3880 = vmatprep.subr.mxu0 %v1237
    %3881 = vmatpush1.msra.mxu0 %v1236
    %3882 = vmatprep.subr.mxu0 %v1245
    %3883 = vmatpush1.msra.mxu0 %v1244
    %3884 = vmatprep.subr.mxu0 %v1253
    %3885 = vmatpush1.msra.mxu0 %v1252
    %3886 = vmatprep.subr.mxu0 %v1261
    %3887 = vmatpush1.msra.mxu0 %v1260
    %3888 = vmatprep.subr.mxu0 %v1269
    %3889 = vmatpush1.msra.mxu0 %v1268
    %3890 = vmatprep.mubr.f32.mxu0 %v3825
    %3891 = vmatmul.mubr.f32.gmra.mrb[0].mxu0 %v3824
    %v3892 = vpop.f32.mrb[0].mxu0
    %v3893 = vadd.f32 %v3269, %v3892
    %v3894 = vpop.f32.mrb[0].mxu0
    %v3895 = vadd.f32 %v3271, %v3894
    %3896 = vdwg.mxu0
    %3897 = vmatprep.subr.mxu0 %v1023
    %3898 = vmatpush1.msra.mxu0 %v1022
    %3899 = vmatprep.subr.mxu0 %v1031
    %3900 = vmatpush1.msra.mxu0 %v1030
    %3901 = vmatprep.subr.mxu0 %v1039
    %3902 = vmatpush1.msra.mxu0 %v1038
    %3903 = vmatprep.subr.mxu0 %v1047
    %3904 = vmatpush1.msra.mxu0 %v1046
    %3905 = vmatprep.subr.mxu0 %v1055
    %3906 = vmatpush1.msra.mxu0 %v1054
    %3907 = vmatprep.subr.mxu0 %v1063
    %3908 = vmatpush1.msra.mxu0 %v1062
    %3909 = vmatprep.subr.mxu0 %v1071
    %3910 = vmatpush1.msra.mxu0 %v1070
    %3911 = vmatprep.subr.mxu0 %v1079
    %3912 = vmatpush1.msra.mxu0 %v1078
    %3913 = vmatprep.subr.mxu0 %v1087
    %3914 = vmatpush1.msra.mxu0 %v1086
    %3915 = vmatprep.subr.mxu0 %v1095
    %3916 = vmatpush1.msra.mxu0 %v1094
    %3917 = vmatprep.subr.mxu0 %v1103
    %3918 = vmatpush1.msra.mxu0 %v1102
    %3919 = vmatprep.subr.mxu0 %v1111
    %3920 = vmatpush1.msra.mxu0 %v1110
    %3921 = vmatprep.subr.mxu0 %v1119
    %3922 = vmatpush1.msra.mxu0 %v1118
    %3923 = vmatprep.subr.mxu0 %v1127
    %3924 = vmatpush1.msra.mxu0 %v1126
    %3925 = vmatprep.subr.mxu0 %v1135
    %3926 = vmatpush1.msra.mxu0 %v1134
    %3927 = vmatprep.subr.mxu0 %v1143
    %3928 = vmatpush1.msra.mxu0 %v1142
    %3929 = vmatprep.subr.mxu0 %v1151
    %3930 = vmatpush1.msra.mxu0 %v1150
    %3931 = vmatprep.subr.mxu0 %v1159
    %3932 = vmatpush1.msra.mxu0 %v1158
    %3933 = vmatprep.subr.mxu0 %v1167
    %3934 = vmatpush1.msra.mxu0 %v1166
    %3935 = vmatprep.subr.mxu0 %v1175
    %3936 = vmatpush1.msra.mxu0 %v1174
    %3937 = vmatprep.subr.mxu0 %v1183
    %3938 = vmatpush1.msra.mxu0 %v1182
    %3939 = vmatprep.subr.mxu0 %v1191
    %3940 = vmatpush1.msra.mxu0 %v1190
    %3941 = vmatprep.subr.mxu0 %v1199
    %3942 = vmatpush1.msra.mxu0 %v1198
    %3943 = vmatprep.subr.mxu0 %v1207
    %3944 = vmatpush1.msra.mxu0 %v1206
    %3945 = vmatprep.subr.mxu0 %v1215
    %3946 = vmatpush1.msra.mxu0 %v1214
    %3947 = vmatprep.subr.mxu0 %v1223
    %3948 = vmatpush1.msra.mxu0 %v1222
    %3949 = vmatprep.subr.mxu0 %v1231
    %3950 = vmatpush1.msra.mxu0 %v1230
    %3951 = vmatprep.subr.mxu0 %v1239
    %3952 = vmatpush1.msra.mxu0 %v1238
    %3953 = vmatprep.subr.mxu0 %v1247
    %3954 = vmatpush1.msra.mxu0 %v1246
    %3955 = vmatprep.subr.mxu0 %v1255
    %3956 = vmatpush1.msra.mxu0 %v1254
    %3957 = vmatprep.subr.mxu0 %v1263
    %3958 = vmatpush1.msra.mxu0 %v1262
    %3959 = vmatprep.subr.mxu0 %v1271
    %3960 = vmatpush1.msra.mxu0 %v1270
    %3961 = vmatprep.mubr.f32.mxu0 %v3825
    %3962 = vmatmul.mubr.f32.gmra.mrb[0].mxu0 %v3824
    %v3963 = vpop.f32.mrb[0].mxu0
    %v3964 = vadd.f32 %v3340, %v3963
    %v3965 = vpop.f32.mrb[0].mxu0
    %v3966 = vadd.f32 %v3342, %v3965
    %3967 = vdwg.mxu0
    %3968 = vmatprep.subr.mxu0 %v1025
    %3969 = vmatpush1.msra.mxu0 %v1024
    %3970 = vmatprep.subr.mxu0 %v1033
    %3971 = vmatpush1.msra.mxu0 %v1032
    %3972 = vmatprep.subr.mxu0 %v1041
    %3973 = vmatpush1.msra.mxu0 %v1040
    %3974 = vmatprep.subr.mxu0 %v1049
    %3975 = vmatpush1.msra.mxu0 %v1048
    %3976 = vmatprep.subr.mxu0 %v1057
    %3977 = vmatpush1.msra.mxu0 %v1056
    %3978 = vmatprep.subr.mxu0 %v1065
    %3979 = vmatpush1.msra.mxu0 %v1064
    %3980 = vmatprep.subr.mxu0 %v1073
    %3981 = vmatpush1.msra.mxu0 %v1072
    %3982 = vmatprep.subr.mxu0 %v1081
    %3983 = vmatpush1.msra.mxu0 %v1080
    %3984 = vmatprep.subr.mxu0 %v1089
    %3985 = vmatpush1.msra.mxu0 %v1088
    %3986 = vmatprep.subr.mxu0 %v1097
    %3987 = vmatpush1.msra.mxu0 %v1096
    %3988 = vmatprep.subr.mxu0 %v1105
    %3989 = vmatpush1.msra.mxu0 %v1104
    %3990 = vmatprep.subr.mxu0 %v1113
    %3991 = vmatpush1.msra.mxu0 %v1112
    %3992 = vmatprep.subr.mxu0 %v1121
    %3993 = vmatpush1.msra.mxu0 %v1120
    %3994 = vmatprep.subr.mxu0 %v1129
    %3995 = vmatpush1.msra.mxu0 %v1128
    %3996 = vmatprep.subr.mxu0 %v1137
    %3997 = vmatpush1.msra.mxu0 %v1136
    %3998 = vmatprep.subr.mxu0 %v1145
    %3999 = vmatpush1.msra.mxu0 %v1144
    %4000 = vmatprep.subr.mxu0 %v1153
    %4001 = vmatpush1.msra.mxu0 %v1152
    %4002 = vmatprep.subr.mxu0 %v1161
    %4003 = vmatpush1.msra.mxu0 %v1160
    %4004 = vmatprep.subr.mxu0 %v1169
    %4005 = vmatpush1.msra.mxu0 %v1168
    %4006 = vmatprep.subr.mxu0 %v1177
    %4007 = vmatpush1.msra.mxu0 %v1176
    %4008 = vmatprep.subr.mxu0 %v1185
    %4009 = vmatpush1.msra.mxu0 %v1184
    %4010 = vmatprep.subr.mxu0 %v1193
    %4011 = vmatpush1.msra.mxu0 %v1192
    %4012 = vmatprep.subr.mxu0 %v1201
    %4013 = vmatpush1.msra.mxu0 %v1200
    %4014 = vmatprep.subr.mxu0 %v1209
    %4015 = vmatpush1.msra.mxu0 %v1208
    %4016 = vmatprep.subr.mxu0 %v1217
    %4017 = vmatpush1.msra.mxu0 %v1216
    %4018 = vmatprep.subr.mxu0 %v1225
    %4019 = vmatpush1.msra.mxu0 %v1224
    %4020 = vmatprep.subr.mxu0 %v1233
    %4021 = vmatpush1.msra.mxu0 %v1232
    %4022 = vmatprep.subr.mxu0 %v1241
    %4023 = vmatpush1.msra.mxu0 %v1240
    %4024 = vmatprep.subr.mxu0 %v1249
    %4025 = vmatpush1.msra.mxu0 %v1248
    %4026 = vmatprep.subr.mxu0 %v1257
    %4027 = vmatpush1.msra.mxu0 %v1256
    %4028 = vmatprep.subr.mxu0 %v1265
    %4029 = vmatpush1.msra.mxu0 %v1264
    %4030 = vmatprep.subr.mxu0 %v1273
    %4031 = vmatpush1.msra.mxu0 %v1272
    %4032 = vmatprep.mubr.f32.mxu0 %v3825
    %4033 = vmatmul.mubr.f32.gmra.mrb[0].mxu0 %v3824
    %v4034 = vpop.f32.mrb[0].mxu0
    %v4035 = vadd.f32 %v3411, %v4034
    %v4036 = vpop.f32.mrb[0].mxu0
    %v4037 = vadd.f32 %v3413, %v4036
    %4038 = vdwg.mxu0
    %4039 = vmatprep.subr.mxu0 %v1027
    %4040 = vmatpush1.msra.mxu0 %v1026
    %4041 = vmatprep.subr.mxu0 %v1035
    %4042 = vmatpush1.msra.mxu0 %v1034
    %4043 = vmatprep.subr.mxu0 %v1043
    %4044 = vmatpush1.msra.mxu0 %v1042
    %4045 = vmatprep.subr.mxu0 %v1051
    %4046 = vmatpush1.msra.mxu0 %v1050
    %4047 = vmatprep.subr.mxu0 %v1059
    %4048 = vmatpush1.msra.mxu0 %v1058
    %4049 = vmatprep.subr.mxu0 %v1067
    %4050 = vmatpush1.msra.mxu0 %v1066
    %4051 = vmatprep.subr.mxu0 %v1075
    %4052 = vmatpush1.msra.mxu0 %v1074
    %4053 = vmatprep.subr.mxu0 %v1083
    %4054 = vmatpush1.msra.mxu0 %v1082
    %4055 = vmatprep.subr.mxu0 %v1091
    %4056 = vmatpush1.msra.mxu0 %v1090
    %4057 = vmatprep.subr.mxu0 %v1099
    %4058 = vmatpush1.msra.mxu0 %v1098
    %4059 = vmatprep.subr.mxu0 %v1107
    %4060 = vmatpush1.msra.mxu0 %v1106
    %4061 = vmatprep.subr.mxu0 %v1115
    %4062 = vmatpush1.msra.mxu0 %v1114
    %4063 = vmatprep.subr.mxu0 %v1123
    %4064 = vmatpush1.msra.mxu0 %v1122
    %4065 = vmatprep.subr.mxu0 %v1131
    %4066 = vmatpush1.msra.mxu0 %v1130
    %4067 = vmatprep.subr.mxu0 %v1139
    %4068 = vmatpush1.msra.mxu0 %v1138
    %4069 = vmatprep.subr.mxu0 %v1147
    %4070 = vmatpush1.msra.mxu0 %v1146
    %4071 = vmatprep.subr.mxu0 %v1155
    %4072 = vmatpush1.msra.mxu0 %v1154
    %4073 = vmatprep.subr.mxu0 %v1163
    %4074 = vmatpush1.msra.mxu0 %v1162
    %4075 = vmatprep.subr.mxu0 %v1171
    %4076 = vmatpush1.msra.mxu0 %v1170
    %4077 = vmatprep.subr.mxu0 %v1179
    %4078 = vmatpush1.msra.mxu0 %v1178
    %4079 = vmatprep.subr.mxu0 %v1187
    %4080 = vmatpush1.msra.mxu0 %v1186
    %4081 = vmatprep.subr.mxu0 %v1195
    %4082 = vmatpush1.msra.mxu0 %v1194
    %4083 = vmatprep.subr.mxu0 %v1203
    %4084 = vmatpush1.msra.mxu0 %v1202
    %4085 = vmatprep.subr.mxu0 %v1211
    %4086 = vmatpush1.msra.mxu0 %v1210
    %4087 = vmatprep.subr.mxu0 %v1219
    %4088 = vmatpush1.msra.mxu0 %v1218
    %4089 = vmatprep.subr.mxu0 %v1227
    %4090 = vmatpush1.msra.mxu0 %v1226
    %4091 = vmatprep.subr.mxu0 %v1235
    %4092 = vmatpush1.msra.mxu0 %v1234
    %4093 = vmatprep.subr.mxu0 %v1243
    %4094 = vmatpush1.msra.mxu0 %v1242
    %4095 = vmatprep.subr.mxu0 %v1251
    %4096 = vmatpush1.msra.mxu0 %v1250
    %4097 = vmatprep.subr.mxu0 %v1259
    %4098 = vmatpush1.msra.mxu0 %v1258
    %4099 = vmatprep.subr.mxu0 %v1267
    %4100 = vmatpush1.msra.mxu0 %v1266
    %4101 = vmatprep.subr.mxu0 %v1275
    %4102 = vmatpush1.msra.mxu0 %v1274
    %4103 = vmatprep.mubr.f32.mxu0 %v3825
    %4104 = vmatmul.mubr.f32.gmra.mrb[0].mxu0 %v3824
    %v4105 = vpop.f32.mrb[0].mxu0
    %v4106 = vadd.f32 %v3482, %v4105
    %v4107 = vpop.f32.mrb[0].mxu0
    %v4108 = vadd.f32 %v3484, %v4107
    %4109 = vdwg.mxu0
    %v4110 = vxor.u32 %v3893, 2147483648
    %v4111 = vxor.u32 %v3895, 2147483648
    %v4112 = vmul.f32 %v4110, 1.442695
    %v4113 = vpow.pop %v4112
    %v4114 = vmul.f32 %v4111, 1.442695
    %v4115 = vpow.pop %v4114
    %v4116 = vadd.f32 %v4113, 1.0
    %v4117 = vadd.f32 %v4115, 1.0
    %v4118 = vrcp.pop %v4116
    %v4119 = vmul.f32 1.0, %v4118
    %v4120 = vrcp.pop %v4117
    %v4121 = vmul.f32 1.0, %v4120
    %v4122 = vxor.u32 %v3964, 2147483648
    %v4123 = vxor.u32 %v3966, 2147483648
    %v4124 = vmul.f32 %v4122, 1.442695
    %v4125 = vpow.pop %v4124
    %v4126 = vmul.f32 %v4123, 1.442695
    %v4127 = vpow.pop %v4126
    %v4128 = vadd.f32 %v4125, 1.0
    %v4129 = vadd.f32 %v4127, 1.0
    %v4130 = vrcp.pop %v4128
    %v4131 = vmul.f32 1.0, %v4130
    %v4132 = vrcp.pop %v4129
    %v4133 = vmul.f32 1.0, %v4132
    %v4134 = vtanh.pop %v4035
    %v4135 = vtanh.pop %v4037
    %v4136 = vxor.u32 %v4106, 2147483648
    %v4137 = vxor.u32 %v4108, 2147483648
    %v4138 = vmul.f32 %v4136, 1.442695
    %v4139 = vpow.pop %v4138
    %v4140 = vmul.f32 %v4137, 1.442695
    %v4141 = vpow.pop %v4140
    %v4142 = vadd.f32 %v4139, 1.0
    %v4143 = vadd.f32 %v4141, 1.0
    %v4144 = vrcp.pop %v4142
    %v4145 = vmul.f32 1.0, %v4144
    %v4146 = vrcp.pop %v4143
    %v4147 = vmul.f32 1.0, %v4146
    %v4148 = vmul.f32 %v4131, %v3196
    %v4149 = vmul.f32 %v4133, %v3197
    %v4150 = vmul.f32 %v4119, %v4134
    %v4151 = vmul.f32 %v4121, %v4135
    %v4152 = vadd.f32 %v4148, %v4150
    %v4153 = vadd.f32 %v4149, %v4151
    %v4154 = vtanh.pop %v4152
    %v4155 = vtanh.pop %v4153
    %v4156 = vmul.f32 %v4145, %v4154
    %v4157 = vmul.f32 %v4147, %v4155
    %4158 = vmatprep.subr.mxu0 %v1277
    %4159 = vmatpush1.msra.mxu0 %v1276
    %4160 = vmatprep.subr.mxu0 %v1285
    %4161 = vmatpush1.msra.mxu0 %v1284
    %4162 = vmatprep.subr.mxu0 %v1293
    %4163 = vmatpush1.msra.mxu0 %v1292
    %4164 = vmatprep.subr.mxu0 %v1301
    %4165 = vmatpush1.msra.mxu0 %v1300
    %4166 = vmatprep.subr.mxu0 %v1309
    %4167 = vmatpush1.msra.mxu0 %v1308
    %4168 = vmatprep.subr.mxu0 %v1317
    %4169 = vmatpush1.msra.mxu0 %v1316
    %4170 = vmatprep.subr.mxu0 %v1325
    %4171 = vmatpush1.msra.mxu0 %v1324
    %4172 = vmatprep.subr.mxu0 %v1333
    %4173 = vmatpush1.msra.mxu0 %v1332
    %4174 = vmatprep.subr.mxu0 %v1341
    %4175 = vmatpush1.msra.mxu0 %v1340
    %4176 = vmatprep.subr.mxu0 %v1349
    %4177 = vmatpush1.msra.mxu0 %v1348
    %4178 = vmatprep.subr.mxu0 %v1357
    %4179 = vmatpush1.msra.mxu0 %v1356
    %4180 = vmatprep.subr.mxu0 %v1365
    %4181 = vmatpush1.msra.mxu0 %v1364
    %4182 = vmatprep.subr.mxu0 %v1373
    %4183 = vmatpush1.msra.mxu0 %v1372
    %4184 = vmatprep.subr.mxu0 %v1381
    %4185 = vmatpush1.msra.mxu0 %v1380
    %4186 = vmatprep.subr.mxu0 %v1389
    %4187 = vmatpush1.msra.mxu0 %v1388
    %4188 = vmatprep.subr.mxu0 %v1397
    %4189 = vmatpush1.msra.mxu0 %v1396
    %4190 = vmatprep.subr.mxu0 %v1405
    %4191 = vmatpush1.msra.mxu0 %v1404
    %4192 = vmatprep.subr.mxu0 %v1413
    %4193 = vmatpush1.msra.mxu0 %v1412
    %4194 = vmatprep.subr.mxu0 %v1421
    %4195 = vmatpush1.msra.mxu0 %v1420
    %4196 = vmatprep.subr.mxu0 %v1429
    %4197 = vmatpush1.msra.mxu0 %v1428
    %4198 = vmatprep.subr.mxu0 %v1437
    %4199 = vmatpush1.msra.mxu0 %v1436
    %4200 = vmatprep.subr.mxu0 %v1445
    %4201 = vmatpush1.msra.mxu0 %v1444
    %4202 = vmatprep.subr.mxu0 %v1453
    %4203 = vmatpush1.msra.mxu0 %v1452
    %4204 = vmatprep.subr.mxu0 %v1461
    %4205 = vmatpush1.msra.mxu0 %v1460
    %4206 = vmatprep.subr.mxu0 %v1469
    %4207 = vmatpush1.msra.mxu0 %v1468
    %4208 = vmatprep.subr.mxu0 %v1477
    %4209 = vmatpush1.msra.mxu0 %v1476
    %4210 = vmatprep.subr.mxu0 %v1485
    %4211 = vmatpush1.msra.mxu0 %v1484
    %4212 = vmatprep.subr.mxu0 %v1493
    %4213 = vmatpush1.msra.mxu0 %v1492
    %4214 = vmatprep.subr.mxu0 %v1501
    %4215 = vmatpush1.msra.mxu0 %v1500
    %4216 = vmatprep.subr.mxu0 %v1509
    %4217 = vmatpush1.msra.mxu0 %v1508
    %4218 = vmatprep.subr.mxu0 %v1517
    %4219 = vmatpush1.msra.mxu0 %v1516
    %4220 = vmatprep.subr.mxu0 %v1525
    %4221 = vmatpush1.msra.mxu0 %v1524
    %4222 = vmatprep.mubr.f32.mxu0 %v4157
    %4223 = vmatmul.mubr.f32.gmra.mrb[0].mxu0 %v4156
    %v4224 = vpop.f32.mrb[0].mxu0
    %v4225 = vadd.f32 %v1537, %v4224
    %v4226 = vpop.f32.mrb[0].mxu0
    %v4227 = vadd.f32 %v1541, %v4226
    %4228 = vdwg.mxu0
    %4229 = vmatprep.subr.mxu0 %v1279
    %4230 = vmatpush1.msra.mxu0 %v1278
    %4231 = vmatprep.subr.mxu0 %v1287
    %4232 = vmatpush1.msra.mxu0 %v1286
    %4233 = vmatprep.subr.mxu0 %v1295
    %4234 = vmatpush1.msra.mxu0 %v1294
    %4235 = vmatprep.subr.mxu0 %v1303
    %4236 = vmatpush1.msra.mxu0 %v1302
    %4237 = vmatprep.subr.mxu0 %v1311
    %4238 = vmatpush1.msra.mxu0 %v1310
    %4239 = vmatprep.subr.mxu0 %v1319
    %4240 = vmatpush1.msra.mxu0 %v1318
    %4241 = vmatprep.subr.mxu0 %v1327
    %4242 = vmatpush1.msra.mxu0 %v1326
    %4243 = vmatprep.subr.mxu0 %v1335
    %4244 = vmatpush1.msra.mxu0 %v1334
    %4245 = vmatprep.subr.mxu0 %v1343
    %4246 = vmatpush1.msra.mxu0 %v1342
    %4247 = vmatprep.subr.mxu0 %v1351
    %4248 = vmatpush1.msra.mxu0 %v1350
    %4249 = vmatprep.subr.mxu0 %v1359
    %4250 = vmatpush1.msra.mxu0 %v1358
    %4251 = vmatprep.subr.mxu0 %v1367
    %4252 = vmatpush1.msra.mxu0 %v1366
    %4253 = vmatprep.subr.mxu0 %v1375
    %4254 = vmatpush1.msra.mxu0 %v1374
    %4255 = vmatprep.subr.mxu0 %v1383
    %4256 = vmatpush1.msra.mxu0 %v1382
    %4257 = vmatprep.subr.mxu0 %v1391
    %4258 = vmatpush1.msra.mxu0 %v1390
    %4259 = vmatprep.subr.mxu0 %v1399
    %4260 = vmatpush1.msra.mxu0 %v1398
    %4261 = vmatprep.subr.mxu0 %v1407
    %4262 = vmatpush1.msra.mxu0 %v1406
    %4263 = vmatprep.subr.mxu0 %v1415
    %4264 = vmatpush1.msra.mxu0 %v1414
    %4265 = vmatprep.subr.mxu0 %v1423
    %4266 = vmatpush1.msra.mxu0 %v1422
    %4267 = vmatprep.subr.mxu0 %v1431
    %4268 = vmatpush1.msra.mxu0 %v1430
    %4269 = vmatprep.subr.mxu0 %v1439
    %4270 = vmatpush1.msra.mxu0 %v1438
    %4271 = vmatprep.subr.mxu0 %v1447
    %4272 = vmatpush1.msra.mxu0 %v1446
    %4273 = vmatprep.subr.mxu0 %v1455
    %4274 = vmatpush1.msra.mxu0 %v1454
    %4275 = vmatprep.subr.mxu0 %v1463
    %4276 = vmatpush1.msra.mxu0 %v1462
    %4277 = vmatprep.subr.mxu0 %v1471
    %4278 = vmatpush1.msra.mxu0 %v1470
    %4279 = vmatprep.subr.mxu0 %v1479
    %4280 = vmatpush1.msra.mxu0 %v1478
    %4281 = vmatprep.subr.mxu0 %v1487
    %4282 = vmatpush1.msra.mxu0 %v1486
    %4283 = vmatprep.subr.mxu0 %v1495
    %4284 = vmatpush1.msra.mxu0 %v1494
    %4285 = vmatprep.subr.mxu0 %v1503
    %4286 = vmatpush1.msra.mxu0 %v1502
    %4287 = vmatprep.subr.mxu0 %v1511
    %4288 = vmatpush1.msra.mxu0 %v1510
    %4289 = vmatprep.subr.mxu0 %v1519
    %4290 = vmatpush1.msra.mxu0 %v1518
    %4291 = vmatprep.subr.mxu0 %v1527
    %4292 = vmatpush1.msra.mxu0 %v1526
    %4293 = vmatprep.mubr.f32.mxu0 %v4157
    %4294 = vmatmul.mubr.f32.gmra.mrb[0].mxu0 %v4156
    %v4295 = vpop.f32.mrb[0].mxu0
    %v4296 = vadd.f32 %v1545, %v4295
    %v4297 = vpop.f32.mrb[0].mxu0
    %v4298 = vadd.f32 %v1549, %v4297
    %4299 = vdwg.mxu0
    %4300 = vmatprep.subr.mxu0 %v1281
    %4301 = vmatpush1.msra.mxu0 %v1280
    %4302 = vmatprep.subr.mxu0 %v1289
    %4303 = vmatpush1.msra.mxu0 %v1288
    %4304 = vmatprep.subr.mxu0 %v1297
    %4305 = vmatpush1.msra.mxu0 %v1296
    %4306 = vmatprep.subr.mxu0 %v1305
    %4307 = vmatpush1.msra.mxu0 %v1304
    %4308 = vmatprep.subr.mxu0 %v1313
    %4309 = vmatpush1.msra.mxu0 %v1312
    %4310 = vmatprep.subr.mxu0 %v1321
    %4311 = vmatpush1.msra.mxu0 %v1320
    %4312 = vmatprep.subr.mxu0 %v1329
    %4313 = vmatpush1.msra.mxu0 %v1328
    %4314 = vmatprep.subr.mxu0 %v1337
    %4315 = vmatpush1.msra.mxu0 %v1336
    %4316 = vmatprep.subr.mxu0 %v1345
    %4317 = vmatpush1.msra.mxu0 %v1344
    %4318 = vmatprep.subr.mxu0 %v1353
    %4319 = vmatpush1.msra.mxu0 %v1352
    %4320 = vmatprep.subr.mxu0 %v1361
    %4321 = vmatpush1.msra.mxu0 %v1360
    %4322 = vmatprep.subr.mxu0 %v1369
    %4323 = vmatpush1.msra.mxu0 %v1368
    %4324 = vmatprep.subr.mxu0 %v1377
    %4325 = vmatpush1.msra.mxu0 %v1376
    %4326 = vmatprep.subr.mxu0 %v1385
    %4327 = vmatpush1.msra.mxu0 %v1384
    %4328 = vmatprep.subr.mxu0 %v1393
    %4329 = vmatpush1.msra.mxu0 %v1392
    %4330 = vmatprep.subr.mxu0 %v1401
    %4331 = vmatpush1.msra.mxu0 %v1400
    %4332 = vmatprep.subr.mxu0 %v1409
    %4333 = vmatpush1.msra.mxu0 %v1408
    %4334 = vmatprep.subr.mxu0 %v1417
    %4335 = vmatpush1.msra.mxu0 %v1416
    %4336 = vmatprep.subr.mxu0 %v1425
    %4337 = vmatpush1.msra.mxu0 %v1424
    %4338 = vmatprep.subr.mxu0 %v1433
    %4339 = vmatpush1.msra.mxu0 %v1432
    %4340 = vmatprep.subr.mxu0 %v1441
    %4341 = vmatpush1.msra.mxu0 %v1440
    %4342 = vmatprep.subr.mxu0 %v1449
    %4343 = vmatpush1.msra.mxu0 %v1448
    %4344 = vmatprep.subr.mxu0 %v1457
    %4345 = vmatpush1.msra.mxu0 %v1456
    %4346 = vmatprep.subr.mxu0 %v1465
    %4347 = vmatpush1.msra.mxu0 %v1464
    %4348 = vmatprep.subr.mxu0 %v1473
    %4349 = vmatpush1.msra.mxu0 %v1472
    %4350 = vmatprep.subr.mxu0 %v1481
    %4351 = vmatpush1.msra.mxu0 %v1480
    %4352 = vmatprep.subr.mxu0 %v1489
    %4353 = vmatpush1.msra.mxu0 %v1488
    %4354 = vmatprep.subr.mxu0 %v1497
    %4355 = vmatpush1.msra.mxu0 %v1496
    %4356 = vmatprep.subr.mxu0 %v1505
    %4357 = vmatpush1.msra.mxu0 %v1504
    %4358 = vmatprep.subr.mxu0 %v1513
    %4359 = vmatpush1.msra.mxu0 %v1512
    %4360 = vmatprep.subr.mxu0 %v1521
    %4361 = vmatpush1.msra.mxu0 %v1520
    %4362 = vmatprep.subr.mxu0 %v1529
    %4363 = vmatpush1.msra.mxu0 %v1528
    %4364 = vmatprep.mubr.f32.mxu0 %v4157
    %4365 = vmatmul.mubr.f32.gmra.mrb[0].mxu0 %v4156
    %v4366 = vpop.f32.mrb[0].mxu0
    %v4367 = vadd.f32 %v1553, %v4366
    %v4368 = vpop.f32.mrb[0].mxu0
    %v4369 = vadd.f32 %v1557, %v4368
    %4370 = vdwg.mxu0
    %4371 = vmatprep.subr.mxu0 %v1283
    %4372 = vmatpush1.msra.mxu0 %v1282
    %4373 = vmatprep.subr.mxu0 %v1291
    %4374 = vmatpush1.msra.mxu0 %v1290
    %4375 = vmatprep.subr.mxu0 %v1299
    %4376 = vmatpush1.msra.mxu0 %v1298
    %4377 = vmatprep.subr.mxu0 %v1307
    %4378 = vmatpush1.msra.mxu0 %v1306
    %4379 = vmatprep.subr.mxu0 %v1315
    %4380 = vmatpush1.msra.mxu0 %v1314
    %4381 = vmatprep.subr.mxu0 %v1323
    %4382 = vmatpush1.msra.mxu0 %v1322
    %4383 = vmatprep.subr.mxu0 %v1331
    %4384 = vmatpush1.msra.mxu0 %v1330
    %4385 = vmatprep.subr.mxu0 %v1339
    %4386 = vmatpush1.msra.mxu0 %v1338
    %4387 = vmatprep.subr.mxu0 %v1347
    %4388 = vmatpush1.msra.mxu0 %v1346
    %4389 = vmatprep.subr.mxu0 %v1355
    %4390 = vmatpush1.msra.mxu0 %v1354
    %4391 = vmatprep.subr.mxu0 %v1363
    %4392 = vmatpush1.msra.mxu0 %v1362
    %4393 = vmatprep.subr.mxu0 %v1371
    %4394 = vmatpush1.msra.mxu0 %v1370
    %4395 = vmatprep.subr.mxu0 %v1379
    %4396 = vmatpush1.msra.mxu0 %v1378
    %4397 = vmatprep.subr.mxu0 %v1387
    %4398 = vmatpush1.msra.mxu0 %v1386
    %4399 = vmatprep.subr.mxu0 %v1395
    %4400 = vmatpush1.msra.mxu0 %v1394
    %4401 = vmatprep.subr.mxu0 %v1403
    %4402 = vmatpush1.msra.mxu0 %v1402
    %4403 = vmatprep.subr.mxu0 %v1411
    %4404 = vmatpush1.msra.mxu0 %v1410
    %4405 = vmatprep.subr.mxu0 %v1419
    %4406 = vmatpush1.msra.mxu0 %v1418
    %4407 = vmatprep.subr.mxu0 %v1427
    %4408 = vmatpush1.msra.mxu0 %v1426
    %4409 = vmatprep.subr.mxu0 %v1435
    %4410 = vmatpush1.msra.mxu0 %v1434
    %4411 = vmatprep.subr.mxu0 %v1443
    %4412 = vmatpush1.msra.mxu0 %v1442
    %4413 = vmatprep.subr.mxu0 %v1451
    %4414 = vmatpush1.msra.mxu0 %v1450
    %4415 = vmatprep.subr.mxu0 %v1459
    %4416 = vmatpush1.msra.mxu0 %v1458
    %4417 = vmatprep.subr.mxu0 %v1467
    %4418 = vmatpush1.msra.mxu0 %v1466
    %4419 = vmatprep.subr.mxu0 %v1475
    %4420 = vmatpush1.msra.mxu0 %v1474
    %4421 = vmatprep.subr.mxu0 %v1483
    %4422 = vmatpush1.msra.mxu0 %v1482
    %4423 = vmatprep.subr.mxu0 %v1491
    %4424 = vmatpush1.msra.mxu0 %v1490
    %4425 = vmatprep.subr.mxu0 %v1499
    %4426 = vmatpush1.msra.mxu0 %v1498
    %4427 = vmatprep.subr.mxu0 %v1507
    %4428 = vmatpush1.msra.mxu0 %v1506
    %4429 = vmatprep.subr.mxu0 %v1515
    %4430 = vmatpush1.msra.mxu0 %v1514
    %4431 = vmatprep.subr.mxu0 %v1523
    %4432 = vmatpush1.msra.mxu0 %v1522
    %4433 = vmatprep.subr.mxu0 %v1531
    %4434 = vmatpush1.msra.mxu0 %v1530
    %4435 = vmatprep.mubr.f32.mxu0 %v4157
    %4436 = vmatmul.mubr.f32.gmra.mrb[0].mxu0 %v4156
    %v4437 = vpop.f32.mrb[0].mxu0
    %v4438 = vadd.f32 %v1561, %v4437
    %v4439 = vpop.f32.mrb[0].mxu0
    %v4440 = vadd.f32 %v1565, %v4439
    %4441 = vdwg.mxu0
    %4442 = vmatprep.subr.mxu0 %v765
    %4443 = vmatpush1.msra.mxu0 %v764
    %4444 = vmatprep.subr.mxu0 %v773
    %4445 = vmatpush1.msra.mxu0 %v772
    %4446 = vmatprep.subr.mxu0 %v781
    %4447 = vmatpush1.msra.mxu0 %v780
    %4448 = vmatprep.subr.mxu0 %v789
    %4449 = vmatpush1.msra.mxu0 %v788
    %4450 = vmatprep.subr.mxu0 %v797
    %4451 = vmatpush1.msra.mxu0 %v796
    %4452 = vmatprep.subr.mxu0 %v805
    %4453 = vmatpush1.msra.mxu0 %v804
    %4454 = vmatprep.subr.mxu0 %v813
    %4455 = vmatpush1.msra.mxu0 %v812
    %4456 = vmatprep.subr.mxu0 %v821
    %4457 = vmatpush1.msra.mxu0 %v820
    %4458 = vmatprep.subr.mxu0 %v829
    %4459 = vmatpush1.msra.mxu0 %v828
    %4460 = vmatprep.subr.mxu0 %v837
    %4461 = vmatpush1.msra.mxu0 %v836
    %4462 = vmatprep.subr.mxu0 %v845
    %4463 = vmatpush1.msra.mxu0 %v844
    %4464 = vmatprep.subr.mxu0 %v853
    %4465 = vmatpush1.msra.mxu0 %v852
    %4466 = vmatprep.subr.mxu0 %v861
    %4467 = vmatpush1.msra.mxu0 %v860
    %4468 = vmatprep.subr.mxu0 %v869
    %4469 = vmatpush1.msra.mxu0 %v868
    %4470 = vmatprep.subr.mxu0 %v877
    %4471 = vmatpush1.msra.mxu0 %v876
    %4472 = vmatprep.subr.mxu0 %v885
    %4473 = vmatpush1.msra.mxu0 %v884
    %4474 = vmatprep.subr.mxu0 %v893
    %4475 = vmatpush1.msra.mxu0 %v892
    %4476 = vmatprep.subr.mxu0 %v901
    %4477 = vmatpush1.msra.mxu0 %v900
    %4478 = vmatprep.subr.mxu0 %v909
    %4479 = vmatpush1.msra.mxu0 %v908
    %4480 = vmatprep.subr.mxu0 %v917
    %4481 = vmatpush1.msra.mxu0 %v916
    %4482 = vmatprep.subr.mxu0 %v925
    %4483 = vmatpush1.msra.mxu0 %v924
    %4484 = vmatprep.subr.mxu0 %v933
    %4485 = vmatpush1.msra.mxu0 %v932
    %4486 = vmatprep.subr.mxu0 %v941
    %4487 = vmatpush1.msra.mxu0 %v940
    %4488 = vmatprep.subr.mxu0 %v949
    %4489 = vmatpush1.msra.mxu0 %v948
    %4490 = vmatprep.subr.mxu0 %v957
    %4491 = vmatpush1.msra.mxu0 %v956
    %4492 = vmatprep.subr.mxu0 %v965
    %4493 = vmatpush1.msra.mxu0 %v964
    %4494 = vmatprep.subr.mxu0 %v973
    %4495 = vmatpush1.msra.mxu0 %v972
    %4496 = vmatprep.subr.mxu0 %v981
    %4497 = vmatpush1.msra.mxu0 %v980
    %4498 = vmatprep.subr.mxu0 %v989
    %4499 = vmatpush1.msra.mxu0 %v988
    %4500 = vmatprep.subr.mxu0 %v997
    %4501 = vmatpush1.msra.mxu0 %v996
    %4502 = vmatprep.subr.mxu0 %v1005
    %4503 = vmatpush1.msra.mxu0 %v1004
    %4504 = vmatprep.subr.mxu0 %v1013
    %4505 = vmatpush1.msra.mxu0 %v1012
    %4506 = vmatprep.mubr.f32.mxu0 %v3825
    %4507 = vmatmul.mubr.f32.gmra.mrb[0].mxu0 %v3824
    %v4508 = vpop.f32.mrb[0].mxu0
    %v4509 = vadd.f32 0.0, %v4508
    %v4510 = vpop.f32.mrb[0].mxu0
    %v4511 = vadd.f32 0.0, %v4510
    %4512 = vdwg.mxu0
    %4513 = vmatprep.subr.mxu0 %v767
    %4514 = vmatpush1.msra.mxu0 %v766
    %4515 = vmatprep.subr.mxu0 %v775
    %4516 = vmatpush1.msra.mxu0 %v774
    %4517 = vmatprep.subr.mxu0 %v783
    %4518 = vmatpush1.msra.mxu0 %v782
    %4519 = vmatprep.subr.mxu0 %v791
    %4520 = vmatpush1.msra.mxu0 %v790
    %4521 = vmatprep.subr.mxu0 %v799
    %4522 = vmatpush1.msra.mxu0 %v798
    %4523 = vmatprep.subr.mxu0 %v807
    %4524 = vmatpush1.msra.mxu0 %v806
    %4525 = vmatprep.subr.mxu0 %v815
    %4526 = vmatpush1.msra.mxu0 %v814
    %4527 = vmatprep.subr.mxu0 %v823
    %4528 = vmatpush1.msra.mxu0 %v822
    %4529 = vmatprep.subr.mxu0 %v831
    %4530 = vmatpush1.msra.mxu0 %v830
    %4531 = vmatprep.subr.mxu0 %v839
    %4532 = vmatpush1.msra.mxu0 %v838
    %4533 = vmatprep.subr.mxu0 %v847
    %4534 = vmatpush1.msra.mxu0 %v846
    %4535 = vmatprep.subr.mxu0 %v855
    %4536 = vmatpush1.msra.mxu0 %v854
    %4537 = vmatprep.subr.mxu0 %v863
    %4538 = vmatpush1.msra.mxu0 %v862
    %4539 = vmatprep.subr.mxu0 %v871
    %4540 = vmatpush1.msra.mxu0 %v870
    %4541 = vmatprep.subr.mxu0 %v879
    %4542 = vmatpush1.msra.mxu0 %v878
    %4543 = vmatprep.subr.mxu0 %v887
    %4544 = vmatpush1.msra.mxu0 %v886
    %4545 = vmatprep.subr.mxu0 %v895
    %4546 = vmatpush1.msra.mxu0 %v894
    %4547 = vmatprep.subr.mxu0 %v903
    %4548 = vmatpush1.msra.mxu0 %v902
    %4549 = vmatprep.subr.mxu0 %v911
    %4550 = vmatpush1.msra.mxu0 %v910
    %4551 = vmatprep.subr.mxu0 %v919
    %4552 = vmatpush1.msra.mxu0 %v918
    %4553 = vmatprep.subr.mxu0 %v927
    %4554 = vmatpush1.msra.mxu0 %v926
    %4555 = vmatprep.subr.mxu0 %v935
    %4556 = vmatpush1.msra.mxu0 %v934
    %4557 = vmatprep.subr.mxu0 %v943
    %4558 = vmatpush1.msra.mxu0 %v942
    %4559 = vmatprep.subr.mxu0 %v951
    %4560 = vmatpush1.msra.mxu0 %v950
    %4561 = vmatprep.subr.mxu0 %v959
    %4562 = vmatpush1.msra.mxu0 %v958
    %4563 = vmatprep.subr.mxu0 %v967
    %4564 = vmatpush1.msra.mxu0 %v966
    %4565 = vmatprep.subr.mxu0 %v975
    %4566 = vmatpush1.msra.mxu0 %v974
    %4567 = vmatprep.subr.mxu0 %v983
    %4568 = vmatpush1.msra.mxu0 %v982
    %4569 = vmatprep.subr.mxu0 %v991
    %4570 = vmatpush1.msra.mxu0 %v990
    %4571 = vmatprep.subr.mxu0 %v999
    %4572 = vmatpush1.msra.mxu0 %v998
    %4573 = vmatprep.subr.mxu0 %v1007
    %4574 = vmatpush1.msra.mxu0 %v1006
    %4575 = vmatprep.subr.mxu0 %v1015
    %4576 = vmatpush1.msra.mxu0 %v1014
    %4577 = vmatprep.mubr.f32.mxu0 %v3825
    %4578 = vmatmul.mubr.f32.gmra.mrb[0].mxu0 %v3824
    %v4579 = vpop.f32.mrb[0].mxu0
    %v4580 = vadd.f32 0.0, %v4579
    %v4581 = vpop.f32.mrb[0].mxu0
    %v4582 = vadd.f32 0.0, %v4581
    %4583 = vdwg.mxu0
    %4584 = vmatprep.subr.mxu0 %v769
    %4585 = vmatpush1.msra.mxu0 %v768
    %4586 = vmatprep.subr.mxu0 %v777
    %4587 = vmatpush1.msra.mxu0 %v776
    %4588 = vmatprep.subr.mxu0 %v785
    %4589 = vmatpush1.msra.mxu0 %v784
    %4590 = vmatprep.subr.mxu0 %v793
    %4591 = vmatpush1.msra.mxu0 %v792
    %4592 = vmatprep.subr.mxu0 %v801
    %4593 = vmatpush1.msra.mxu0 %v800
    %4594 = vmatprep.subr.mxu0 %v809
    %4595 = vmatpush1.msra.mxu0 %v808
    %4596 = vmatprep.subr.mxu0 %v817
    %4597 = vmatpush1.msra.mxu0 %v816
    %4598 = vmatprep.subr.mxu0 %v825
    %4599 = vmatpush1.msra.mxu0 %v824
    %4600 = vmatprep.subr.mxu0 %v833
    %4601 = vmatpush1.msra.mxu0 %v832
    %4602 = vmatprep.subr.mxu0 %v841
    %4603 = vmatpush1.msra.mxu0 %v840
    %4604 = vmatprep.subr.mxu0 %v849
    %4605 = vmatpush1.msra.mxu0 %v848
    %4606 = vmatprep.subr.mxu0 %v857
    %4607 = vmatpush1.msra.mxu0 %v856
    %4608 = vmatprep.subr.mxu0 %v865
    %4609 = vmatpush1.msra.mxu0 %v864
    %4610 = vmatprep.subr.mxu0 %v873
    %4611 = vmatpush1.msra.mxu0 %v872
    %4612 = vmatprep.subr.mxu0 %v881
    %4613 = vmatpush1.msra.mxu0 %v880
    %4614 = vmatprep.subr.mxu0 %v889
    %4615 = vmatpush1.msra.mxu0 %v888
    %4616 = vmatprep.subr.mxu0 %v897
    %4617 = vmatpush1.msra.mxu0 %v896
    %4618 = vmatprep.subr.mxu0 %v905
    %4619 = vmatpush1.msra.mxu0 %v904
    %4620 = vmatprep.subr.mxu0 %v913
    %4621 = vmatpush1.msra.mxu0 %v912
    %4622 = vmatprep.subr.mxu0 %v921
    %4623 = vmatpush1.msra.mxu0 %v920
    %4624 = vmatprep.subr.mxu0 %v929
    %4625 = vmatpush1.msra.mxu0 %v928
    %4626 = vmatprep.subr.mxu0 %v937
    %4627 = vmatpush1.msra.mxu0 %v936
    %4628 = vmatprep.subr.mxu0 %v945
    %4629 = vmatpush1.msra.mxu0 %v944
    %4630 = vmatprep.subr.mxu0 %v953
    %4631 = vmatpush1.msra.mxu0 %v952
    %4632 = vmatprep.subr.mxu0 %v961
    %4633 = vmatpush1.msra.mxu0 %v960
    %4634 = vmatprep.subr.mxu0 %v969
    %4635 = vmatpush1.msra.mxu0 %v968
    %4636 = vmatprep.subr.mxu0 %v977
    %4637 = vmatpush1.msra.mxu0 %v976
    %4638 = vmatprep.subr.mxu0 %v985
    %4639 = vmatpush1.msra.mxu0 %v984
    %4640 = vmatprep.subr.mxu0 %v993
    %4641 = vmatpush1.msra.mxu0 %v992
    %4642 = vmatprep.subr.mxu0 %v1001
    %4643 = vmatpush1.msra.mxu0 %v1000
    %4644 = vmatprep.subr.mxu0 %v1009
    %4645 = vmatpush1.msra.mxu0 %v1008
    %4646 = vmatprep.subr.mxu0 %v1017
    %4647 = vmatpush1.msra.mxu0 %v1016
    %4648 = vmatprep.mubr.f32.mxu0 %v3825
    %4649 = vmatmul.mubr.f32.gmra.mrb[0].mxu0 %v3824
    %v4650 = vpop.f32.mrb[0].mxu0
    %v4651 = vadd.f32 0.0, %v4650
    %v4652 = vpop.f32.mrb[0].mxu0
    %v4653 = vadd.f32 0.0, %v4652
    %4654 = vdwg.mxu0
    %4655 = vmatprep.subr.mxu0 %v771
    %4656 = vmatpush1.msra.mxu0 %v770
    %4657 = vmatprep.subr.mxu0 %v779
    %4658 = vmatpush1.msra.mxu0 %v778
    %4659 = vmatprep.subr.mxu0 %v787
    %4660 = vmatpush1.msra.mxu0 %v786
    %4661 = vmatprep.subr.mxu0 %v795
    %4662 = vmatpush1.msra.mxu0 %v794
    %4663 = vmatprep.subr.mxu0 %v803
    %4664 = vmatpush1.msra.mxu0 %v802
    %4665 = vmatprep.subr.mxu0 %v811
    %4666 = vmatpush1.msra.mxu0 %v810
    %4667 = vmatprep.subr.mxu0 %v819
    %4668 = vmatpush1.msra.mxu0 %v818
    %4669 = vmatprep.subr.mxu0 %v827
    %4670 = vmatpush1.msra.mxu0 %v826
    %4671 = vmatprep.subr.mxu0 %v835
    %4672 = vmatpush1.msra.mxu0 %v834
    %4673 = vmatprep.subr.mxu0 %v843
    %4674 = vmatpush1.msra.mxu0 %v842
    %4675 = vmatprep.subr.mxu0 %v851
    %4676 = vmatpush1.msra.mxu0 %v850
    %4677 = vmatprep.subr.mxu0 %v859
    %4678 = vmatpush1.msra.mxu0 %v858
    %4679 = vmatprep.subr.mxu0 %v867
    %4680 = vmatpush1.msra.mxu0 %v866
    %4681 = vmatprep.subr.mxu0 %v875
    %4682 = vmatpush1.msra.mxu0 %v874
    %4683 = vmatprep.subr.mxu0 %v883
    %4684 = vmatpush1.msra.mxu0 %v882
    %4685 = vmatprep.subr.mxu0 %v891
    %4686 = vmatpush1.msra.mxu0 %v890
    %4687 = vmatprep.subr.mxu0 %v899
    %4688 = vmatpush1.msra.mxu0 %v898
    %4689 = vmatprep.subr.mxu0 %v907
    %4690 = vmatpush1.msra.mxu0 %v906
    %4691 = vmatprep.subr.mxu0 %v915
    %4692 = vmatpush1.msra.mxu0 %v914
    %4693 = vmatprep.subr.mxu0 %v923
    %4694 = vmatpush1.msra.mxu0 %v922
    %4695 = vmatprep.subr.mxu0 %v931
    %4696 = vmatpush1.msra.mxu0 %v930
    %4697 = vmatprep.subr.mxu0 %v939
    %4698 = vmatpush1.msra.mxu0 %v938
    %4699 = vmatprep.subr.mxu0 %v947
    %4700 = vmatpush1.msra.mxu0 %v946
    %4701 = vmatprep.subr.mxu0 %v955
    %4702 = vmatpush1.msra.mxu0 %v954
    %4703 = vmatprep.subr.mxu0 %v963
    %4704 = vmatpush1.msra.mxu0 %v962
    %4705 = vmatprep.subr.mxu0 %v971
    %4706 = vmatpush1.msra.mxu0 %v970
    %4707 = vmatprep.subr.mxu0 %v979
    %4708 = vmatpush1.msra.mxu0 %v978
    %4709 = vmatprep.subr.mxu0 %v987
    %4710 = vmatpush1.msra.mxu0 %v986
    %4711 = vmatprep.subr.mxu0 %v995
    %4712 = vmatpush1.msra.mxu0 %v994
    %4713 = vmatprep.subr.mxu0 %v1003
    %4714 = vmatpush1.msra.mxu0 %v1002
    %4715 = vmatprep.subr.mxu0 %v1011
    %4716 = vmatpush1.msra.mxu0 %v1010
    %4717 = vmatprep.subr.mxu0 %v1019
    %4718 = vmatpush1.msra.mxu0 %v1018
    %4719 = vmatprep.mubr.f32.mxu0 %v3825
    %4720 = vmatmul.mubr.f32.gmra.mrb[0].mxu0 %v3824
    %v4721 = vpop.f32.mrb[0].mxu0
    %v4722 = vadd.f32 0.0, %v4721
    %v4723 = vpop.f32.mrb[0].mxu0
    %v4724 = vadd.f32 0.0, %v4723
    %4725 = vdwg.mxu0
    %v4726 = vadd.f32 %v397, %v4509
    %v4727 = vadd.f32 %v399, %v4511
    %v4728 = vadd.f32 %v510, %v4580
    %v4729 = vadd.f32 %v512, %v4582
    %v4730 = vadd.f32 %v623, %v4651
    %v4731 = vadd.f32 %v625, %v4653
    %v4732 = vadd.f32 %v736, %v4722
    %v4733 = vadd.f32 %v738, %v4724
    %v4734 = vxor.u32 %v4726, 2147483648
    %v4735 = vxor.u32 %v4727, 2147483648
    %v4736 = vmul.f32 %v4734, 1.442695
    %v4737 = vpow.pop %v4736
    %v4738 = vmul.f32 %v4735, 1.442695
    %v4739 = vpow.pop %v4738
    %v4740 = vadd.f32 %v4737, 1.0
    %v4741 = vadd.f32 %v4739, 1.0
    %v4742 = vrcp.pop %v4740
    %v4743 = vmul.f32 1.0, %v4742
    %v4744 = vrcp.pop %v4741
    %v4745 = vmul.f32 1.0, %v4744
    %v4746 = vxor.u32 %v4728, 2147483648
    %v4747 = vxor.u32 %v4729, 2147483648
    %v4748 = vmul.f32 %v4746, 1.442695
    %v4749 = vpow.pop %v4748
    %v4750 = vmul.f32 %v4747, 1.442695
    %v4751 = vpow.pop %v4750
    %v4752 = vadd.f32 %v4749, 1.0
    %v4753 = vadd.f32 %v4751, 1.0
    %v4754 = vrcp.pop %v4752
    %v4755 = vmul.f32 1.0, %v4754
    %v4756 = vrcp.pop %v4753
    %v4757 = vmul.f32 1.0, %v4756
    %v4758 = vtanh.pop %v4730
    %v4759 = vtanh.pop %v4731
    %v4760 = vxor.u32 %v4732, 2147483648
    %v4761 = vxor.u32 %v4733, 2147483648
    %v4762 = vmul.f32 %v4760, 1.442695
    %v4763 = vpow.pop %v4762
    %v4764 = vmul.f32 %v4761, 1.442695
    %v4765 = vpow.pop %v4764
    %v4766 = vadd.f32 %v4763, 1.0
    %v4767 = vadd.f32 %v4765, 1.0
    %v4768 = vrcp.pop %v4766
    %v4769 = vmul.f32 1.0, %v4768
    %v4770 = vrcp.pop %v4767
    %v4771 = vmul.f32 1.0, %v4770
    %v4772 = vmul.f32 %v4755, %v3820
    %v4773 = vmul.f32 %v4757, %v3821
    %v4774 = vmul.f32 %v4743, %v4758
    %v4775 = vmul.f32 %v4745, %v4759
    %v4776 = vadd.f32 %v4772, %v4774
    %v4777 = vadd.f32 %v4773, %v4775
    %v4778 = vtanh.pop %v4776
    %v4779 = vtanh.pop %v4777
    %v4780 = vmul.f32 %v4769, %v4778
    %v4781 = vmul.f32 %v4771, %v4779
    %4782 = vmatprep.subr.mxu0 %v1021
    %4783 = vmatpush1.msra.mxu0 %v1020
    %4784 = vmatprep.subr.mxu0 %v1029
    %4785 = vmatpush1.msra.mxu0 %v1028
    %4786 = vmatprep.subr.mxu0 %v1037
    %4787 = vmatpush1.msra.mxu0 %v1036
    %4788 = vmatprep.subr.mxu0 %v1045
    %4789 = vmatpush1.msra.mxu0 %v1044
    %4790 = vmatprep.subr.mxu0 %v1053
    %4791 = vmatpush1.msra.mxu0 %v1052
    %4792 = vmatprep.subr.mxu0 %v1061
    %4793 = vmatpush1.msra.mxu0 %v1060
    %4794 = vmatprep.subr.mxu0 %v1069
    %4795 = vmatpush1.msra.mxu0 %v1068
    %4796 = vmatprep.subr.mxu0 %v1077
    %4797 = vmatpush1.msra.mxu0 %v1076
    %4798 = vmatprep.subr.mxu0 %v1085
    %4799 = vmatpush1.msra.mxu0 %v1084
    %4800 = vmatprep.subr.mxu0 %v1093
    %4801 = vmatpush1.msra.mxu0 %v1092
    %4802 = vmatprep.subr.mxu0 %v1101
    %4803 = vmatpush1.msra.mxu0 %v1100
    %4804 = vmatprep.subr.mxu0 %v1109
    %4805 = vmatpush1.msra.mxu0 %v1108
    %4806 = vmatprep.subr.mxu0 %v1117
    %4807 = vmatpush1.msra.mxu0 %v1116
    %4808 = vmatprep.subr.mxu0 %v1125
    %4809 = vmatpush1.msra.mxu0 %v1124
    %4810 = vmatprep.subr.mxu0 %v1133
    %4811 = vmatpush1.msra.mxu0 %v1132
    %4812 = vmatprep.subr.mxu0 %v1141
    %4813 = vmatpush1.msra.mxu0 %v1140
    %4814 = vmatprep.subr.mxu0 %v1149
    %4815 = vmatpush1.msra.mxu0 %v1148
    %4816 = vmatprep.subr.mxu0 %v1157
    %4817 = vmatpush1.msra.mxu0 %v1156
    %4818 = vmatprep.subr.mxu0 %v1165
    %4819 = vmatpush1.msra.mxu0 %v1164
    %4820 = vmatprep.subr.mxu0 %v1173
    %4821 = vmatpush1.msra.mxu0 %v1172
    %4822 = vmatprep.subr.mxu0 %v1181
    %4823 = vmatpush1.msra.mxu0 %v1180
    %4824 = vmatprep.subr.mxu0 %v1189
    %4825 = vmatpush1.msra.mxu0 %v1188
    %4826 = vmatprep.subr.mxu0 %v1197
    %4827 = vmatpush1.msra.mxu0 %v1196
    %4828 = vmatprep.subr.mxu0 %v1205
    %4829 = vmatpush1.msra.mxu0 %v1204
    %4830 = vmatprep.subr.mxu0 %v1213
    %4831 = vmatpush1.msra.mxu0 %v1212
    %4832 = vmatprep.subr.mxu0 %v1221
    %4833 = vmatpush1.msra.mxu0 %v1220
    %4834 = vmatprep.subr.mxu0 %v1229
    %4835 = vmatpush1.msra.mxu0 %v1228
    %4836 = vmatprep.subr.mxu0 %v1237
    %4837 = vmatpush1.msra.mxu0 %v1236
    %4838 = vmatprep.subr.mxu0 %v1245
    %4839 = vmatpush1.msra.mxu0 %v1244
    %4840 = vmatprep.subr.mxu0 %v1253
    %4841 = vmatpush1.msra.mxu0 %v1252
    %4842 = vmatprep.subr.mxu0 %v1261
    %4843 = vmatpush1.msra.mxu0 %v1260
    %4844 = vmatprep.subr.mxu0 %v1269
    %4845 = vmatpush1.msra.mxu0 %v1268
    %4846 = vmatprep.mubr.f32.mxu0 %v4781
    %4847 = vmatmul.mubr.f32.gmra.mrb[0].mxu0 %v4780
    %v4848 = vpop.f32.mrb[0].mxu0
    %v4849 = vadd.f32 %v4225, %v4848
    %v4850 = vpop.f32.mrb[0].mxu0
    %v4851 = vadd.f32 %v4227, %v4850
    %4852 = vdwg.mxu0
    %4853 = vmatprep.subr.mxu0 %v1023
    %4854 = vmatpush1.msra.mxu0 %v1022
    %4855 = vmatprep.subr.mxu0 %v1031
    %4856 = vmatpush1.msra.mxu0 %v1030
    %4857 = vmatprep.subr.mxu0 %v1039
    %4858 = vmatpush1.msra.mxu0 %v1038
    %4859 = vmatprep.subr.mxu0 %v1047
    %4860 = vmatpush1.msra.mxu0 %v1046
    %4861 = vmatprep.subr.mxu0 %v1055
    %4862 = vmatpush1.msra.mxu0 %v1054
    %4863 = vmatprep.subr.mxu0 %v1063
    %4864 = vmatpush1.msra.mxu0 %v1062
    %4865 = vmatprep.subr.mxu0 %v1071
    %4866 = vmatpush1.msra.mxu0 %v1070
    %4867 = vmatprep.subr.mxu0 %v1079
    %4868 = vmatpush1.msra.mxu0 %v1078
    %4869 = vmatprep.subr.mxu0 %v1087
    %4870 = vmatpush1.msra.mxu0 %v1086
    %4871 = vmatprep.subr.mxu0 %v1095
    %4872 = vmatpush1.msra.mxu0 %v1094
    %4873 = vmatprep.subr.mxu0 %v1103
    %4874 = vmatpush1.msra.mxu0 %v1102
    %4875 = vmatprep.subr.mxu0 %v1111
    %4876 = vmatpush1.msra.mxu0 %v1110
    %4877 = vmatprep.subr.mxu0 %v1119
    %4878 = vmatpush1.msra.mxu0 %v1118
    %4879 = vmatprep.subr.mxu0 %v1127
    %4880 = vmatpush1.msra.mxu0 %v1126
    %4881 = vmatprep.subr.mxu0 %v1135
    %4882 = vmatpush1.msra.mxu0 %v1134
    %4883 = vmatprep.subr.mxu0 %v1143
    %4884 = vmatpush1.msra.mxu0 %v1142
    %4885 = vmatprep.subr.mxu0 %v1151
    %4886 = vmatpush1.msra.mxu0 %v1150
    %4887 = vmatprep.subr.mxu0 %v1159
    %4888 = vmatpush1.msra.mxu0 %v1158
    %4889 = vmatprep.subr.mxu0 %v1167
    %4890 = vmatpush1.msra.mxu0 %v1166
    %4891 = vmatprep.subr.mxu0 %v1175
    %4892 = vmatpush1.msra.mxu0 %v1174
    %4893 = vmatprep.subr.mxu0 %v1183
    %4894 = vmatpush1.msra.mxu0 %v1182
    %4895 = vmatprep.subr.mxu0 %v1191
    %4896 = vmatpush1.msra.mxu0 %v1190
    %4897 = vmatprep.subr.mxu0 %v1199
    %4898 = vmatpush1.msra.mxu0 %v1198
    %4899 = vmatprep.subr.mxu0 %v1207
    %4900 = vmatpush1.msra.mxu0 %v1206
    %4901 = vmatprep.subr.mxu0 %v1215
    %4902 = vmatpush1.msra.mxu0 %v1214
    %4903 = vmatprep.subr.mxu0 %v1223
    %4904 = vmatpush1.msra.mxu0 %v1222
    %4905 = vmatprep.subr.mxu0 %v1231
    %4906 = vmatpush1.msra.mxu0 %v1230
    %4907 = vmatprep.subr.mxu0 %v1239
    %4908 = vmatpush1.msra.mxu0 %v1238
    %4909 = vmatprep.subr.mxu0 %v1247
    %4910 = vmatpush1.msra.mxu0 %v1246
    %4911 = vmatprep.subr.mxu0 %v1255
    %4912 = vmatpush1.msra.mxu0 %v1254
    %4913 = vmatprep.subr.mxu0 %v1263
    %4914 = vmatpush1.msra.mxu0 %v1262
    %4915 = vmatprep.subr.mxu0 %v1271
    %4916 = vmatpush1.msra.mxu0 %v1270
    %4917 = vmatprep.mubr.f32.mxu0 %v4781
    %4918 = vmatmul.mubr.f32.gmra.mrb[0].mxu0 %v4780
    %v4919 = vpop.f32.mrb[0].mxu0
    %v4920 = vadd.f32 %v4296, %v4919
    %v4921 = vpop.f32.mrb[0].mxu0
    %v4922 = vadd.f32 %v4298, %v4921
    %4923 = vdwg.mxu0
    %4924 = vmatprep.subr.mxu0 %v1025
    %4925 = vmatpush1.msra.mxu0 %v1024
    %4926 = vmatprep.subr.mxu0 %v1033
    %4927 = vmatpush1.msra.mxu0 %v1032
    %4928 = vmatprep.subr.mxu0 %v1041
    %4929 = vmatpush1.msra.mxu0 %v1040
    %4930 = vmatprep.subr.mxu0 %v1049
    %4931 = vmatpush1.msra.mxu0 %v1048
    %4932 = vmatprep.subr.mxu0 %v1057
    %4933 = vmatpush1.msra.mxu0 %v1056
    %4934 = vmatprep.subr.mxu0 %v1065
    %4935 = vmatpush1.msra.mxu0 %v1064
    %4936 = vmatprep.subr.mxu0 %v1073
    %4937 = vmatpush1.msra.mxu0 %v1072
    %4938 = vmatprep.subr.mxu0 %v1081
    %4939 = vmatpush1.msra.mxu0 %v1080
    %4940 = vmatprep.subr.mxu0 %v1089
    %4941 = vmatpush1.msra.mxu0 %v1088
    %4942 = vmatprep.subr.mxu0 %v1097
    %4943 = vmatpush1.msra.mxu0 %v1096
    %4944 = vmatprep.subr.mxu0 %v1105
    %4945 = vmatpush1.msra.mxu0 %v1104
    %4946 = vmatprep.subr.mxu0 %v1113
    %4947 = vmatpush1.msra.mxu0 %v1112
    %4948 = vmatprep.subr.mxu0 %v1121
    %4949 = vmatpush1.msra.mxu0 %v1120
    %4950 = vmatprep.subr.mxu0 %v1129
    %4951 = vmatpush1.msra.mxu0 %v1128
    %4952 = vmatprep.subr.mxu0 %v1137
    %4953 = vmatpush1.msra.mxu0 %v1136
    %4954 = vmatprep.subr.mxu0 %v1145
    %4955 = vmatpush1.msra.mxu0 %v1144
    %4956 = vmatprep.subr.mxu0 %v1153
    %4957 = vmatpush1.msra.mxu0 %v1152
    %4958 = vmatprep.subr.mxu0 %v1161
    %4959 = vmatpush1.msra.mxu0 %v1160
    %4960 = vmatprep.subr.mxu0 %v1169
    %4961 = vmatpush1.msra.mxu0 %v1168
    %4962 = vmatprep.subr.mxu0 %v1177
    %4963 = vmatpush1.msra.mxu0 %v1176
    %4964 = vmatprep.subr.mxu0 %v1185
    %4965 = vmatpush1.msra.mxu0 %v1184
    %4966 = vmatprep.subr.mxu0 %v1193
    %4967 = vmatpush1.msra.mxu0 %v1192
    %4968 = vmatprep.subr.mxu0 %v1201
    %4969 = vmatpush1.msra.mxu0 %v1200
    %4970 = vmatprep.subr.mxu0 %v1209
    %4971 = vmatpush1.msra.mxu0 %v1208
    %4972 = vmatprep.subr.mxu0 %v1217
    %4973 = vmatpush1.msra.mxu0 %v1216
    %4974 = vmatprep.subr.mxu0 %v1225
    %4975 = vmatpush1.msra.mxu0 %v1224
    %4976 = vmatprep.subr.mxu0 %v1233
    %4977 = vmatpush1.msra.mxu0 %v1232
    %4978 = vmatprep.subr.mxu0 %v1241
    %4979 = vmatpush1.msra.mxu0 %v1240
    %4980 = vmatprep.subr.mxu0 %v1249
    %4981 = vmatpush1.msra.mxu0 %v1248
    %4982 = vmatprep.subr.mxu0 %v1257
    %4983 = vmatpush1.msra.mxu0 %v1256
    %4984 = vmatprep.subr.mxu0 %v1265
    %4985 = vmatpush1.msra.mxu0 %v1264
    %4986 = vmatprep.subr.mxu0 %v1273
    %4987 = vmatpush1.msra.mxu0 %v1272
    %4988 = vmatprep.mubr.f32.mxu0 %v4781
    %4989 = vmatmul.mubr.f32.gmra.mrb[0].mxu0 %v4780
    %v4990 = vpop.f32.mrb[0].mxu0
    %v4991 = vadd.f32 %v4367, %v4990
    %v4992 = vpop.f32.mrb[0].mxu0
    %v4993 = vadd.f32 %v4369, %v4992
    %4994 = vdwg.mxu0
    %4995 = vmatprep.subr.mxu0 %v1027
    %4996 = vmatpush1.msra.mxu0 %v1026
    %4997 = vmatprep.subr.mxu0 %v1035
    %4998 = vmatpush1.msra.mxu0 %v1034
    %4999 = vmatprep.subr.mxu0 %v1043
    %5000 = vmatpush1.msra.mxu0 %v1042
    %5001 = vmatprep.subr.mxu0 %v1051
    %5002 = vmatpush1.msra.mxu0 %v1050
    %5003 = vmatprep.subr.mxu0 %v1059
    %5004 = vmatpush1.msra.mxu0 %v1058
    %5005 = vmatprep.subr.mxu0 %v1067
    %5006 = vmatpush1.msra.mxu0 %v1066
    %5007 = vmatprep.subr.mxu0 %v1075
    %5008 = vmatpush1.msra.mxu0 %v1074
    %5009 = vmatprep.subr.mxu0 %v1083
    %5010 = vmatpush1.msra.mxu0 %v1082
    %5011 = vmatprep.subr.mxu0 %v1091
    %5012 = vmatpush1.msra.mxu0 %v1090
    %5013 = vmatprep.subr.mxu0 %v1099
    %5014 = vmatpush1.msra.mxu0 %v1098
    %5015 = vmatprep.subr.mxu0 %v1107
    %5016 = vmatpush1.msra.mxu0 %v1106
    %5017 = vmatprep.subr.mxu0 %v1115
    %5018 = vmatpush1.msra.mxu0 %v1114
    %5019 = vmatprep.subr.mxu0 %v1123
    %5020 = vmatpush1.msra.mxu0 %v1122
    %5021 = vmatprep.subr.mxu0 %v1131
    %5022 = vmatpush1.msra.mxu0 %v1130
    %5023 = vmatprep.subr.mxu0 %v1139
    %5024 = vmatpush1.msra.mxu0 %v1138
    %5025 = vmatprep.subr.mxu0 %v1147
    %5026 = vmatpush1.msra.mxu0 %v1146
    %5027 = vmatprep.subr.mxu0 %v1155
    %5028 = vmatpush1.msra.mxu0 %v1154
    %5029 = vmatprep.subr.mxu0 %v1163
    %5030 = vmatpush1.msra.mxu0 %v1162
    %5031 = vmatprep.subr.mxu0 %v1171
    %5032 = vmatpush1.msra.mxu0 %v1170
    %5033 = vmatprep.subr.mxu0 %v1179
    %5034 = vmatpush1.msra.mxu0 %v1178
    %5035 = vmatprep.subr.mxu0 %v1187
    %5036 = vmatpush1.msra.mxu0 %v1186
    %5037 = vmatprep.subr.mxu0 %v1195
    %5038 = vmatpush1.msra.mxu0 %v1194
    %5039 = vmatprep.subr.mxu0 %v1203
    %5040 = vmatpush1.msra.mxu0 %v1202
    %5041 = vmatprep.subr.mxu0 %v1211
    %5042 = vmatpush1.msra.mxu0 %v1210
    %5043 = vmatprep.subr.mxu0 %v1219
    %5044 = vmatpush1.msra.mxu0 %v1218
    %5045 = vmatprep.subr.mxu0 %v1227
    %5046 = vmatpush1.msra.mxu0 %v1226
    %5047 = vmatprep.subr.mxu0 %v1235
    %5048 = vmatpush1.msra.mxu0 %v1234
    %5049 = vmatprep.subr.mxu0 %v1243
    %5050 = vmatpush1.msra.mxu0 %v1242
    %5051 = vmatprep.subr.mxu0 %v1251
    %5052 = vmatpush1.msra.mxu0 %v1250
    %5053 = vmatprep.subr.mxu0 %v1259
    %5054 = vmatpush1.msra.mxu0 %v1258
    %5055 = vmatprep.subr.mxu0 %v1267
    %5056 = vmatpush1.msra.mxu0 %v1266
    %5057 = vmatprep.subr.mxu0 %v1275
    %5058 = vmatpush1.msra.mxu0 %v1274
    %5059 = vmatprep.mubr.f32.mxu0 %v4781
    %5060 = vmatmul.mubr.f32.gmra.mrb[0].mxu0 %v4780
    %v5061 = vpop.f32.mrb[0].mxu0
    %v5062 = vadd.f32 %v4438, %v5061
    %v5063 = vpop.f32.mrb[0].mxu0
    %v5064 = vadd.f32 %v4440, %v5063
    %5065 = vdwg.mxu0
    %v5066 = vxor.u32 %v4849, 2147483648
    %v5067 = vxor.u32 %v4851, 2147483648
    %v5068 = vmul.f32 %v5066, 1.442695
    %v5069 = vpow.pop %v5068
    %v5070 = vmul.f32 %v5067, 1.442695
    %v5071 = vpow.pop %v5070
    %v5072 = vadd.f32 %v5069, 1.0
    %v5073 = vadd.f32 %v5071, 1.0
    %v5074 = vrcp.pop %v5072
    %v5075 = vmul.f32 1.0, %v5074
    %v5076 = vrcp.pop %v5073
    %v5077 = vmul.f32 1.0, %v5076
    %v5078 = vxor.u32 %v4920, 2147483648
    %v5079 = vxor.u32 %v4922, 2147483648
    %v5080 = vmul.f32 %v5078, 1.442695
    %v5081 = vpow.pop %v5080
    %v5082 = vmul.f32 %v5079, 1.442695
    %v5083 = vpow.pop %v5082
    %v5084 = vadd.f32 %v5081, 1.0
    %v5085 = vadd.f32 %v5083, 1.0
    %v5086 = vrcp.pop %v5084
    %v5087 = vmul.f32 1.0, %v5086
    %v5088 = vrcp.pop %v5085
    %v5089 = vmul.f32 1.0, %v5088
    %v5090 = vtanh.pop %v4991
    %v5091 = vtanh.pop %v4993
    %v5092 = vxor.u32 %v5062, 2147483648
    %v5093 = vxor.u32 %v5064, 2147483648
    %v5094 = vmul.f32 %v5092, 1.442695
    %v5095 = vpow.pop %v5094
    %v5096 = vmul.f32 %v5093, 1.442695
    %v5097 = vpow.pop %v5096
    %v5098 = vadd.f32 %v5095, 1.0
    %v5099 = vadd.f32 %v5097, 1.0
    %v5100 = vrcp.pop %v5098
    %v5101 = vmul.f32 1.0, %v5100
    %v5102 = vrcp.pop %v5099
    %v5103 = vmul.f32 1.0, %v5102
    %v5104 = vmul.f32 %v5087, %v4152
    %v5105 = vmul.f32 %v5089, %v4153
    %v5106 = vmul.f32 %v5075, %v5090
    %v5107 = vmul.f32 %v5077, %v5091
    %v5108 = vadd.f32 %v5104, %v5106
    %v5109 = vadd.f32 %v5105, %v5107
    %v5110 = vtanh.pop %v5108
    %v5111 = vtanh.pop %v5109
    %v5112 = vmul.f32 %v5101, %v5110
    %v5113 = vmul.f32 %v5103, %v5111
    %5114 = vmatprep.subr.mxu0 %v1277
    %5115 = vmatpush1.msra.mxu0 %v1276
    %5116 = vmatprep.subr.mxu0 %v1285
    %5117 = vmatpush1.msra.mxu0 %v1284
    %5118 = vmatprep.subr.mxu0 %v1293
    %5119 = vmatpush1.msra.mxu0 %v1292
    %5120 = vmatprep.subr.mxu0 %v1301
    %5121 = vmatpush1.msra.mxu0 %v1300
    %5122 = vmatprep.subr.mxu0 %v1309
    %5123 = vmatpush1.msra.mxu0 %v1308
    %5124 = vmatprep.subr.mxu0 %v1317
    %5125 = vmatpush1.msra.mxu0 %v1316
    %5126 = vmatprep.subr.mxu0 %v1325
    %5127 = vmatpush1.msra.mxu0 %v1324
    %5128 = vmatprep.subr.mxu0 %v1333
    %5129 = vmatpush1.msra.mxu0 %v1332
    %5130 = vmatprep.subr.mxu0 %v1341
    %5131 = vmatpush1.msra.mxu0 %v1340
    %5132 = vmatprep.subr.mxu0 %v1349
    %5133 = vmatpush1.msra.mxu0 %v1348
    %5134 = vmatprep.subr.mxu0 %v1357
    %5135 = vmatpush1.msra.mxu0 %v1356
    %5136 = vmatprep.subr.mxu0 %v1365
    %5137 = vmatpush1.msra.mxu0 %v1364
    %5138 = vmatprep.subr.mxu0 %v1373
    %5139 = vmatpush1.msra.mxu0 %v1372
    %5140 = vmatprep.subr.mxu0 %v1381
    %5141 = vmatpush1.msra.mxu0 %v1380
    %5142 = vmatprep.subr.mxu0 %v1389
    %5143 = vmatpush1.msra.mxu0 %v1388
    %5144 = vmatprep.subr.mxu0 %v1397
    %5145 = vmatpush1.msra.mxu0 %v1396
    %5146 = vmatprep.subr.mxu0 %v1405
    %5147 = vmatpush1.msra.mxu0 %v1404
    %5148 = vmatprep.subr.mxu0 %v1413
    %5149 = vmatpush1.msra.mxu0 %v1412
    %5150 = vmatprep.subr.mxu0 %v1421
    %5151 = vmatpush1.msra.mxu0 %v1420
    %5152 = vmatprep.subr.mxu0 %v1429
    %5153 = vmatpush1.msra.mxu0 %v1428
    %5154 = vmatprep.subr.mxu0 %v1437
    %5155 = vmatpush1.msra.mxu0 %v1436
    %5156 = vmatprep.subr.mxu0 %v1445
    %5157 = vmatpush1.msra.mxu0 %v1444
    %5158 = vmatprep.subr.mxu0 %v1453
    %5159 = vmatpush1.msra.mxu0 %v1452
    %5160 = vmatprep.subr.mxu0 %v1461
    %5161 = vmatpush1.msra.mxu0 %v1460
    %5162 = vmatprep.subr.mxu0 %v1469
    %5163 = vmatpush1.msra.mxu0 %v1468
    %5164 = vmatprep.subr.mxu0 %v1477
    %5165 = vmatpush1.msra.mxu0 %v1476
    %5166 = vmatprep.subr.mxu0 %v1485
    %5167 = vmatpush1.msra.mxu0 %v1484
    %5168 = vmatprep.subr.mxu0 %v1493
    %5169 = vmatpush1.msra.mxu0 %v1492
    %5170 = vmatprep.subr.mxu0 %v1501
    %5171 = vmatpush1.msra.mxu0 %v1500
    %5172 = vmatprep.subr.mxu0 %v1509
    %5173 = vmatpush1.msra.mxu0 %v1508
    %5174 = vmatprep.subr.mxu0 %v1517
    %5175 = vmatpush1.msra.mxu0 %v1516
    %5176 = vmatprep.subr.mxu0 %v1525
    %5177 = vmatpush1.msra.mxu0 %v1524
    %5178 = vmatprep.mubr.f32.mxu0 %v5113
    %5179 = vmatmul.mubr.f32.gmra.mrb[0].mxu0 %v5112
    %v5180 = vpop.f32.mrb[0].mxu0
    %v5181 = vadd.f32 %v1537, %v5180
    %v5182 = vpop.f32.mrb[0].mxu0
    %v5183 = vadd.f32 %v1541, %v5182
    %5184 = vdwg.mxu0
    %5185 = vmatprep.subr.mxu0 %v1279
    %5186 = vmatpush1.msra.mxu0 %v1278
    %5187 = vmatprep.subr.mxu0 %v1287
    %5188 = vmatpush1.msra.mxu0 %v1286
    %5189 = vmatprep.subr.mxu0 %v1295
    %5190 = vmatpush1.msra.mxu0 %v1294
    %5191 = vmatprep.subr.mxu0 %v1303
    %5192 = vmatpush1.msra.mxu0 %v1302
    %5193 = vmatprep.subr.mxu0 %v1311
    %5194 = vmatpush1.msra.mxu0 %v1310
    %5195 = vmatprep.subr.mxu0 %v1319
    %5196 = vmatpush1.msra.mxu0 %v1318
    %5197 = vmatprep.subr.mxu0 %v1327
    %5198 = vmatpush1.msra.mxu0 %v1326
    %5199 = vmatprep.subr.mxu0 %v1335
    %5200 = vmatpush1.msra.mxu0 %v1334
    %5201 = vmatprep.subr.mxu0 %v1343
    %5202 = vmatpush1.msra.mxu0 %v1342
    %5203 = vmatprep.subr.mxu0 %v1351
    %5204 = vmatpush1.msra.mxu0 %v1350
    %5205 = vmatprep.subr.mxu0 %v1359
    %5206 = vmatpush1.msra.mxu0 %v1358
    %5207 = vmatprep.subr.mxu0 %v1367
    %5208 = vmatpush1.msra.mxu0 %v1366
    %5209 = vmatprep.subr.mxu0 %v1375
    %5210 = vmatpush1.msra.mxu0 %v1374
    %5211 = vmatprep.subr.mxu0 %v1383
    %5212 = vmatpush1.msra.mxu0 %v1382
    %5213 = vmatprep.subr.mxu0 %v1391
    %5214 = vmatpush1.msra.mxu0 %v1390
    %5215 = vmatprep.subr.mxu0 %v1399
    %5216 = vmatpush1.msra.mxu0 %v1398
    %5217 = vmatprep.subr.mxu0 %v1407
    %5218 = vmatpush1.msra.mxu0 %v1406
    %5219 = vmatprep.subr.mxu0 %v1415
    %5220 = vmatpush1.msra.mxu0 %v1414
    %5221 = vmatprep.subr.mxu0 %v1423
    %5222 = vmatpush1.msra.mxu0 %v1422
    %5223 = vmatprep.subr.mxu0 %v1431
    %5224 = vmatpush1.msra.mxu0 %v1430
    %5225 = vmatprep.subr.mxu0 %v1439
    %5226 = vmatpush1.msra.mxu0 %v1438
    %5227 = vmatprep.subr.mxu0 %v1447
    %5228 = vmatpush1.msra.mxu0 %v1446
    %5229 = vmatprep.subr.mxu0 %v1455
    %5230 = vmatpush1.msra.mxu0 %v1454
    %5231 = vmatprep.subr.mxu0 %v1463
    %5232 = vmatpush1.msra.mxu0 %v1462
    %5233 = vmatprep.subr.mxu0 %v1471
    %5234 = vmatpush1.msra.mxu0 %v1470
    %5235 = vmatprep.subr.mxu0 %v1479
    %5236 = vmatpush1.msra.mxu0 %v1478
    %5237 = vmatprep.subr.mxu0 %v1487
    %5238 = vmatpush1.msra.mxu0 %v1486
    %5239 = vmatprep.subr.mxu0 %v1495
    %5240 = vmatpush1.msra.mxu0 %v1494
    %5241 = vmatprep.subr.mxu0 %v1503
    %5242 = vmatpush1.msra.mxu0 %v1502
    %5243 = vmatprep.subr.mxu0 %v1511
    %5244 = vmatpush1.msra.mxu0 %v1510
    %5245 = vmatprep.subr.mxu0 %v1519
    %5246 = vmatpush1.msra.mxu0 %v1518
    %5247 = vmatprep.subr.mxu0 %v1527
    %5248 = vmatpush1.msra.mxu0 %v1526
    %5249 = vmatprep.mubr.f32.mxu0 %v5113
    %5250 = vmatmul.mubr.f32.gmra.mrb[0].mxu0 %v5112
    %v5251 = vpop.f32.mrb[0].mxu0
    %v5252 = vadd.f32 %v1545, %v5251
    %v5253 = vpop.f32.mrb[0].mxu0
    %v5254 = vadd.f32 %v1549, %v5253
    %5255 = vdwg.mxu0
    %5256 = vmatprep.subr.mxu0 %v1281
    %5257 = vmatpush1.msra.mxu0 %v1280
    %5258 = vmatprep.subr.mxu0 %v1289
    %5259 = vmatpush1.msra.mxu0 %v1288
    %5260 = vmatprep.subr.mxu0 %v1297
    %5261 = vmatpush1.msra.mxu0 %v1296
    %5262 = vmatprep.subr.mxu0 %v1305
    %5263 = vmatpush1.msra.mxu0 %v1304
    %5264 = vmatprep.subr.mxu0 %v1313
    %5265 = vmatpush1.msra.mxu0 %v1312
    %5266 = vmatprep.subr.mxu0 %v1321
    %5267 = vmatpush1.msra.mxu0 %v1320
    %5268 = vmatprep.subr.mxu0 %v1329
    %5269 = vmatpush1.msra.mxu0 %v1328
    %5270 = vmatprep.subr.mxu0 %v1337
    %5271 = vmatpush1.msra.mxu0 %v1336
    %5272 = vmatprep.subr.mxu0 %v1345
    %5273 = vmatpush1.msra.mxu0 %v1344
    %5274 = vmatprep.subr.mxu0 %v1353
    %5275 = vmatpush1.msra.mxu0 %v1352
    %5276 = vmatprep.subr.mxu0 %v1361
    %5277 = vmatpush1.msra.mxu0 %v1360
    %5278 = vmatprep.subr.mxu0 %v1369
    %5279 = vmatpush1.msra.mxu0 %v1368
    %5280 = vmatprep.subr.mxu0 %v1377
    %5281 = vmatpush1.msra.mxu0 %v1376
    %5282 = vmatprep.subr.mxu0 %v1385
    %5283 = vmatpush1.msra.mxu0 %v1384
    %5284 = vmatprep.subr.mxu0 %v1393
    %5285 = vmatpush1.msra.mxu0 %v1392
    %5286 = vmatprep.subr.mxu0 %v1401
    %5287 = vmatpush1.msra.mxu0 %v1400
    %5288 = vmatprep.subr.mxu0 %v1409
    %5289 = vmatpush1.msra.mxu0 %v1408
    %5290 = vmatprep.subr.mxu0 %v1417
    %5291 = vmatpush1.msra.mxu0 %v1416
    %5292 = vmatprep.subr.mxu0 %v1425
    %5293 = vmatpush1.msra.mxu0 %v1424
    %5294 = vmatprep.subr.mxu0 %v1433
    %5295 = vmatpush1.msra.mxu0 %v1432
    %5296 = vmatprep.subr.mxu0 %v1441
    %5297 = vmatpush1.msra.mxu0 %v1440
    %5298 = vmatprep.subr.mxu0 %v1449
    %5299 = vmatpush1.msra.mxu0 %v1448
    %5300 = vmatprep.subr.mxu0 %v1457
    %5301 = vmatpush1.msra.mxu0 %v1456
    %5302 = vmatprep.subr.mxu0 %v1465
    %5303 = vmatpush1.msra.mxu0 %v1464
    %5304 = vmatprep.subr.mxu0 %v1473
    %5305 = vmatpush1.msra.mxu0 %v1472
    %5306 = vmatprep.subr.mxu0 %v1481
    %5307 = vmatpush1.msra.mxu0 %v1480
    %5308 = vmatprep.subr.mxu0 %v1489
    %5309 = vmatpush1.msra.mxu0 %v1488
    %5310 = vmatprep.subr.mxu0 %v1497
    %5311 = vmatpush1.msra.mxu0 %v1496
    %5312 = vmatprep.subr.mxu0 %v1505
    %5313 = vmatpush1.msra.mxu0 %v1504
    %5314 = vmatprep.subr.mxu0 %v1513
    %5315 = vmatpush1.msra.mxu0 %v1512
    %5316 = vmatprep.subr.mxu0 %v1521
    %5317 = vmatpush1.msra.mxu0 %v1520
    %5318 = vmatprep.subr.mxu0 %v1529
    %5319 = vmatpush1.msra.mxu0 %v1528
    %5320 = vmatprep.mubr.f32.mxu0 %v5113
    %5321 = vmatmul.mubr.f32.gmra.mrb[0].mxu0 %v5112
    %v5322 = vpop.f32.mrb[0].mxu0
    %v5323 = vadd.f32 %v1553, %v5322
    %v5324 = vpop.f32.mrb[0].mxu0
    %v5325 = vadd.f32 %v1557, %v5324
    %5326 = vdwg.mxu0
    %5327 = vmatprep.subr.mxu0 %v1283
    %5328 = vmatpush1.msra.mxu0 %v1282
    %5329 = vmatprep.subr.mxu0 %v1291
    %5330 = vmatpush1.msra.mxu0 %v1290
    %5331 = vmatprep.subr.mxu0 %v1299
    %5332 = vmatpush1.msra.mxu0 %v1298
    %5333 = vmatprep.subr.mxu0 %v1307
    %5334 = vmatpush1.msra.mxu0 %v1306
    %5335 = vmatprep.subr.mxu0 %v1315
    %5336 = vmatpush1.msra.mxu0 %v1314
    %5337 = vmatprep.subr.mxu0 %v1323
    %5338 = vmatpush1.msra.mxu0 %v1322
    %5339 = vmatprep.subr.mxu0 %v1331
    %5340 = vmatpush1.msra.mxu0 %v1330
    %5341 = vmatprep.subr.mxu0 %v1339
    %5342 = vmatpush1.msra.mxu0 %v1338
    %5343 = vmatprep.subr.mxu0 %v1347
    %5344 = vmatpush1.msra.mxu0 %v1346
    %5345 = vmatprep.subr.mxu0 %v1355
    %5346 = vmatpush1.msra.mxu0 %v1354
    %5347 = vmatprep.subr.mxu0 %v1363
    %5348 = vmatpush1.msra.mxu0 %v1362
    %5349 = vmatprep.subr.mxu0 %v1371
    %5350 = vmatpush1.msra.mxu0 %v1370
    %5351 = vmatprep.subr.mxu0 %v1379
    %5352 = vmatpush1.msra.mxu0 %v1378
    %5353 = vmatprep.subr.mxu0 %v1387
    %5354 = vmatpush1.msra.mxu0 %v1386
    %5355 = vmatprep.subr.mxu0 %v1395
    %5356 = vmatpush1.msra.mxu0 %v1394
    %5357 = vmatprep.subr.mxu0 %v1403
    %5358 = vmatpush1.msra.mxu0 %v1402
    %5359 = vmatprep.subr.mxu0 %v1411
    %5360 = vmatpush1.msra.mxu0 %v1410
    %5361 = vmatprep.subr.mxu0 %v1419
    %5362 = vmatpush1.msra.mxu0 %v1418
    %5363 = vmatprep.subr.mxu0 %v1427
    %5364 = vmatpush1.msra.mxu0 %v1426
    %5365 = vmatprep.subr.mxu0 %v1435
    %5366 = vmatpush1.msra.mxu0 %v1434
    %5367 = vmatprep.subr.mxu0 %v1443
    %5368 = vmatpush1.msra.mxu0 %v1442
    %5369 = vmatprep.subr.mxu0 %v1451
    %5370 = vmatpush1.msra.mxu0 %v1450
    %5371 = vmatprep.subr.mxu0 %v1459
    %5372 = vmatpush1.msra.mxu0 %v1458
    %5373 = vmatprep.subr.mxu0 %v1467
    %5374 = vmatpush1.msra.mxu0 %v1466
    %5375 = vmatprep.subr.mxu0 %v1475
    %5376 = vmatpush1.msra.mxu0 %v1474
    %5377 = vmatprep.subr.mxu0 %v1483
    %5378 = vmatpush1.msra.mxu0 %v1482
    %5379 = vmatprep.subr.mxu0 %v1491
    %5380 = vmatpush1.msra.mxu0 %v1490
    %5381 = vmatprep.subr.mxu0 %v1499
    %5382 = vmatpush1.msra.mxu0 %v1498
    %5383 = vmatprep.subr.mxu0 %v1507
    %5384 = vmatpush1.msra.mxu0 %v1506
    %5385 = vmatprep.subr.mxu0 %v1515
    %5386 = vmatpush1.msra.mxu0 %v1514
    %5387 = vmatprep.subr.mxu0 %v1523
    %5388 = vmatpush1.msra.mxu0 %v1522
    %5389 = vmatprep.subr.mxu0 %v1531
    %5390 = vmatpush1.msra.mxu0 %v1530
    %5391 = vmatprep.mubr.f32.mxu0 %v5113
    %5392 = vmatmul.mubr.f32.gmra.mrb[0].mxu0 %v5112
    %v5393 = vpop.f32.mrb[0].mxu0
    %v5394 = vadd.f32 %v1561, %v5393
    %v5395 = vpop.f32.mrb[0].mxu0
    %v5396 = vadd.f32 %v1565, %v5395
    %5397 = vdwg.mxu0
    %5398 = vmatprep.subr.mxu0 %v765
    %5399 = vmatpush1.msra.mxu0 %v764
    %5400 = vmatprep.subr.mxu0 %v773
    %5401 = vmatpush1.msra.mxu0 %v772
    %5402 = vmatprep.subr.mxu0 %v781
    %5403 = vmatpush1.msra.mxu0 %v780
    %5404 = vmatprep.subr.mxu0 %v789
    %5405 = vmatpush1.msra.mxu0 %v788
    %5406 = vmatprep.subr.mxu0 %v797
    %5407 = vmatpush1.msra.mxu0 %v796
    %5408 = vmatprep.subr.mxu0 %v805
    %5409 = vmatpush1.msra.mxu0 %v804
    %5410 = vmatprep.subr.mxu0 %v813
    %5411 = vmatpush1.msra.mxu0 %v812
    %5412 = vmatprep.subr.mxu0 %v821
    %5413 = vmatpush1.msra.mxu0 %v820
    %5414 = vmatprep.subr.mxu0 %v829
    %5415 = vmatpush1.msra.mxu0 %v828
    %5416 = vmatprep.subr.mxu0 %v837
    %5417 = vmatpush1.msra.mxu0 %v836
    %5418 = vmatprep.subr.mxu0 %v845
    %5419 = vmatpush1.msra.mxu0 %v844
    %5420 = vmatprep.subr.mxu0 %v853
    %5421 = vmatpush1.msra.mxu0 %v852
    %5422 = vmatprep.subr.mxu0 %v861
    %5423 = vmatpush1.msra.mxu0 %v860
    %5424 = vmatprep.subr.mxu0 %v869
    %5425 = vmatpush1.msra.mxu0 %v868
    %5426 = vmatprep.subr.mxu0 %v877
    %5427 = vmatpush1.msra.mxu0 %v876
    %5428 = vmatprep.subr.mxu0 %v885
    %5429 = vmatpush1.msra.mxu0 %v884
    %5430 = vmatprep.subr.mxu0 %v893
    %5431 = vmatpush1.msra.mxu0 %v892
    %5432 = vmatprep.subr.mxu0 %v901
    %5433 = vmatpush1.msra.mxu0 %v900
    %5434 = vmatprep.subr.mxu0 %v909
    %5435 = vmatpush1.msra.mxu0 %v908
    %5436 = vmatprep.subr.mxu0 %v917
    %5437 = vmatpush1.msra.mxu0 %v916
    %5438 = vmatprep.subr.mxu0 %v925
    %5439 = vmatpush1.msra.mxu0 %v924
    %5440 = vmatprep.subr.mxu0 %v933
    %5441 = vmatpush1.msra.mxu0 %v932
    %5442 = vmatprep.subr.mxu0 %v941
    %5443 = vmatpush1.msra.mxu0 %v940
    %5444 = vmatprep.subr.mxu0 %v949
    %5445 = vmatpush1.msra.mxu0 %v948
    %5446 = vmatprep.subr.mxu0 %v957
    %5447 = vmatpush1.msra.mxu0 %v956
    %5448 = vmatprep.subr.mxu0 %v965
    %5449 = vmatpush1.msra.mxu0 %v964
    %5450 = vmatprep.subr.mxu0 %v973
    %5451 = vmatpush1.msra.mxu0 %v972
    %5452 = vmatprep.subr.mxu0 %v981
    %5453 = vmatpush1.msra.mxu0 %v980
    %5454 = vmatprep.subr.mxu0 %v989
    %5455 = vmatpush1.msra.mxu0 %v988
    %5456 = vmatprep.subr.mxu0 %v997
    %5457 = vmatpush1.msra.mxu0 %v996
    %5458 = vmatprep.subr.mxu0 %v1005
    %5459 = vmatpush1.msra.mxu0 %v1004
    %5460 = vmatprep.subr.mxu0 %v1013
    %5461 = vmatpush1.msra.mxu0 %v1012
    %5462 = vmatprep.mubr.f32.mxu0 %v4781
    %5463 = vmatmul.mubr.f32.gmra.mrb[0].mxu0 %v4780
    %v5464 = vpop.f32.mrb[0].mxu0
    %v5465 = vadd.f32 0.0, %v5464
    %v5466 = vpop.f32.mrb[0].mxu0
    %v5467 = vadd.f32 0.0, %v5466
    %5468 = vdwg.mxu0
    %5469 = vmatprep.subr.mxu0 %v767
    %5470 = vmatpush1.msra.mxu0 %v766
    %5471 = vmatprep.subr.mxu0 %v775
    %5472 = vmatpush1.msra.mxu0 %v774
    %5473 = vmatprep.subr.mxu0 %v783
    %5474 = vmatpush1.msra.mxu0 %v782
    %5475 = vmatprep.subr.mxu0 %v791
    %5476 = vmatpush1.msra.mxu0 %v790
    %5477 = vmatprep.subr.mxu0 %v799
    %5478 = vmatpush1.msra.mxu0 %v798
    %5479 = vmatprep.subr.mxu0 %v807
    %5480 = vmatpush1.msra.mxu0 %v806
    %5481 = vmatprep.subr.mxu0 %v815
    %5482 = vmatpush1.msra.mxu0 %v814
    %5483 = vmatprep.subr.mxu0 %v823
    %5484 = vmatpush1.msra.mxu0 %v822
    %5485 = vmatprep.subr.mxu0 %v831
    %5486 = vmatpush1.msra.mxu0 %v830
    %5487 = vmatprep.subr.mxu0 %v839
    %5488 = vmatpush1.msra.mxu0 %v838
    %5489 = vmatprep.subr.mxu0 %v847
    %5490 = vmatpush1.msra.mxu0 %v846
    %5491 = vmatprep.subr.mxu0 %v855
    %5492 = vmatpush1.msra.mxu0 %v854
    %5493 = vmatprep.subr.mxu0 %v863
    %5494 = vmatpush1.msra.mxu0 %v862
    %5495 = vmatprep.subr.mxu0 %v871
    %5496 = vmatpush1.msra.mxu0 %v870
    %5497 = vmatprep.subr.mxu0 %v879
    %5498 = vmatpush1.msra.mxu0 %v878
    %5499 = vmatprep.subr.mxu0 %v887
    %5500 = vmatpush1.msra.mxu0 %v886
    %5501 = vmatprep.subr.mxu0 %v895
    %5502 = vmatpush1.msra.mxu0 %v894
    %5503 = vmatprep.subr.mxu0 %v903
    %5504 = vmatpush1.msra.mxu0 %v902
    %5505 = vmatprep.subr.mxu0 %v911
    %5506 = vmatpush1.msra.mxu0 %v910
    %5507 = vmatprep.subr.mxu0 %v919
    %5508 = vmatpush1.msra.mxu0 %v918
    %5509 = vmatprep.subr.mxu0 %v927
    %5510 = vmatpush1.msra.mxu0 %v926
    %5511 = vmatprep.subr.mxu0 %v935
    %5512 = vmatpush1.msra.mxu0 %v934
    %5513 = vmatprep.subr.mxu0 %v943
    %5514 = vmatpush1.msra.mxu0 %v942
    %5515 = vmatprep.subr.mxu0 %v951
    %5516 = vmatpush1.msra.mxu0 %v950
    %5517 = vmatprep.subr.mxu0 %v959
    %5518 = vmatpush1.msra.mxu0 %v958
    %5519 = vmatprep.subr.mxu0 %v967
    %5520 = vmatpush1.msra.mxu0 %v966
    %5521 = vmatprep.subr.mxu0 %v975
    %5522 = vmatpush1.msra.mxu0 %v974
    %5523 = vmatprep.subr.mxu0 %v983
    %5524 = vmatpush1.msra.mxu0 %v982
    %5525 = vmatprep.subr.mxu0 %v991
    %5526 = vmatpush1.msra.mxu0 %v990
    %5527 = vmatprep.subr.mxu0 %v999
    %5528 = vmatpush1.msra.mxu0 %v998
    %5529 = vmatprep.subr.mxu0 %v1007
    %5530 = vmatpush1.msra.mxu0 %v1006
    %5531 = vmatprep.subr.mxu0 %v1015
    %5532 = vmatpush1.msra.mxu0 %v1014
    %5533 = vmatprep.mubr.f32.mxu0 %v4781
    %5534 = vmatmul.mubr.f32.gmra.mrb[0].mxu0 %v4780
    %v5535 = vpop.f32.mrb[0].mxu0
    %v5536 = vadd.f32 0.0, %v5535
    %v5537 = vpop.f32.mrb[0].mxu0
    %v5538 = vadd.f32 0.0, %v5537
    %5539 = vdwg.mxu0
    %5540 = vmatprep.subr.mxu0 %v769
    %5541 = vmatpush1.msra.mxu0 %v768
    %5542 = vmatprep.subr.mxu0 %v777
    %5543 = vmatpush1.msra.mxu0 %v776
    %5544 = vmatprep.subr.mxu0 %v785
    %5545 = vmatpush1.msra.mxu0 %v784
    %5546 = vmatprep.subr.mxu0 %v793
    %5547 = vmatpush1.msra.mxu0 %v792
    %5548 = vmatprep.subr.mxu0 %v801
    %5549 = vmatpush1.msra.mxu0 %v800
    %5550 = vmatprep.subr.mxu0 %v809
    %5551 = vmatpush1.msra.mxu0 %v808
    %5552 = vmatprep.subr.mxu0 %v817
    %5553 = vmatpush1.msra.mxu0 %v816
    %5554 = vmatprep.subr.mxu0 %v825
    %5555 = vmatpush1.msra.mxu0 %v824
    %5556 = vmatprep.subr.mxu0 %v833
    %5557 = vmatpush1.msra.mxu0 %v832
    %5558 = vmatprep.subr.mxu0 %v841
    %5559 = vmatpush1.msra.mxu0 %v840
    %5560 = vmatprep.subr.mxu0 %v849
    %5561 = vmatpush1.msra.mxu0 %v848
    %5562 = vmatprep.subr.mxu0 %v857
    %5563 = vmatpush1.msra.mxu0 %v856
    %5564 = vmatprep.subr.mxu0 %v865
    %5565 = vmatpush1.msra.mxu0 %v864
    %5566 = vmatprep.subr.mxu0 %v873
    %5567 = vmatpush1.msra.mxu0 %v872
    %5568 = vmatprep.subr.mxu0 %v881
    %5569 = vmatpush1.msra.mxu0 %v880
    %5570 = vmatprep.subr.mxu0 %v889
    %5571 = vmatpush1.msra.mxu0 %v888
    %5572 = vmatprep.subr.mxu0 %v897
    %5573 = vmatpush1.msra.mxu0 %v896
    %5574 = vmatprep.subr.mxu0 %v905
    %5575 = vmatpush1.msra.mxu0 %v904
    %5576 = vmatprep.subr.mxu0 %v913
    %5577 = vmatpush1.msra.mxu0 %v912
    %5578 = vmatprep.subr.mxu0 %v921
    %5579 = vmatpush1.msra.mxu0 %v920
    %5580 = vmatprep.subr.mxu0 %v929
    %5581 = vmatpush1.msra.mxu0 %v928
    %5582 = vmatprep.subr.mxu0 %v937
    %5583 = vmatpush1.msra.mxu0 %v936
    %5584 = vmatprep.subr.mxu0 %v945
    %5585 = vmatpush1.msra.mxu0 %v944
    %5586 = vmatprep.subr.mxu0 %v953
    %5587 = vmatpush1.msra.mxu0 %v952
    %5588 = vmatprep.subr.mxu0 %v961
    %5589 = vmatpush1.msra.mxu0 %v960
    %5590 = vmatprep.subr.mxu0 %v969
    %5591 = vmatpush1.msra.mxu0 %v968
    %5592 = vmatprep.subr.mxu0 %v977
    %5593 = vmatpush1.msra.mxu0 %v976
    %5594 = vmatprep.subr.mxu0 %v985
    %5595 = vmatpush1.msra.mxu0 %v984
    %5596 = vmatprep.subr.mxu0 %v993
    %5597 = vmatpush1.msra.mxu0 %v992
    %5598 = vmatprep.subr.mxu0 %v1001
    %5599 = vmatpush1.msra.mxu0 %v1000
    %5600 = vmatprep.subr.mxu0 %v1009
    %5601 = vmatpush1.msra.mxu0 %v1008
    %5602 = vmatprep.subr.mxu0 %v1017
    %5603 = vmatpush1.msra.mxu0 %v1016
    %5604 = vmatprep.mubr.f32.mxu0 %v4781
    %5605 = vmatmul.mubr.f32.gmra.mrb[0].mxu0 %v4780
    %v5606 = vpop.f32.mrb[0].mxu0
    %v5607 = vadd.f32 0.0, %v5606
    %v5608 = vpop.f32.mrb[0].mxu0
    %v5609 = vadd.f32 0.0, %v5608
    %5610 = vdwg.mxu0
    %5611 = vmatprep.subr.mxu0 %v771
    %5612 = vmatpush1.msra.mxu0 %v770
    %5613 = vmatprep.subr.mxu0 %v779
    %5614 = vmatpush1.msra.mxu0 %v778
    %5615 = vmatprep.subr.mxu0 %v787
    %5616 = vmatpush1.msra.mxu0 %v786
    %5617 = vmatprep.subr.mxu0 %v795
    %5618 = vmatpush1.msra.mxu0 %v794
    %5619 = vmatprep.subr.mxu0 %v803
    %5620 = vmatpush1.msra.mxu0 %v802
    %5621 = vmatprep.subr.mxu0 %v811
    %5622 = vmatpush1.msra.mxu0 %v810
    %5623 = vmatprep.subr.mxu0 %v819
    %5624 = vmatpush1.msra.mxu0 %v818
    %5625 = vmatprep.subr.mxu0 %v827
    %5626 = vmatpush1.msra.mxu0 %v826
    %5627 = vmatprep.subr.mxu0 %v835
    %5628 = vmatpush1.msra.mxu0 %v834
    %5629 = vmatprep.subr.mxu0 %v843
    %5630 = vmatpush1.msra.mxu0 %v842
    %5631 = vmatprep.subr.mxu0 %v851
    %5632 = vmatpush1.msra.mxu0 %v850
    %5633 = vmatprep.subr.mxu0 %v859
    %5634 = vmatpush1.msra.mxu0 %v858
    %5635 = vmatprep.subr.mxu0 %v867
    %5636 = vmatpush1.msra.mxu0 %v866
    %5637 = vmatprep.subr.mxu0 %v875
    %5638 = vmatpush1.msra.mxu0 %v874
    %5639 = vmatprep.subr.mxu0 %v883
    %5640 = vmatpush1.msra.mxu0 %v882
    %5641 = vmatprep.subr.mxu0 %v891
    %5642 = vmatpush1.msra.mxu0 %v890
    %5643 = vmatprep.subr.mxu0 %v899
    %5644 = vmatpush1.msra.mxu0 %v898
    %5645 = vmatprep.subr.mxu0 %v907
    %5646 = vmatpush1.msra.mxu0 %v906
    %5647 = vmatprep.subr.mxu0 %v915
    %5648 = vmatpush1.msra.mxu0 %v914
    %5649 = vmatprep.subr.mxu0 %v923
    %5650 = vmatpush1.msra.mxu0 %v922
    %5651 = vmatprep.subr.mxu0 %v931
    %5652 = vmatpush1.msra.mxu0 %v930
    %5653 = vmatprep.subr.mxu0 %v939
    %5654 = vmatpush1.msra.mxu0 %v938
    %5655 = vmatprep.subr.mxu0 %v947
    %5656 = vmatpush1.msra.mxu0 %v946
    %5657 = vmatprep.subr.mxu0 %v955
    %5658 = vmatpush1.msra.mxu0 %v954
    %5659 = vmatprep.subr.mxu0 %v963
    %5660 = vmatpush1.msra.mxu0 %v962
    %5661 = vmatprep.subr.mxu0 %v971
    %5662 = vmatpush1.msra.mxu0 %v970
    %5663 = vmatprep.subr.mxu0 %v979
    %5664 = vmatpush1.msra.mxu0 %v978
    %5665 = vmatprep.subr.mxu0 %v987
    %5666 = vmatpush1.msra.mxu0 %v986
    %5667 = vmatprep.subr.mxu0 %v995
    %5668 = vmatpush1.msra.mxu0 %v994
    %5669 = vmatprep.subr.mxu0 %v1003
    %5670 = vmatpush1.msra.mxu0 %v1002
    %5671 = vmatprep.subr.mxu0 %v1011
    %5672 = vmatpush1.msra.mxu0 %v1010
    %5673 = vmatprep.subr.mxu0 %v1019
    %5674 = vmatpush1.msra.mxu0 %v1018
    %5675 = vmatprep.mubr.f32.mxu0 %v4781
    %5676 = vmatmul.mubr.f32.gmra.mrb[0].mxu0 %v4780
    %v5677 = vpop.f32.mrb[0].mxu0
    %v5678 = vadd.f32 0.0, %v5677
    %v5679 = vpop.f32.mrb[0].mxu0
    %v5680 = vadd.f32 0.0, %v5679
    %5681 = vdwg.mxu0
    %v5682 = vadd.f32 %v403, %v5465
    %v5683 = vadd.f32 %v405, %v5467
    %v5684 = vadd.f32 %v516, %v5536
    %v5685 = vadd.f32 %v518, %v5538
    %v5686 = vadd.f32 %v629, %v5607
    %v5687 = vadd.f32 %v631, %v5609
    %v5688 = vadd.f32 %v742, %v5678
    %v5689 = vadd.f32 %v744, %v5680
    %v5690 = vxor.u32 %v5682, 2147483648
    %v5691 = vxor.u32 %v5683, 2147483648
    %v5692 = vmul.f32 %v5690, 1.442695
    %v5693 = vpow.pop %v5692
    %v5694 = vmul.f32 %v5691, 1.442695
    %v5695 = vpow.pop %v5694
    %v5696 = vadd.f32 %v5693, 1.0
    %v5697 = vadd.f32 %v5695, 1.0
    %v5698 = vrcp.pop %v5696
    %v5699 = vmul.f32 1.0, %v5698
    %v5700 = vrcp.pop %v5697
    %v5701 = vmul.f32 1.0, %v5700
    %v5702 = vxor.u32 %v5684, 2147483648
    %v5703 = vxor.u32 %v5685, 2147483648
    %v5704 = vmul.f32 %v5702, 1.442695
    %v5705 = vpow.pop %v5704
    %v5706 = vmul.f32 %v5703, 1.442695
    %v5707 = vpow.pop %v5706
    %v5708 = vadd.f32 %v5705, 1.0
    %v5709 = vadd.f32 %v5707, 1.0
    %v5710 = vrcp.pop %v5708
    %v5711 = vmul.f32 1.0, %v5710
    %v5712 = vrcp.pop %v5709
    %v5713 = vmul.f32 1.0, %v5712
    %v5714 = vtanh.pop %v5686
    %v5715 = vtanh.pop %v5687
    %v5716 = vxor.u32 %v5688, 2147483648
    %v5717 = vxor.u32 %v5689, 2147483648
    %v5718 = vmul.f32 %v5716, 1.442695
    %v5719 = vpow.pop %v5718
    %v5720 = vmul.f32 %v5717, 1.442695
    %v5721 = vpow.pop %v5720
    %v5722 = vadd.f32 %v5719, 1.0
    %v5723 = vadd.f32 %v5721, 1.0
    %v5724 = vrcp.pop %v5722
    %v5725 = vmul.f32 1.0, %v5724
    %v5726 = vrcp.pop %v5723
    %v5727 = vmul.f32 1.0, %v5726
    %v5728 = vmul.f32 %v5711, %v4776
    %v5729 = vmul.f32 %v5713, %v4777
    %v5730 = vmul.f32 %v5699, %v5714
    %v5731 = vmul.f32 %v5701, %v5715
    %v5732 = vadd.f32 %v5728, %v5730
    %v5733 = vadd.f32 %v5729, %v5731
    %v5734 = vtanh.pop %v5732
    %v5735 = vtanh.pop %v5733
    %v5736 = vmul.f32 %v5725, %v5734
    %v5737 = vmul.f32 %v5727, %v5735
    %5738 = vmatprep.subr.mxu0 %v1021
    %5739 = vmatpush1.msra.mxu0 %v1020
    %5740 = vmatprep.subr.mxu0 %v1029
    %5741 = vmatpush1.msra.mxu0 %v1028
    %5742 = vmatprep.subr.mxu0 %v1037
    %5743 = vmatpush1.msra.mxu0 %v1036
    %5744 = vmatprep.subr.mxu0 %v1045
    %5745 = vmatpush1.msra.mxu0 %v1044
    %5746 = vmatprep.subr.mxu0 %v1053
    %5747 = vmatpush1.msra.mxu0 %v1052
    %5748 = vmatprep.subr.mxu0 %v1061
    %5749 = vmatpush1.msra.mxu0 %v1060
    %5750 = vmatprep.subr.mxu0 %v1069
    %5751 = vmatpush1.msra.mxu0 %v1068
    %5752 = vmatprep.subr.mxu0 %v1077
    %5753 = vmatpush1.msra.mxu0 %v1076
    %5754 = vmatprep.subr.mxu0 %v1085
    %5755 = vmatpush1.msra.mxu0 %v1084
    %5756 = vmatprep.subr.mxu0 %v1093
    %5757 = vmatpush1.msra.mxu0 %v1092
    %5758 = vmatprep.subr.mxu0 %v1101
    %5759 = vmatpush1.msra.mxu0 %v1100
    %5760 = vmatprep.subr.mxu0 %v1109
    %5761 = vmatpush1.msra.mxu0 %v1108
    %5762 = vmatprep.subr.mxu0 %v1117
    %5763 = vmatpush1.msra.mxu0 %v1116
    %5764 = vmatprep.subr.mxu0 %v1125
    %5765 = vmatpush1.msra.mxu0 %v1124
    %5766 = vmatprep.subr.mxu0 %v1133
    %5767 = vmatpush1.msra.mxu0 %v1132
    %5768 = vmatprep.subr.mxu0 %v1141
    %5769 = vmatpush1.msra.mxu0 %v1140
    %5770 = vmatprep.subr.mxu0 %v1149
    %5771 = vmatpush1.msra.mxu0 %v1148
    %5772 = vmatprep.subr.mxu0 %v1157
    %5773 = vmatpush1.msra.mxu0 %v1156
    %5774 = vmatprep.subr.mxu0 %v1165
    %5775 = vmatpush1.msra.mxu0 %v1164
    %5776 = vmatprep.subr.mxu0 %v1173
    %5777 = vmatpush1.msra.mxu0 %v1172
    %5778 = vmatprep.subr.mxu0 %v1181
    %5779 = vmatpush1.msra.mxu0 %v1180
    %5780 = vmatprep.subr.mxu0 %v1189
    %5781 = vmatpush1.msra.mxu0 %v1188
    %5782 = vmatprep.subr.mxu0 %v1197
    %5783 = vmatpush1.msra.mxu0 %v1196
    %5784 = vmatprep.subr.mxu0 %v1205
    %5785 = vmatpush1.msra.mxu0 %v1204
    %5786 = vmatprep.subr.mxu0 %v1213
    %5787 = vmatpush1.msra.mxu0 %v1212
    %5788 = vmatprep.subr.mxu0 %v1221
    %5789 = vmatpush1.msra.mxu0 %v1220
    %5790 = vmatprep.subr.mxu0 %v1229
    %5791 = vmatpush1.msra.mxu0 %v1228
    %5792 = vmatprep.subr.mxu0 %v1237
    %5793 = vmatpush1.msra.mxu0 %v1236
    %5794 = vmatprep.subr.mxu0 %v1245
    %5795 = vmatpush1.msra.mxu0 %v1244
    %5796 = vmatprep.subr.mxu0 %v1253
    %5797 = vmatpush1.msra.mxu0 %v1252
    %5798 = vmatprep.subr.mxu0 %v1261
    %5799 = vmatpush1.msra.mxu0 %v1260
    %5800 = vmatprep.subr.mxu0 %v1269
    %5801 = vmatpush1.msra.mxu0 %v1268
    %5802 = vmatprep.mubr.f32.mxu0 %v5737
    %5803 = vmatmul.mubr.f32.gmra.mrb[0].mxu0 %v5736
    %v5804 = vpop.f32.mrb[0].mxu0
    %v5805 = vadd.f32 %v5181, %v5804
    %v5806 = vpop.f32.mrb[0].mxu0
    %v5807 = vadd.f32 %v5183, %v5806
    %5808 = vdwg.mxu0
    %5809 = vmatprep.subr.mxu0 %v1023
    %5810 = vmatpush1.msra.mxu0 %v1022
    %5811 = vmatprep.subr.mxu0 %v1031
    %5812 = vmatpush1.msra.mxu0 %v1030
    %5813 = vmatprep.subr.mxu0 %v1039
    %5814 = vmatpush1.msra.mxu0 %v1038
    %5815 = vmatprep.subr.mxu0 %v1047
    %5816 = vmatpush1.msra.mxu0 %v1046
    %5817 = vmatprep.subr.mxu0 %v1055
    %5818 = vmatpush1.msra.mxu0 %v1054
    %5819 = vmatprep.subr.mxu0 %v1063
    %5820 = vmatpush1.msra.mxu0 %v1062
    %5821 = vmatprep.subr.mxu0 %v1071
    %5822 = vmatpush1.msra.mxu0 %v1070
    %5823 = vmatprep.subr.mxu0 %v1079
    %5824 = vmatpush1.msra.mxu0 %v1078
    %5825 = vmatprep.subr.mxu0 %v1087
    %5826 = vmatpush1.msra.mxu0 %v1086
    %5827 = vmatprep.subr.mxu0 %v1095
    %5828 = vmatpush1.msra.mxu0 %v1094
    %5829 = vmatprep.subr.mxu0 %v1103
    %5830 = vmatpush1.msra.mxu0 %v1102
    %5831 = vmatprep.subr.mxu0 %v1111
    %5832 = vmatpush1.msra.mxu0 %v1110
    %5833 = vmatprep.subr.mxu0 %v1119
    %5834 = vmatpush1.msra.mxu0 %v1118
    %5835 = vmatprep.subr.mxu0 %v1127
    %5836 = vmatpush1.msra.mxu0 %v1126
    %5837 = vmatprep.subr.mxu0 %v1135
    %5838 = vmatpush1.msra.mxu0 %v1134
    %5839 = vmatprep.subr.mxu0 %v1143
    %5840 = vmatpush1.msra.mxu0 %v1142
    %5841 = vmatprep.subr.mxu0 %v1151
    %5842 = vmatpush1.msra.mxu0 %v1150
    %5843 = vmatprep.subr.mxu0 %v1159
    %5844 = vmatpush1.msra.mxu0 %v1158
    %5845 = vmatprep.subr.mxu0 %v1167
    %5846 = vmatpush1.msra.mxu0 %v1166
    %5847 = vmatprep.subr.mxu0 %v1175
    %5848 = vmatpush1.msra.mxu0 %v1174
    %5849 = vmatprep.subr.mxu0 %v1183
    %5850 = vmatpush1.msra.mxu0 %v1182
    %5851 = vmatprep.subr.mxu0 %v1191
    %5852 = vmatpush1.msra.mxu0 %v1190
    %5853 = vmatprep.subr.mxu0 %v1199
    %5854 = vmatpush1.msra.mxu0 %v1198
    %5855 = vmatprep.subr.mxu0 %v1207
    %5856 = vmatpush1.msra.mxu0 %v1206
    %5857 = vmatprep.subr.mxu0 %v1215
    %5858 = vmatpush1.msra.mxu0 %v1214
    %5859 = vmatprep.subr.mxu0 %v1223
    %5860 = vmatpush1.msra.mxu0 %v1222
    %5861 = vmatprep.subr.mxu0 %v1231
    %5862 = vmatpush1.msra.mxu0 %v1230
    %5863 = vmatprep.subr.mxu0 %v1239
    %5864 = vmatpush1.msra.mxu0 %v1238
    %5865 = vmatprep.subr.mxu0 %v1247
    %5866 = vmatpush1.msra.mxu0 %v1246
    %5867 = vmatprep.subr.mxu0 %v1255
    %5868 = vmatpush1.msra.mxu0 %v1254
    %5869 = vmatprep.subr.mxu0 %v1263
    %5870 = vmatpush1.msra.mxu0 %v1262
    %5871 = vmatprep.subr.mxu0 %v1271
    %5872 = vmatpush1.msra.mxu0 %v1270
    %5873 = vmatprep.mubr.f32.mxu0 %v5737
    %5874 = vmatmul.mubr.f32.gmra.mrb[0].mxu0 %v5736
    %v5875 = vpop.f32.mrb[0].mxu0
    %v5876 = vadd.f32 %v5252, %v5875
    %v5877 = vpop.f32.mrb[0].mxu0
    %v5878 = vadd.f32 %v5254, %v5877
    %5879 = vdwg.mxu0
    %5880 = vmatprep.subr.mxu0 %v1025
    %5881 = vmatpush1.msra.mxu0 %v1024
    %5882 = vmatprep.subr.mxu0 %v1033
    %5883 = vmatpush1.msra.mxu0 %v1032
    %5884 = vmatprep.subr.mxu0 %v1041
    %5885 = vmatpush1.msra.mxu0 %v1040
    %5886 = vmatprep.subr.mxu0 %v1049
    %5887 = vmatpush1.msra.mxu0 %v1048
    %5888 = vmatprep.subr.mxu0 %v1057
    %5889 = vmatpush1.msra.mxu0 %v1056
    %5890 = vmatprep.subr.mxu0 %v1065
    %5891 = vmatpush1.msra.mxu0 %v1064
    %5892 = vmatprep.subr.mxu0 %v1073
    %5893 = vmatpush1.msra.mxu0 %v1072
    %5894 = vmatprep.subr.mxu0 %v1081
    %5895 = vmatpush1.msra.mxu0 %v1080
    %5896 = vmatprep.subr.mxu0 %v1089
    %5897 = vmatpush1.msra.mxu0 %v1088
    %5898 = vmatprep.subr.mxu0 %v1097
    %5899 = vmatpush1.msra.mxu0 %v1096
    %5900 = vmatprep.subr.mxu0 %v1105
    %5901 = vmatpush1.msra.mxu0 %v1104
    %5902 = vmatprep.subr.mxu0 %v1113
    %5903 = vmatpush1.msra.mxu0 %v1112
    %5904 = vmatprep.subr.mxu0 %v1121
    %5905 = vmatpush1.msra.mxu0 %v1120
    %5906 = vmatprep.subr.mxu0 %v1129
    %5907 = vmatpush1.msra.mxu0 %v1128
    %5908 = vmatprep.subr.mxu0 %v1137
    %5909 = vmatpush1.msra.mxu0 %v1136
    %5910 = vmatprep.subr.mxu0 %v1145
    %5911 = vmatpush1.msra.mxu0 %v1144
    %5912 = vmatprep.subr.mxu0 %v1153
    %5913 = vmatpush1.msra.mxu0 %v1152
    %5914 = vmatprep.subr.mxu0 %v1161
    %5915 = vmatpush1.msra.mxu0 %v1160
    %5916 = vmatprep.subr.mxu0 %v1169
    %5917 = vmatpush1.msra.mxu0 %v1168
    %5918 = vmatprep.subr.mxu0 %v1177
    %5919 = vmatpush1.msra.mxu0 %v1176
    %5920 = vmatprep.subr.mxu0 %v1185
    %5921 = vmatpush1.msra.mxu0 %v1184
    %5922 = vmatprep.subr.mxu0 %v1193
    %5923 = vmatpush1.msra.mxu0 %v1192
    %5924 = vmatprep.subr.mxu0 %v1201
    %5925 = vmatpush1.msra.mxu0 %v1200
    %5926 = vmatprep.subr.mxu0 %v1209
    %5927 = vmatpush1.msra.mxu0 %v1208
    %5928 = vmatprep.subr.mxu0 %v1217
    %5929 = vmatpush1.msra.mxu0 %v1216
    %5930 = vmatprep.subr.mxu0 %v1225
    %5931 = vmatpush1.msra.mxu0 %v1224
    %5932 = vmatprep.subr.mxu0 %v1233
    %5933 = vmatpush1.msra.mxu0 %v1232
    %5934 = vmatprep.subr.mxu0 %v1241
    %5935 = vmatpush1.msra.mxu0 %v1240
    %5936 = vmatprep.subr.mxu0 %v1249
    %5937 = vmatpush1.msra.mxu0 %v1248
    %5938 = vmatprep.subr.mxu0 %v1257
    %5939 = vmatpush1.msra.mxu0 %v1256
    %5940 = vmatprep.subr.mxu0 %v1265
    %5941 = vmatpush1.msra.mxu0 %v1264
    %5942 = vmatprep.subr.mxu0 %v1273
    %5943 = vmatpush1.msra.mxu0 %v1272
    %5944 = vmatprep.mubr.f32.mxu0 %v5737
    %5945 = vmatmul.mubr.f32.gmra.mrb[0].mxu0 %v5736
    %v5946 = vpop.f32.mrb[0].mxu0
    %v5947 = vadd.f32 %v5323, %v5946
    %v5948 = vpop.f32.mrb[0].mxu0
    %v5949 = vadd.f32 %v5325, %v5948
    %5950 = vdwg.mxu0
    %5951 = vmatprep.subr.mxu0 %v1027
    %5952 = vmatpush1.msra.mxu0 %v1026
    %5953 = vmatprep.subr.mxu0 %v1035
    %5954 = vmatpush1.msra.mxu0 %v1034
    %5955 = vmatprep.subr.mxu0 %v1043
    %5956 = vmatpush1.msra.mxu0 %v1042
    %5957 = vmatprep.subr.mxu0 %v1051
    %5958 = vmatpush1.msra.mxu0 %v1050
    %5959 = vmatprep.subr.mxu0 %v1059
    %5960 = vmatpush1.msra.mxu0 %v1058
    %5961 = vmatprep.subr.mxu0 %v1067
    %5962 = vmatpush1.msra.mxu0 %v1066
    %5963 = vmatprep.subr.mxu0 %v1075
    %5964 = vmatpush1.msra.mxu0 %v1074
    %5965 = vmatprep.subr.mxu0 %v1083
    %5966 = vmatpush1.msra.mxu0 %v1082
    %5967 = vmatprep.subr.mxu0 %v1091
    %5968 = vmatpush1.msra.mxu0 %v1090
    %5969 = vmatprep.subr.mxu0 %v1099
    %5970 = vmatpush1.msra.mxu0 %v1098
    %5971 = vmatprep.subr.mxu0 %v1107
    %5972 = vmatpush1.msra.mxu0 %v1106
    %5973 = vmatprep.subr.mxu0 %v1115
    %5974 = vmatpush1.msra.mxu0 %v1114
    %5975 = vmatprep.subr.mxu0 %v1123
    %5976 = vmatpush1.msra.mxu0 %v1122
    %5977 = vmatprep.subr.mxu0 %v1131
    %5978 = vmatpush1.msra.mxu0 %v1130
    %5979 = vmatprep.subr.mxu0 %v1139
    %5980 = vmatpush1.msra.mxu0 %v1138
    %5981 = vmatprep.subr.mxu0 %v1147
    %5982 = vmatpush1.msra.mxu0 %v1146
    %5983 = vmatprep.subr.mxu0 %v1155
    %5984 = vmatpush1.msra.mxu0 %v1154
    %5985 = vmatprep.subr.mxu0 %v1163
    %5986 = vmatpush1.msra.mxu0 %v1162
    %5987 = vmatprep.subr.mxu0 %v1171
    %5988 = vmatpush1.msra.mxu0 %v1170
    %5989 = vmatprep.subr.mxu0 %v1179
    %5990 = vmatpush1.msra.mxu0 %v1178
    %5991 = vmatprep.subr.mxu0 %v1187
    %5992 = vmatpush1.msra.mxu0 %v1186
    %5993 = vmatprep.subr.mxu0 %v1195
    %5994 = vmatpush1.msra.mxu0 %v1194
    %5995 = vmatprep.subr.mxu0 %v1203
    %5996 = vmatpush1.msra.mxu0 %v1202
    %5997 = vmatprep.subr.mxu0 %v1211
    %5998 = vmatpush1.msra.mxu0 %v1210
    %5999 = vmatprep.subr.mxu0 %v1219
    %6000 = vmatpush1.msra.mxu0 %v1218
    %6001 = vmatprep.subr.mxu0 %v1227
    %6002 = vmatpush1.msra.mxu0 %v1226
    %6003 = vmatprep.subr.mxu0 %v1235
    %6004 = vmatpush1.msra.mxu0 %v1234
    %6005 = vmatprep.subr.mxu0 %v1243
    %6006 = vmatpush1.msra.mxu0 %v1242
    %6007 = vmatprep.subr.mxu0 %v1251
    %6008 = vmatpush1.msra.mxu0 %v1250
    %6009 = vmatprep.subr.mxu0 %v1259
    %6010 = vmatpush1.msra.mxu0 %v1258
    %6011 = vmatprep.subr.mxu0 %v1267
    %6012 = vmatpush1.msra.mxu0 %v1266
    %6013 = vmatprep.subr.mxu0 %v1275
    %6014 = vmatpush1.msra.mxu0 %v1274
    %6015 = vmatprep.mubr.f32.mxu0 %v5737
    %6016 = vmatmul.mubr.f32.gmra.mrb[0].mxu0 %v5736
    %v6017 = vpop.f32.mrb[0].mxu0
    %v6018 = vadd.f32 %v5394, %v6017
    %v6019 = vpop.f32.mrb[0].mxu0
    %v6020 = vadd.f32 %v5396, %v6019
    %6021 = vdwg.mxu0
    %v6022 = vxor.u32 %v5805, 2147483648
    %v6023 = vxor.u32 %v5807, 2147483648
    %v6024 = vmul.f32 %v6022, 1.442695
    %v6025 = vpow.pop %v6024
    %v6026 = vmul.f32 %v6023, 1.442695
    %v6027 = vpow.pop %v6026
    %v6028 = vadd.f32 %v6025, 1.0
    %v6029 = vadd.f32 %v6027, 1.0
    %v6030 = vrcp.pop %v6028
    %v6031 = vmul.f32 1.0, %v6030
    %v6032 = vrcp.pop %v6029
    %v6033 = vmul.f32 1.0, %v6032
    %v6034 = vxor.u32 %v5876, 2147483648
    %v6035 = vxor.u32 %v5878, 2147483648
    %v6036 = vmul.f32 %v6034, 1.442695
    %v6037 = vpow.pop %v6036
    %v6038 = vmul.f32 %v6035, 1.442695
    %v6039 = vpow.pop %v6038
    %v6040 = vadd.f32 %v6037, 1.0
    %v6041 = vadd.f32 %v6039, 1.0
    %v6042 = vrcp.pop %v6040
    %v6043 = vmul.f32 1.0, %v6042
    %v6044 = vrcp.pop %v6041
    %v6045 = vmul.f32 1.0, %v6044
    %v6046 = vtanh.pop %v5947
    %v6047 = vtanh.pop %v5949
    %v6048 = vxor.u32 %v6018, 2147483648
    %v6049 = vxor.u32 %v6020, 2147483648
    %v6050 = vmul.f32 %v6048, 1.442695
    %v6051 = vpow.pop %v6050
    %v6052 = vmul.f32 %v6049, 1.442695
    %v6053 = vpow.pop %v6052
    %v6054 = vadd.f32 %v6051, 1.0
    %v6055 = vadd.f32 %v6053, 1.0
    %v6056 = vrcp.pop %v6054
    %v6057 = vmul.f32 1.0, %v6056
    %v6058 = vrcp.pop %v6055
    %v6059 = vmul.f32 1.0, %v6058
    %v6060 = vmul.f32 %v6043, %v5108
    %v6061 = vmul.f32 %v6045, %v5109
    %v6062 = vmul.f32 %v6031, %v6046
    %v6063 = vmul.f32 %v6033, %v6047
    %v6064 = vadd.f32 %v6060, %v6062
    %v6065 = vadd.f32 %v6061, %v6063
    %v6066 = vtanh.pop %v6064
    %v6067 = vtanh.pop %v6065
    %v6068 = vmul.f32 %v6057, %v6066
    %v6069 = vmul.f32 %v6059, %v6067
    %6070 = vmatprep.subr.mxu0 %v1277
    %6071 = vmatpush1.msra.mxu0 %v1276
    %6072 = vmatprep.subr.mxu0 %v1285
    %6073 = vmatpush1.msra.mxu0 %v1284
    %6074 = vmatprep.subr.mxu0 %v1293
    %6075 = vmatpush1.msra.mxu0 %v1292
    %6076 = vmatprep.subr.mxu0 %v1301
    %6077 = vmatpush1.msra.mxu0 %v1300
    %6078 = vmatprep.subr.mxu0 %v1309
    %6079 = vmatpush1.msra.mxu0 %v1308
    %6080 = vmatprep.subr.mxu0 %v1317
    %6081 = vmatpush1.msra.mxu0 %v1316
    %6082 = vmatprep.subr.mxu0 %v1325
    %6083 = vmatpush1.msra.mxu0 %v1324
    %6084 = vmatprep.subr.mxu0 %v1333
    %6085 = vmatpush1.msra.mxu0 %v1332
    %6086 = vmatprep.subr.mxu0 %v1341
    %6087 = vmatpush1.msra.mxu0 %v1340
    %6088 = vmatprep.subr.mxu0 %v1349
    %6089 = vmatpush1.msra.mxu0 %v1348
    %6090 = vmatprep.subr.mxu0 %v1357
    %6091 = vmatpush1.msra.mxu0 %v1356
    %6092 = vmatprep.subr.mxu0 %v1365
    %6093 = vmatpush1.msra.mxu0 %v1364
    %6094 = vmatprep.subr.mxu0 %v1373
    %6095 = vmatpush1.msra.mxu0 %v1372
    %6096 = vmatprep.subr.mxu0 %v1381
    %6097 = vmatpush1.msra.mxu0 %v1380
    %6098 = vmatprep.subr.mxu0 %v1389
    %6099 = vmatpush1.msra.mxu0 %v1388
    %6100 = vmatprep.subr.mxu0 %v1397
    %6101 = vmatpush1.msra.mxu0 %v1396
    %6102 = vmatprep.subr.mxu0 %v1405
    %6103 = vmatpush1.msra.mxu0 %v1404
    %6104 = vmatprep.subr.mxu0 %v1413
    %6105 = vmatpush1.msra.mxu0 %v1412
    %6106 = vmatprep.subr.mxu0 %v1421
    %6107 = vmatpush1.msra.mxu0 %v1420
    %6108 = vmatprep.subr.mxu0 %v1429
    %6109 = vmatpush1.msra.mxu0 %v1428
    %6110 = vmatprep.subr.mxu0 %v1437
    %6111 = vmatpush1.msra.mxu0 %v1436
    %6112 = vmatprep.subr.mxu0 %v1445
    %6113 = vmatpush1.msra.mxu0 %v1444
    %6114 = vmatprep.subr.mxu0 %v1453
    %6115 = vmatpush1.msra.mxu0 %v1452
    %6116 = vmatprep.subr.mxu0 %v1461
    %6117 = vmatpush1.msra.mxu0 %v1460
    %6118 = vmatprep.subr.mxu0 %v1469
    %6119 = vmatpush1.msra.mxu0 %v1468
    %6120 = vmatprep.subr.mxu0 %v1477
    %6121 = vmatpush1.msra.mxu0 %v1476
    %6122 = vmatprep.subr.mxu0 %v1485
    %6123 = vmatpush1.msra.mxu0 %v1484
    %6124 = vmatprep.subr.mxu0 %v1493
    %6125 = vmatpush1.msra.mxu0 %v1492
    %6126 = vmatprep.subr.mxu0 %v1501
    %6127 = vmatpush1.msra.mxu0 %v1500
    %6128 = vmatprep.subr.mxu0 %v1509
    %6129 = vmatpush1.msra.mxu0 %v1508
    %6130 = vmatprep.subr.mxu0 %v1517
    %6131 = vmatpush1.msra.mxu0 %v1516
    %6132 = vmatprep.subr.mxu0 %v1525
    %6133 = vmatpush1.msra.mxu0 %v1524
    %6134 = vmatprep.mubr.f32.mxu0 %v6069
    %6135 = vmatmul.mubr.f32.gmra.mrb[0].mxu0 %v6068
    %v6136 = vpop.f32.mrb[0].mxu0
    %v6137 = vadd.f32 %v1537, %v6136
    %v6138 = vpop.f32.mrb[0].mxu0
    %v6139 = vadd.f32 %v1541, %v6138
    %6140 = vdwg.mxu0
    %6141 = vmatprep.subr.mxu0 %v1279
    %6142 = vmatpush1.msra.mxu0 %v1278
    %6143 = vmatprep.subr.mxu0 %v1287
    %6144 = vmatpush1.msra.mxu0 %v1286
    %6145 = vmatprep.subr.mxu0 %v1295
    %6146 = vmatpush1.msra.mxu0 %v1294
    %6147 = vmatprep.subr.mxu0 %v1303
    %6148 = vmatpush1.msra.mxu0 %v1302
    %6149 = vmatprep.subr.mxu0 %v1311
    %6150 = vmatpush1.msra.mxu0 %v1310
    %6151 = vmatprep.subr.mxu0 %v1319
    %6152 = vmatpush1.msra.mxu0 %v1318
    %6153 = vmatprep.subr.mxu0 %v1327
    %6154 = vmatpush1.msra.mxu0 %v1326
    %6155 = vmatprep.subr.mxu0 %v1335
    %6156 = vmatpush1.msra.mxu0 %v1334
    %6157 = vmatprep.subr.mxu0 %v1343
    %6158 = vmatpush1.msra.mxu0 %v1342
    %6159 = vmatprep.subr.mxu0 %v1351
    %6160 = vmatpush1.msra.mxu0 %v1350
    %6161 = vmatprep.subr.mxu0 %v1359
    %6162 = vmatpush1.msra.mxu0 %v1358
    %6163 = vmatprep.subr.mxu0 %v1367
    %6164 = vmatpush1.msra.mxu0 %v1366
    %6165 = vmatprep.subr.mxu0 %v1375
    %6166 = vmatpush1.msra.mxu0 %v1374
    %6167 = vmatprep.subr.mxu0 %v1383
    %6168 = vmatpush1.msra.mxu0 %v1382
    %6169 = vmatprep.subr.mxu0 %v1391
    %6170 = vmatpush1.msra.mxu0 %v1390
    %6171 = vmatprep.subr.mxu0 %v1399
    %6172 = vmatpush1.msra.mxu0 %v1398
    %6173 = vmatprep.subr.mxu0 %v1407
    %6174 = vmatpush1.msra.mxu0 %v1406
    %6175 = vmatprep.subr.mxu0 %v1415
    %6176 = vmatpush1.msra.mxu0 %v1414
    %6177 = vmatprep.subr.mxu0 %v1423
    %6178 = vmatpush1.msra.mxu0 %v1422
    %6179 = vmatprep.subr.mxu0 %v1431
    %6180 = vmatpush1.msra.mxu0 %v1430
    %6181 = vmatprep.subr.mxu0 %v1439
    %6182 = vmatpush1.msra.mxu0 %v1438
    %6183 = vmatprep.subr.mxu0 %v1447
    %6184 = vmatpush1.msra.mxu0 %v1446
    %6185 = vmatprep.subr.mxu0 %v1455
    %6186 = vmatpush1.msra.mxu0 %v1454
    %6187 = vmatprep.subr.mxu0 %v1463
    %6188 = vmatpush1.msra.mxu0 %v1462
    %6189 = vmatprep.subr.mxu0 %v1471
    %6190 = vmatpush1.msra.mxu0 %v1470
    %6191 = vmatprep.subr.mxu0 %v1479
    %6192 = vmatpush1.msra.mxu0 %v1478
    %6193 = vmatprep.subr.mxu0 %v1487
    %6194 = vmatpush1.msra.mxu0 %v1486
    %6195 = vmatprep.subr.mxu0 %v1495
    %6196 = vmatpush1.msra.mxu0 %v1494
    %6197 = vmatprep.subr.mxu0 %v1503
    %6198 = vmatpush1.msra.mxu0 %v1502
    %6199 = vmatprep.subr.mxu0 %v1511
    %6200 = vmatpush1.msra.mxu0 %v1510
    %6201 = vmatprep.subr.mxu0 %v1519
    %6202 = vmatpush1.msra.mxu0 %v1518
    %6203 = vmatprep.subr.mxu0 %v1527
    %6204 = vmatpush1.msra.mxu0 %v1526
    %6205 = vmatprep.mubr.f32.mxu0 %v6069
    %6206 = vmatmul.mubr.f32.gmra.mrb[0].mxu0 %v6068
    %v6207 = vpop.f32.mrb[0].mxu0
    %v6208 = vadd.f32 %v1545, %v6207
    %v6209 = vpop.f32.mrb[0].mxu0
    %v6210 = vadd.f32 %v1549, %v6209
    %6211 = vdwg.mxu0
    %6212 = vmatprep.subr.mxu0 %v1281
    %6213 = vmatpush1.msra.mxu0 %v1280
    %6214 = vmatprep.subr.mxu0 %v1289
    %6215 = vmatpush1.msra.mxu0 %v1288
    %6216 = vmatprep.subr.mxu0 %v1297
    %6217 = vmatpush1.msra.mxu0 %v1296
    %6218 = vmatprep.subr.mxu0 %v1305
    %6219 = vmatpush1.msra.mxu0 %v1304
    %6220 = vmatprep.subr.mxu0 %v1313
    %6221 = vmatpush1.msra.mxu0 %v1312
    %6222 = vmatprep.subr.mxu0 %v1321
    %6223 = vmatpush1.msra.mxu0 %v1320
    %6224 = vmatprep.subr.mxu0 %v1329
    %6225 = vmatpush1.msra.mxu0 %v1328
    %6226 = vmatprep.subr.mxu0 %v1337
    %6227 = vmatpush1.msra.mxu0 %v1336
    %6228 = vmatprep.subr.mxu0 %v1345
    %6229 = vmatpush1.msra.mxu0 %v1344
    %6230 = vmatprep.subr.mxu0 %v1353
    %6231 = vmatpush1.msra.mxu0 %v1352
    %6232 = vmatprep.subr.mxu0 %v1361
    %6233 = vmatpush1.msra.mxu0 %v1360
    %6234 = vmatprep.subr.mxu0 %v1369
    %6235 = vmatpush1.msra.mxu0 %v1368
    %6236 = vmatprep.subr.mxu0 %v1377
    %6237 = vmatpush1.msra.mxu0 %v1376
    %6238 = vmatprep.subr.mxu0 %v1385
    %6239 = vmatpush1.msra.mxu0 %v1384
    %6240 = vmatprep.subr.mxu0 %v1393
    %6241 = vmatpush1.msra.mxu0 %v1392
    %6242 = vmatprep.subr.mxu0 %v1401
    %6243 = vmatpush1.msra.mxu0 %v1400
    %6244 = vmatprep.subr.mxu0 %v1409
    %6245 = vmatpush1.msra.mxu0 %v1408
    %6246 = vmatprep.subr.mxu0 %v1417
    %6247 = vmatpush1.msra.mxu0 %v1416
    %6248 = vmatprep.subr.mxu0 %v1425
    %6249 = vmatpush1.msra.mxu0 %v1424
    %6250 = vmatprep.subr.mxu0 %v1433
    %6251 = vmatpush1.msra.mxu0 %v1432
    %6252 = vmatprep.subr.mxu0 %v1441
    %6253 = vmatpush1.msra.mxu0 %v1440
    %6254 = vmatprep.subr.mxu0 %v1449
    %6255 = vmatpush1.msra.mxu0 %v1448
    %6256 = vmatprep.subr.mxu0 %v1457
    %6257 = vmatpush1.msra.mxu0 %v1456
    %6258 = vmatprep.subr.mxu0 %v1465
    %6259 = vmatpush1.msra.mxu0 %v1464
    %6260 = vmatprep.subr.mxu0 %v1473
    %6261 = vmatpush1.msra.mxu0 %v1472
    %6262 = vmatprep.subr.mxu0 %v1481
    %6263 = vmatpush1.msra.mxu0 %v1480
    %6264 = vmatprep.subr.mxu0 %v1489
    %6265 = vmatpush1.msra.mxu0 %v1488
    %6266 = vmatprep.subr.mxu0 %v1497
    %6267 = vmatpush1.msra.mxu0 %v1496
    %6268 = vmatprep.subr.mxu0 %v1505
    %6269 = vmatpush1.msra.mxu0 %v1504
    %6270 = vmatprep.subr.mxu0 %v1513
    %6271 = vmatpush1.msra.mxu0 %v1512
    %6272 = vmatprep.subr.mxu0 %v1521
    %6273 = vmatpush1.msra.mxu0 %v1520
    %6274 = vmatprep.subr.mxu0 %v1529
    %6275 = vmatpush1.msra.mxu0 %v1528
    %6276 = vmatprep.mubr.f32.mxu0 %v6069
    %6277 = vmatmul.mubr.f32.gmra.mrb[0].mxu0 %v6068
    %v6278 = vpop.f32.mrb[0].mxu0
    %v6279 = vadd.f32 %v1553, %v6278
    %v6280 = vpop.f32.mrb[0].mxu0
    %v6281 = vadd.f32 %v1557, %v6280
    %6282 = vdwg.mxu0
    %6283 = vmatprep.subr.mxu0 %v1283
    %6284 = vmatpush1.msra.mxu0 %v1282
    %6285 = vmatprep.subr.mxu0 %v1291
    %6286 = vmatpush1.msra.mxu0 %v1290
    %6287 = vmatprep.subr.mxu0 %v1299
    %6288 = vmatpush1.msra.mxu0 %v1298
    %6289 = vmatprep.subr.mxu0 %v1307
    %6290 = vmatpush1.msra.mxu0 %v1306
    %6291 = vmatprep.subr.mxu0 %v1315
    %6292 = vmatpush1.msra.mxu0 %v1314
    %6293 = vmatprep.subr.mxu0 %v1323
    %6294 = vmatpush1.msra.mxu0 %v1322
    %6295 = vmatprep.subr.mxu0 %v1331
    %6296 = vmatpush1.msra.mxu0 %v1330
    %6297 = vmatprep.subr.mxu0 %v1339
    %6298 = vmatpush1.msra.mxu0 %v1338
    %6299 = vmatprep.subr.mxu0 %v1347
    %6300 = vmatpush1.msra.mxu0 %v1346
    %6301 = vmatprep.subr.mxu0 %v1355
    %6302 = vmatpush1.msra.mxu0 %v1354
    %6303 = vmatprep.subr.mxu0 %v1363
    %6304 = vmatpush1.msra.mxu0 %v1362
    %6305 = vmatprep.subr.mxu0 %v1371
    %6306 = vmatpush1.msra.mxu0 %v1370
    %6307 = vmatprep.subr.mxu0 %v1379
    %6308 = vmatpush1.msra.mxu0 %v1378
    %6309 = vmatprep.subr.mxu0 %v1387
    %6310 = vmatpush1.msra.mxu0 %v1386
    %6311 = vmatprep.subr.mxu0 %v1395
    %6312 = vmatpush1.msra.mxu0 %v1394
    %6313 = vmatprep.subr.mxu0 %v1403
    %6314 = vmatpush1.msra.mxu0 %v1402
    %6315 = vmatprep.subr.mxu0 %v1411
    %6316 = vmatpush1.msra.mxu0 %v1410
    %6317 = vmatprep.subr.mxu0 %v1419
    %6318 = vmatpush1.msra.mxu0 %v1418
    %6319 = vmatprep.subr.mxu0 %v1427
    %6320 = vmatpush1.msra.mxu0 %v1426
    %6321 = vmatprep.subr.mxu0 %v1435
    %6322 = vmatpush1.msra.mxu0 %v1434
    %6323 = vmatprep.subr.mxu0 %v1443
    %6324 = vmatpush1.msra.mxu0 %v1442
    %6325 = vmatprep.subr.mxu0 %v1451
    %6326 = vmatpush1.msra.mxu0 %v1450
    %6327 = vmatprep.subr.mxu0 %v1459
    %6328 = vmatpush1.msra.mxu0 %v1458
    %6329 = vmatprep.subr.mxu0 %v1467
    %6330 = vmatpush1.msra.mxu0 %v1466
    %6331 = vmatprep.subr.mxu0 %v1475
    %6332 = vmatpush1.msra.mxu0 %v1474
    %6333 = vmatprep.subr.mxu0 %v1483
    %6334 = vmatpush1.msra.mxu0 %v1482
    %6335 = vmatprep.subr.mxu0 %v1491
    %6336 = vmatpush1.msra.mxu0 %v1490
    %6337 = vmatprep.subr.mxu0 %v1499
    %6338 = vmatpush1.msra.mxu0 %v1498
    %6339 = vmatprep.subr.mxu0 %v1507
    %6340 = vmatpush1.msra.mxu0 %v1506
    %6341 = vmatprep.subr.mxu0 %v1515
    %6342 = vmatpush1.msra.mxu0 %v1514
    %6343 = vmatprep.subr.mxu0 %v1523
    %6344 = vmatpush1.msra.mxu0 %v1522
    %6345 = vmatprep.subr.mxu0 %v1531
    %6346 = vmatpush1.msra.mxu0 %v1530
    %6347 = vmatprep.mubr.f32.mxu0 %v6069
    %6348 = vmatmul.mubr.f32.gmra.mrb[0].mxu0 %v6068
    %v6349 = vpop.f32.mrb[0].mxu0
    %v6350 = vadd.f32 %v1561, %v6349
    %v6351 = vpop.f32.mrb[0].mxu0
    %v6352 = vadd.f32 %v1565, %v6351
    %6353 = vdwg.mxu0
    %6354 = vmatprep.subr.mxu0 %v765
    %6355 = vmatpush1.msra.mxu0 %v764
    %6356 = vmatprep.subr.mxu0 %v773
    %6357 = vmatpush1.msra.mxu0 %v772
    %6358 = vmatprep.subr.mxu0 %v781
    %6359 = vmatpush1.msra.mxu0 %v780
    %6360 = vmatprep.subr.mxu0 %v789
    %6361 = vmatpush1.msra.mxu0 %v788
    %6362 = vmatprep.subr.mxu0 %v797
    %6363 = vmatpush1.msra.mxu0 %v796
    %6364 = vmatprep.subr.mxu0 %v805
    %6365 = vmatpush1.msra.mxu0 %v804
    %6366 = vmatprep.subr.mxu0 %v813
    %6367 = vmatpush1.msra.mxu0 %v812
    %6368 = vmatprep.subr.mxu0 %v821
    %6369 = vmatpush1.msra.mxu0 %v820
    %6370 = vmatprep.subr.mxu0 %v829
    %6371 = vmatpush1.msra.mxu0 %v828
    %6372 = vmatprep.subr.mxu0 %v837
    %6373 = vmatpush1.msra.mxu0 %v836
    %6374 = vmatprep.subr.mxu0 %v845
    %6375 = vmatpush1.msra.mxu0 %v844
    %6376 = vmatprep.subr.mxu0 %v853
    %6377 = vmatpush1.msra.mxu0 %v852
    %6378 = vmatprep.subr.mxu0 %v861
    %6379 = vmatpush1.msra.mxu0 %v860
    %6380 = vmatprep.subr.mxu0 %v869
    %6381 = vmatpush1.msra.mxu0 %v868
    %6382 = vmatprep.subr.mxu0 %v877
    %6383 = vmatpush1.msra.mxu0 %v876
    %6384 = vmatprep.subr.mxu0 %v885
    %6385 = vmatpush1.msra.mxu0 %v884
    %6386 = vmatprep.subr.mxu0 %v893
    %6387 = vmatpush1.msra.mxu0 %v892
    %6388 = vmatprep.subr.mxu0 %v901
    %6389 = vmatpush1.msra.mxu0 %v900
    %6390 = vmatprep.subr.mxu0 %v909
    %6391 = vmatpush1.msra.mxu0 %v908
    %6392 = vmatprep.subr.mxu0 %v917
    %6393 = vmatpush1.msra.mxu0 %v916
    %6394 = vmatprep.subr.mxu0 %v925
    %6395 = vmatpush1.msra.mxu0 %v924
    %6396 = vmatprep.subr.mxu0 %v933
    %6397 = vmatpush1.msra.mxu0 %v932
    %6398 = vmatprep.subr.mxu0 %v941
    %6399 = vmatpush1.msra.mxu0 %v940
    %6400 = vmatprep.subr.mxu0 %v949
    %6401 = vmatpush1.msra.mxu0 %v948
    %6402 = vmatprep.subr.mxu0 %v957
    %6403 = vmatpush1.msra.mxu0 %v956
    %6404 = vmatprep.subr.mxu0 %v965
    %6405 = vmatpush1.msra.mxu0 %v964
    %6406 = vmatprep.subr.mxu0 %v973
    %6407 = vmatpush1.msra.mxu0 %v972
    %6408 = vmatprep.subr.mxu0 %v981
    %6409 = vmatpush1.msra.mxu0 %v980
    %6410 = vmatprep.subr.mxu0 %v989
    %6411 = vmatpush1.msra.mxu0 %v988
    %6412 = vmatprep.subr.mxu0 %v997
    %6413 = vmatpush1.msra.mxu0 %v996
    %6414 = vmatprep.subr.mxu0 %v1005
    %6415 = vmatpush1.msra.mxu0 %v1004
    %6416 = vmatprep.subr.mxu0 %v1013
    %6417 = vmatpush1.msra.mxu0 %v1012
    %6418 = vmatprep.mubr.f32.mxu0 %v5737
    %6419 = vmatmul.mubr.f32.gmra.mrb[0].mxu0 %v5736
    %v6420 = vpop.f32.mrb[0].mxu0
    %v6421 = vadd.f32 0.0, %v6420
    %v6422 = vpop.f32.mrb[0].mxu0
    %v6423 = vadd.f32 0.0, %v6422
    %6424 = vdwg.mxu0
    %6425 = vmatprep.subr.mxu0 %v767
    %6426 = vmatpush1.msra.mxu0 %v766
    %6427 = vmatprep.subr.mxu0 %v775
    %6428 = vmatpush1.msra.mxu0 %v774
    %6429 = vmatprep.subr.mxu0 %v783
    %6430 = vmatpush1.msra.mxu0 %v782
    %6431 = vmatprep.subr.mxu0 %v791
    %6432 = vmatpush1.msra.mxu0 %v790
    %6433 = vmatprep.subr.mxu0 %v799
    %6434 = vmatpush1.msra.mxu0 %v798
    %6435 = vmatprep.subr.mxu0 %v807
    %6436 = vmatpush1.msra.mxu0 %v806
    %6437 = vmatprep.subr.mxu0 %v815
    %6438 = vmatpush1.msra.mxu0 %v814
    %6439 = vmatprep.subr.mxu0 %v823
    %6440 = vmatpush1.msra.mxu0 %v822
    %6441 = vmatprep.subr.mxu0 %v831
    %6442 = vmatpush1.msra.mxu0 %v830
    %6443 = vmatprep.subr.mxu0 %v839
    %6444 = vmatpush1.msra.mxu0 %v838
    %6445 = vmatprep.subr.mxu0 %v847
    %6446 = vmatpush1.msra.mxu0 %v846
    %6447 = vmatprep.subr.mxu0 %v855
    %6448 = vmatpush1.msra.mxu0 %v854
    %6449 = vmatprep.subr.mxu0 %v863
    %6450 = vmatpush1.msra.mxu0 %v862
    %6451 = vmatprep.subr.mxu0 %v871
    %6452 = vmatpush1.msra.mxu0 %v870
    %6453 = vmatprep.subr.mxu0 %v879
    %6454 = vmatpush1.msra.mxu0 %v878
    %6455 = vmatprep.subr.mxu0 %v887
    %6456 = vmatpush1.msra.mxu0 %v886
    %6457 = vmatprep.subr.mxu0 %v895
    %6458 = vmatpush1.msra.mxu0 %v894
    %6459 = vmatprep.subr.mxu0 %v903
    %6460 = vmatpush1.msra.mxu0 %v902
    %6461 = vmatprep.subr.mxu0 %v911
    %6462 = vmatpush1.msra.mxu0 %v910
    %6463 = vmatprep.subr.mxu0 %v919
    %6464 = vmatpush1.msra.mxu0 %v918
    %6465 = vmatprep.subr.mxu0 %v927
    %6466 = vmatpush1.msra.mxu0 %v926
    %6467 = vmatprep.subr.mxu0 %v935
    %6468 = vmatpush1.msra.mxu0 %v934
    %6469 = vmatprep.subr.mxu0 %v943
    %6470 = vmatpush1.msra.mxu0 %v942
    %6471 = vmatprep.subr.mxu0 %v951
    %6472 = vmatpush1.msra.mxu0 %v950
    %6473 = vmatprep.subr.mxu0 %v959
    %6474 = vmatpush1.msra.mxu0 %v958
    %6475 = vmatprep.subr.mxu0 %v967
    %6476 = vmatpush1.msra.mxu0 %v966
    %6477 = vmatprep.subr.mxu0 %v975
    %6478 = vmatpush1.msra.mxu0 %v974
    %6479 = vmatprep.subr.mxu0 %v983
    %6480 = vmatpush1.msra.mxu0 %v982
    %6481 = vmatprep.subr.mxu0 %v991
    %6482 = vmatpush1.msra.mxu0 %v990
    %6483 = vmatprep.subr.mxu0 %v999
    %6484 = vmatpush1.msra.mxu0 %v998
    %6485 = vmatprep.subr.mxu0 %v1007
    %6486 = vmatpush1.msra.mxu0 %v1006
    %6487 = vmatprep.subr.mxu0 %v1015
    %6488 = vmatpush1.msra.mxu0 %v1014
    %6489 = vmatprep.mubr.f32.mxu0 %v5737
    %6490 = vmatmul.mubr.f32.gmra.mrb[0].mxu0 %v5736
    %v6491 = vpop.f32.mrb[0].mxu0
    %v6492 = vadd.f32 0.0, %v6491
    %v6493 = vpop.f32.mrb[0].mxu0
    %v6494 = vadd.f32 0.0, %v6493
    %6495 = vdwg.mxu0
    %6496 = vmatprep.subr.mxu0 %v769
    %6497 = vmatpush1.msra.mxu0 %v768
    %6498 = vmatprep.subr.mxu0 %v777
    %6499 = vmatpush1.msra.mxu0 %v776
    %6500 = vmatprep.subr.mxu0 %v785
    %6501 = vmatpush1.msra.mxu0 %v784
    %6502 = vmatprep.subr.mxu0 %v793
    %6503 = vmatpush1.msra.mxu0 %v792
    %6504 = vmatprep.subr.mxu0 %v801
    %6505 = vmatpush1.msra.mxu0 %v800
    %6506 = vmatprep.subr.mxu0 %v809
    %6507 = vmatpush1.msra.mxu0 %v808
    %6508 = vmatprep.subr.mxu0 %v817
    %6509 = vmatpush1.msra.mxu0 %v816
    %6510 = vmatprep.subr.mxu0 %v825
    %6511 = vmatpush1.msra.mxu0 %v824
    %6512 = vmatprep.subr.mxu0 %v833
    %6513 = vmatpush1.msra.mxu0 %v832
    %6514 = vmatprep.subr.mxu0 %v841
    %6515 = vmatpush1.msra.mxu0 %v840
    %6516 = vmatprep.subr.mxu0 %v849
    %6517 = vmatpush1.msra.mxu0 %v848
    %6518 = vmatprep.subr.mxu0 %v857
    %6519 = vmatpush1.msra.mxu0 %v856
    %6520 = vmatprep.subr.mxu0 %v865
    %6521 = vmatpush1.msra.mxu0 %v864
    %6522 = vmatprep.subr.mxu0 %v873
    %6523 = vmatpush1.msra.mxu0 %v872
    %6524 = vmatprep.subr.mxu0 %v881
    %6525 = vmatpush1.msra.mxu0 %v880
    %6526 = vmatprep.subr.mxu0 %v889
    %6527 = vmatpush1.msra.mxu0 %v888
    %6528 = vmatprep.subr.mxu0 %v897
    %6529 = vmatpush1.msra.mxu0 %v896
    %6530 = vmatprep.subr.mxu0 %v905
    %6531 = vmatpush1.msra.mxu0 %v904
    %6532 = vmatprep.subr.mxu0 %v913
    %6533 = vmatpush1.msra.mxu0 %v912
    %6534 = vmatprep.subr.mxu0 %v921
    %6535 = vmatpush1.msra.mxu0 %v920
    %6536 = vmatprep.subr.mxu0 %v929
    %6537 = vmatpush1.msra.mxu0 %v928
    %6538 = vmatprep.subr.mxu0 %v937
    %6539 = vmatpush1.msra.mxu0 %v936
    %6540 = vmatprep.subr.mxu0 %v945
    %6541 = vmatpush1.msra.mxu0 %v944
    %6542 = vmatprep.subr.mxu0 %v953
    %6543 = vmatpush1.msra.mxu0 %v952
    %6544 = vmatprep.subr.mxu0 %v961
    %6545 = vmatpush1.msra.mxu0 %v960
    %6546 = vmatprep.subr.mxu0 %v969
    %6547 = vmatpush1.msra.mxu0 %v968
    %6548 = vmatprep.subr.mxu0 %v977
    %6549 = vmatpush1.msra.mxu0 %v976
    %6550 = vmatprep.subr.mxu0 %v985
    %6551 = vmatpush1.msra.mxu0 %v984
    %6552 = vmatprep.subr.mxu0 %v993
    %6553 = vmatpush1.msra.mxu0 %v992
    %6554 = vmatprep.subr.mxu0 %v1001
    %6555 = vmatpush1.msra.mxu0 %v1000
    %6556 = vmatprep.subr.mxu0 %v1009
    %6557 = vmatpush1.msra.mxu0 %v1008
    %6558 = vmatprep.subr.mxu0 %v1017
    %6559 = vmatpush1.msra.mxu0 %v1016
    %6560 = vmatprep.mubr.f32.mxu0 %v5737
    %6561 = vmatmul.mubr.f32.gmra.mrb[0].mxu0 %v5736
    %v6562 = vpop.f32.mrb[0].mxu0
    %v6563 = vadd.f32 0.0, %v6562
    %v6564 = vpop.f32.mrb[0].mxu0
    %v6565 = vadd.f32 0.0, %v6564
    %6566 = vdwg.mxu0
    %6567 = vmatprep.subr.mxu0 %v771
    %6568 = vmatpush1.msra.mxu0 %v770
    %6569 = vmatprep.subr.mxu0 %v779
    %6570 = vmatpush1.msra.mxu0 %v778
    %6571 = vmatprep.subr.mxu0 %v787
    %6572 = vmatpush1.msra.mxu0 %v786
    %6573 = vmatprep.subr.mxu0 %v795
    %6574 = vmatpush1.msra.mxu0 %v794
    %6575 = vmatprep.subr.mxu0 %v803
    %6576 = vmatpush1.msra.mxu0 %v802
    %6577 = vmatprep.subr.mxu0 %v811
    %6578 = vmatpush1.msra.mxu0 %v810
    %6579 = vmatprep.subr.mxu0 %v819
    %6580 = vmatpush1.msra.mxu0 %v818
    %6581 = vmatprep.subr.mxu0 %v827
    %6582 = vmatpush1.msra.mxu0 %v826
    %6583 = vmatprep.subr.mxu0 %v835
    %6584 = vmatpush1.msra.mxu0 %v834
    %6585 = vmatprep.subr.mxu0 %v843
    %6586 = vmatpush1.msra.mxu0 %v842
    %6587 = vmatprep.subr.mxu0 %v851
    %6588 = vmatpush1.msra.mxu0 %v850
    %6589 = vmatprep.subr.mxu0 %v859
    %6590 = vmatpush1.msra.mxu0 %v858
    %6591 = vmatprep.subr.mxu0 %v867
    %6592 = vmatpush1.msra.mxu0 %v866
    %6593 = vmatprep.subr.mxu0 %v875
    %6594 = vmatpush1.msra.mxu0 %v874
    %6595 = vmatprep.subr.mxu0 %v883
    %6596 = vmatpush1.msra.mxu0 %v882
    %6597 = vmatprep.subr.mxu0 %v891
    %6598 = vmatpush1.msra.mxu0 %v890
    %6599 = vmatprep.subr.mxu0 %v899
    %6600 = vmatpush1.msra.mxu0 %v898
    %6601 = vmatprep.subr.mxu0 %v907
    %6602 = vmatpush1.msra.mxu0 %v906
    %6603 = vmatprep.subr.mxu0 %v915
    %6604 = vmatpush1.msra.mxu0 %v914
    %6605 = vmatprep.subr.mxu0 %v923
    %6606 = vmatpush1.msra.mxu0 %v922
    %6607 = vmatprep.subr.mxu0 %v931
    %6608 = vmatpush1.msra.mxu0 %v930
    %6609 = vmatprep.subr.mxu0 %v939
    %6610 = vmatpush1.msra.mxu0 %v938
    %6611 = vmatprep.subr.mxu0 %v947
    %6612 = vmatpush1.msra.mxu0 %v946
    %6613 = vmatprep.subr.mxu0 %v955
    %6614 = vmatpush1.msra.mxu0 %v954
    %6615 = vmatprep.subr.mxu0 %v963
    %6616 = vmatpush1.msra.mxu0 %v962
    %6617 = vmatprep.subr.mxu0 %v971
    %6618 = vmatpush1.msra.mxu0 %v970
    %6619 = vmatprep.subr.mxu0 %v979
    %6620 = vmatpush1.msra.mxu0 %v978
    %6621 = vmatprep.subr.mxu0 %v987
    %6622 = vmatpush1.msra.mxu0 %v986
    %6623 = vmatprep.subr.mxu0 %v995
    %6624 = vmatpush1.msra.mxu0 %v994
    %6625 = vmatprep.subr.mxu0 %v1003
    %6626 = vmatpush1.msra.mxu0 %v1002
    %6627 = vmatprep.subr.mxu0 %v1011
    %6628 = vmatpush1.msra.mxu0 %v1010
    %6629 = vmatprep.subr.mxu0 %v1019
    %6630 = vmatpush1.msra.mxu0 %v1018
    %6631 = vmatprep.mubr.f32.mxu0 %v5737
    %6632 = vmatmul.mubr.f32.gmra.mrb[0].mxu0 %v5736
    %v6633 = vpop.f32.mrb[0].mxu0
    %v6634 = vadd.f32 0.0, %v6633
    %v6635 = vpop.f32.mrb[0].mxu0
    %v6636 = vadd.f32 0.0, %v6635
    %6637 = vdwg.mxu0
    %v6638 = vadd.f32 %v409, %v6421
    %v6639 = vadd.f32 %v411, %v6423
    %v6640 = vadd.f32 %v522, %v6492
    %v6641 = vadd.f32 %v524, %v6494
    %v6642 = vadd.f32 %v635, %v6563
    %v6643 = vadd.f32 %v637, %v6565
    %v6644 = vadd.f32 %v748, %v6634
    %v6645 = vadd.f32 %v750, %v6636
    %v6646 = vxor.u32 %v6638, 2147483648
    %v6647 = vxor.u32 %v6639, 2147483648
    %v6648 = vmul.f32 %v6646, 1.442695
    %v6649 = vpow.pop %v6648
    %v6650 = vmul.f32 %v6647, 1.442695
    %v6651 = vpow.pop %v6650
    %v6652 = vadd.f32 %v6649, 1.0
    %v6653 = vadd.f32 %v6651, 1.0
    %v6654 = vrcp.pop %v6652
    %v6655 = vmul.f32 1.0, %v6654
    %v6656 = vrcp.pop %v6653
    %v6657 = vmul.f32 1.0, %v6656
    %v6658 = vxor.u32 %v6640, 2147483648
    %v6659 = vxor.u32 %v6641, 2147483648
    %v6660 = vmul.f32 %v6658, 1.442695
    %v6661 = vpow.pop %v6660
    %v6662 = vmul.f32 %v6659, 1.442695
    %v6663 = vpow.pop %v6662
    %v6664 = vadd.f32 %v6661, 1.0
    %v6665 = vadd.f32 %v6663, 1.0
    %v6666 = vrcp.pop %v6664
    %v6667 = vmul.f32 1.0, %v6666
    %v6668 = vrcp.pop %v6665
    %v6669 = vmul.f32 1.0, %v6668
    %v6670 = vtanh.pop %v6642
    %v6671 = vtanh.pop %v6643
    %v6672 = vxor.u32 %v6644, 2147483648
    %v6673 = vxor.u32 %v6645, 2147483648
    %v6674 = vmul.f32 %v6672, 1.442695
    %v6675 = vpow.pop %v6674
    %v6676 = vmul.f32 %v6673, 1.442695
    %v6677 = vpow.pop %v6676
    %v6678 = vadd.f32 %v6675, 1.0
    %v6679 = vadd.f32 %v6677, 1.0
    %v6680 = vrcp.pop %v6678
    %v6681 = vmul.f32 1.0, %v6680
    %v6682 = vrcp.pop %v6679
    %v6683 = vmul.f32 1.0, %v6682
    %v6684 = vmul.f32 %v6667, %v5732
    %v6685 = vmul.f32 %v6669, %v5733
    %v6686 = vmul.f32 %v6655, %v6670
    %v6687 = vmul.f32 %v6657, %v6671
    %v6688 = vadd.f32 %v6684, %v6686
    %v6689 = vadd.f32 %v6685, %v6687
    %v6690 = vtanh.pop %v6688
    %v6691 = vtanh.pop %v6689
    %v6692 = vmul.f32 %v6681, %v6690
    %v6693 = vmul.f32 %v6683, %v6691
    %6694 = vmatprep.subr.mxu0 %v1021
    %6695 = vmatpush1.msra.mxu0 %v1020
    %6696 = vmatprep.subr.mxu0 %v1029
    %6697 = vmatpush1.msra.mxu0 %v1028
    %6698 = vmatprep.subr.mxu0 %v1037
    %6699 = vmatpush1.msra.mxu0 %v1036
    %6700 = vmatprep.subr.mxu0 %v1045
    %6701 = vmatpush1.msra.mxu0 %v1044
    %6702 = vmatprep.subr.mxu0 %v1053
    %6703 = vmatpush1.msra.mxu0 %v1052
    %6704 = vmatprep.subr.mxu0 %v1061
    %6705 = vmatpush1.msra.mxu0 %v1060
    %6706 = vmatprep.subr.mxu0 %v1069
    %6707 = vmatpush1.msra.mxu0 %v1068
    %6708 = vmatprep.subr.mxu0 %v1077
    %6709 = vmatpush1.msra.mxu0 %v1076
    %6710 = vmatprep.subr.mxu0 %v1085
    %6711 = vmatpush1.msra.mxu0 %v1084
    %6712 = vmatprep.subr.mxu0 %v1093
    %6713 = vmatpush1.msra.mxu0 %v1092
    %6714 = vmatprep.subr.mxu0 %v1101
    %6715 = vmatpush1.msra.mxu0 %v1100
    %6716 = vmatprep.subr.mxu0 %v1109
    %6717 = vmatpush1.msra.mxu0 %v1108
    %6718 = vmatprep.subr.mxu0 %v1117
    %6719 = vmatpush1.msra.mxu0 %v1116
    %6720 = vmatprep.subr.mxu0 %v1125
    %6721 = vmatpush1.msra.mxu0 %v1124
    %6722 = vmatprep.subr.mxu0 %v1133
    %6723 = vmatpush1.msra.mxu0 %v1132
    %6724 = vmatprep.subr.mxu0 %v1141
    %6725 = vmatpush1.msra.mxu0 %v1140
    %6726 = vmatprep.subr.mxu0 %v1149
    %6727 = vmatpush1.msra.mxu0 %v1148
    %6728 = vmatprep.subr.mxu0 %v1157
    %6729 = vmatpush1.msra.mxu0 %v1156
    %6730 = vmatprep.subr.mxu0 %v1165
    %6731 = vmatpush1.msra.mxu0 %v1164
    %6732 = vmatprep.subr.mxu0 %v1173
    %6733 = vmatpush1.msra.mxu0 %v1172
    %6734 = vmatprep.subr.mxu0 %v1181
    %6735 = vmatpush1.msra.mxu0 %v1180
    %6736 = vmatprep.subr.mxu0 %v1189
    %6737 = vmatpush1.msra.mxu0 %v1188
    %6738 = vmatprep.subr.mxu0 %v1197
    %6739 = vmatpush1.msra.mxu0 %v1196
    %6740 = vmatprep.subr.mxu0 %v1205
    %6741 = vmatpush1.msra.mxu0 %v1204
    %6742 = vmatprep.subr.mxu0 %v1213
    %6743 = vmatpush1.msra.mxu0 %v1212
    %6744 = vmatprep.subr.mxu0 %v1221
    %6745 = vmatpush1.msra.mxu0 %v1220
    %6746 = vmatprep.subr.mxu0 %v1229
    %6747 = vmatpush1.msra.mxu0 %v1228
    %6748 = vmatprep.subr.mxu0 %v1237
    %6749 = vmatpush1.msra.mxu0 %v1236
    %6750 = vmatprep.subr.mxu0 %v1245
    %6751 = vmatpush1.msra.mxu0 %v1244
    %6752 = vmatprep.subr.mxu0 %v1253
    %6753 = vmatpush1.msra.mxu0 %v1252
    %6754 = vmatprep.subr.mxu0 %v1261
    %6755 = vmatpush1.msra.mxu0 %v1260
    %6756 = vmatprep.subr.mxu0 %v1269
    %6757 = vmatpush1.msra.mxu0 %v1268
    %6758 = vmatprep.mubr.f32.mxu0 %v6693
    %6759 = vmatmul.mubr.f32.gmra.mrb[0].mxu0 %v6692
    %v6760 = vpop.f32.mrb[0].mxu0
    %v6761 = vadd.f32 %v6137, %v6760
    %v6762 = vpop.f32.mrb[0].mxu0
    %v6763 = vadd.f32 %v6139, %v6762
    %6764 = vdwg.mxu0
    %6765 = vmatprep.subr.mxu0 %v1023
    %6766 = vmatpush1.msra.mxu0 %v1022
    %6767 = vmatprep.subr.mxu0 %v1031
    %6768 = vmatpush1.msra.mxu0 %v1030
    %6769 = vmatprep.subr.mxu0 %v1039
    %6770 = vmatpush1.msra.mxu0 %v1038
    %6771 = vmatprep.subr.mxu0 %v1047
    %6772 = vmatpush1.msra.mxu0 %v1046
    %6773 = vmatprep.subr.mxu0 %v1055
    %6774 = vmatpush1.msra.mxu0 %v1054
    %6775 = vmatprep.subr.mxu0 %v1063
    %6776 = vmatpush1.msra.mxu0 %v1062
    %6777 = vmatprep.subr.mxu0 %v1071
    %6778 = vmatpush1.msra.mxu0 %v1070
    %6779 = vmatprep.subr.mxu0 %v1079
    %6780 = vmatpush1.msra.mxu0 %v1078
    %6781 = vmatprep.subr.mxu0 %v1087
    %6782 = vmatpush1.msra.mxu0 %v1086
    %6783 = vmatprep.subr.mxu0 %v1095
    %6784 = vmatpush1.msra.mxu0 %v1094
    %6785 = vmatprep.subr.mxu0 %v1103
    %6786 = vmatpush1.msra.mxu0 %v1102
    %6787 = vmatprep.subr.mxu0 %v1111
    %6788 = vmatpush1.msra.mxu0 %v1110
    %6789 = vmatprep.subr.mxu0 %v1119
    %6790 = vmatpush1.msra.mxu0 %v1118
    %6791 = vmatprep.subr.mxu0 %v1127
    %6792 = vmatpush1.msra.mxu0 %v1126
    %6793 = vmatprep.subr.mxu0 %v1135
    %6794 = vmatpush1.msra.mxu0 %v1134
    %6795 = vmatprep.subr.mxu0 %v1143
    %6796 = vmatpush1.msra.mxu0 %v1142
    %6797 = vmatprep.subr.mxu0 %v1151
    %6798 = vmatpush1.msra.mxu0 %v1150
    %6799 = vmatprep.subr.mxu0 %v1159
    %6800 = vmatpush1.msra.mxu0 %v1158
    %6801 = vmatprep.subr.mxu0 %v1167
    %6802 = vmatpush1.msra.mxu0 %v1166
    %6803 = vmatprep.subr.mxu0 %v1175
    %6804 = vmatpush1.msra.mxu0 %v1174
    %6805 = vmatprep.subr.mxu0 %v1183
    %6806 = vmatpush1.msra.mxu0 %v1182
    %6807 = vmatprep.subr.mxu0 %v1191
    %6808 = vmatpush1.msra.mxu0 %v1190
    %6809 = vmatprep.subr.mxu0 %v1199
    %6810 = vmatpush1.msra.mxu0 %v1198
    %6811 = vmatprep.subr.mxu0 %v1207
    %6812 = vmatpush1.msra.mxu0 %v1206
    %6813 = vmatprep.subr.mxu0 %v1215
    %6814 = vmatpush1.msra.mxu0 %v1214
    %6815 = vmatprep.subr.mxu0 %v1223
    %6816 = vmatpush1.msra.mxu0 %v1222
    %6817 = vmatprep.subr.mxu0 %v1231
    %6818 = vmatpush1.msra.mxu0 %v1230
    %6819 = vmatprep.subr.mxu0 %v1239
    %6820 = vmatpush1.msra.mxu0 %v1238
    %6821 = vmatprep.subr.mxu0 %v1247
    %6822 = vmatpush1.msra.mxu0 %v1246
    %6823 = vmatprep.subr.mxu0 %v1255
    %6824 = vmatpush1.msra.mxu0 %v1254
    %6825 = vmatprep.subr.mxu0 %v1263
    %6826 = vmatpush1.msra.mxu0 %v1262
    %6827 = vmatprep.subr.mxu0 %v1271
    %6828 = vmatpush1.msra.mxu0 %v1270
    %6829 = vmatprep.mubr.f32.mxu0 %v6693
    %6830 = vmatmul.mubr.f32.gmra.mrb[0].mxu0 %v6692
    %v6831 = vpop.f32.mrb[0].mxu0
    %v6832 = vadd.f32 %v6208, %v6831
    %v6833 = vpop.f32.mrb[0].mxu0
    %v6834 = vadd.f32 %v6210, %v6833
    %6835 = vdwg.mxu0
    %6836 = vmatprep.subr.mxu0 %v1025
    %6837 = vmatpush1.msra.mxu0 %v1024
    %6838 = vmatprep.subr.mxu0 %v1033
    %6839 = vmatpush1.msra.mxu0 %v1032
    %6840 = vmatprep.subr.mxu0 %v1041
    %6841 = vmatpush1.msra.mxu0 %v1040
    %6842 = vmatprep.subr.mxu0 %v1049
    %6843 = vmatpush1.msra.mxu0 %v1048
    %6844 = vmatprep.subr.mxu0 %v1057
    %6845 = vmatpush1.msra.mxu0 %v1056
    %6846 = vmatprep.subr.mxu0 %v1065
    %6847 = vmatpush1.msra.mxu0 %v1064
    %6848 = vmatprep.subr.mxu0 %v1073
    %6849 = vmatpush1.msra.mxu0 %v1072
    %6850 = vmatprep.subr.mxu0 %v1081
    %6851 = vmatpush1.msra.mxu0 %v1080
    %6852 = vmatprep.subr.mxu0 %v1089
    %6853 = vmatpush1.msra.mxu0 %v1088
    %6854 = vmatprep.subr.mxu0 %v1097
    %6855 = vmatpush1.msra.mxu0 %v1096
    %6856 = vmatprep.subr.mxu0 %v1105
    %6857 = vmatpush1.msra.mxu0 %v1104
    %6858 = vmatprep.subr.mxu0 %v1113
    %6859 = vmatpush1.msra.mxu0 %v1112
    %6860 = vmatprep.subr.mxu0 %v1121
    %6861 = vmatpush1.msra.mxu0 %v1120
    %6862 = vmatprep.subr.mxu0 %v1129
    %6863 = vmatpush1.msra.mxu0 %v1128
    %6864 = vmatprep.subr.mxu0 %v1137
    %6865 = vmatpush1.msra.mxu0 %v1136
    %6866 = vmatprep.subr.mxu0 %v1145
    %6867 = vmatpush1.msra.mxu0 %v1144
    %6868 = vmatprep.subr.mxu0 %v1153
    %6869 = vmatpush1.msra.mxu0 %v1152
    %6870 = vmatprep.subr.mxu0 %v1161
    %6871 = vmatpush1.msra.mxu0 %v1160
    %6872 = vmatprep.subr.mxu0 %v1169
    %6873 = vmatpush1.msra.mxu0 %v1168
    %6874 = vmatprep.subr.mxu0 %v1177
    %6875 = vmatpush1.msra.mxu0 %v1176
    %6876 = vmatprep.subr.mxu0 %v1185
    %6877 = vmatpush1.msra.mxu0 %v1184
    %6878 = vmatprep.subr.mxu0 %v1193
    %6879 = vmatpush1.msra.mxu0 %v1192
    %6880 = vmatprep.subr.mxu0 %v1201
    %6881 = vmatpush1.msra.mxu0 %v1200
    %6882 = vmatprep.subr.mxu0 %v1209
    %6883 = vmatpush1.msra.mxu0 %v1208
    %6884 = vmatprep.subr.mxu0 %v1217
    %6885 = vmatpush1.msra.mxu0 %v1216
    %6886 = vmatprep.subr.mxu0 %v1225
    %6887 = vmatpush1.msra.mxu0 %v1224
    %6888 = vmatprep.subr.mxu0 %v1233
    %6889 = vmatpush1.msra.mxu0 %v1232
    %6890 = vmatprep.subr.mxu0 %v1241
    %6891 = vmatpush1.msra.mxu0 %v1240
    %6892 = vmatprep.subr.mxu0 %v1249
    %6893 = vmatpush1.msra.mxu0 %v1248
    %6894 = vmatprep.subr.mxu0 %v1257
    %6895 = vmatpush1.msra.mxu0 %v1256
    %6896 = vmatprep.subr.mxu0 %v1265
    %6897 = vmatpush1.msra.mxu0 %v1264
    %6898 = vmatprep.subr.mxu0 %v1273
    %6899 = vmatpush1.msra.mxu0 %v1272
    %6900 = vmatprep.mubr.f32.mxu0 %v6693
    %6901 = vmatmul.mubr.f32.gmra.mrb[0].mxu0 %v6692
    %v6902 = vpop.f32.mrb[0].mxu0
    %v6903 = vadd.f32 %v6279, %v6902
    %v6904 = vpop.f32.mrb[0].mxu0
    %v6905 = vadd.f32 %v6281, %v6904
    %6906 = vdwg.mxu0
    %6907 = vmatprep.subr.mxu0 %v1027
    %6908 = vmatpush1.msra.mxu0 %v1026
    %6909 = vmatprep.subr.mxu0 %v1035
    %6910 = vmatpush1.msra.mxu0 %v1034
    %6911 = vmatprep.subr.mxu0 %v1043
    %6912 = vmatpush1.msra.mxu0 %v1042
    %6913 = vmatprep.subr.mxu0 %v1051
    %6914 = vmatpush1.msra.mxu0 %v1050
    %6915 = vmatprep.subr.mxu0 %v1059
    %6916 = vmatpush1.msra.mxu0 %v1058
    %6917 = vmatprep.subr.mxu0 %v1067
    %6918 = vmatpush1.msra.mxu0 %v1066
    %6919 = vmatprep.subr.mxu0 %v1075
    %6920 = vmatpush1.msra.mxu0 %v1074
    %6921 = vmatprep.subr.mxu0 %v1083
    %6922 = vmatpush1.msra.mxu0 %v1082
    %6923 = vmatprep.subr.mxu0 %v1091
    %6924 = vmatpush1.msra.mxu0 %v1090
    %6925 = vmatprep.subr.mxu0 %v1099
    %6926 = vmatpush1.msra.mxu0 %v1098
    %6927 = vmatprep.subr.mxu0 %v1107
    %6928 = vmatpush1.msra.mxu0 %v1106
    %6929 = vmatprep.subr.mxu0 %v1115
    %6930 = vmatpush1.msra.mxu0 %v1114
    %6931 = vmatprep.subr.mxu0 %v1123
    %6932 = vmatpush1.msra.mxu0 %v1122
    %6933 = vmatprep.subr.mxu0 %v1131
    %6934 = vmatpush1.msra.mxu0 %v1130
    %6935 = vmatprep.subr.mxu0 %v1139
    %6936 = vmatpush1.msra.mxu0 %v1138
    %6937 = vmatprep.subr.mxu0 %v1147
    %6938 = vmatpush1.msra.mxu0 %v1146
    %6939 = vmatprep.subr.mxu0 %v1155
    %6940 = vmatpush1.msra.mxu0 %v1154
    %6941 = vmatprep.subr.mxu0 %v1163
    %6942 = vmatpush1.msra.mxu0 %v1162
    %6943 = vmatprep.subr.mxu0 %v1171
    %6944 = vmatpush1.msra.mxu0 %v1170
    %6945 = vmatprep.subr.mxu0 %v1179
    %6946 = vmatpush1.msra.mxu0 %v1178
    %6947 = vmatprep.subr.mxu0 %v1187
    %6948 = vmatpush1.msra.mxu0 %v1186
    %6949 = vmatprep.subr.mxu0 %v1195
    %6950 = vmatpush1.msra.mxu0 %v1194
    %6951 = vmatprep.subr.mxu0 %v1203
    %6952 = vmatpush1.msra.mxu0 %v1202
    %6953 = vmatprep.subr.mxu0 %v1211
    %6954 = vmatpush1.msra.mxu0 %v1210
    %6955 = vmatprep.subr.mxu0 %v1219
    %6956 = vmatpush1.msra.mxu0 %v1218
    %6957 = vmatprep.subr.mxu0 %v1227
    %6958 = vmatpush1.msra.mxu0 %v1226
    %6959 = vmatprep.subr.mxu0 %v1235
    %6960 = vmatpush1.msra.mxu0 %v1234
    %6961 = vmatprep.subr.mxu0 %v1243
    %6962 = vmatpush1.msra.mxu0 %v1242
    %6963 = vmatprep.subr.mxu0 %v1251
    %6964 = vmatpush1.msra.mxu0 %v1250
    %6965 = vmatprep.subr.mxu0 %v1259
    %6966 = vmatpush1.msra.mxu0 %v1258
    %6967 = vmatprep.subr.mxu0 %v1267
    %6968 = vmatpush1.msra.mxu0 %v1266
    %6969 = vmatprep.subr.mxu0 %v1275
    %6970 = vmatpush1.msra.mxu0 %v1274
    %6971 = vmatprep.mubr.f32.mxu0 %v6693
    %6972 = vmatmul.mubr.f32.gmra.mrb[0].mxu0 %v6692
    %v6973 = vpop.f32.mrb[0].mxu0
    %v6974 = vadd.f32 %v6350, %v6973
    %v6975 = vpop.f32.mrb[0].mxu0
    %v6976 = vadd.f32 %v6352, %v6975
    %6977 = vdwg.mxu0
    %v6978 = vxor.u32 %v6761, 2147483648
    %v6979 = vxor.u32 %v6763, 2147483648
    %v6980 = vmul.f32 %v6978, 1.442695
    %v6981 = vpow.pop %v6980
    %v6982 = vmul.f32 %v6979, 1.442695
    %v6983 = vpow.pop %v6982
    %v6984 = vadd.f32 %v6981, 1.0
    %v6985 = vadd.f32 %v6983, 1.0
    %v6986 = vrcp.pop %v6984
    %v6987 = vmul.f32 1.0, %v6986
    %v6988 = vrcp.pop %v6985
    %v6989 = vmul.f32 1.0, %v6988
    %v6990 = vxor.u32 %v6832, 2147483648
    %v6991 = vxor.u32 %v6834, 2147483648
    %v6992 = vmul.f32 %v6990, 1.442695
    %v6993 = vpow.pop %v6992
    %v6994 = vmul.f32 %v6991, 1.442695
    %v6995 = vpow.pop %v6994
    %v6996 = vadd.f32 %v6993, 1.0
    %v6997 = vadd.f32 %v6995, 1.0
    %v6998 = vrcp.pop %v6996
    %v6999 = vmul.f32 1.0, %v6998
    %v7000 = vrcp.pop %v6997
    %v7001 = vmul.f32 1.0, %v7000
    %v7002 = vtanh.pop %v6903
    %v7003 = vtanh.pop %v6905
    %v7004 = vxor.u32 %v6974, 2147483648
    %v7005 = vxor.u32 %v6976, 2147483648
    %v7006 = vmul.f32 %v7004, 1.442695
    %v7007 = vpow.pop %v7006
    %v7008 = vmul.f32 %v7005, 1.442695
    %v7009 = vpow.pop %v7008
    %v7010 = vadd.f32 %v7007, 1.0
    %v7011 = vadd.f32 %v7009, 1.0
    %v7012 = vrcp.pop %v7010
    %v7013 = vmul.f32 1.0, %v7012
    %v7014 = vrcp.pop %v7011
    %v7015 = vmul.f32 1.0, %v7014
    %v7016 = vmul.f32 %v6999, %v6064
    %v7017 = vmul.f32 %v7001, %v6065
    %v7018 = vmul.f32 %v6987, %v7002
    %v7019 = vmul.f32 %v6989, %v7003
    %v7020 = vadd.f32 %v7016, %v7018
    %v7021 = vadd.f32 %v7017, %v7019
    %v7022 = vtanh.pop %v7020
    %v7023 = vtanh.pop %v7021
    %v7024 = vmul.f32 %v7013, %v7022
    %v7025 = vmul.f32 %v7015, %v7023
    %7026 = vmatprep.subr.mxu0 %v1277
    %7027 = vmatpush1.msra.mxu0 %v1276
    %7028 = vmatprep.subr.mxu0 %v1285
    %7029 = vmatpush1.msra.mxu0 %v1284
    %7030 = vmatprep.subr.mxu0 %v1293
    %7031 = vmatpush1.msra.mxu0 %v1292
    %7032 = vmatprep.subr.mxu0 %v1301
    %7033 = vmatpush1.msra.mxu0 %v1300
    %7034 = vmatprep.subr.mxu0 %v1309
    %7035 = vmatpush1.msra.mxu0 %v1308
    %7036 = vmatprep.subr.mxu0 %v1317
    %7037 = vmatpush1.msra.mxu0 %v1316
    %7038 = vmatprep.subr.mxu0 %v1325
    %7039 = vmatpush1.msra.mxu0 %v1324
    %7040 = vmatprep.subr.mxu0 %v1333
    %7041 = vmatpush1.msra.mxu0 %v1332
    %7042 = vmatprep.subr.mxu0 %v1341
    %7043 = vmatpush1.msra.mxu0 %v1340
    %7044 = vmatprep.subr.mxu0 %v1349
    %7045 = vmatpush1.msra.mxu0 %v1348
    %7046 = vmatprep.subr.mxu0 %v1357
    %7047 = vmatpush1.msra.mxu0 %v1356
    %7048 = vmatprep.subr.mxu0 %v1365
    %7049 = vmatpush1.msra.mxu0 %v1364
    %7050 = vmatprep.subr.mxu0 %v1373
    %7051 = vmatpush1.msra.mxu0 %v1372
    %7052 = vmatprep.subr.mxu0 %v1381
    %7053 = vmatpush1.msra.mxu0 %v1380
    %7054 = vmatprep.subr.mxu0 %v1389
    %7055 = vmatpush1.msra.mxu0 %v1388
    %7056 = vmatprep.subr.mxu0 %v1397
    %7057 = vmatpush1.msra.mxu0 %v1396
    %7058 = vmatprep.subr.mxu0 %v1405
    %7059 = vmatpush1.msra.mxu0 %v1404
    %7060 = vmatprep.subr.mxu0 %v1413
    %7061 = vmatpush1.msra.mxu0 %v1412
    %7062 = vmatprep.subr.mxu0 %v1421
    %7063 = vmatpush1.msra.mxu0 %v1420
    %7064 = vmatprep.subr.mxu0 %v1429
    %7065 = vmatpush1.msra.mxu0 %v1428
    %7066 = vmatprep.subr.mxu0 %v1437
    %7067 = vmatpush1.msra.mxu0 %v1436
    %7068 = vmatprep.subr.mxu0 %v1445
    %7069 = vmatpush1.msra.mxu0 %v1444
    %7070 = vmatprep.subr.mxu0 %v1453
    %7071 = vmatpush1.msra.mxu0 %v1452
    %7072 = vmatprep.subr.mxu0 %v1461
    %7073 = vmatpush1.msra.mxu0 %v1460
    %7074 = vmatprep.subr.mxu0 %v1469
    %7075 = vmatpush1.msra.mxu0 %v1468
    %7076 = vmatprep.subr.mxu0 %v1477
    %7077 = vmatpush1.msra.mxu0 %v1476
    %7078 = vmatprep.subr.mxu0 %v1485
    %7079 = vmatpush1.msra.mxu0 %v1484
    %7080 = vmatprep.subr.mxu0 %v1493
    %7081 = vmatpush1.msra.mxu0 %v1492
    %7082 = vmatprep.subr.mxu0 %v1501
    %7083 = vmatpush1.msra.mxu0 %v1500
    %7084 = vmatprep.subr.mxu0 %v1509
    %7085 = vmatpush1.msra.mxu0 %v1508
    %7086 = vmatprep.subr.mxu0 %v1517
    %7087 = vmatpush1.msra.mxu0 %v1516
    %7088 = vmatprep.subr.mxu0 %v1525
    %7089 = vmatpush1.msra.mxu0 %v1524
    %7090 = vmatprep.mubr.f32.mxu0 %v7025
    %7091 = vmatmul.mubr.f32.gmra.mrb[0].mxu0 %v7024
    %v7092 = vpop.f32.mrb[0].mxu0
    %v7093 = vadd.f32 %v1537, %v7092
    %v7094 = vpop.f32.mrb[0].mxu0
    %v7095 = vadd.f32 %v1541, %v7094
    %7096 = vdwg.mxu0
    %7097 = vmatprep.subr.mxu0 %v1279
    %7098 = vmatpush1.msra.mxu0 %v1278
    %7099 = vmatprep.subr.mxu0 %v1287
    %7100 = vmatpush1.msra.mxu0 %v1286
    %7101 = vmatprep.subr.mxu0 %v1295
    %7102 = vmatpush1.msra.mxu0 %v1294
    %7103 = vmatprep.subr.mxu0 %v1303
    %7104 = vmatpush1.msra.mxu0 %v1302
    %7105 = vmatprep.subr.mxu0 %v1311
    %7106 = vmatpush1.msra.mxu0 %v1310
    %7107 = vmatprep.subr.mxu0 %v1319
    %7108 = vmatpush1.msra.mxu0 %v1318
    %7109 = vmatprep.subr.mxu0 %v1327
    %7110 = vmatpush1.msra.mxu0 %v1326
    %7111 = vmatprep.subr.mxu0 %v1335
    %7112 = vmatpush1.msra.mxu0 %v1334
    %7113 = vmatprep.subr.mxu0 %v1343
    %7114 = vmatpush1.msra.mxu0 %v1342
    %7115 = vmatprep.subr.mxu0 %v1351
    %7116 = vmatpush1.msra.mxu0 %v1350
    %7117 = vmatprep.subr.mxu0 %v1359
    %7118 = vmatpush1.msra.mxu0 %v1358
    %7119 = vmatprep.subr.mxu0 %v1367
    %7120 = vmatpush1.msra.mxu0 %v1366
    %7121 = vmatprep.subr.mxu0 %v1375
    %7122 = vmatpush1.msra.mxu0 %v1374
    %7123 = vmatprep.subr.mxu0 %v1383
    %7124 = vmatpush1.msra.mxu0 %v1382
    %7125 = vmatprep.subr.mxu0 %v1391
    %7126 = vmatpush1.msra.mxu0 %v1390
    %7127 = vmatprep.subr.mxu0 %v1399
    %7128 = vmatpush1.msra.mxu0 %v1398
    %7129 = vmatprep.subr.mxu0 %v1407
    %7130 = vmatpush1.msra.mxu0 %v1406
    %7131 = vmatprep.subr.mxu0 %v1415
    %7132 = vmatpush1.msra.mxu0 %v1414
    %7133 = vmatprep.subr.mxu0 %v1423
    %7134 = vmatpush1.msra.mxu0 %v1422
    %7135 = vmatprep.subr.mxu0 %v1431
    %7136 = vmatpush1.msra.mxu0 %v1430
    %7137 = vmatprep.subr.mxu0 %v1439
    %7138 = vmatpush1.msra.mxu0 %v1438
    %7139 = vmatprep.subr.mxu0 %v1447
    %7140 = vmatpush1.msra.mxu0 %v1446
    %7141 = vmatprep.subr.mxu0 %v1455
    %7142 = vmatpush1.msra.mxu0 %v1454
    %7143 = vmatprep.subr.mxu0 %v1463
    %7144 = vmatpush1.msra.mxu0 %v1462
    %7145 = vmatprep.subr.mxu0 %v1471
    %7146 = vmatpush1.msra.mxu0 %v1470
    %7147 = vmatprep.subr.mxu0 %v1479
    %7148 = vmatpush1.msra.mxu0 %v1478
    %7149 = vmatprep.subr.mxu0 %v1487
    %7150 = vmatpush1.msra.mxu0 %v1486
    %7151 = vmatprep.subr.mxu0 %v1495
    %7152 = vmatpush1.msra.mxu0 %v1494
    %7153 = vmatprep.subr.mxu0 %v1503
    %7154 = vmatpush1.msra.mxu0 %v1502
    %7155 = vmatprep.subr.mxu0 %v1511
    %7156 = vmatpush1.msra.mxu0 %v1510
    %7157 = vmatprep.subr.mxu0 %v1519
    %7158 = vmatpush1.msra.mxu0 %v1518
    %7159 = vmatprep.subr.mxu0 %v1527
    %7160 = vmatpush1.msra.mxu0 %v1526
    %7161 = vmatprep.mubr.f32.mxu0 %v7025
    %7162 = vmatmul.mubr.f32.gmra.mrb[0].mxu0 %v7024
    %v7163 = vpop.f32.mrb[0].mxu0
    %v7164 = vadd.f32 %v1545, %v7163
    %v7165 = vpop.f32.mrb[0].mxu0
    %v7166 = vadd.f32 %v1549, %v7165
    %7167 = vdwg.mxu0
    %7168 = vmatprep.subr.mxu0 %v1281
    %7169 = vmatpush1.msra.mxu0 %v1280
    %7170 = vmatprep.subr.mxu0 %v1289
    %7171 = vmatpush1.msra.mxu0 %v1288
    %7172 = vmatprep.subr.mxu0 %v1297
    %7173 = vmatpush1.msra.mxu0 %v1296
    %7174 = vmatprep.subr.mxu0 %v1305
    %7175 = vmatpush1.msra.mxu0 %v1304
    %7176 = vmatprep.subr.mxu0 %v1313
    %7177 = vmatpush1.msra.mxu0 %v1312
    %7178 = vmatprep.subr.mxu0 %v1321
    %7179 = vmatpush1.msra.mxu0 %v1320
    %7180 = vmatprep.subr.mxu0 %v1329
    %7181 = vmatpush1.msra.mxu0 %v1328
    %7182 = vmatprep.subr.mxu0 %v1337
    %7183 = vmatpush1.msra.mxu0 %v1336
    %7184 = vmatprep.subr.mxu0 %v1345
    %7185 = vmatpush1.msra.mxu0 %v1344
    %7186 = vmatprep.subr.mxu0 %v1353
    %7187 = vmatpush1.msra.mxu0 %v1352
    %7188 = vmatprep.subr.mxu0 %v1361
    %7189 = vmatpush1.msra.mxu0 %v1360
    %7190 = vmatprep.subr.mxu0 %v1369
    %7191 = vmatpush1.msra.mxu0 %v1368
    %7192 = vmatprep.subr.mxu0 %v1377
    %7193 = vmatpush1.msra.mxu0 %v1376
    %7194 = vmatprep.subr.mxu0 %v1385
    %7195 = vmatpush1.msra.mxu0 %v1384
    %7196 = vmatprep.subr.mxu0 %v1393
    %7197 = vmatpush1.msra.mxu0 %v1392
    %7198 = vmatprep.subr.mxu0 %v1401
    %7199 = vmatpush1.msra.mxu0 %v1400
    %7200 = vmatprep.subr.mxu0 %v1409
    %7201 = vmatpush1.msra.mxu0 %v1408
    %7202 = vmatprep.subr.mxu0 %v1417
    %7203 = vmatpush1.msra.mxu0 %v1416
    %7204 = vmatprep.subr.mxu0 %v1425
    %7205 = vmatpush1.msra.mxu0 %v1424
    %7206 = vmatprep.subr.mxu0 %v1433
    %7207 = vmatpush1.msra.mxu0 %v1432
    %7208 = vmatprep.subr.mxu0 %v1441
    %7209 = vmatpush1.msra.mxu0 %v1440
    %7210 = vmatprep.subr.mxu0 %v1449
    %7211 = vmatpush1.msra.mxu0 %v1448
    %7212 = vmatprep.subr.mxu0 %v1457
    %7213 = vmatpush1.msra.mxu0 %v1456
    %7214 = vmatprep.subr.mxu0 %v1465
    %7215 = vmatpush1.msra.mxu0 %v1464
    %7216 = vmatprep.subr.mxu0 %v1473
    %7217 = vmatpush1.msra.mxu0 %v1472
    %7218 = vmatprep.subr.mxu0 %v1481
    %7219 = vmatpush1.msra.mxu0 %v1480
    %7220 = vmatprep.subr.mxu0 %v1489
    %7221 = vmatpush1.msra.mxu0 %v1488
    %7222 = vmatprep.subr.mxu0 %v1497
    %7223 = vmatpush1.msra.mxu0 %v1496
    %7224 = vmatprep.subr.mxu0 %v1505
    %7225 = vmatpush1.msra.mxu0 %v1504
    %7226 = vmatprep.subr.mxu0 %v1513
    %7227 = vmatpush1.msra.mxu0 %v1512
    %7228 = vmatprep.subr.mxu0 %v1521
    %7229 = vmatpush1.msra.mxu0 %v1520
    %7230 = vmatprep.subr.mxu0 %v1529
    %7231 = vmatpush1.msra.mxu0 %v1528
    %7232 = vmatprep.mubr.f32.mxu0 %v7025
    %7233 = vmatmul.mubr.f32.gmra.mrb[0].mxu0 %v7024
    %v7234 = vpop.f32.mrb[0].mxu0
    %v7235 = vadd.f32 %v1553, %v7234
    %v7236 = vpop.f32.mrb[0].mxu0
    %v7237 = vadd.f32 %v1557, %v7236
    %7238 = vdwg.mxu0
    %7239 = vmatprep.subr.mxu0 %v1283
    %7240 = vmatpush1.msra.mxu0 %v1282
    %7241 = vmatprep.subr.mxu0 %v1291
    %7242 = vmatpush1.msra.mxu0 %v1290
    %7243 = vmatprep.subr.mxu0 %v1299
    %7244 = vmatpush1.msra.mxu0 %v1298
    %7245 = vmatprep.subr.mxu0 %v1307
    %7246 = vmatpush1.msra.mxu0 %v1306
    %7247 = vmatprep.subr.mxu0 %v1315
    %7248 = vmatpush1.msra.mxu0 %v1314
    %7249 = vmatprep.subr.mxu0 %v1323
    %7250 = vmatpush1.msra.mxu0 %v1322
    %7251 = vmatprep.subr.mxu0 %v1331
    %7252 = vmatpush1.msra.mxu0 %v1330
    %7253 = vmatprep.subr.mxu0 %v1339
    %7254 = vmatpush1.msra.mxu0 %v1338
    %7255 = vmatprep.subr.mxu0 %v1347
    %7256 = vmatpush1.msra.mxu0 %v1346
    %7257 = vmatprep.subr.mxu0 %v1355
    %7258 = vmatpush1.msra.mxu0 %v1354
    %7259 = vmatprep.subr.mxu0 %v1363
    %7260 = vmatpush1.msra.mxu0 %v1362
    %7261 = vmatprep.subr.mxu0 %v1371
    %7262 = vmatpush1.msra.mxu0 %v1370
    %7263 = vmatprep.subr.mxu0 %v1379
    %7264 = vmatpush1.msra.mxu0 %v1378
    %7265 = vmatprep.subr.mxu0 %v1387
    %7266 = vmatpush1.msra.mxu0 %v1386
    %7267 = vmatprep.subr.mxu0 %v1395
    %7268 = vmatpush1.msra.mxu0 %v1394
    %7269 = vmatprep.subr.mxu0 %v1403
    %7270 = vmatpush1.msra.mxu0 %v1402
    %7271 = vmatprep.subr.mxu0 %v1411
    %7272 = vmatpush1.msra.mxu0 %v1410
    %7273 = vmatprep.subr.mxu0 %v1419
    %7274 = vmatpush1.msra.mxu0 %v1418
    %7275 = vmatprep.subr.mxu0 %v1427
    %7276 = vmatpush1.msra.mxu0 %v1426
    %7277 = vmatprep.subr.mxu0 %v1435
    %7278 = vmatpush1.msra.mxu0 %v1434
    %7279 = vmatprep.subr.mxu0 %v1443
    %7280 = vmatpush1.msra.mxu0 %v1442
    %7281 = vmatprep.subr.mxu0 %v1451
    %7282 = vmatpush1.msra.mxu0 %v1450
    %7283 = vmatprep.subr.mxu0 %v1459
    %7284 = vmatpush1.msra.mxu0 %v1458
    %7285 = vmatprep.subr.mxu0 %v1467
    %7286 = vmatpush1.msra.mxu0 %v1466
    %7287 = vmatprep.subr.mxu0 %v1475
    %7288 = vmatpush1.msra.mxu0 %v1474
    %7289 = vmatprep.subr.mxu0 %v1483
    %7290 = vmatpush1.msra.mxu0 %v1482
    %7291 = vmatprep.subr.mxu0 %v1491
    %7292 = vmatpush1.msra.mxu0 %v1490
    %7293 = vmatprep.subr.mxu0 %v1499
    %7294 = vmatpush1.msra.mxu0 %v1498
    %7295 = vmatprep.subr.mxu0 %v1507
    %7296 = vmatpush1.msra.mxu0 %v1506
    %7297 = vmatprep.subr.mxu0 %v1515
    %7298 = vmatpush1.msra.mxu0 %v1514
    %7299 = vmatprep.subr.mxu0 %v1523
    %7300 = vmatpush1.msra.mxu0 %v1522
    %7301 = vmatprep.subr.mxu0 %v1531
    %7302 = vmatpush1.msra.mxu0 %v1530
    %7303 = vmatprep.mubr.f32.mxu0 %v7025
    %7304 = vmatmul.mubr.f32.gmra.mrb[0].mxu0 %v7024
    %v7305 = vpop.f32.mrb[0].mxu0
    %v7306 = vadd.f32 %v1561, %v7305
    %v7307 = vpop.f32.mrb[0].mxu0
    %v7308 = vadd.f32 %v1565, %v7307
    %7309 = vdwg.mxu0
    %7310 = vmatprep.subr.mxu0 %v765
    %7311 = vmatpush1.msra.mxu0 %v764
    %7312 = vmatprep.subr.mxu0 %v773
    %7313 = vmatpush1.msra.mxu0 %v772
    %7314 = vmatprep.subr.mxu0 %v781
    %7315 = vmatpush1.msra.mxu0 %v780
    %7316 = vmatprep.subr.mxu0 %v789
    %7317 = vmatpush1.msra.mxu0 %v788
    %7318 = vmatprep.subr.mxu0 %v797
    %7319 = vmatpush1.msra.mxu0 %v796
    %7320 = vmatprep.subr.mxu0 %v805
    %7321 = vmatpush1.msra.mxu0 %v804
    %7322 = vmatprep.subr.mxu0 %v813
    %7323 = vmatpush1.msra.mxu0 %v812
    %7324 = vmatprep.subr.mxu0 %v821
    %7325 = vmatpush1.msra.mxu0 %v820
    %7326 = vmatprep.subr.mxu0 %v829
    %7327 = vmatpush1.msra.mxu0 %v828
    %7328 = vmatprep.subr.mxu0 %v837
    %7329 = vmatpush1.msra.mxu0 %v836
    %7330 = vmatprep.subr.mxu0 %v845
    %7331 = vmatpush1.msra.mxu0 %v844
    %7332 = vmatprep.subr.mxu0 %v853
    %7333 = vmatpush1.msra.mxu0 %v852
    %7334 = vmatprep.subr.mxu0 %v861
    %7335 = vmatpush1.msra.mxu0 %v860
    %7336 = vmatprep.subr.mxu0 %v869
    %7337 = vmatpush1.msra.mxu0 %v868
    %7338 = vmatprep.subr.mxu0 %v877
    %7339 = vmatpush1.msra.mxu0 %v876
    %7340 = vmatprep.subr.mxu0 %v885
    %7341 = vmatpush1.msra.mxu0 %v884
    %7342 = vmatprep.subr.mxu0 %v893
    %7343 = vmatpush1.msra.mxu0 %v892
    %7344 = vmatprep.subr.mxu0 %v901
    %7345 = vmatpush1.msra.mxu0 %v900
    %7346 = vmatprep.subr.mxu0 %v909
    %7347 = vmatpush1.msra.mxu0 %v908
    %7348 = vmatprep.subr.mxu0 %v917
    %7349 = vmatpush1.msra.mxu0 %v916
    %7350 = vmatprep.subr.mxu0 %v925
    %7351 = vmatpush1.msra.mxu0 %v924
    %7352 = vmatprep.subr.mxu0 %v933
    %7353 = vmatpush1.msra.mxu0 %v932
    %7354 = vmatprep.subr.mxu0 %v941
    %7355 = vmatpush1.msra.mxu0 %v940
    %7356 = vmatprep.subr.mxu0 %v949
    %7357 = vmatpush1.msra.mxu0 %v948
    %7358 = vmatprep.subr.mxu0 %v957
    %7359 = vmatpush1.msra.mxu0 %v956
    %7360 = vmatprep.subr.mxu0 %v965
    %7361 = vmatpush1.msra.mxu0 %v964
    %7362 = vmatprep.subr.mxu0 %v973
    %7363 = vmatpush1.msra.mxu0 %v972
    %7364 = vmatprep.subr.mxu0 %v981
    %7365 = vmatpush1.msra.mxu0 %v980
    %7366 = vmatprep.subr.mxu0 %v989
    %7367 = vmatpush1.msra.mxu0 %v988
    %7368 = vmatprep.subr.mxu0 %v997
    %7369 = vmatpush1.msra.mxu0 %v996
    %7370 = vmatprep.subr.mxu0 %v1005
    %7371 = vmatpush1.msra.mxu0 %v1004
    %7372 = vmatprep.subr.mxu0 %v1013
    %7373 = vmatpush1.msra.mxu0 %v1012
    %7374 = vmatprep.mubr.f32.mxu0 %v6693
    %7375 = vmatmul.mubr.f32.gmra.mrb[0].mxu0 %v6692
    %v7376 = vpop.f32.mrb[0].mxu0
    %v7377 = vadd.f32 0.0, %v7376
    %v7378 = vpop.f32.mrb[0].mxu0
    %v7379 = vadd.f32 0.0, %v7378
    %7380 = vdwg.mxu0
    %7381 = vmatprep.subr.mxu0 %v767
    %7382 = vmatpush1.msra.mxu0 %v766
    %7383 = vmatprep.subr.mxu0 %v775
    %7384 = vmatpush1.msra.mxu0 %v774
    %7385 = vmatprep.subr.mxu0 %v783
    %7386 = vmatpush1.msra.mxu0 %v782
    %7387 = vmatprep.subr.mxu0 %v791
    %7388 = vmatpush1.msra.mxu0 %v790
    %7389 = vmatprep.subr.mxu0 %v799
    %7390 = vmatpush1.msra.mxu0 %v798
    %7391 = vmatprep.subr.mxu0 %v807
    %7392 = vmatpush1.msra.mxu0 %v806
    %7393 = vmatprep.subr.mxu0 %v815
    %7394 = vmatpush1.msra.mxu0 %v814
    %7395 = vmatprep.subr.mxu0 %v823
    %7396 = vmatpush1.msra.mxu0 %v822
    %7397 = vmatprep.subr.mxu0 %v831
    %7398 = vmatpush1.msra.mxu0 %v830
    %7399 = vmatprep.subr.mxu0 %v839
    %7400 = vmatpush1.msra.mxu0 %v838
    %7401 = vmatprep.subr.mxu0 %v847
    %7402 = vmatpush1.msra.mxu0 %v846
    %7403 = vmatprep.subr.mxu0 %v855
    %7404 = vmatpush1.msra.mxu0 %v854
    %7405 = vmatprep.subr.mxu0 %v863
    %7406 = vmatpush1.msra.mxu0 %v862
    %7407 = vmatprep.subr.mxu0 %v871
    %7408 = vmatpush1.msra.mxu0 %v870
    %7409 = vmatprep.subr.mxu0 %v879
    %7410 = vmatpush1.msra.mxu0 %v878
    %7411 = vmatprep.subr.mxu0 %v887
    %7412 = vmatpush1.msra.mxu0 %v886
    %7413 = vmatprep.subr.mxu0 %v895
    %7414 = vmatpush1.msra.mxu0 %v894
    %7415 = vmatprep.subr.mxu0 %v903
    %7416 = vmatpush1.msra.mxu0 %v902
    %7417 = vmatprep.subr.mxu0 %v911
    %7418 = vmatpush1.msra.mxu0 %v910
    %7419 = vmatprep.subr.mxu0 %v919
    %7420 = vmatpush1.msra.mxu0 %v918
    %7421 = vmatprep.subr.mxu0 %v927
    %7422 = vmatpush1.msra.mxu0 %v926
    %7423 = vmatprep.subr.mxu0 %v935
    %7424 = vmatpush1.msra.mxu0 %v934
    %7425 = vmatprep.subr.mxu0 %v943
    %7426 = vmatpush1.msra.mxu0 %v942
    %7427 = vmatprep.subr.mxu0 %v951
    %7428 = vmatpush1.msra.mxu0 %v950
    %7429 = vmatprep.subr.mxu0 %v959
    %7430 = vmatpush1.msra.mxu0 %v958
    %7431 = vmatprep.subr.mxu0 %v967
    %7432 = vmatpush1.msra.mxu0 %v966
    %7433 = vmatprep.subr.mxu0 %v975
    %7434 = vmatpush1.msra.mxu0 %v974
    %7435 = vmatprep.subr.mxu0 %v983
    %7436 = vmatpush1.msra.mxu0 %v982
    %7437 = vmatprep.subr.mxu0 %v991
    %7438 = vmatpush1.msra.mxu0 %v990
    %7439 = vmatprep.subr.mxu0 %v999
    %7440 = vmatpush1.msra.mxu0 %v998
    %7441 = vmatprep.subr.mxu0 %v1007
    %7442 = vmatpush1.msra.mxu0 %v1006
    %7443 = vmatprep.subr.mxu0 %v1015
    %7444 = vmatpush1.msra.mxu0 %v1014
    %7445 = vmatprep.mubr.f32.mxu0 %v6693
    %7446 = vmatmul.mubr.f32.gmra.mrb[0].mxu0 %v6692
    %v7447 = vpop.f32.mrb[0].mxu0
    %v7448 = vadd.f32 0.0, %v7447
    %v7449 = vpop.f32.mrb[0].mxu0
    %v7450 = vadd.f32 0.0, %v7449
    %7451 = vdwg.mxu0
    %7452 = vmatprep.subr.mxu0 %v769
    %7453 = vmatpush1.msra.mxu0 %v768
    %7454 = vmatprep.subr.mxu0 %v777
    %7455 = vmatpush1.msra.mxu0 %v776
    %7456 = vmatprep.subr.mxu0 %v785
    %7457 = vmatpush1.msra.mxu0 %v784
    %7458 = vmatprep.subr.mxu0 %v793
    %7459 = vmatpush1.msra.mxu0 %v792
    %7460 = vmatprep.subr.mxu0 %v801
    %7461 = vmatpush1.msra.mxu0 %v800
    %7462 = vmatprep.subr.mxu0 %v809
    %7463 = vmatpush1.msra.mxu0 %v808
    %7464 = vmatprep.subr.mxu0 %v817
    %7465 = vmatpush1.msra.mxu0 %v816
    %7466 = vmatprep.subr.mxu0 %v825
    %7467 = vmatpush1.msra.mxu0 %v824
    %7468 = vmatprep.subr.mxu0 %v833
    %7469 = vmatpush1.msra.mxu0 %v832
    %7470 = vmatprep.subr.mxu0 %v841
    %7471 = vmatpush1.msra.mxu0 %v840
    %7472 = vmatprep.subr.mxu0 %v849
    %7473 = vmatpush1.msra.mxu0 %v848
    %7474 = vmatprep.subr.mxu0 %v857
    %7475 = vmatpush1.msra.mxu0 %v856
    %7476 = vmatprep.subr.mxu0 %v865
    %7477 = vmatpush1.msra.mxu0 %v864
    %7478 = vmatprep.subr.mxu0 %v873
    %7479 = vmatpush1.msra.mxu0 %v872
    %7480 = vmatprep.subr.mxu0 %v881
    %7481 = vmatpush1.msra.mxu0 %v880
    %7482 = vmatprep.subr.mxu0 %v889
    %7483 = vmatpush1.msra.mxu0 %v888
    %7484 = vmatprep.subr.mxu0 %v897
    %7485 = vmatpush1.msra.mxu0 %v896
    %7486 = vmatprep.subr.mxu0 %v905
    %7487 = vmatpush1.msra.mxu0 %v904
    %7488 = vmatprep.subr.mxu0 %v913
    %7489 = vmatpush1.msra.mxu0 %v912
    %7490 = vmatprep.subr.mxu0 %v921
    %7491 = vmatpush1.msra.mxu0 %v920
    %7492 = vmatprep.subr.mxu0 %v929
    %7493 = vmatpush1.msra.mxu0 %v928
    %7494 = vmatprep.subr.mxu0 %v937
    %7495 = vmatpush1.msra.mxu0 %v936
    %7496 = vmatprep.subr.mxu0 %v945
    %7497 = vmatpush1.msra.mxu0 %v944
    %7498 = vmatprep.subr.mxu0 %v953
    %7499 = vmatpush1.msra.mxu0 %v952
    %7500 = vmatprep.subr.mxu0 %v961
    %7501 = vmatpush1.msra.mxu0 %v960
    %7502 = vmatprep.subr.mxu0 %v969
    %7503 = vmatpush1.msra.mxu0 %v968
    %7504 = vmatprep.subr.mxu0 %v977
    %7505 = vmatpush1.msra.mxu0 %v976
    %7506 = vmatprep.subr.mxu0 %v985
    %7507 = vmatpush1.msra.mxu0 %v984
    %7508 = vmatprep.subr.mxu0 %v993
    %7509 = vmatpush1.msra.mxu0 %v992
    %7510 = vmatprep.subr.mxu0 %v1001
    %7511 = vmatpush1.msra.mxu0 %v1000
    %7512 = vmatprep.subr.mxu0 %v1009
    %7513 = vmatpush1.msra.mxu0 %v1008
    %7514 = vmatprep.subr.mxu0 %v1017
    %7515 = vmatpush1.msra.mxu0 %v1016
    %7516 = vmatprep.mubr.f32.mxu0 %v6693
    %7517 = vmatmul.mubr.f32.gmra.mrb[0].mxu0 %v6692
    %v7518 = vpop.f32.mrb[0].mxu0
    %v7519 = vadd.f32 0.0, %v7518
    %v7520 = vpop.f32.mrb[0].mxu0
    %v7521 = vadd.f32 0.0, %v7520
    %7522 = vdwg.mxu0
    %7523 = vmatprep.subr.mxu0 %v771
    %7524 = vmatpush1.msra.mxu0 %v770
    %7525 = vmatprep.subr.mxu0 %v779
    %7526 = vmatpush1.msra.mxu0 %v778
    %7527 = vmatprep.subr.mxu0 %v787
    %7528 = vmatpush1.msra.mxu0 %v786
    %7529 = vmatprep.subr.mxu0 %v795
    %7530 = vmatpush1.msra.mxu0 %v794
    %7531 = vmatprep.subr.mxu0 %v803
    %7532 = vmatpush1.msra.mxu0 %v802
    %7533 = vmatprep.subr.mxu0 %v811
    %7534 = vmatpush1.msra.mxu0 %v810
    %7535 = vmatprep.subr.mxu0 %v819
    %7536 = vmatpush1.msra.mxu0 %v818
    %7537 = vmatprep.subr.mxu0 %v827
    %7538 = vmatpush1.msra.mxu0 %v826
    %7539 = vmatprep.subr.mxu0 %v835
    %7540 = vmatpush1.msra.mxu0 %v834
    %7541 = vmatprep.subr.mxu0 %v843
    %7542 = vmatpush1.msra.mxu0 %v842
    %7543 = vmatprep.subr.mxu0 %v851
    %7544 = vmatpush1.msra.mxu0 %v850
    %7545 = vmatprep.subr.mxu0 %v859
    %7546 = vmatpush1.msra.mxu0 %v858
    %7547 = vmatprep.subr.mxu0 %v867
    %7548 = vmatpush1.msra.mxu0 %v866
    %7549 = vmatprep.subr.mxu0 %v875
    %7550 = vmatpush1.msra.mxu0 %v874
    %7551 = vmatprep.subr.mxu0 %v883
    %7552 = vmatpush1.msra.mxu0 %v882
    %7553 = vmatprep.subr.mxu0 %v891
    %7554 = vmatpush1.msra.mxu0 %v890
    %7555 = vmatprep.subr.mxu0 %v899
    %7556 = vmatpush1.msra.mxu0 %v898
    %7557 = vmatprep.subr.mxu0 %v907
    %7558 = vmatpush1.msra.mxu0 %v906
    %7559 = vmatprep.subr.mxu0 %v915
    %7560 = vmatpush1.msra.mxu0 %v914
    %7561 = vmatprep.subr.mxu0 %v923
    %7562 = vmatpush1.msra.mxu0 %v922
    %7563 = vmatprep.subr.mxu0 %v931
    %7564 = vmatpush1.msra.mxu0 %v930
    %7565 = vmatprep.subr.mxu0 %v939
    %7566 = vmatpush1.msra.mxu0 %v938
    %7567 = vmatprep.subr.mxu0 %v947
    %7568 = vmatpush1.msra.mxu0 %v946
    %7569 = vmatprep.subr.mxu0 %v955
    %7570 = vmatpush1.msra.mxu0 %v954
    %7571 = vmatprep.subr.mxu0 %v963
    %7572 = vmatpush1.msra.mxu0 %v962
    %7573 = vmatprep.subr.mxu0 %v971
    %7574 = vmatpush1.msra.mxu0 %v970
    %7575 = vmatprep.subr.mxu0 %v979
    %7576 = vmatpush1.msra.mxu0 %v978
    %7577 = vmatprep.subr.mxu0 %v987
    %7578 = vmatpush1.msra.mxu0 %v986
    %7579 = vmatprep.subr.mxu0 %v995
    %7580 = vmatpush1.msra.mxu0 %v994
    %7581 = vmatprep.subr.mxu0 %v1003
    %7582 = vmatpush1.msra.mxu0 %v1002
    %7583 = vmatprep.subr.mxu0 %v1011
    %7584 = vmatpush1.msra.mxu0 %v1010
    %7585 = vmatprep.subr.mxu0 %v1019
    %7586 = vmatpush1.msra.mxu0 %v1018
    %7587 = vmatprep.mubr.f32.mxu0 %v6693
    %7588 = vmatmul.mubr.f32.gmra.mrb[0].mxu0 %v6692
    %v7589 = vpop.f32.mrb[0].mxu0
    %v7590 = vadd.f32 0.0, %v7589
    %v7591 = vpop.f32.mrb[0].mxu0
    %v7592 = vadd.f32 0.0, %v7591
    %7593 = vdwg.mxu0
    %v7594 = vadd.f32 %v415, %v7377
    %v7595 = vadd.f32 %v417, %v7379
    %v7596 = vadd.f32 %v528, %v7448
    %v7597 = vadd.f32 %v530, %v7450
    %v7598 = vadd.f32 %v641, %v7519
    %v7599 = vadd.f32 %v643, %v7521
    %v7600 = vadd.f32 %v754, %v7590
    %v7601 = vadd.f32 %v756, %v7592
    %v7602 = vxor.u32 %v7594, 2147483648
    %v7603 = vxor.u32 %v7595, 2147483648
    %v7604 = vmul.f32 %v7602, 1.442695
    %v7605 = vpow.pop %v7604
    %v7606 = vmul.f32 %v7603, 1.442695
    %v7607 = vpow.pop %v7606
    %v7608 = vadd.f32 %v7605, 1.0
    %v7609 = vadd.f32 %v7607, 1.0
    %v7610 = vrcp.pop %v7608
    %v7611 = vmul.f32 1.0, %v7610
    %v7612 = vrcp.pop %v7609
    %v7613 = vmul.f32 1.0, %v7612
    %v7614 = vxor.u32 %v7596, 2147483648
    %v7615 = vxor.u32 %v7597, 2147483648
    %v7616 = vmul.f32 %v7614, 1.442695
    %v7617 = vpow.pop %v7616
    %v7618 = vmul.f32 %v7615, 1.442695
    %v7619 = vpow.pop %v7618
    %v7620 = vadd.f32 %v7617, 1.0
    %v7621 = vadd.f32 %v7619, 1.0
    %v7622 = vrcp.pop %v7620
    %v7623 = vmul.f32 1.0, %v7622
    %v7624 = vrcp.pop %v7621
    %v7625 = vmul.f32 1.0, %v7624
    %v7626 = vtanh.pop %v7598
    %v7627 = vtanh.pop %v7599
    %v7628 = vxor.u32 %v7600, 2147483648
    %v7629 = vxor.u32 %v7601, 2147483648
    %v7630 = vmul.f32 %v7628, 1.442695
    %v7631 = vpow.pop %v7630
    %v7632 = vmul.f32 %v7629, 1.442695
    %v7633 = vpow.pop %v7632
    %v7634 = vadd.f32 %v7631, 1.0
    %v7635 = vadd.f32 %v7633, 1.0
    %v7636 = vrcp.pop %v7634
    %v7637 = vmul.f32 1.0, %v7636
    %v7638 = vrcp.pop %v7635
    %v7639 = vmul.f32 1.0, %v7638
    %v7640 = vmul.f32 %v7623, %v6688
    %v7641 = vmul.f32 %v7625, %v6689
    %v7642 = vmul.f32 %v7611, %v7626
    %v7643 = vmul.f32 %v7613, %v7627
    %v7644 = vadd.f32 %v7640, %v7642
    %v7645 = vadd.f32 %v7641, %v7643
    %v7646 = vtanh.pop %v7644
    %v7647 = vtanh.pop %v7645
    %v7648 = vmul.f32 %v7637, %v7646
    %v7649 = vmul.f32 %v7639, %v7647
    %7650 = vmatprep.subr.mxu0 %v1021
    %7651 = vmatpush1.msra.mxu0 %v1020
    %7652 = vmatprep.subr.mxu0 %v1029
    %7653 = vmatpush1.msra.mxu0 %v1028
    %7654 = vmatprep.subr.mxu0 %v1037
    %7655 = vmatpush1.msra.mxu0 %v1036
    %7656 = vmatprep.subr.mxu0 %v1045
    %7657 = vmatpush1.msra.mxu0 %v1044
    %7658 = vmatprep.subr.mxu0 %v1053
    %7659 = vmatpush1.msra.mxu0 %v1052
    %7660 = vmatprep.subr.mxu0 %v1061
    %7661 = vmatpush1.msra.mxu0 %v1060
    %7662 = vmatprep.subr.mxu0 %v1069
    %7663 = vmatpush1.msra.mxu0 %v1068
    %7664 = vmatprep.subr.mxu0 %v1077
    %7665 = vmatpush1.msra.mxu0 %v1076
    %7666 = vmatprep.subr.mxu0 %v1085
    %7667 = vmatpush1.msra.mxu0 %v1084
    %7668 = vmatprep.subr.mxu0 %v1093
    %7669 = vmatpush1.msra.mxu0 %v1092
    %7670 = vmatprep.subr.mxu0 %v1101
    %7671 = vmatpush1.msra.mxu0 %v1100
    %7672 = vmatprep.subr.mxu0 %v1109
    %7673 = vmatpush1.msra.mxu0 %v1108
    %7674 = vmatprep.subr.mxu0 %v1117
    %7675 = vmatpush1.msra.mxu0 %v1116
    %7676 = vmatprep.subr.mxu0 %v1125
    %7677 = vmatpush1.msra.mxu0 %v1124
    %7678 = vmatprep.subr.mxu0 %v1133
    %7679 = vmatpush1.msra.mxu0 %v1132
    %7680 = vmatprep.subr.mxu0 %v1141
    %7681 = vmatpush1.msra.mxu0 %v1140
    %7682 = vmatprep.subr.mxu0 %v1149
    %7683 = vmatpush1.msra.mxu0 %v1148
    %7684 = vmatprep.subr.mxu0 %v1157
    %7685 = vmatpush1.msra.mxu0 %v1156
    %7686 = vmatprep.subr.mxu0 %v1165
    %7687 = vmatpush1.msra.mxu0 %v1164
    %7688 = vmatprep.subr.mxu0 %v1173
    %7689 = vmatpush1.msra.mxu0 %v1172
    %7690 = vmatprep.subr.mxu0 %v1181
    %7691 = vmatpush1.msra.mxu0 %v1180
    %7692 = vmatprep.subr.mxu0 %v1189
    %7693 = vmatpush1.msra.mxu0 %v1188
    %7694 = vmatprep.subr.mxu0 %v1197
    %7695 = vmatpush1.msra.mxu0 %v1196
    %7696 = vmatprep.subr.mxu0 %v1205
    %7697 = vmatpush1.msra.mxu0 %v1204
    %7698 = vmatprep.subr.mxu0 %v1213
    %7699 = vmatpush1.msra.mxu0 %v1212
    %7700 = vmatprep.subr.mxu0 %v1221
    %7701 = vmatpush1.msra.mxu0 %v1220
    %7702 = vmatprep.subr.mxu0 %v1229
    %7703 = vmatpush1.msra.mxu0 %v1228
    %7704 = vmatprep.subr.mxu0 %v1237
    %7705 = vmatpush1.msra.mxu0 %v1236
    %7706 = vmatprep.subr.mxu0 %v1245
    %7707 = vmatpush1.msra.mxu0 %v1244
    %7708 = vmatprep.subr.mxu0 %v1253
    %7709 = vmatpush1.msra.mxu0 %v1252
    %7710 = vmatprep.subr.mxu0 %v1261
    %7711 = vmatpush1.msra.mxu0 %v1260
    %7712 = vmatprep.subr.mxu0 %v1269
    %7713 = vmatpush1.msra.mxu0 %v1268
    %7714 = vmatprep.mubr.f32.mxu0 %v7649
    %7715 = vmatmul.mubr.f32.gmra.mrb[0].mxu0 %v7648
    %v7716 = vpop.f32.mrb[0].mxu0
    %v7717 = vadd.f32 %v7093, %v7716
    %v7718 = vpop.f32.mrb[0].mxu0
    %v7719 = vadd.f32 %v7095, %v7718
    %7720 = vdwg.mxu0
    %7721 = vmatprep.subr.mxu0 %v1023
    %7722 = vmatpush1.msra.mxu0 %v1022
    %7723 = vmatprep.subr.mxu0 %v1031
    %7724 = vmatpush1.msra.mxu0 %v1030
    %7725 = vmatprep.subr.mxu0 %v1039
    %7726 = vmatpush1.msra.mxu0 %v1038
    %7727 = vmatprep.subr.mxu0 %v1047
    %7728 = vmatpush1.msra.mxu0 %v1046
    %7729 = vmatprep.subr.mxu0 %v1055
    %7730 = vmatpush1.msra.mxu0 %v1054
    %7731 = vmatprep.subr.mxu0 %v1063
    %7732 = vmatpush1.msra.mxu0 %v1062
    %7733 = vmatprep.subr.mxu0 %v1071
    %7734 = vmatpush1.msra.mxu0 %v1070
    %7735 = vmatprep.subr.mxu0 %v1079
    %7736 = vmatpush1.msra.mxu0 %v1078
    %7737 = vmatprep.subr.mxu0 %v1087
    %7738 = vmatpush1.msra.mxu0 %v1086
    %7739 = vmatprep.subr.mxu0 %v1095
    %7740 = vmatpush1.msra.mxu0 %v1094
    %7741 = vmatprep.subr.mxu0 %v1103
    %7742 = vmatpush1.msra.mxu0 %v1102
    %7743 = vmatprep.subr.mxu0 %v1111
    %7744 = vmatpush1.msra.mxu0 %v1110
    %7745 = vmatprep.subr.mxu0 %v1119
    %7746 = vmatpush1.msra.mxu0 %v1118
    %7747 = vmatprep.subr.mxu0 %v1127
    %7748 = vmatpush1.msra.mxu0 %v1126
    %7749 = vmatprep.subr.mxu0 %v1135
    %7750 = vmatpush1.msra.mxu0 %v1134
    %7751 = vmatprep.subr.mxu0 %v1143
    %7752 = vmatpush1.msra.mxu0 %v1142
    %7753 = vmatprep.subr.mxu0 %v1151
    %7754 = vmatpush1.msra.mxu0 %v1150
    %7755 = vmatprep.subr.mxu0 %v1159
    %7756 = vmatpush1.msra.mxu0 %v1158
    %7757 = vmatprep.subr.mxu0 %v1167
    %7758 = vmatpush1.msra.mxu0 %v1166
    %7759 = vmatprep.subr.mxu0 %v1175
    %7760 = vmatpush1.msra.mxu0 %v1174
    %7761 = vmatprep.subr.mxu0 %v1183
    %7762 = vmatpush1.msra.mxu0 %v1182
    %7763 = vmatprep.subr.mxu0 %v1191
    %7764 = vmatpush1.msra.mxu0 %v1190
    %7765 = vmatprep.subr.mxu0 %v1199
    %7766 = vmatpush1.msra.mxu0 %v1198
    %7767 = vmatprep.subr.mxu0 %v1207
    %7768 = vmatpush1.msra.mxu0 %v1206
    %7769 = vmatprep.subr.mxu0 %v1215
    %7770 = vmatpush1.msra.mxu0 %v1214
    %7771 = vmatprep.subr.mxu0 %v1223
    %7772 = vmatpush1.msra.mxu0 %v1222
    %7773 = vmatprep.subr.mxu0 %v1231
    %7774 = vmatpush1.msra.mxu0 %v1230
    %7775 = vmatprep.subr.mxu0 %v1239
    %7776 = vmatpush1.msra.mxu0 %v1238
    %7777 = vmatprep.subr.mxu0 %v1247
    %7778 = vmatpush1.msra.mxu0 %v1246
    %7779 = vmatprep.subr.mxu0 %v1255
    %7780 = vmatpush1.msra.mxu0 %v1254
    %7781 = vmatprep.subr.mxu0 %v1263
    %7782 = vmatpush1.msra.mxu0 %v1262
    %7783 = vmatprep.subr.mxu0 %v1271
    %7784 = vmatpush1.msra.mxu0 %v1270
    %7785 = vmatprep.mubr.f32.mxu0 %v7649
    %7786 = vmatmul.mubr.f32.gmra.mrb[0].mxu0 %v7648
    %v7787 = vpop.f32.mrb[0].mxu0
    %v7788 = vadd.f32 %v7164, %v7787
    %v7789 = vpop.f32.mrb[0].mxu0
    %v7790 = vadd.f32 %v7166, %v7789
    %7791 = vdwg.mxu0
    %7792 = vmatprep.subr.mxu0 %v1025
    %7793 = vmatpush1.msra.mxu0 %v1024
    %7794 = vmatprep.subr.mxu0 %v1033
    %7795 = vmatpush1.msra.mxu0 %v1032
    %7796 = vmatprep.subr.mxu0 %v1041
    %7797 = vmatpush1.msra.mxu0 %v1040
    %7798 = vmatprep.subr.mxu0 %v1049
    %7799 = vmatpush1.msra.mxu0 %v1048
    %7800 = vmatprep.subr.mxu0 %v1057
    %7801 = vmatpush1.msra.mxu0 %v1056
    %7802 = vmatprep.subr.mxu0 %v1065
    %7803 = vmatpush1.msra.mxu0 %v1064
    %7804 = vmatprep.subr.mxu0 %v1073
    %7805 = vmatpush1.msra.mxu0 %v1072
    %7806 = vmatprep.subr.mxu0 %v1081
    %7807 = vmatpush1.msra.mxu0 %v1080
    %7808 = vmatprep.subr.mxu0 %v1089
    %7809 = vmatpush1.msra.mxu0 %v1088
    %7810 = vmatprep.subr.mxu0 %v1097
    %7811 = vmatpush1.msra.mxu0 %v1096
    %7812 = vmatprep.subr.mxu0 %v1105
    %7813 = vmatpush1.msra.mxu0 %v1104
    %7814 = vmatprep.subr.mxu0 %v1113
    %7815 = vmatpush1.msra.mxu0 %v1112
    %7816 = vmatprep.subr.mxu0 %v1121
    %7817 = vmatpush1.msra.mxu0 %v1120
    %7818 = vmatprep.subr.mxu0 %v1129
    %7819 = vmatpush1.msra.mxu0 %v1128
    %7820 = vmatprep.subr.mxu0 %v1137
    %7821 = vmatpush1.msra.mxu0 %v1136
    %7822 = vmatprep.subr.mxu0 %v1145
    %7823 = vmatpush1.msra.mxu0 %v1144
    %7824 = vmatprep.subr.mxu0 %v1153
    %7825 = vmatpush1.msra.mxu0 %v1152
    %7826 = vmatprep.subr.mxu0 %v1161
    %7827 = vmatpush1.msra.mxu0 %v1160
    %7828 = vmatprep.subr.mxu0 %v1169
    %7829 = vmatpush1.msra.mxu0 %v1168
    %7830 = vmatprep.subr.mxu0 %v1177
    %7831 = vmatpush1.msra.mxu0 %v1176
    %7832 = vmatprep.subr.mxu0 %v1185
    %7833 = vmatpush1.msra.mxu0 %v1184
    %7834 = vmatprep.subr.mxu0 %v1193
    %7835 = vmatpush1.msra.mxu0 %v1192
    %7836 = vmatprep.subr.mxu0 %v1201
    %7837 = vmatpush1.msra.mxu0 %v1200
    %7838 = vmatprep.subr.mxu0 %v1209
    %7839 = vmatpush1.msra.mxu0 %v1208
    %7840 = vmatprep.subr.mxu0 %v1217
    %7841 = vmatpush1.msra.mxu0 %v1216
    %7842 = vmatprep.subr.mxu0 %v1225
    %7843 = vmatpush1.msra.mxu0 %v1224
    %7844 = vmatprep.subr.mxu0 %v1233
    %7845 = vmatpush1.msra.mxu0 %v1232
    %7846 = vmatprep.subr.mxu0 %v1241
    %7847 = vmatpush1.msra.mxu0 %v1240
    %7848 = vmatprep.subr.mxu0 %v1249
    %7849 = vmatpush1.msra.mxu0 %v1248
    %7850 = vmatprep.subr.mxu0 %v1257
    %7851 = vmatpush1.msra.mxu0 %v1256
    %7852 = vmatprep.subr.mxu0 %v1265
    %7853 = vmatpush1.msra.mxu0 %v1264
    %7854 = vmatprep.subr.mxu0 %v1273
    %7855 = vmatpush1.msra.mxu0 %v1272
    %7856 = vmatprep.mubr.f32.mxu0 %v7649
    %7857 = vmatmul.mubr.f32.gmra.mrb[0].mxu0 %v7648
    %v7858 = vpop.f32.mrb[0].mxu0
    %v7859 = vadd.f32 %v7235, %v7858
    %v7860 = vpop.f32.mrb[0].mxu0
    %v7861 = vadd.f32 %v7237, %v7860
    %7862 = vdwg.mxu0
    %7863 = vmatprep.subr.mxu0 %v1027
    %7864 = vmatpush1.msra.mxu0 %v1026
    %7865 = vmatprep.subr.mxu0 %v1035
    %7866 = vmatpush1.msra.mxu0 %v1034
    %7867 = vmatprep.subr.mxu0 %v1043
    %7868 = vmatpush1.msra.mxu0 %v1042
    %7869 = vmatprep.subr.mxu0 %v1051
    %7870 = vmatpush1.msra.mxu0 %v1050
    %7871 = vmatprep.subr.mxu0 %v1059
    %7872 = vmatpush1.msra.mxu0 %v1058
    %7873 = vmatprep.subr.mxu0 %v1067
    %7874 = vmatpush1.msra.mxu0 %v1066
    %7875 = vmatprep.subr.mxu0 %v1075
    %7876 = vmatpush1.msra.mxu0 %v1074
    %7877 = vmatprep.subr.mxu0 %v1083
    %7878 = vmatpush1.msra.mxu0 %v1082
    %7879 = vmatprep.subr.mxu0 %v1091
    %7880 = vmatpush1.msra.mxu0 %v1090
    %7881 = vmatprep.subr.mxu0 %v1099
    %7882 = vmatpush1.msra.mxu0 %v1098
    %7883 = vmatprep.subr.mxu0 %v1107
    %7884 = vmatpush1.msra.mxu0 %v1106
    %7885 = vmatprep.subr.mxu0 %v1115
    %7886 = vmatpush1.msra.mxu0 %v1114
    %7887 = vmatprep.subr.mxu0 %v1123
    %7888 = vmatpush1.msra.mxu0 %v1122
    %7889 = vmatprep.subr.mxu0 %v1131
    %7890 = vmatpush1.msra.mxu0 %v1130
    %7891 = vmatprep.subr.mxu0 %v1139
    %7892 = vmatpush1.msra.mxu0 %v1138
    %7893 = vmatprep.subr.mxu0 %v1147
    %7894 = vmatpush1.msra.mxu0 %v1146
    %7895 = vmatprep.subr.mxu0 %v1155
    %7896 = vmatpush1.msra.mxu0 %v1154
    %7897 = vmatprep.subr.mxu0 %v1163
    %7898 = vmatpush1.msra.mxu0 %v1162
    %7899 = vmatprep.subr.mxu0 %v1171
    %7900 = vmatpush1.msra.mxu0 %v1170
    %7901 = vmatprep.subr.mxu0 %v1179
    %7902 = vmatpush1.msra.mxu0 %v1178
    %7903 = vmatprep.subr.mxu0 %v1187
    %7904 = vmatpush1.msra.mxu0 %v1186
    %7905 = vmatprep.subr.mxu0 %v1195
    %7906 = vmatpush1.msra.mxu0 %v1194
    %7907 = vmatprep.subr.mxu0 %v1203
    %7908 = vmatpush1.msra.mxu0 %v1202
    %7909 = vmatprep.subr.mxu0 %v1211
    %7910 = vmatpush1.msra.mxu0 %v1210
    %7911 = vmatprep.subr.mxu0 %v1219
    %7912 = vmatpush1.msra.mxu0 %v1218
    %7913 = vmatprep.subr.mxu0 %v1227
    %7914 = vmatpush1.msra.mxu0 %v1226
    %7915 = vmatprep.subr.mxu0 %v1235
    %7916 = vmatpush1.msra.mxu0 %v1234
    %7917 = vmatprep.subr.mxu0 %v1243
    %7918 = vmatpush1.msra.mxu0 %v1242
    %7919 = vmatprep.subr.mxu0 %v1251
    %7920 = vmatpush1.msra.mxu0 %v1250
    %7921 = vmatprep.subr.mxu0 %v1259
    %7922 = vmatpush1.msra.mxu0 %v1258
    %7923 = vmatprep.subr.mxu0 %v1267
    %7924 = vmatpush1.msra.mxu0 %v1266
    %7925 = vmatprep.subr.mxu0 %v1275
    %7926 = vmatpush1.msra.mxu0 %v1274
    %7927 = vmatprep.mubr.f32.mxu0 %v7649
    %7928 = vmatmul.mubr.f32.gmra.mrb[0].mxu0 %v7648
    %v7929 = vpop.f32.mrb[0].mxu0
    %v7930 = vadd.f32 %v7306, %v7929
    %v7931 = vpop.f32.mrb[0].mxu0
    %v7932 = vadd.f32 %v7308, %v7931
    %7933 = vdwg.mxu0
    %v7934 = vxor.u32 %v7717, 2147483648
    %v7935 = vxor.u32 %v7719, 2147483648
    %v7936 = vmul.f32 %v7934, 1.442695
    %v7937 = vpow.pop %v7936
    %v7938 = vmul.f32 %v7935, 1.442695
    %v7939 = vpow.pop %v7938
    %v7940 = vadd.f32 %v7937, 1.0
    %v7941 = vadd.f32 %v7939, 1.0
    %v7942 = vrcp.pop %v7940
    %v7943 = vmul.f32 1.0, %v7942
    %v7944 = vrcp.pop %v7941
    %v7945 = vmul.f32 1.0, %v7944
    %v7946 = vxor.u32 %v7788, 2147483648
    %v7947 = vxor.u32 %v7790, 2147483648
    %v7948 = vmul.f32 %v7946, 1.442695
    %v7949 = vpow.pop %v7948
    %v7950 = vmul.f32 %v7947, 1.442695
    %v7951 = vpow.pop %v7950
    %v7952 = vadd.f32 %v7949, 1.0
    %v7953 = vadd.f32 %v7951, 1.0
    %v7954 = vrcp.pop %v7952
    %v7955 = vmul.f32 1.0, %v7954
    %v7956 = vrcp.pop %v7953
    %v7957 = vmul.f32 1.0, %v7956
    %v7958 = vtanh.pop %v7859
    %v7959 = vtanh.pop %v7861
    %v7960 = vxor.u32 %v7930, 2147483648
    %v7961 = vxor.u32 %v7932, 2147483648
    %v7962 = vmul.f32 %v7960, 1.442695
    %v7963 = vpow.pop %v7962
    %v7964 = vmul.f32 %v7961, 1.442695
    %v7965 = vpow.pop %v7964
    %v7966 = vadd.f32 %v7963, 1.0
    %v7967 = vadd.f32 %v7965, 1.0
    %v7968 = vrcp.pop %v7966
    %v7969 = vmul.f32 1.0, %v7968
    %v7970 = vrcp.pop %v7967
    %v7971 = vmul.f32 1.0, %v7970
    %v7972 = vmul.f32 %v7955, %v7020
    %v7973 = vmul.f32 %v7957, %v7021
    %v7974 = vmul.f32 %v7943, %v7958
    %v7975 = vmul.f32 %v7945, %v7959
    %v7976 = vadd.f32 %v7972, %v7974
    %v7977 = vadd.f32 %v7973, %v7975
    %v7978 = vtanh.pop %v7976
    %v7979 = vtanh.pop %v7977
    %v7980 = vmul.f32 %v7969, %v7978
    %v7981 = vmul.f32 %v7971, %v7979
    %7982 = vmatprep.subr.mxu0 %v1277
    %7983 = vmatpush1.msra.mxu0 %v1276
    %7984 = vmatprep.subr.mxu0 %v1285
    %7985 = vmatpush1.msra.mxu0 %v1284
    %7986 = vmatprep.subr.mxu0 %v1293
    %7987 = vmatpush1.msra.mxu0 %v1292
    %7988 = vmatprep.subr.mxu0 %v1301
    %7989 = vmatpush1.msra.mxu0 %v1300
    %7990 = vmatprep.subr.mxu0 %v1309
    %7991 = vmatpush1.msra.mxu0 %v1308
    %7992 = vmatprep.subr.mxu0 %v1317
    %7993 = vmatpush1.msra.mxu0 %v1316
    %7994 = vmatprep.subr.mxu0 %v1325
    %7995 = vmatpush1.msra.mxu0 %v1324
    %7996 = vmatprep.subr.mxu0 %v1333
    %7997 = vmatpush1.msra.mxu0 %v1332
    %7998 = vmatprep.subr.mxu0 %v1341
    %7999 = vmatpush1.msra.mxu0 %v1340
    %8000 = vmatprep.subr.mxu0 %v1349
    %8001 = vmatpush1.msra.mxu0 %v1348
    %8002 = vmatprep.subr.mxu0 %v1357
    %8003 = vmatpush1.msra.mxu0 %v1356
    %8004 = vmatprep.subr.mxu0 %v1365
    %8005 = vmatpush1.msra.mxu0 %v1364
    %8006 = vmatprep.subr.mxu0 %v1373
    %8007 = vmatpush1.msra.mxu0 %v1372
    %8008 = vmatprep.subr.mxu0 %v1381
    %8009 = vmatpush1.msra.mxu0 %v1380
    %8010 = vmatprep.subr.mxu0 %v1389
    %8011 = vmatpush1.msra.mxu0 %v1388
    %8012 = vmatprep.subr.mxu0 %v1397
    %8013 = vmatpush1.msra.mxu0 %v1396
    %8014 = vmatprep.subr.mxu0 %v1405
    %8015 = vmatpush1.msra.mxu0 %v1404
    %8016 = vmatprep.subr.mxu0 %v1413
    %8017 = vmatpush1.msra.mxu0 %v1412
    %8018 = vmatprep.subr.mxu0 %v1421
    %8019 = vmatpush1.msra.mxu0 %v1420
    %8020 = vmatprep.subr.mxu0 %v1429
    %8021 = vmatpush1.msra.mxu0 %v1428
    %8022 = vmatprep.subr.mxu0 %v1437
    %8023 = vmatpush1.msra.mxu0 %v1436
    %8024 = vmatprep.subr.mxu0 %v1445
    %8025 = vmatpush1.msra.mxu0 %v1444
    %8026 = vmatprep.subr.mxu0 %v1453
    %8027 = vmatpush1.msra.mxu0 %v1452
    %8028 = vmatprep.subr.mxu0 %v1461
    %8029 = vmatpush1.msra.mxu0 %v1460
    %8030 = vmatprep.subr.mxu0 %v1469
    %8031 = vmatpush1.msra.mxu0 %v1468
    %8032 = vmatprep.subr.mxu0 %v1477
    %8033 = vmatpush1.msra.mxu0 %v1476
    %8034 = vmatprep.subr.mxu0 %v1485
    %8035 = vmatpush1.msra.mxu0 %v1484
    %8036 = vmatprep.subr.mxu0 %v1493
    %8037 = vmatpush1.msra.mxu0 %v1492
    %8038 = vmatprep.subr.mxu0 %v1501
    %8039 = vmatpush1.msra.mxu0 %v1500
    %8040 = vmatprep.subr.mxu0 %v1509
    %8041 = vmatpush1.msra.mxu0 %v1508
    %8042 = vmatprep.subr.mxu0 %v1517
    %8043 = vmatpush1.msra.mxu0 %v1516
    %8044 = vmatprep.subr.mxu0 %v1525
    %8045 = vmatpush1.msra.mxu0 %v1524
    %8046 = vmatprep.mubr.f32.mxu0 %v7981
    %8047 = vmatmul.mubr.f32.gmra.mrb[0].mxu0 %v7980
    %v8048 = vpop.f32.mrb[0].mxu0
    %v8049 = vadd.f32 %v1537, %v8048
    %v8050 = vpop.f32.mrb[0].mxu0
    %v8051 = vadd.f32 %v1541, %v8050
    %8052 = vdwg.mxu0
    %8053 = vmatprep.subr.mxu0 %v1279
    %8054 = vmatpush1.msra.mxu0 %v1278
    %8055 = vmatprep.subr.mxu0 %v1287
    %8056 = vmatpush1.msra.mxu0 %v1286
    %8057 = vmatprep.subr.mxu0 %v1295
    %8058 = vmatpush1.msra.mxu0 %v1294
    %8059 = vmatprep.subr.mxu0 %v1303
    %8060 = vmatpush1.msra.mxu0 %v1302
    %8061 = vmatprep.subr.mxu0 %v1311
    %8062 = vmatpush1.msra.mxu0 %v1310
    %8063 = vmatprep.subr.mxu0 %v1319
    %8064 = vmatpush1.msra.mxu0 %v1318
    %8065 = vmatprep.subr.mxu0 %v1327
    %8066 = vmatpush1.msra.mxu0 %v1326
    %8067 = vmatprep.subr.mxu0 %v1335
    %8068 = vmatpush1.msra.mxu0 %v1334
    %8069 = vmatprep.subr.mxu0 %v1343
    %8070 = vmatpush1.msra.mxu0 %v1342
    %8071 = vmatprep.subr.mxu0 %v1351
    %8072 = vmatpush1.msra.mxu0 %v1350
    %8073 = vmatprep.subr.mxu0 %v1359
    %8074 = vmatpush1.msra.mxu0 %v1358
    %8075 = vmatprep.subr.mxu0 %v1367
    %8076 = vmatpush1.msra.mxu0 %v1366
    %8077 = vmatprep.subr.mxu0 %v1375
    %8078 = vmatpush1.msra.mxu0 %v1374
    %8079 = vmatprep.subr.mxu0 %v1383
    %8080 = vmatpush1.msra.mxu0 %v1382
    %8081 = vmatprep.subr.mxu0 %v1391
    %8082 = vmatpush1.msra.mxu0 %v1390
    %8083 = vmatprep.subr.mxu0 %v1399
    %8084 = vmatpush1.msra.mxu0 %v1398
    %8085 = vmatprep.subr.mxu0 %v1407
    %8086 = vmatpush1.msra.mxu0 %v1406
    %8087 = vmatprep.subr.mxu0 %v1415
    %8088 = vmatpush1.msra.mxu0 %v1414
    %8089 = vmatprep.subr.mxu0 %v1423
    %8090 = vmatpush1.msra.mxu0 %v1422
    %8091 = vmatprep.subr.mxu0 %v1431
    %8092 = vmatpush1.msra.mxu0 %v1430
    %8093 = vmatprep.subr.mxu0 %v1439
    %8094 = vmatpush1.msra.mxu0 %v1438
    %8095 = vmatprep.subr.mxu0 %v1447
    %8096 = vmatpush1.msra.mxu0 %v1446
    %8097 = vmatprep.subr.mxu0 %v1455
    %8098 = vmatpush1.msra.mxu0 %v1454
    %8099 = vmatprep.subr.mxu0 %v1463
    %8100 = vmatpush1.msra.mxu0 %v1462
    %8101 = vmatprep.subr.mxu0 %v1471
    %8102 = vmatpush1.msra.mxu0 %v1470
    %8103 = vmatprep.subr.mxu0 %v1479
    %8104 = vmatpush1.msra.mxu0 %v1478
    %8105 = vmatprep.subr.mxu0 %v1487
    %8106 = vmatpush1.msra.mxu0 %v1486
    %8107 = vmatprep.subr.mxu0 %v1495
    %8108 = vmatpush1.msra.mxu0 %v1494
    %8109 = vmatprep.subr.mxu0 %v1503
    %8110 = vmatpush1.msra.mxu0 %v1502
    %8111 = vmatprep.subr.mxu0 %v1511
    %8112 = vmatpush1.msra.mxu0 %v1510
    %8113 = vmatprep.subr.mxu0 %v1519
    %8114 = vmatpush1.msra.mxu0 %v1518
    %8115 = vmatprep.subr.mxu0 %v1527
    %8116 = vmatpush1.msra.mxu0 %v1526
    %8117 = vmatprep.mubr.f32.mxu0 %v7981
    %8118 = vmatmul.mubr.f32.gmra.mrb[0].mxu0 %v7980
    %v8119 = vpop.f32.mrb[0].mxu0
    %v8120 = vadd.f32 %v1545, %v8119
    %v8121 = vpop.f32.mrb[0].mxu0
    %v8122 = vadd.f32 %v1549, %v8121
    %8123 = vdwg.mxu0
    %8124 = vmatprep.subr.mxu0 %v1281
    %8125 = vmatpush1.msra.mxu0 %v1280
    %8126 = vmatprep.subr.mxu0 %v1289
    %8127 = vmatpush1.msra.mxu0 %v1288
    %8128 = vmatprep.subr.mxu0 %v1297
    %8129 = vmatpush1.msra.mxu0 %v1296
    %8130 = vmatprep.subr.mxu0 %v1305
    %8131 = vmatpush1.msra.mxu0 %v1304
    %8132 = vmatprep.subr.mxu0 %v1313
    %8133 = vmatpush1.msra.mxu0 %v1312
    %8134 = vmatprep.subr.mxu0 %v1321
    %8135 = vmatpush1.msra.mxu0 %v1320
    %8136 = vmatprep.subr.mxu0 %v1329
    %8137 = vmatpush1.msra.mxu0 %v1328
    %8138 = vmatprep.subr.mxu0 %v1337
    %8139 = vmatpush1.msra.mxu0 %v1336
    %8140 = vmatprep.subr.mxu0 %v1345
    %8141 = vmatpush1.msra.mxu0 %v1344
    %8142 = vmatprep.subr.mxu0 %v1353
    %8143 = vmatpush1.msra.mxu0 %v1352
    %8144 = vmatprep.subr.mxu0 %v1361
    %8145 = vmatpush1.msra.mxu0 %v1360
    %8146 = vmatprep.subr.mxu0 %v1369
    %8147 = vmatpush1.msra.mxu0 %v1368
    %8148 = vmatprep.subr.mxu0 %v1377
    %8149 = vmatpush1.msra.mxu0 %v1376
    %8150 = vmatprep.subr.mxu0 %v1385
    %8151 = vmatpush1.msra.mxu0 %v1384
    %8152 = vmatprep.subr.mxu0 %v1393
    %8153 = vmatpush1.msra.mxu0 %v1392
    %8154 = vmatprep.subr.mxu0 %v1401
    %8155 = vmatpush1.msra.mxu0 %v1400
    %8156 = vmatprep.subr.mxu0 %v1409
    %8157 = vmatpush1.msra.mxu0 %v1408
    %8158 = vmatprep.subr.mxu0 %v1417
    %8159 = vmatpush1.msra.mxu0 %v1416
    %8160 = vmatprep.subr.mxu0 %v1425
    %8161 = vmatpush1.msra.mxu0 %v1424
    %8162 = vmatprep.subr.mxu0 %v1433
    %8163 = vmatpush1.msra.mxu0 %v1432
    %8164 = vmatprep.subr.mxu0 %v1441
    %8165 = vmatpush1.msra.mxu0 %v1440
    %8166 = vmatprep.subr.mxu0 %v1449
    %8167 = vmatpush1.msra.mxu0 %v1448
    %8168 = vmatprep.subr.mxu0 %v1457
    %8169 = vmatpush1.msra.mxu0 %v1456
    %8170 = vmatprep.subr.mxu0 %v1465
    %8171 = vmatpush1.msra.mxu0 %v1464
    %8172 = vmatprep.subr.mxu0 %v1473
    %8173 = vmatpush1.msra.mxu0 %v1472
    %8174 = vmatprep.subr.mxu0 %v1481
    %8175 = vmatpush1.msra.mxu0 %v1480
    %8176 = vmatprep.subr.mxu0 %v1489
    %8177 = vmatpush1.msra.mxu0 %v1488
    %8178 = vmatprep.subr.mxu0 %v1497
    %8179 = vmatpush1.msra.mxu0 %v1496
    %8180 = vmatprep.subr.mxu0 %v1505
    %8181 = vmatpush1.msra.mxu0 %v1504
    %8182 = vmatprep.subr.mxu0 %v1513
    %8183 = vmatpush1.msra.mxu0 %v1512
    %8184 = vmatprep.subr.mxu0 %v1521
    %8185 = vmatpush1.msra.mxu0 %v1520
    %8186 = vmatprep.subr.mxu0 %v1529
    %8187 = vmatpush1.msra.mxu0 %v1528
    %8188 = vmatprep.mubr.f32.mxu0 %v7981
    %8189 = vmatmul.mubr.f32.gmra.mrb[0].mxu0 %v7980
    %v8190 = vpop.f32.mrb[0].mxu0
    %v8191 = vadd.f32 %v1553, %v8190
    %v8192 = vpop.f32.mrb[0].mxu0
    %v8193 = vadd.f32 %v1557, %v8192
    %8194 = vdwg.mxu0
    %8195 = vmatprep.subr.mxu0 %v1283
    %8196 = vmatpush1.msra.mxu0 %v1282
    %8197 = vmatprep.subr.mxu0 %v1291
    %8198 = vmatpush1.msra.mxu0 %v1290
    %8199 = vmatprep.subr.mxu0 %v1299
    %8200 = vmatpush1.msra.mxu0 %v1298
    %8201 = vmatprep.subr.mxu0 %v1307
    %8202 = vmatpush1.msra.mxu0 %v1306
    %8203 = vmatprep.subr.mxu0 %v1315
    %8204 = vmatpush1.msra.mxu0 %v1314
    %8205 = vmatprep.subr.mxu0 %v1323
    %8206 = vmatpush1.msra.mxu0 %v1322
    %8207 = vmatprep.subr.mxu0 %v1331
    %8208 = vmatpush1.msra.mxu0 %v1330
    %8209 = vmatprep.subr.mxu0 %v1339
    %8210 = vmatpush1.msra.mxu0 %v1338
    %8211 = vmatprep.subr.mxu0 %v1347
    %8212 = vmatpush1.msra.mxu0 %v1346
    %8213 = vmatprep.subr.mxu0 %v1355
    %8214 = vmatpush1.msra.mxu0 %v1354
    %8215 = vmatprep.subr.mxu0 %v1363
    %8216 = vmatpush1.msra.mxu0 %v1362
    %8217 = vmatprep.subr.mxu0 %v1371
    %8218 = vmatpush1.msra.mxu0 %v1370
    %8219 = vmatprep.subr.mxu0 %v1379
    %8220 = vmatpush1.msra.mxu0 %v1378
    %8221 = vmatprep.subr.mxu0 %v1387
    %8222 = vmatpush1.msra.mxu0 %v1386
    %8223 = vmatprep.subr.mxu0 %v1395
    %8224 = vmatpush1.msra.mxu0 %v1394
    %8225 = vmatprep.subr.mxu0 %v1403
    %8226 = vmatpush1.msra.mxu0 %v1402
    %8227 = vmatprep.subr.mxu0 %v1411
    %8228 = vmatpush1.msra.mxu0 %v1410
    %8229 = vmatprep.subr.mxu0 %v1419
    %8230 = vmatpush1.msra.mxu0 %v1418
    %8231 = vmatprep.subr.mxu0 %v1427
    %8232 = vmatpush1.msra.mxu0 %v1426
    %8233 = vmatprep.subr.mxu0 %v1435
    %8234 = vmatpush1.msra.mxu0 %v1434
    %8235 = vmatprep.subr.mxu0 %v1443
    %8236 = vmatpush1.msra.mxu0 %v1442
    %8237 = vmatprep.subr.mxu0 %v1451
    %8238 = vmatpush1.msra.mxu0 %v1450
    %8239 = vmatprep.subr.mxu0 %v1459
    %8240 = vmatpush1.msra.mxu0 %v1458
    %8241 = vmatprep.subr.mxu0 %v1467
    %8242 = vmatpush1.msra.mxu0 %v1466
    %8243 = vmatprep.subr.mxu0 %v1475
    %8244 = vmatpush1.msra.mxu0 %v1474
    %8245 = vmatprep.subr.mxu0 %v1483
    %8246 = vmatpush1.msra.mxu0 %v1482
    %8247 = vmatprep.subr.mxu0 %v1491
    %8248 = vmatpush1.msra.mxu0 %v1490
    %8249 = vmatprep.subr.mxu0 %v1499
    %8250 = vmatpush1.msra.mxu0 %v1498
    %8251 = vmatprep.subr.mxu0 %v1507
    %8252 = vmatpush1.msra.mxu0 %v1506
    %8253 = vmatprep.subr.mxu0 %v1515
    %8254 = vmatpush1.msra.mxu0 %v1514
    %8255 = vmatprep.subr.mxu0 %v1523
    %8256 = vmatpush1.msra.mxu0 %v1522
    %8257 = vmatprep.subr.mxu0 %v1531
    %8258 = vmatpush1.msra.mxu0 %v1530
    %8259 = vmatprep.mubr.f32.mxu0 %v7981
    %8260 = vmatmul.mubr.f32.gmra.mrb[0].mxu0 %v7980
    %v8261 = vpop.f32.mrb[0].mxu0
    %v8262 = vadd.f32 %v1561, %v8261
    %v8263 = vpop.f32.mrb[0].mxu0
    %v8264 = vadd.f32 %v1565, %v8263
    %8265 = vdwg.mxu0
    %8266 = vmatprep.subr.mxu0 %v765
    %8267 = vmatpush1.msra.mxu0 %v764
    %8268 = vmatprep.subr.mxu0 %v773
    %8269 = vmatpush1.msra.mxu0 %v772
    %8270 = vmatprep.subr.mxu0 %v781
    %8271 = vmatpush1.msra.mxu0 %v780
    %8272 = vmatprep.subr.mxu0 %v789
    %8273 = vmatpush1.msra.mxu0 %v788
    %8274 = vmatprep.subr.mxu0 %v797
    %8275 = vmatpush1.msra.mxu0 %v796
    %8276 = vmatprep.subr.mxu0 %v805
    %8277 = vmatpush1.msra.mxu0 %v804
    %8278 = vmatprep.subr.mxu0 %v813
    %8279 = vmatpush1.msra.mxu0 %v812
    %8280 = vmatprep.subr.mxu0 %v821
    %8281 = vmatpush1.msra.mxu0 %v820
    %8282 = vmatprep.subr.mxu0 %v829
    %8283 = vmatpush1.msra.mxu0 %v828
    %8284 = vmatprep.subr.mxu0 %v837
    %8285 = vmatpush1.msra.mxu0 %v836
    %8286 = vmatprep.subr.mxu0 %v845
    %8287 = vmatpush1.msra.mxu0 %v844
    %8288 = vmatprep.subr.mxu0 %v853
    %8289 = vmatpush1.msra.mxu0 %v852
    %8290 = vmatprep.subr.mxu0 %v861
    %8291 = vmatpush1.msra.mxu0 %v860
    %8292 = vmatprep.subr.mxu0 %v869
    %8293 = vmatpush1.msra.mxu0 %v868
    %8294 = vmatprep.subr.mxu0 %v877
    %8295 = vmatpush1.msra.mxu0 %v876
    %8296 = vmatprep.subr.mxu0 %v885
    %8297 = vmatpush1.msra.mxu0 %v884
    %8298 = vmatprep.subr.mxu0 %v893
    %8299 = vmatpush1.msra.mxu0 %v892
    %8300 = vmatprep.subr.mxu0 %v901
    %8301 = vmatpush1.msra.mxu0 %v900
    %8302 = vmatprep.subr.mxu0 %v909
    %8303 = vmatpush1.msra.mxu0 %v908
    %8304 = vmatprep.subr.mxu0 %v917
    %8305 = vmatpush1.msra.mxu0 %v916
    %8306 = vmatprep.subr.mxu0 %v925
    %8307 = vmatpush1.msra.mxu0 %v924
    %8308 = vmatprep.subr.mxu0 %v933
    %8309 = vmatpush1.msra.mxu0 %v932
    %8310 = vmatprep.subr.mxu0 %v941
    %8311 = vmatpush1.msra.mxu0 %v940
    %8312 = vmatprep.subr.mxu0 %v949
    %8313 = vmatpush1.msra.mxu0 %v948
    %8314 = vmatprep.subr.mxu0 %v957
    %8315 = vmatpush1.msra.mxu0 %v956
    %8316 = vmatprep.subr.mxu0 %v965
    %8317 = vmatpush1.msra.mxu0 %v964
    %8318 = vmatprep.subr.mxu0 %v973
    %8319 = vmatpush1.msra.mxu0 %v972
    %8320 = vmatprep.subr.mxu0 %v981
    %8321 = vmatpush1.msra.mxu0 %v980
    %8322 = vmatprep.subr.mxu0 %v989
    %8323 = vmatpush1.msra.mxu0 %v988
    %8324 = vmatprep.subr.mxu0 %v997
    %8325 = vmatpush1.msra.mxu0 %v996
    %8326 = vmatprep.subr.mxu0 %v1005
    %8327 = vmatpush1.msra.mxu0 %v1004
    %8328 = vmatprep.subr.mxu0 %v1013
    %8329 = vmatpush1.msra.mxu0 %v1012
    %8330 = vmatprep.mubr.f32.mxu0 %v7649
    %8331 = vmatmul.mubr.f32.gmra.mrb[0].mxu0 %v7648
    %v8332 = vpop.f32.mrb[0].mxu0
    %v8333 = vadd.f32 0.0, %v8332
    %v8334 = vpop.f32.mrb[0].mxu0
    %v8335 = vadd.f32 0.0, %v8334
    %8336 = vdwg.mxu0
    %8337 = vmatprep.subr.mxu0 %v767
    %8338 = vmatpush1.msra.mxu0 %v766
    %8339 = vmatprep.subr.mxu0 %v775
    %8340 = vmatpush1.msra.mxu0 %v774
    %8341 = vmatprep.subr.mxu0 %v783
    %8342 = vmatpush1.msra.mxu0 %v782
    %8343 = vmatprep.subr.mxu0 %v791
    %8344 = vmatpush1.msra.mxu0 %v790
    %8345 = vmatprep.subr.mxu0 %v799
    %8346 = vmatpush1.msra.mxu0 %v798
    %8347 = vmatprep.subr.mxu0 %v807
    %8348 = vmatpush1.msra.mxu0 %v806
    %8349 = vmatprep.subr.mxu0 %v815
    %8350 = vmatpush1.msra.mxu0 %v814
    %8351 = vmatprep.subr.mxu0 %v823
    %8352 = vmatpush1.msra.mxu0 %v822
    %8353 = vmatprep.subr.mxu0 %v831
    %8354 = vmatpush1.msra.mxu0 %v830
    %8355 = vmatprep.subr.mxu0 %v839
    %8356 = vmatpush1.msra.mxu0 %v838
    %8357 = vmatprep.subr.mxu0 %v847
    %8358 = vmatpush1.msra.mxu0 %v846
    %8359 = vmatprep.subr.mxu0 %v855
    %8360 = vmatpush1.msra.mxu0 %v854
    %8361 = vmatprep.subr.mxu0 %v863
    %8362 = vmatpush1.msra.mxu0 %v862
    %8363 = vmatprep.subr.mxu0 %v871
    %8364 = vmatpush1.msra.mxu0 %v870
    %8365 = vmatprep.subr.mxu0 %v879
    %8366 = vmatpush1.msra.mxu0 %v878
    %8367 = vmatprep.subr.mxu0 %v887
    %8368 = vmatpush1.msra.mxu0 %v886
    %8369 = vmatprep.subr.mxu0 %v895
    %8370 = vmatpush1.msra.mxu0 %v894
    %8371 = vmatprep.subr.mxu0 %v903
    %8372 = vmatpush1.msra.mxu0 %v902
    %8373 = vmatprep.subr.mxu0 %v911
    %8374 = vmatpush1.msra.mxu0 %v910
    %8375 = vmatprep.subr.mxu0 %v919
    %8376 = vmatpush1.msra.mxu0 %v918
    %8377 = vmatprep.subr.mxu0 %v927
    %8378 = vmatpush1.msra.mxu0 %v926
    %8379 = vmatprep.subr.mxu0 %v935
    %8380 = vmatpush1.msra.mxu0 %v934
    %8381 = vmatprep.subr.mxu0 %v943
    %8382 = vmatpush1.msra.mxu0 %v942
    %8383 = vmatprep.subr.mxu0 %v951
    %8384 = vmatpush1.msra.mxu0 %v950
    %8385 = vmatprep.subr.mxu0 %v959
    %8386 = vmatpush1.msra.mxu0 %v958
    %8387 = vmatprep.subr.mxu0 %v967
    %8388 = vmatpush1.msra.mxu0 %v966
    %8389 = vmatprep.subr.mxu0 %v975
    %8390 = vmatpush1.msra.mxu0 %v974
    %8391 = vmatprep.subr.mxu0 %v983
    %8392 = vmatpush1.msra.mxu0 %v982
    %8393 = vmatprep.subr.mxu0 %v991
    %8394 = vmatpush1.msra.mxu0 %v990
    %8395 = vmatprep.subr.mxu0 %v999
    %8396 = vmatpush1.msra.mxu0 %v998
    %8397 = vmatprep.subr.mxu0 %v1007
    %8398 = vmatpush1.msra.mxu0 %v1006
    %8399 = vmatprep.subr.mxu0 %v1015
    %8400 = vmatpush1.msra.mxu0 %v1014
    %8401 = vmatprep.mubr.f32.mxu0 %v7649
    %8402 = vmatmul.mubr.f32.gmra.mrb[0].mxu0 %v7648
    %v8403 = vpop.f32.mrb[0].mxu0
    %v8404 = vadd.f32 0.0, %v8403
    %v8405 = vpop.f32.mrb[0].mxu0
    %v8406 = vadd.f32 0.0, %v8405
    %8407 = vdwg.mxu0
    %8408 = vmatprep.subr.mxu0 %v769
    %8409 = vmatpush1.msra.mxu0 %v768
    %8410 = vmatprep.subr.mxu0 %v777
    %8411 = vmatpush1.msra.mxu0 %v776
    %8412 = vmatprep.subr.mxu0 %v785
    %8413 = vmatpush1.msra.mxu0 %v784
    %8414 = vmatprep.subr.mxu0 %v793
    %8415 = vmatpush1.msra.mxu0 %v792
    %8416 = vmatprep.subr.mxu0 %v801
    %8417 = vmatpush1.msra.mxu0 %v800
    %8418 = vmatprep.subr.mxu0 %v809
    %8419 = vmatpush1.msra.mxu0 %v808
    %8420 = vmatprep.subr.mxu0 %v817
    %8421 = vmatpush1.msra.mxu0 %v816
    %8422 = vmatprep.subr.mxu0 %v825
    %8423 = vmatpush1.msra.mxu0 %v824
    %8424 = vmatprep.subr.mxu0 %v833
    %8425 = vmatpush1.msra.mxu0 %v832
    %8426 = vmatprep.subr.mxu0 %v841
    %8427 = vmatpush1.msra.mxu0 %v840
    %8428 = vmatprep.subr.mxu0 %v849
    %8429 = vmatpush1.msra.mxu0 %v848
    %8430 = vmatprep.subr.mxu0 %v857
    %8431 = vmatpush1.msra.mxu0 %v856
    %8432 = vmatprep.subr.mxu0 %v865
    %8433 = vmatpush1.msra.mxu0 %v864
    %8434 = vmatprep.subr.mxu0 %v873
    %8435 = vmatpush1.msra.mxu0 %v872
    %8436 = vmatprep.subr.mxu0 %v881
    %8437 = vmatpush1.msra.mxu0 %v880
    %8438 = vmatprep.subr.mxu0 %v889
    %8439 = vmatpush1.msra.mxu0 %v888
    %8440 = vmatprep.subr.mxu0 %v897
    %8441 = vmatpush1.msra.mxu0 %v896
    %8442 = vmatprep.subr.mxu0 %v905
    %8443 = vmatpush1.msra.mxu0 %v904
    %8444 = vmatprep.subr.mxu0 %v913
    %8445 = vmatpush1.msra.mxu0 %v912
    %8446 = vmatprep.subr.mxu0 %v921
    %8447 = vmatpush1.msra.mxu0 %v920
    %8448 = vmatprep.subr.mxu0 %v929
    %8449 = vmatpush1.msra.mxu0 %v928
    %8450 = vmatprep.subr.mxu0 %v937
    %8451 = vmatpush1.msra.mxu0 %v936
    %8452 = vmatprep.subr.mxu0 %v945
    %8453 = vmatpush1.msra.mxu0 %v944
    %8454 = vmatprep.subr.mxu0 %v953
    %8455 = vmatpush1.msra.mxu0 %v952
    %8456 = vmatprep.subr.mxu0 %v961
    %8457 = vmatpush1.msra.mxu0 %v960
    %8458 = vmatprep.subr.mxu0 %v969
    %8459 = vmatpush1.msra.mxu0 %v968
    %8460 = vmatprep.subr.mxu0 %v977
    %8461 = vmatpush1.msra.mxu0 %v976
    %8462 = vmatprep.subr.mxu0 %v985
    %8463 = vmatpush1.msra.mxu0 %v984
    %8464 = vmatprep.subr.mxu0 %v993
    %8465 = vmatpush1.msra.mxu0 %v992
    %8466 = vmatprep.subr.mxu0 %v1001
    %8467 = vmatpush1.msra.mxu0 %v1000
    %8468 = vmatprep.subr.mxu0 %v1009
    %8469 = vmatpush1.msra.mxu0 %v1008
    %8470 = vmatprep.subr.mxu0 %v1017
    %8471 = vmatpush1.msra.mxu0 %v1016
    %8472 = vmatprep.mubr.f32.mxu0 %v7649
    %8473 = vmatmul.mubr.f32.gmra.mrb[0].mxu0 %v7648
    %v8474 = vpop.f32.mrb[0].mxu0
    %v8475 = vadd.f32 0.0, %v8474
    %v8476 = vpop.f32.mrb[0].mxu0
    %v8477 = vadd.f32 0.0, %v8476
    %8478 = vdwg.mxu0
    %8479 = vmatprep.subr.mxu0 %v771
    %8480 = vmatpush1.msra.mxu0 %v770
    %8481 = vmatprep.subr.mxu0 %v779
    %8482 = vmatpush1.msra.mxu0 %v778
    %8483 = vmatprep.subr.mxu0 %v787
    %8484 = vmatpush1.msra.mxu0 %v786
    %8485 = vmatprep.subr.mxu0 %v795
    %8486 = vmatpush1.msra.mxu0 %v794
    %8487 = vmatprep.subr.mxu0 %v803
    %8488 = vmatpush1.msra.mxu0 %v802
    %8489 = vmatprep.subr.mxu0 %v811
    %8490 = vmatpush1.msra.mxu0 %v810
    %8491 = vmatprep.subr.mxu0 %v819
    %8492 = vmatpush1.msra.mxu0 %v818
    %8493 = vmatprep.subr.mxu0 %v827
    %8494 = vmatpush1.msra.mxu0 %v826
    %8495 = vmatprep.subr.mxu0 %v835
    %8496 = vmatpush1.msra.mxu0 %v834
    %8497 = vmatprep.subr.mxu0 %v843
    %8498 = vmatpush1.msra.mxu0 %v842
    %8499 = vmatprep.subr.mxu0 %v851
    %8500 = vmatpush1.msra.mxu0 %v850
    %8501 = vmatprep.subr.mxu0 %v859
    %8502 = vmatpush1.msra.mxu0 %v858
    %8503 = vmatprep.subr.mxu0 %v867
    %8504 = vmatpush1.msra.mxu0 %v866
    %8505 = vmatprep.subr.mxu0 %v875
    %8506 = vmatpush1.msra.mxu0 %v874
    %8507 = vmatprep.subr.mxu0 %v883
    %8508 = vmatpush1.msra.mxu0 %v882
    %8509 = vmatprep.subr.mxu0 %v891
    %8510 = vmatpush1.msra.mxu0 %v890
    %8511 = vmatprep.subr.mxu0 %v899
    %8512 = vmatpush1.msra.mxu0 %v898
    %8513 = vmatprep.subr.mxu0 %v907
    %8514 = vmatpush1.msra.mxu0 %v906
    %8515 = vmatprep.subr.mxu0 %v915
    %8516 = vmatpush1.msra.mxu0 %v914
    %8517 = vmatprep.subr.mxu0 %v923
    %8518 = vmatpush1.msra.mxu0 %v922
    %8519 = vmatprep.subr.mxu0 %v931
    %8520 = vmatpush1.msra.mxu0 %v930
    %8521 = vmatprep.subr.mxu0 %v939
    %8522 = vmatpush1.msra.mxu0 %v938
    %8523 = vmatprep.subr.mxu0 %v947
    %8524 = vmatpush1.msra.mxu0 %v946
    %8525 = vmatprep.subr.mxu0 %v955
    %8526 = vmatpush1.msra.mxu0 %v954
    %8527 = vmatprep.subr.mxu0 %v963
    %8528 = vmatpush1.msra.mxu0 %v962
    %8529 = vmatprep.subr.mxu0 %v971
    %8530 = vmatpush1.msra.mxu0 %v970
    %8531 = vmatprep.subr.mxu0 %v979
    %8532 = vmatpush1.msra.mxu0 %v978
    %8533 = vmatprep.subr.mxu0 %v987
    %8534 = vmatpush1.msra.mxu0 %v986
    %8535 = vmatprep.subr.mxu0 %v995
    %8536 = vmatpush1.msra.mxu0 %v994
    %8537 = vmatprep.subr.mxu0 %v1003
    %8538 = vmatpush1.msra.mxu0 %v1002
    %8539 = vmatprep.subr.mxu0 %v1011
    %8540 = vmatpush1.msra.mxu0 %v1010
    %8541 = vmatprep.subr.mxu0 %v1019
    %8542 = vmatpush1.msra.mxu0 %v1018
    %8543 = vmatprep.mubr.f32.mxu0 %v7649
    %8544 = vmatmul.mubr.f32.gmra.mrb[0].mxu0 %v7648
    %v8545 = vpop.f32.mrb[0].mxu0
    %v8546 = vadd.f32 0.0, %v8545
    %v8547 = vpop.f32.mrb[0].mxu0
    %v8548 = vadd.f32 0.0, %v8547
    %8549 = vdwg.mxu0
    %v8550 = vadd.f32 %v421, %v8333
    %v8551 = vadd.f32 %v423, %v8335
    %v8552 = vadd.f32 %v534, %v8404
    %v8553 = vadd.f32 %v536, %v8406
    %v8554 = vadd.f32 %v647, %v8475
    %v8555 = vadd.f32 %v649, %v8477
    %v8556 = vadd.f32 %v760, %v8546
    %v8557 = vadd.f32 %v762, %v8548
    %v8558 = vxor.u32 %v8550, 2147483648
    %v8559 = vxor.u32 %v8551, 2147483648
    %v8560 = vmul.f32 %v8558, 1.442695
    %v8561 = vpow.pop %v8560
    %v8562 = vmul.f32 %v8559, 1.442695
    %v8563 = vpow.pop %v8562
    %v8564 = vadd.f32 %v8561, 1.0
    %v8565 = vadd.f32 %v8563, 1.0
    %v8566 = vrcp.pop %v8564
    %v8567 = vmul.f32 1.0, %v8566
    %v8568 = vrcp.pop %v8565
    %v8569 = vmul.f32 1.0, %v8568
    %v8570 = vxor.u32 %v8552, 2147483648
    %v8571 = vxor.u32 %v8553, 2147483648
    %v8572 = vmul.f32 %v8570, 1.442695
    %v8573 = vpow.pop %v8572
    %v8574 = vmul.f32 %v8571, 1.442695
    %v8575 = vpow.pop %v8574
    %v8576 = vadd.f32 %v8573, 1.0
    %v8577 = vadd.f32 %v8575, 1.0
    %v8578 = vrcp.pop %v8576
    %v8579 = vmul.f32 1.0, %v8578
    %v8580 = vrcp.pop %v8577
    %v8581 = vmul.f32 1.0, %v8580
    %v8582 = vtanh.pop %v8554
    %v8583 = vtanh.pop %v8555
    %v8584 = vxor.u32 %v8556, 2147483648
    %v8585 = vxor.u32 %v8557, 2147483648
    %v8586 = vmul.f32 %v8584, 1.442695
    %v8587 = vpow.pop %v8586
    %v8588 = vmul.f32 %v8585, 1.442695
    %v8589 = vpow.pop %v8588
    %v8590 = vadd.f32 %v8587, 1.0
    %v8591 = vadd.f32 %v8589, 1.0
    %v8592 = vrcp.pop %v8590
    %v8593 = vmul.f32 1.0, %v8592
    %v8594 = vrcp.pop %v8591
    %v8595 = vmul.f32 1.0, %v8594
    %v8596 = vmul.f32 %v8579, %v7644
    %v8597 = vmul.f32 %v8581, %v7645
    %v8598 = vmul.f32 %v8567, %v8582
    %v8599 = vmul.f32 %v8569, %v8583
    %v8600 = vadd.f32 %v8596, %v8598
    %v8601 = vadd.f32 %v8597, %v8599
    %v8602 = vtanh.pop %v8600
    %v8603 = vtanh.pop %v8601
    %v8604 = vmul.f32 %v8593, %v8602
    %v8605 = vmul.f32 %v8595, %v8603
    %8606 = vmatprep.subr.mxu0 %v1021
    %8607 = vmatpush1.msra.mxu0 %v1020
    %8608 = vmatprep.subr.mxu0 %v1029
    %8609 = vmatpush1.msra.mxu0 %v1028
    %8610 = vmatprep.subr.mxu0 %v1037
    %8611 = vmatpush1.msra.mxu0 %v1036
    %8612 = vmatprep.subr.mxu0 %v1045
    %8613 = vmatpush1.msra.mxu0 %v1044
    %8614 = vmatprep.subr.mxu0 %v1053
    %8615 = vmatpush1.msra.mxu0 %v1052
    %8616 = vmatprep.subr.mxu0 %v1061
    %8617 = vmatpush1.msra.mxu0 %v1060
    %8618 = vmatprep.subr.mxu0 %v1069
    %8619 = vmatpush1.msra.mxu0 %v1068
    %8620 = vmatprep.subr.mxu0 %v1077
    %8621 = vmatpush1.msra.mxu0 %v1076
    %8622 = vmatprep.subr.mxu0 %v1085
    %8623 = vmatpush1.msra.mxu0 %v1084
    %8624 = vmatprep.subr.mxu0 %v1093
    %8625 = vmatpush1.msra.mxu0 %v1092
    %8626 = vmatprep.subr.mxu0 %v1101
    %8627 = vmatpush1.msra.mxu0 %v1100
    %8628 = vmatprep.subr.mxu0 %v1109
    %8629 = vmatpush1.msra.mxu0 %v1108
    %8630 = vmatprep.subr.mxu0 %v1117
    %8631 = vmatpush1.msra.mxu0 %v1116
    %8632 = vmatprep.subr.mxu0 %v1125
    %8633 = vmatpush1.msra.mxu0 %v1124
    %8634 = vmatprep.subr.mxu0 %v1133
    %8635 = vmatpush1.msra.mxu0 %v1132
    %8636 = vmatprep.subr.mxu0 %v1141
    %8637 = vmatpush1.msra.mxu0 %v1140
    %8638 = vmatprep.subr.mxu0 %v1149
    %8639 = vmatpush1.msra.mxu0 %v1148
    %8640 = vmatprep.subr.mxu0 %v1157
    %8641 = vmatpush1.msra.mxu0 %v1156
    %8642 = vmatprep.subr.mxu0 %v1165
    %8643 = vmatpush1.msra.mxu0 %v1164
    %8644 = vmatprep.subr.mxu0 %v1173
    %8645 = vmatpush1.msra.mxu0 %v1172
    %8646 = vmatprep.subr.mxu0 %v1181
    %8647 = vmatpush1.msra.mxu0 %v1180
    %8648 = vmatprep.subr.mxu0 %v1189
    %8649 = vmatpush1.msra.mxu0 %v1188
    %8650 = vmatprep.subr.mxu0 %v1197
    %8651 = vmatpush1.msra.mxu0 %v1196
    %8652 = vmatprep.subr.mxu0 %v1205
    %8653 = vmatpush1.msra.mxu0 %v1204
    %8654 = vmatprep.subr.mxu0 %v1213
    %8655 = vmatpush1.msra.mxu0 %v1212
    %8656 = vmatprep.subr.mxu0 %v1221
    %8657 = vmatpush1.msra.mxu0 %v1220
    %8658 = vmatprep.subr.mxu0 %v1229
    %8659 = vmatpush1.msra.mxu0 %v1228
    %8660 = vmatprep.subr.mxu0 %v1237
    %8661 = vmatpush1.msra.mxu0 %v1236
    %8662 = vmatprep.subr.mxu0 %v1245
    %8663 = vmatpush1.msra.mxu0 %v1244
    %8664 = vmatprep.subr.mxu0 %v1253
    %8665 = vmatpush1.msra.mxu0 %v1252
    %8666 = vmatprep.subr.mxu0 %v1261
    %8667 = vmatpush1.msra.mxu0 %v1260
    %8668 = vmatprep.subr.mxu0 %v1269
    %8669 = vmatpush1.msra.mxu0 %v1268
    %8670 = vmatprep.mubr.f32.mxu0 %v8605
    %8671 = vmatmul.mubr.f32.gmra.mrb[0].mxu0 %v8604
    %v8672 = vpop.f32.mrb[0].mxu0
    %v8673 = vadd.f32 %v8049, %v8672
    %v8674 = vpop.f32.mrb[0].mxu0
    %v8675 = vadd.f32 %v8051, %v8674
    %8676 = vdwg.mxu0
    %8677 = vmatprep.subr.mxu0 %v1023
    %8678 = vmatpush1.msra.mxu0 %v1022
    %8679 = vmatprep.subr.mxu0 %v1031
    %8680 = vmatpush1.msra.mxu0 %v1030
    %8681 = vmatprep.subr.mxu0 %v1039
    %8682 = vmatpush1.msra.mxu0 %v1038
    %8683 = vmatprep.subr.mxu0 %v1047
    %8684 = vmatpush1.msra.mxu0 %v1046
    %8685 = vmatprep.subr.mxu0 %v1055
    %8686 = vmatpush1.msra.mxu0 %v1054
    %8687 = vmatprep.subr.mxu0 %v1063
    %8688 = vmatpush1.msra.mxu0 %v1062
    %8689 = vmatprep.subr.mxu0 %v1071
    %8690 = vmatpush1.msra.mxu0 %v1070
    %8691 = vmatprep.subr.mxu0 %v1079
    %8692 = vmatpush1.msra.mxu0 %v1078
    %8693 = vmatprep.subr.mxu0 %v1087
    %8694 = vmatpush1.msra.mxu0 %v1086
    %8695 = vmatprep.subr.mxu0 %v1095
    %8696 = vmatpush1.msra.mxu0 %v1094
    %8697 = vmatprep.subr.mxu0 %v1103
    %8698 = vmatpush1.msra.mxu0 %v1102
    %8699 = vmatprep.subr.mxu0 %v1111
    %8700 = vmatpush1.msra.mxu0 %v1110
    %8701 = vmatprep.subr.mxu0 %v1119
    %8702 = vmatpush1.msra.mxu0 %v1118
    %8703 = vmatprep.subr.mxu0 %v1127
    %8704 = vmatpush1.msra.mxu0 %v1126
    %8705 = vmatprep.subr.mxu0 %v1135
    %8706 = vmatpush1.msra.mxu0 %v1134
    %8707 = vmatprep.subr.mxu0 %v1143
    %8708 = vmatpush1.msra.mxu0 %v1142
    %8709 = vmatprep.subr.mxu0 %v1151
    %8710 = vmatpush1.msra.mxu0 %v1150
    %8711 = vmatprep.subr.mxu0 %v1159
    %8712 = vmatpush1.msra.mxu0 %v1158
    %8713 = vmatprep.subr.mxu0 %v1167
    %8714 = vmatpush1.msra.mxu0 %v1166
    %8715 = vmatprep.subr.mxu0 %v1175
    %8716 = vmatpush1.msra.mxu0 %v1174
    %8717 = vmatprep.subr.mxu0 %v1183
    %8718 = vmatpush1.msra.mxu0 %v1182
    %8719 = vmatprep.subr.mxu0 %v1191
    %8720 = vmatpush1.msra.mxu0 %v1190
    %8721 = vmatprep.subr.mxu0 %v1199
    %8722 = vmatpush1.msra.mxu0 %v1198
    %8723 = vmatprep.subr.mxu0 %v1207
    %8724 = vmatpush1.msra.mxu0 %v1206
    %8725 = vmatprep.subr.mxu0 %v1215
    %8726 = vmatpush1.msra.mxu0 %v1214
    %8727 = vmatprep.subr.mxu0 %v1223
    %8728 = vmatpush1.msra.mxu0 %v1222
    %8729 = vmatprep.subr.mxu0 %v1231
    %8730 = vmatpush1.msra.mxu0 %v1230
    %8731 = vmatprep.subr.mxu0 %v1239
    %8732 = vmatpush1.msra.mxu0 %v1238
    %8733 = vmatprep.subr.mxu0 %v1247
    %8734 = vmatpush1.msra.mxu0 %v1246
    %8735 = vmatprep.subr.mxu0 %v1255
    %8736 = vmatpush1.msra.mxu0 %v1254
    %8737 = vmatprep.subr.mxu0 %v1263
    %8738 = vmatpush1.msra.mxu0 %v1262
    %8739 = vmatprep.subr.mxu0 %v1271
    %8740 = vmatpush1.msra.mxu0 %v1270
    %8741 = vmatprep.mubr.f32.mxu0 %v8605
    %8742 = vmatmul.mubr.f32.gmra.mrb[0].mxu0 %v8604
    %v8743 = vpop.f32.mrb[0].mxu0
    %v8744 = vadd.f32 %v8120, %v8743
    %v8745 = vpop.f32.mrb[0].mxu0
    %v8746 = vadd.f32 %v8122, %v8745
    %8747 = vdwg.mxu0
    %8748 = vmatprep.subr.mxu0 %v1025
    %8749 = vmatpush1.msra.mxu0 %v1024
    %8750 = vmatprep.subr.mxu0 %v1033
    %8751 = vmatpush1.msra.mxu0 %v1032
    %8752 = vmatprep.subr.mxu0 %v1041
    %8753 = vmatpush1.msra.mxu0 %v1040
    %8754 = vmatprep.subr.mxu0 %v1049
    %8755 = vmatpush1.msra.mxu0 %v1048
    %8756 = vmatprep.subr.mxu0 %v1057
    %8757 = vmatpush1.msra.mxu0 %v1056
    %8758 = vmatprep.subr.mxu0 %v1065
    %8759 = vmatpush1.msra.mxu0 %v1064
    %8760 = vmatprep.subr.mxu0 %v1073
    %8761 = vmatpush1.msra.mxu0 %v1072
    %8762 = vmatprep.subr.mxu0 %v1081
    %8763 = vmatpush1.msra.mxu0 %v1080
    %8764 = vmatprep.subr.mxu0 %v1089
    %8765 = vmatpush1.msra.mxu0 %v1088
    %8766 = vmatprep.subr.mxu0 %v1097
    %8767 = vmatpush1.msra.mxu0 %v1096
    %8768 = vmatprep.subr.mxu0 %v1105
    %8769 = vmatpush1.msra.mxu0 %v1104
    %8770 = vmatprep.subr.mxu0 %v1113
    %8771 = vmatpush1.msra.mxu0 %v1112
    %8772 = vmatprep.subr.mxu0 %v1121
    %8773 = vmatpush1.msra.mxu0 %v1120
    %8774 = vmatprep.subr.mxu0 %v1129
    %8775 = vmatpush1.msra.mxu0 %v1128
    %8776 = vmatprep.subr.mxu0 %v1137
    %8777 = vmatpush1.msra.mxu0 %v1136
    %8778 = vmatprep.subr.mxu0 %v1145
    %8779 = vmatpush1.msra.mxu0 %v1144
    %8780 = vmatprep.subr.mxu0 %v1153
    %8781 = vmatpush1.msra.mxu0 %v1152
    %8782 = vmatprep.subr.mxu0 %v1161
    %8783 = vmatpush1.msra.mxu0 %v1160
    %8784 = vmatprep.subr.mxu0 %v1169
    %8785 = vmatpush1.msra.mxu0 %v1168
    %8786 = vmatprep.subr.mxu0 %v1177
    %8787 = vmatpush1.msra.mxu0 %v1176
    %8788 = vmatprep.subr.mxu0 %v1185
    %8789 = vmatpush1.msra.mxu0 %v1184
    %8790 = vmatprep.subr.mxu0 %v1193
    %8791 = vmatpush1.msra.mxu0 %v1192
    %8792 = vmatprep.subr.mxu0 %v1201
    %8793 = vmatpush1.msra.mxu0 %v1200
    %8794 = vmatprep.subr.mxu0 %v1209
    %8795 = vmatpush1.msra.mxu0 %v1208
    %8796 = vmatprep.subr.mxu0 %v1217
    %8797 = vmatpush1.msra.mxu0 %v1216
    %8798 = vmatprep.subr.mxu0 %v1225
    %8799 = vmatpush1.msra.mxu0 %v1224
    %8800 = vmatprep.subr.mxu0 %v1233
    %8801 = vmatpush1.msra.mxu0 %v1232
    %8802 = vmatprep.subr.mxu0 %v1241
    %8803 = vmatpush1.msra.mxu0 %v1240
    %8804 = vmatprep.subr.mxu0 %v1249
    %8805 = vmatpush1.msra.mxu0 %v1248
    %8806 = vmatprep.subr.mxu0 %v1257
    %8807 = vmatpush1.msra.mxu0 %v1256
    %8808 = vmatprep.subr.mxu0 %v1265
    %8809 = vmatpush1.msra.mxu0 %v1264
    %8810 = vmatprep.subr.mxu0 %v1273
    %8811 = vmatpush1.msra.mxu0 %v1272
    %8812 = vmatprep.mubr.f32.mxu0 %v8605
    %8813 = vmatmul.mubr.f32.gmra.mrb[0].mxu0 %v8604
    %v8814 = vpop.f32.mrb[0].mxu0
    %v8815 = vadd.f32 %v8191, %v8814
    %v8816 = vpop.f32.mrb[0].mxu0
    %v8817 = vadd.f32 %v8193, %v8816
    %8818 = vdwg.mxu0
    %8819 = vmatprep.subr.mxu0 %v1027
    %8820 = vmatpush1.msra.mxu0 %v1026
    %8821 = vmatprep.subr.mxu0 %v1035
    %8822 = vmatpush1.msra.mxu0 %v1034
    %8823 = vmatprep.subr.mxu0 %v1043
    %8824 = vmatpush1.msra.mxu0 %v1042
    %8825 = vmatprep.subr.mxu0 %v1051
    %8826 = vmatpush1.msra.mxu0 %v1050
    %8827 = vmatprep.subr.mxu0 %v1059
    %8828 = vmatpush1.msra.mxu0 %v1058
    %8829 = vmatprep.subr.mxu0 %v1067
    %8830 = vmatpush1.msra.mxu0 %v1066
    %8831 = vmatprep.subr.mxu0 %v1075
    %8832 = vmatpush1.msra.mxu0 %v1074
    %8833 = vmatprep.subr.mxu0 %v1083
    %8834 = vmatpush1.msra.mxu0 %v1082
    %8835 = vmatprep.subr.mxu0 %v1091
    %8836 = vmatpush1.msra.mxu0 %v1090
    %8837 = vmatprep.subr.mxu0 %v1099
    %8838 = vmatpush1.msra.mxu0 %v1098
    %8839 = vmatprep.subr.mxu0 %v1107
    %8840 = vmatpush1.msra.mxu0 %v1106
    %8841 = vmatprep.subr.mxu0 %v1115
    %8842 = vmatpush1.msra.mxu0 %v1114
    %8843 = vmatprep.subr.mxu0 %v1123
    %8844 = vmatpush1.msra.mxu0 %v1122
    %8845 = vmatprep.subr.mxu0 %v1131
    %8846 = vmatpush1.msra.mxu0 %v1130
    %8847 = vmatprep.subr.mxu0 %v1139
    %8848 = vmatpush1.msra.mxu0 %v1138
    %8849 = vmatprep.subr.mxu0 %v1147
    %8850 = vmatpush1.msra.mxu0 %v1146
    %8851 = vmatprep.subr.mxu0 %v1155
    %8852 = vmatpush1.msra.mxu0 %v1154
    %8853 = vmatprep.subr.mxu0 %v1163
    %8854 = vmatpush1.msra.mxu0 %v1162
    %8855 = vmatprep.subr.mxu0 %v1171
    %8856 = vmatpush1.msra.mxu0 %v1170
    %8857 = vmatprep.subr.mxu0 %v1179
    %8858 = vmatpush1.msra.mxu0 %v1178
    %8859 = vmatprep.subr.mxu0 %v1187
    %8860 = vmatpush1.msra.mxu0 %v1186
    %8861 = vmatprep.subr.mxu0 %v1195
    %8862 = vmatpush1.msra.mxu0 %v1194
    %8863 = vmatprep.subr.mxu0 %v1203
    %8864 = vmatpush1.msra.mxu0 %v1202
    %8865 = vmatprep.subr.mxu0 %v1211
    %8866 = vmatpush1.msra.mxu0 %v1210
    %8867 = vmatprep.subr.mxu0 %v1219
    %8868 = vmatpush1.msra.mxu0 %v1218
    %8869 = vmatprep.subr.mxu0 %v1227
    %8870 = vmatpush1.msra.mxu0 %v1226
    %8871 = vmatprep.subr.mxu0 %v1235
    %8872 = vmatpush1.msra.mxu0 %v1234
    %8873 = vmatprep.subr.mxu0 %v1243
    %8874 = vmatpush1.msra.mxu0 %v1242
    %8875 = vmatprep.subr.mxu0 %v1251
    %8876 = vmatpush1.msra.mxu0 %v1250
    %8877 = vmatprep.subr.mxu0 %v1259
    %8878 = vmatpush1.msra.mxu0 %v1258
    %8879 = vmatprep.subr.mxu0 %v1267
    %8880 = vmatpush1.msra.mxu0 %v1266
    %8881 = vmatprep.subr.mxu0 %v1275
    %8882 = vmatpush1.msra.mxu0 %v1274
    %8883 = vmatprep.mubr.f32.mxu0 %v8605
    %8884 = vmatmul.mubr.f32.gmra.mrb[0].mxu0 %v8604
    %v8885 = vpop.f32.mrb[0].mxu0
    %v8886 = vadd.f32 %v8262, %v8885
    %v8887 = vpop.f32.mrb[0].mxu0
    %v8888 = vadd.f32 %v8264, %v8887
    %8889 = vdwg.mxu0
    %v8890 = vxor.u32 %v8673, 2147483648
    %v8891 = vxor.u32 %v8675, 2147483648
    %v8892 = vmul.f32 %v8890, 1.442695
    %v8893 = vpow.pop %v8892
    %v8894 = vmul.f32 %v8891, 1.442695
    %v8895 = vpow.pop %v8894
    %v8896 = vadd.f32 %v8893, 1.0
    %v8897 = vadd.f32 %v8895, 1.0
    %v8898 = vrcp.pop %v8896
    %v8899 = vmul.f32 1.0, %v8898
    %v8900 = vrcp.pop %v8897
    %v8901 = vmul.f32 1.0, %v8900
    %v8902 = vxor.u32 %v8744, 2147483648
    %v8903 = vxor.u32 %v8746, 2147483648
    %v8904 = vmul.f32 %v8902, 1.442695
    %v8905 = vpow.pop %v8904
    %v8906 = vmul.f32 %v8903, 1.442695
    %v8907 = vpow.pop %v8906
    %v8908 = vadd.f32 %v8905, 1.0
    %v8909 = vadd.f32 %v8907, 1.0
    %v8910 = vrcp.pop %v8908
    %v8911 = vmul.f32 1.0, %v8910
    %v8912 = vrcp.pop %v8909
    %v8913 = vmul.f32 1.0, %v8912
    %v8914 = vtanh.pop %v8815
    %v8915 = vtanh.pop %v8817
    %v8916 = vxor.u32 %v8886, 2147483648
    %v8917 = vxor.u32 %v8888, 2147483648
    %v8918 = vmul.f32 %v8916, 1.442695
    %v8919 = vpow.pop %v8918
    %v8920 = vmul.f32 %v8917, 1.442695
    %v8921 = vpow.pop %v8920
    %v8922 = vadd.f32 %v8919, 1.0
    %v8923 = vadd.f32 %v8921, 1.0
    %v8924 = vrcp.pop %v8922
    %v8925 = vmul.f32 1.0, %v8924
    %v8926 = vrcp.pop %v8923
    %v8927 = vmul.f32 1.0, %v8926
    %v8928 = vmul.f32 %v8911, %v7976
    %v8929 = vmul.f32 %v8913, %v7977
    %v8930 = vmul.f32 %v8899, %v8914
    %v8931 = vmul.f32 %v8901, %v8915
    %v8932 = vadd.f32 %v8928, %v8930
    %v8933 = vadd.f32 %v8929, %v8931
    %v8934 = vtanh.pop %v8932
    %v8935 = vtanh.pop %v8933
    %v8936 = vmul.f32 %v8925, %v8934
    %v8937 = vmul.f32 %v8927, %v8935
    %v8938 = vld [vmem:[#allocation11] sm:$0xff]
    %v8939 = vld [vmem:[#allocation11 + $0x8] sm:$0xff]
    %v8940 = vld [vmem:[#allocation11 + $0x10] sm:$0xff]
    %v8941 = vld [vmem:[#allocation11 + $0x18] sm:$0xff]
    %v8942 = vld [vmem:[#allocation11 + $0x20] sm:$0xff]
    %v8943 = vld [vmem:[#allocation11 + $0x28] sm:$0xff]
    %v8944 = vld [vmem:[#allocation11 + $0x30] sm:$0xff]
    %v8945 = vld [vmem:[#allocation11 + $0x38] sm:$0xff]
    %v8946 = vld [vmem:[#allocation11 + $0x40] sm:$0xff]
    %v8947 = vld [vmem:[#allocation11 + $0x48] sm:$0xff]
    %v8948 = vld [vmem:[#allocation11 + $0x50] sm:$0xff]
    %v8949 = vld [vmem:[#allocation11 + $0x58] sm:$0xff]
    %v8950 = vld [vmem:[#allocation11 + $0x60] sm:$0xff]
    %v8951 = vld [vmem:[#allocation11 + $0x68] sm:$0xff]
    %v8952 = vld [vmem:[#allocation11 + $0x70] sm:$0xff]
    %v8953 = vld [vmem:[#allocation11 + $0x78] sm:$0xff]
    %v8954 = vld [vmem:[#allocation11 + $0x80] sm:$0xff]
    %v8955 = vld [vmem:[#allocation11 + $0x88] sm:$0xff]
    %v8956 = vld [vmem:[#allocation11 + $0x90] sm:$0xff]
    %v8957 = vld [vmem:[#allocation11 + $0x98] sm:$0xff]
    %v8958 = vld [vmem:[#allocation11 + $0xa0] sm:$0xff]
    %v8959 = vld [vmem:[#allocation11 + $0xa8] sm:$0xff]
    %v8960 = vld [vmem:[#allocation11 + $0xb0] sm:$0xff]
    %v8961 = vld [vmem:[#allocation11 + $0xb8] sm:$0xff]
    %v8962 = vld [vmem:[#allocation11 + $0xc0] sm:$0xff]
    %v8963 = vld [vmem:[#allocation11 + $0xc8] sm:$0xff]
    %v8964 = vld [vmem:[#allocation11 + $0xd0] sm:$0xff]
    %v8965 = vld [vmem:[#allocation11 + $0xd8] sm:$0xff]
    %v8966 = vld [vmem:[#allocation11 + $0xe0] sm:$0xff]
    %v8967 = vld [vmem:[#allocation11 + $0xe8] sm:$0xff]
    %v8968 = vld [vmem:[#allocation11 + $0xf0] sm:$0xff]
    %v8969 = vld [vmem:[#allocation11 + $0xf8] sm:$0xff]
    %v8970 = vld [vmem:[#allocation11 + $0x100] sm:$0xff]
    %v8971 = vld [vmem:[#allocation11 + $0x108] sm:$0xff]
    %v8972 = vld [vmem:[#allocation11 + $0x110] sm:$0xff]
    %v8973 = vld [vmem:[#allocation11 + $0x118] sm:$0xff]
    %v8974 = vld [vmem:[#allocation11 + $0x120] sm:$0xff]
    %v8975 = vld [vmem:[#allocation11 + $0x128] sm:$0xff]
    %v8976 = vld [vmem:[#allocation11 + $0x130] sm:$0xff]
    %v8977 = vld [vmem:[#allocation11 + $0x138] sm:$0xff]
    %v8978 = vld [vmem:[#allocation11 + $0x140] sm:$0xff]
    %v8979 = vld [vmem:[#allocation11 + $0x148] sm:$0xff]
    %v8980 = vld [vmem:[#allocation11 + $0x150] sm:$0xff]
    %v8981 = vld [vmem:[#allocation11 + $0x158] sm:$0xff]
    %v8982 = vld [vmem:[#allocation11 + $0x160] sm:$0xff]
    %v8983 = vld [vmem:[#allocation11 + $0x168] sm:$0xff]
    %v8984 = vld [vmem:[#allocation11 + $0x170] sm:$0xff]
    %v8985 = vld [vmem:[#allocation11 + $0x178] sm:$0xff]
    %v8986 = vld [vmem:[#allocation11 + $0x180] sm:$0xff]
    %v8987 = vld [vmem:[#allocation11 + $0x188] sm:$0xff]
    %v8988 = vld [vmem:[#allocation11 + $0x190] sm:$0xff]
    %v8989 = vld [vmem:[#allocation11 + $0x198] sm:$0xff]
    %v8990 = vld [vmem:[#allocation11 + $0x1a0] sm:$0xff]
    %v8991 = vld [vmem:[#allocation11 + $0x1a8] sm:$0xff]
    %v8992 = vld [vmem:[#allocation11 + $0x1b0] sm:$0xff]
    %v8993 = vld [vmem:[#allocation11 + $0x1b8] sm:$0xff]
    %v8994 = vld [vmem:[#allocation11 + $0x1c0] sm:$0xff]
    %v8995 = vld [vmem:[#allocation11 + $0x1c8] sm:$0xff]
    %v8996 = vld [vmem:[#allocation11 + $0x1d0] sm:$0xff]
    %v8997 = vld [vmem:[#allocation11 + $0x1d8] sm:$0xff]
    %v8998 = vld [vmem:[#allocation11 + $0x1e0] sm:$0xff]
    %v8999 = vld [vmem:[#allocation11 + $0x1e8] sm:$0xff]
    %v9000 = vld [vmem:[#allocation11 + $0x1f0] sm:$0xff]
    %v9001 = vld [vmem:[#allocation11 + $0x1f8] sm:$0xff]
    %v9002 = vld [vmem:[%s8] sm:$0x3]
    %v9004 = vlaneseq
    %v9005 = vshrl.u32 %v9004, 7
    %v9006 = vsub.s32 0, %v9005
    %v9007 = vrot.slane %v9002, %v9006
    %v9008 = vlaneseq
    %v9009 = vshrl.u32 %v9008, 7
    %v9010 = vsub.s32 1, %v9009
    %v9011 = vrot.slane %v9002, %v9010
    %9014 = vmatprep.subr.mxu0 %v8939
    %9015 = vmatpush1.msra.mxu0 %v8938
    %9016 = vmatprep.subr.mxu0 %v8941
    %9017 = vmatpush1.msra.mxu0 %v8940
    %9018 = vmatprep.subr.mxu0 %v8943
    %9019 = vmatpush1.msra.mxu0 %v8942
    %9020 = vmatprep.subr.mxu0 %v8945
    %9021 = vmatpush1.msra.mxu0 %v8944
    %9022 = vmatprep.subr.mxu0 %v8947
    %9023 = vmatpush1.msra.mxu0 %v8946
    %9024 = vmatprep.subr.mxu0 %v8949
    %9025 = vmatpush1.msra.mxu0 %v8948
    %9026 = vmatprep.subr.mxu0 %v8951
    %9027 = vmatpush1.msra.mxu0 %v8950
    %9028 = vmatprep.subr.mxu0 %v8953
    %9029 = vmatpush1.msra.mxu0 %v8952
    %9030 = vmatprep.subr.mxu0 %v8955
    %9031 = vmatpush1.msra.mxu0 %v8954
    %9032 = vmatprep.subr.mxu0 %v8957
    %9033 = vmatpush1.msra.mxu0 %v8956
    %9034 = vmatprep.subr.mxu0 %v8959
    %9035 = vmatpush1.msra.mxu0 %v8958
    %9036 = vmatprep.subr.mxu0 %v8961
    %9037 = vmatpush1.msra.mxu0 %v8960
    %9038 = vmatprep.subr.mxu0 %v8963
    %9039 = vmatpush1.msra.mxu0 %v8962
    %9040 = vmatprep.subr.mxu0 %v8965
    %9041 = vmatpush1.msra.mxu0 %v8964
    %9042 = vmatprep.subr.mxu0 %v8967
    %9043 = vmatpush1.msra.mxu0 %v8966
    %9044 = vmatprep.subr.mxu0 %v8969
    %9045 = vmatpush1.msra.mxu0 %v8968
    %9046 = vmatprep.subr.mxu0 %v8971
    %9047 = vmatpush1.msra.mxu0 %v8970
    %9048 = vmatprep.subr.mxu0 %v8973
    %9049 = vmatpush1.msra.mxu0 %v8972
    %9050 = vmatprep.subr.mxu0 %v8975
    %9051 = vmatpush1.msra.mxu0 %v8974
    %9052 = vmatprep.subr.mxu0 %v8977
    %9053 = vmatpush1.msra.mxu0 %v8976
    %9054 = vmatprep.subr.mxu0 %v8979
    %9055 = vmatpush1.msra.mxu0 %v8978
    %9056 = vmatprep.subr.mxu0 %v8981
    %9057 = vmatpush1.msra.mxu0 %v8980
    %9058 = vmatprep.subr.mxu0 %v8983
    %9059 = vmatpush1.msra.mxu0 %v8982
    %9060 = vmatprep.subr.mxu0 %v8985
    %9061 = vmatpush1.msra.mxu0 %v8984
    %9062 = vmatprep.subr.mxu0 %v8987
    %9063 = vmatpush1.msra.mxu0 %v8986
    %9064 = vmatprep.subr.mxu0 %v8989
    %9065 = vmatpush1.msra.mxu0 %v8988
    %9066 = vmatprep.subr.mxu0 %v8991
    %9067 = vmatpush1.msra.mxu0 %v8990
    %9068 = vmatprep.subr.mxu0 %v8993
    %9069 = vmatpush1.msra.mxu0 %v8992
    %9070 = vmatprep.subr.mxu0 %v8995
    %9071 = vmatpush1.msra.mxu0 %v8994
    %9072 = vmatprep.subr.mxu0 %v8997
    %9073 = vmatpush1.msra.mxu0 %v8996
    %9074 = vmatprep.subr.mxu0 %v8999
    %9075 = vmatpush1.msra.mxu0 %v8998
    %9076 = vmatprep.subr.mxu0 %v9001
    %9077 = vmatpush1.msra.mxu0 %v9000
    %9078 = vmatprep.mubr.f32.mxu0 %v8937
    %9079 = vmatmul.mubr.f32.gmra.mrb[0].mxu0 %v8936
    %v9080 = vpop.f32.mrb[0].mxu0
    %v9081 = vadd.f32 %v9007, %v9080
    %v9082 = vpop.f32.mrb[0].mxu0
    %v9083 = vadd.f32 %v9011, %v9082
    %9084 = vdwg.mxu0
    %v9085 = vmax.f32 %v9081, 0.0
    %v9086 = vmax.f32 %v9083, 0.0
    %v9087 = vld [vmem:[#allocation13] sm:$0xff]
    %v9088 = vld [vmem:[#allocation13 + $0x8] sm:$0xff]
    %v9089 = vld [vmem:[#allocation13 + $0x10] sm:$0xff]
    %v9090 = vld [vmem:[#allocation13 + $0x18] sm:$0xff]
    %v9091 = vld [vmem:[#allocation13 + $0x20] sm:$0xff]
    %v9092 = vld [vmem:[#allocation13 + $0x28] sm:$0xff]
    %v9093 = vld [vmem:[#allocation13 + $0x30] sm:$0xff]
    %v9094 = vld [vmem:[#allocation13 + $0x38] sm:$0xff]
    %v9095 = vld [vmem:[#allocation13 + $0x40] sm:$0xff]
    %v9096 = vld [vmem:[#allocation13 + $0x48] sm:$0xff]
    %v9097 = vld [vmem:[#allocation13 + $0x50] sm:$0xff]
    %v9098 = vld [vmem:[#allocation13 + $0x58] sm:$0xff]
    %v9099 = vld [vmem:[#allocation13 + $0x60] sm:$0xff]
    %v9100 = vld [vmem:[#allocation13 + $0x68] sm:$0xff]
    %v9101 = vld [vmem:[#allocation13 + $0x70] sm:$0xff]
    %v9102 = vld [vmem:[#allocation13 + $0x78] sm:$0xff]
    %v9103 = vld [vmem:[#allocation13 + $0x80] sm:$0xff]
    %v9104 = vld [vmem:[#allocation13 + $0x88] sm:$0xff]
    %v9105 = vld [vmem:[#allocation13 + $0x90] sm:$0xff]
    %v9106 = vld [vmem:[#allocation13 + $0x98] sm:$0xff]
    %v9107 = vld [vmem:[#allocation13 + $0xa0] sm:$0xff]
    %v9108 = vld [vmem:[#allocation13 + $0xa8] sm:$0xff]
    %v9109 = vld [vmem:[#allocation13 + $0xb0] sm:$0xff]
    %v9110 = vld [vmem:[#allocation13 + $0xb8] sm:$0xff]
    %v9111 = vld [vmem:[#allocation13 + $0xc0] sm:$0xff]
    %v9112 = vld [vmem:[#allocation13 + $0xc8] sm:$0xff]
    %v9113 = vld [vmem:[#allocation13 + $0xd0] sm:$0xff]
    %v9114 = vld [vmem:[#allocation13 + $0xd8] sm:$0xff]
    %v9115 = vld [vmem:[#allocation13 + $0xe0] sm:$0xff]
    %v9116 = vld [vmem:[#allocation13 + $0xe8] sm:$0xff]
    %v9117 = vld [vmem:[#allocation13 + $0xf0] sm:$0xff]
    %v9118 = vld [vmem:[#allocation13 + $0xf8] sm:$0xff]
    %v9119 = vld [vmem:[%s10] sm:$0x1]
    %v9121 = vlaneseq
    %v9122 = vshrl.u32 %v9121, 7
    %v9123 = vsub.s32 0, %v9122
    %v9124 = vrot.slane %v9119, %v9123
    %9126 = vmatprep.subr.mxu0 0.0
    %9127 = vmatpush1.msra.mxu0 %v9087
    %9128 = vmatprep.subr.mxu0 0.0
    %9129 = vmatpush1.msra.mxu0 %v9088
    %9130 = vmatprep.subr.mxu0 0.0
    %9131 = vmatpush1.msra.mxu0 %v9089
    %9132 = vmatprep.subr.mxu0 0.0
    %9133 = vmatpush1.msra.mxu0 %v9090
    %9134 = vmatprep.subr.mxu0 0.0
    %9135 = vmatpush1.msra.mxu0 %v9091
    %9136 = vmatprep.subr.mxu0 0.0
    %9137 = vmatpush1.msra.mxu0 %v9092
    %9138 = vmatprep.subr.mxu0 0.0
    %9139 = vmatpush1.msra.mxu0 %v9093
    %9140 = vmatprep.subr.mxu0 0.0
    %9141 = vmatpush1.msra.mxu0 %v9094
    %9142 = vmatprep.subr.mxu0 0.0
    %9143 = vmatpush1.msra.mxu0 %v9095
    %9144 = vmatprep.subr.mxu0 0.0
    %9145 = vmatpush1.msra.mxu0 %v9096
    %9146 = vmatprep.subr.mxu0 0.0
    %9147 = vmatpush1.msra.mxu0 %v9097
    %9148 = vmatprep.subr.mxu0 0.0
    %9149 = vmatpush1.msra.mxu0 %v9098
    %9150 = vmatprep.subr.mxu0 0.0
    %9151 = vmatpush1.msra.mxu0 %v9099
    %9152 = vmatprep.subr.mxu0 0.0
    %9153 = vmatpush1.msra.mxu0 %v9100
    %9154 = vmatprep.subr.mxu0 0.0
    %9155 = vmatpush1.msra.mxu0 %v9101
    %9156 = vmatprep.subr.mxu0 0.0
    %9157 = vmatpush1.msra.mxu0 %v9102
    %9158 = vmatprep.subr.mxu0 0.0
    %9159 = vmatpush1.msra.mxu0 %v9103
    %9160 = vmatprep.subr.mxu0 0.0
    %9161 = vmatpush1.msra.mxu0 %v9104
    %9162 = vmatprep.subr.mxu0 0.0
    %9163 = vmatpush1.msra.mxu0 %v9105
    %9164 = vmatprep.subr.mxu0 0.0
    %9165 = vmatpush1.msra.mxu0 %v9106
    %9166 = vmatprep.subr.mxu0 0.0
    %9167 = vmatpush1.msra.mxu0 %v9107
    %9168 = vmatprep.subr.mxu0 0.0
    %9169 = vmatpush1.msra.mxu0 %v9108
    %9170 = vmatprep.subr.mxu0 0.0
    %9171 = vmatpush1.msra.mxu0 %v9109
    %9172 = vmatprep.subr.mxu0 0.0
    %9173 = vmatpush1.msra.mxu0 %v9110
    %9174 = vmatprep.subr.mxu0 0.0
    %9175 = vmatpush1.msra.mxu0 %v9111
    %9176 = vmatprep.subr.mxu0 0.0
    %9177 = vmatpush1.msra.mxu0 %v9112
    %9178 = vmatprep.subr.mxu0 0.0
    %9179 = vmatpush1.msra.mxu0 %v9113
    %9180 = vmatprep.subr.mxu0 0.0
    %9181 = vmatpush1.msra.mxu0 %v9114
    %9182 = vmatprep.subr.mxu0 0.0
    %9183 = vmatpush1.msra.mxu0 %v9115
    %9184 = vmatprep.subr.mxu0 0.0
    %9185 = vmatpush1.msra.mxu0 %v9116
    %9186 = vmatprep.subr.mxu0 0.0
    %9187 = vmatpush1.msra.mxu0 %v9117
    %9188 = vmatprep.subr.mxu0 0.0
    %9189 = vmatpush1.msra.mxu0 %v9118
    %9190 = vmatprep.mubr.f32.mxu0 %v9086
    %9191 = vmatmul.mubr.f32.gmra.mrb[0].mxu0 %v9085
    %v9192 = vpop.f32.mrb[0].mxu0
    %v9193 = vadd.f32 %v9124, %v9192
    %v9194 = vpop.f32.mrb[0].mxu0
    %9195 = vdwg.mxu0
    %9196 = vst [vmem:[#allocation14] sm:$0xff] %v9193
    // Predicated region
    $region74: #{tpu_custom_call.1} parent=1 // pred_check
      _
    $region75: #{tpu_custom_call.1} parent=1 // pred_check_branch
      %9198 = sbr.rel (0) target = $region77
    $region76: #{tpu_custom_call.1} parent=1 // pred_region
      %s9200 = ssub.s32 128, 128
      %9201 = vsyncadd [#allocation4], %s9200
      %s9203 = sshll.u32 [#allocation14], 4
      %s9204 = int_to_ptr.vmem [resolvable:$true] %s9203
      %9206 = dma.vmem_to_hbm [thread:$0]  %s9204, 128, %s11, [#allocation4]
    $region77: #{tpu_custom_call.1} parent=1 // pred_fallthru
      _
    // Predicated region
    $region78: #{tpu_custom_call.1} parent=1 // pred_check
      _
    $region79: #{tpu_custom_call.1} parent=1 // pred_check_branch
      %9208 = sbr.rel (0) target = $region81
    $region80: #{tpu_custom_call.1} parent=1 // pred_region
      %9209 = dma.done [#allocation4], 128
    $region81: #{tpu_custom_call.1} parent=1 // pred_fallthru
      _
    %9210 = vsyncpa [#allocation3], 1
    %9211 = vsyncpa [#allocation6], 1
    %9212 = vsyncpa [#allocation9], 1
    %9213 = vsyncpa [#allocation12], 1
    %9214 = vsyncpa [#allocation4], 1

</llo_original>
